<compile_context>
chip_gen: v6e
topology: v6e:2x2x1
jax: 0.10.0
libtpu: 0.0.40
codegen_flags: <defaults>
</compile_context>

<pallas_src>
import functools

import jax
import jax.numpy as jnp
from jax.experimental import pallas as pl
from jax.experimental.pallas import tpu as pltpu


# ---------------------------------------------------------------------------
# Pallas kernel: lane-dense fused matmul + bias + activation
#   out[n, :, j*TM:(j+1)*TM] = act( W (Cout,K) @ cols[n, :, j*TM:(j+1)*TM] + b )
# ---------------------------------------------------------------------------
def _conv_mm_kernel(w_ref, b_ref, c_ref, o_ref, *, act):
    # w_ref: (Cout, K) bf16 | c_ref: (1, K, TM) bf16 | b_ref: (Cout, 1) f32
    acc = jnp.dot(w_ref[...], c_ref[0],
                  preferred_element_type=jnp.float32)        # MXU, f32 accum
    acc = acc + b_ref[...]                                    # (Cout,TM)+(Cout,1)
    if act == "relu":
        acc = jnp.maximum(acc, 0.0)
    elif act == "sigmoid":
        acc = jax.nn.sigmoid(acc)                             # exp+recip on EUP
    o_ref[0] = acc.astype(o_ref.dtype)


def _pick_m_tile(mo, cap=1024):
    """Largest M tile <= cap that divides Mo (multiple of 128), else full Mo."""
    if mo <= cap:
        return mo                      # full-dim block is always legal
    t = cap
    while t >= 128 and (mo % t != 0):
        t -= 128
    return t if t >= 128 else mo


def matmul_bias_act(w_mat, bias, cols, act, out_dtype):
    """cols: (N, K, Mo) bf16; w_mat: (Cout, K) bf16; bias: (Cout, 1) f32.

    Returns (N, Cout, Mo) in out_dtype.
    """
    N, K, Mo = cols.shape
    Cout = w_mat.shape[0]
    tm = _pick_m_tile(Mo)

    return pl.pallas_call(
        functools.partial(_conv_mm_kernel, act=act),
        out_shape=jax.ShapeDtypeStruct((N, Cout, Mo), out_dtype),
        grid=(N, Mo // tm),
        in_specs=[
            pl.BlockSpec((Cout, K), lambda n, j: (0, 0)),     # resident weight
            pl.BlockSpec((Cout, 1), lambda n, j: (0, 0)),     # resident bias
            pl.BlockSpec((1, K, tm), lambda n, j: (n, 0, j)),
        ],
        out_specs=pl.BlockSpec((1, Cout, tm), lambda n, j: (n, 0, j)),
        compiler_params=pltpu.CompilerParams(
            dimension_semantics=("parallel", "parallel")),
    )(w_mat, bias, cols)


# ---------------------------------------------------------------------------
# im2col glue (plain JAX) producing cols^T: (N, C*k^3, Do*Ho*Wo)
# K ordering is (c, kd, kh, kw), matching PyTorch's weight.reshape(Cout, -1).
# ---------------------------------------------------------------------------
def _im2col_T(x, k, stride):
    """x: (N, C, Dp, Hp, Wp), already spatially padded."""
    N, C, D, H, W = x.shape
    Do = (D - k) // stride + 1
    Ho = (H - k) // stride + 1
    Wo = (W - k) // stride + 1
    taps = []
    for kd in range(k):
        for kh in range(k):
            for kw in range(k):
                taps.append(
                    x[:, :,
                      kd:kd + stride * Do:stride,
                      kh:kh + stride * Ho:stride,
                      kw:kw + stride * Wo:stride].reshape(N, C, Do * Ho * Wo))
    cols = jnp.stack(taps, axis=2)                    # (N, C, k^3, Mo)
    return cols.reshape(N, C * k ** 3, Do * Ho * Wo), (Do, Ho, Wo)


def conv3d(x, w_mat, bias, k, stride, pad, act, out_dtype):
    """PyTorch-semantics Conv3d. x: (N,Cin,D,H,W); w_mat: (Cout, Cin*k^3)."""
    x = x.astype(jnp.bfloat16)
    xp = jnp.pad(x, ((0, 0), (0, 0), (pad, pad), (pad, pad), (pad, pad)))
    cols, (Do, Ho, Wo) = _im2col_T(xp, k, stride)
    out = matmul_bias_act(w_mat, bias, cols, act, out_dtype)
    N, Cout = out.shape[0], out.shape[1]
    return out.reshape(N, Cout, Do, Ho, Wo)


def conv_transpose3d(x, w_mat, bias, k, stride, pad, out_pad, act, out_dtype):
    """PyTorch-semantics ConvTranspose3d 'the exact way': zero-dilate the input,
    edge-pad, then stride-1 conv with the flipped / channel-swapped weight
    (w_mat is already in equivalent-forward (Cout, Cin*k^3) form)."""
    x = x.astype(jnp.bfloat16)
    N, C, D, H, W = x.shape
    lo = k - 1 - pad
    hi = k - 1 - pad + out_pad
    Dd, Hd, Wd = (D - 1) * stride + 1, (H - 1) * stride + 1, (W - 1) * stride + 1
    xd = jnp.zeros((N, C, Dd + lo + hi, Hd + lo + hi, Wd + lo + hi), x.dtype)
    xd = xd.at[:, :,
               lo:lo + Dd:stride,
               lo:lo + Hd:stride,
               lo:lo + Wd:stride].set(x)
    cols, (Do, Ho, Wo) = _im2col_T(xd, k, 1)
    out = matmul_bias_act(w_mat, bias, cols, act, out_dtype)
    Cout = out.shape[1]
    return out.reshape(N, Cout, Do, Ho, Wo)


# ---------------------------------------------------------------------------
# Autoencoder3D parameters + forward
# ---------------------------------------------------------------------------
def init_params(key):
    """Deterministic synthetic weights matching the PyTorch module's shapes."""
    def nrm(key, shape, scale=0.05):
        return scale * jax.random.normal(key, shape, jnp.float32)

    ks = jax.random.split(key, 12)
    return {
        # Encoder: Conv3d weights are (Cout, Cin, 3,3,3)
        "enc1_w": nrm(ks[0], (16, 1, 3, 3, 3)),  "enc1_b": nrm(ks[1], (16,)),
        "enc2_w": nrm(ks[2], (32, 16, 3, 3, 3)), "enc2_b": nrm(ks[3], (32,)),
        "enc3_w": nrm(ks[4], (64, 32, 3, 3, 3)), "enc3_b": nrm(ks[5], (64,)),
        # Decoder: ConvTranspose3d weights are (Cin, Cout, 3,3,3)
        "dec1_w": nrm(ks[6], (64, 32, 3, 3, 3)), "dec1_b": nrm(ks[7], (32,)),
        "dec2_w": nrm(ks[8], (32, 16, 3, 3, 3)), "dec2_b": nrm(ks[9], (16,)),
        "dec3_w": nrm(ks[10], (16, 1, 3, 3, 3)), "dec3_b": nrm(ks[11], (1,)),
    }


def prepare_params(params):
    """One-time reshape / spatial-flip / cast into matmul-ready form."""
    prep = {}
    for name in ("enc1", "enc2", "enc3"):
        w = params[name + "_w"]                               # (Cout,Cin,3,3,3)
        prep[name + "_w"] = w.reshape(w.shape[0], -1).astype(jnp.bfloat16)
        prep[name + "_b"] = params[name + "_b"].reshape(-1, 1).astype(jnp.float32)
    for name in ("dec1", "dec2", "dec3"):
        w = params[name + "_w"]                               # (Cin,Cout,3,3,3)
        w_eq = jnp.flip(w, axis=(2, 3, 4)).transpose(1, 0, 2, 3, 4)
        prep[name + "_w"] = w_eq.reshape(w_eq.shape[0], -1).astype(jnp.bfloat16)
        prep[name + "_b"] = params[name + "_b"].reshape(-1, 1).astype(jnp.float32)
    return prep


def autoencoder3d_forward(prep, x):
    # Encoder: Conv3d(k=3, s=2, p=1) + ReLU, x3  (intermediates kept in bf16)
    h = conv3d(x, prep["enc1_w"], prep["enc1_b"], 3, 2, 1, "relu", jnp.bfloat16)
    h = conv3d(h, prep["enc2_w"], prep["enc2_b"], 3, 2, 1, "relu", jnp.bfloat16)
    h = conv3d(h, prep["enc3_w"], prep["enc3_b"], 3, 2, 1, "relu", jnp.bfloat16)
    # Decoder: ConvTranspose3d(k=3, s=2, p=1, op=1) + ReLU/ReLU/Sigmoid
    h = conv_transpose3d(h, prep["dec1_w"], prep["dec1_b"], 3, 2, 1, 1,
                         "relu", jnp.bfloat16)
    h = conv_transpose3d(h, prep["dec2_w"], prep["dec2_b"], 3, 2, 1, 1,
                         "relu", jnp.bfloat16)
    h = conv_transpose3d(h, prep["dec3_w"], prep["dec3_b"], 3, 2, 1, 1,
                         "sigmoid", jnp.float32)
    return h


if __name__ == "__main__":
    key = jax.random.PRNGKey(0)
    k_param, k_x = jax.random.split(key)
    params = init_params(k_param)
    prep = prepare_params(params)

    # Small NCDHW input: batch=2, channels=1, spatial=16
    x = jax.random.normal(k_x, (2, 1, 16, 16, 16), jnp.float32)

    out = jax.jit(autoencoder3d_forward)(prep, x)
    out = jax.block_until_ready(out)

    assert out.shape == (2, 1, 16, 16, 16), out.shape
    assert out.dtype == jnp.float32, out.dtype
    assert bool(jnp.all((out > 0.0) & (out < 1.0))), "sigmoid range violated"
    assert bool(jnp.all(jnp.isfinite(out)))
    print("KERNEL_OK")
</pallas_src>

<mosaic_0001>
module attributes {stable_mosaic.version = 11 : i64} {
  func.func @_conv_mm_kernel(%arg0: i32, %arg1: i32, %arg2: memref<16x27xbf16, #tpu.memory_space<vmem>>, %arg3: memref<16x1xf32, #tpu.memory_space<vmem>>, %arg4: memref<1x27x512xbf16, #tpu.memory_space<vmem>>, %arg5: memref<1x16x512xbf16, #tpu.memory_space<vmem>>) attributes {dimension_semantics = [#tpu.dimension_semantics<parallel>, #tpu.dimension_semantics<parallel>], iteration_bounds = array<i64: 2, 1>, scalar_prefetch = 0 : i64, scratch_operands = 0 : i64, tpu.core_type = #tpu.core_type<tc>, window_params = [{pipeline_mode = #tpu.pipeline_mode<synchronous>, transform_indices = @transform_0, window_bounds = array<i64: 16, 27>}, {pipeline_mode = #tpu.pipeline_mode<synchronous>, transform_indices = @transform_1, window_bounds = array<i64: 16, 1>}, {transform_indices = @transform_2, window_bounds = array<i64: 1, 27, 512>}, {transform_indices = @transform_3, window_bounds = array<i64: 1, 16, 512>}]} {
    %c0 = arith.constant 0 : index
    %c0_0 = arith.constant 0 : index
    %0 = vector.load %arg2[%c0, %c0_0] : memref<16x27xbf16, #tpu.memory_space<vmem>>, vector<16x27xbf16>
    %c0_1 = arith.constant 0 : index
    %c0_2 = arith.constant 0 : index
    %c0_3 = arith.constant 0 : index
    %1 = vector.load %arg4[%c0_1, %c0_2, %c0_3] : memref<1x27x512xbf16, #tpu.memory_space<vmem>>, vector<1x27x512xbf16>
    %2 = vector.shape_cast %1 : vector<1x27x512xbf16> to vector<27x512xbf16>
    %cst = arith.constant dense<0.000000e+00> : vector<16x512xf32>
    %3 = tpu.matmul %0, %2, %cst {dimension_numbers = #tpu.dot_dimension_numbers<[1], [0], [0], [1], [0, 0, 1, 1], [], []>} : vector<16x27xbf16>, vector<27x512xbf16>, vector<16x512xf32> -> vector<16x512xf32>
    %c0_4 = arith.constant 0 : index
    %c0_5 = arith.constant 0 : index
    %4 = vector.load %arg3[%c0_4, %c0_5] : memref<16x1xf32, #tpu.memory_space<vmem>>, vector<16x1xf32>
    %5 = vector.broadcast %4 : vector<16x1xf32> to vector<16x512xf32>
    %6 = arith.addf %3, %5 : vector<16x512xf32>
    %cst_6 = arith.constant 0.000000e+00 : f32
    %7 = vector.broadcast %cst_6 : f32 to vector<16x512xf32>
    %8 = arith.maximumf %6, %7 : vector<16x512xf32>
    %9 = arith.truncf %8 : vector<16x512xf32> to vector<16x512xbf16>
    %c0_7 = arith.constant 0 : index
    %c0_8 = arith.constant 0 : index
    %c0_9 = arith.constant 0 : index
    %10 = vector.load %arg5[%c0_7, %c0_8, %c0_9] : memref<1x16x512xbf16, #tpu.memory_space<vmem>>, vector<1x16x512xbf16>
    %11 = vector.shape_cast %10 : vector<1x16x512xbf16> to vector<16x512xbf16>
    %12 = vector.shape_cast %9 : vector<16x512xbf16> to vector<1x16x512xbf16>
    tpu.vector_store %arg5[%c0_7, %c0_8, %c0_9], %12 {strides = array<i32>} : memref<1x16x512xbf16, #tpu.memory_space<vmem>>, vector<1x16x512xbf16>,
    return
  }
  func.func @transform_0(%arg0: i32, %arg1: i32) -> (i32, i32) {
    %c0_i32 = arith.constant 0 : i32
    %c0_i32_0 = arith.constant 0 : i32
    %c0_i32_1 = arith.constant 0 : i32
    return %c0_i32, %c0_i32_0 : i32, i32
  }
  func.func @transform_1(%arg0: i32, %arg1: i32) -> (i32, i32) {
    %c0_i32 = arith.constant 0 : i32
    %c0_i32_0 = arith.constant 0 : i32
    %c0_i32_1 = arith.constant 0 : i32
    return %c0_i32, %c0_i32_0 : i32, i32
  }
  func.func @transform_2(%arg0: i32, %arg1: i32) -> (i32, i32, i32) {
    %c0_i32 = arith.constant 0 : i32
    %c0_i32_0 = arith.constant 0 : i32
    return %arg0, %c0_i32, %arg1 : i32, i32, i32
  }
  func.func @transform_3(%arg0: i32, %arg1: i32) -> (i32, i32, i32) {
    %c0_i32 = arith.constant 0 : i32
    %c0_i32_0 = arith.constant 0 : i32
    return %arg0, %c0_i32, %arg1 : i32, i32, i32
  }
}

module attributes {stable_mosaic.version = 11 : i64} {
  func.func @_conv_mm_kernel(%arg0: i32, %arg1: i32, %arg2: memref<32x432xbf16, #tpu.memory_space<vmem>>, %arg3: memref<32x1xf32, #tpu.memory_space<vmem>>, %arg4: memref<1x432x64xbf16, #tpu.memory_space<vmem>>, %arg5: memref<1x32x64xbf16, #tpu.memory_space<vmem>>) attributes {dimension_semantics = [#tpu.dimension_semantics<parallel>, #tpu.dimension_semantics<parallel>], iteration_bounds = array<i64: 2, 1>, scalar_prefetch = 0 : i64, scratch_operands = 0 : i64, tpu.core_type = #tpu.core_type<tc>, window_params = [{pipeline_mode = #tpu.pipeline_mode<synchronous>, transform_indices = @transform_0, window_bounds = array<i64: 32, 432>}, {pipeline_mode = #tpu.pipeline_mode<synchronous>, transform_indices = @transform_1, window_bounds = array<i64: 32, 1>}, {transform_indices = @transform_2, window_bounds = array<i64: 1, 432, 64>}, {transform_indices = @transform_3, window_bounds = array<i64: 1, 32, 64>}]} {
    %c0 = arith.constant 0 : index
    %c0_0 = arith.constant 0 : index
    %0 = vector.load %arg2[%c0, %c0_0] : memref<32x432xbf16, #tpu.memory_space<vmem>>, vector<32x432xbf16>
    %c0_1 = arith.constant 0 : index
    %c0_2 = arith.constant 0 : index
    %c0_3 = arith.constant 0 : index
    %1 = vector.load %arg4[%c0_1, %c0_2, %c0_3] : memref<1x432x64xbf16, #tpu.memory_space<vmem>>, vector<1x432x64xbf16>
    %2 = vector.shape_cast %1 : vector<1x432x64xbf16> to vector<432x64xbf16>
    %cst = arith.constant dense<0.000000e+00> : vector<32x64xf32>
    %3 = tpu.matmul %0, %2, %cst {dimension_numbers = #tpu.dot_dimension_numbers<[1], [0], [0], [1], [0, 0, 1, 1], [], []>} : vector<32x432xbf16>, vector<432x64xbf16>, vector<32x64xf32> -> vector<32x64xf32>
    %c0_4 = arith.constant 0 : index
    %c0_5 = arith.constant 0 : index
    %4 = vector.load %arg3[%c0_4, %c0_5] : memref<32x1xf32, #tpu.memory_space<vmem>>, vector<32x1xf32>
    %5 = vector.broadcast %4 : vector<32x1xf32> to vector<32x64xf32>
    %6 = arith.addf %3, %5 : vector<32x64xf32>
    %cst_6 = arith.constant 0.000000e+00 : f32
    %7 = vector.broadcast %cst_6 : f32 to vector<32x64xf32>
    %8 = arith.maximumf %6, %7 : vector<32x64xf32>
    %9 = arith.truncf %8 : vector<32x64xf32> to vector<32x64xbf16>
    %c0_7 = arith.constant 0 : index
    %c0_8 = arith.constant 0 : index
    %c0_9 = arith.constant 0 : index
    %10 = vector.load %arg5[%c0_7, %c0_8, %c0_9] : memref<1x32x64xbf16, #tpu.memory_space<vmem>>, vector<1x32x64xbf16>
    %11 = vector.shape_cast %10 : vector<1x32x64xbf16> to vector<32x64xbf16>
    %12 = vector.shape_cast %9 : vector<32x64xbf16> to vector<1x32x64xbf16>
    tpu.vector_store %arg5[%c0_7, %c0_8, %c0_9], %12 {strides = array<i32>} : memref<1x32x64xbf16, #tpu.memory_space<vmem>>, vector<1x32x64xbf16>,
    return
  }
  func.func @transform_0(%arg0: i32, %arg1: i32) -> (i32, i32) {
    %c0_i32 = arith.constant 0 : i32
    %c0_i32_0 = arith.constant 0 : i32
    %c0_i32_1 = arith.constant 0 : i32
    return %c0_i32, %c0_i32_0 : i32, i32
  }
  func.func @transform_1(%arg0: i32, %arg1: i32) -> (i32, i32) {
    %c0_i32 = arith.constant 0 : i32
    %c0_i32_0 = arith.constant 0 : i32
    %c0_i32_1 = arith.constant 0 : i32
    return %c0_i32, %c0_i32_0 : i32, i32
  }
  func.func @transform_2(%arg0: i32, %arg1: i32) -> (i32, i32, i32) {
    %c0_i32 = arith.constant 0 : i32
    %c0_i32_0 = arith.constant 0 : i32
    return %arg0, %c0_i32, %arg1 : i32, i32, i32
  }
  func.func @transform_3(%arg0: i32, %arg1: i32) -> (i32, i32, i32) {
    %c0_i32 = arith.constant 0 : i32
    %c0_i32_0 = arith.constant 0 : i32
    return %arg0, %c0_i32, %arg1 : i32, i32, i32
  }
}

module attributes {stable_mosaic.version = 11 : i64} {
  func.func @_conv_mm_kernel(%arg0: i32, %arg1: i32, %arg2: memref<64x864xbf16, #tpu.memory_space<vmem>>, %arg3: memref<64x1xf32, #tpu.memory_space<vmem>>, %arg4: memref<1x864x8xbf16, #tpu.memory_space<vmem>>, %arg5: memref<1x64x8xbf16, #tpu.memory_space<vmem>>) attributes {dimension_semantics = [#tpu.dimension_semantics<parallel>, #tpu.dimension_semantics<parallel>], iteration_bounds = array<i64: 2, 1>, scalar_prefetch = 0 : i64, scratch_operands = 0 : i64, tpu.core_type = #tpu.core_type<tc>, window_params = [{pipeline_mode = #tpu.pipeline_mode<synchronous>, transform_indices = @transform_0, window_bounds = array<i64: 64, 864>}, {pipeline_mode = #tpu.pipeline_mode<synchronous>, transform_indices = @transform_1, window_bounds = array<i64: 64, 1>}, {transform_indices = @transform_2, window_bounds = array<i64: 1, 864, 8>}, {transform_indices = @transform_3, window_bounds = array<i64: 1, 64, 8>}]} {
    %c0 = arith.constant 0 : index
    %c0_0 = arith.constant 0 : index
    %0 = vector.load %arg2[%c0, %c0_0] : memref<64x864xbf16, #tpu.memory_space<vmem>>, vector<64x864xbf16>
    %c0_1 = arith.constant 0 : index
    %c0_2 = arith.constant 0 : index
    %c0_3 = arith.constant 0 : index
    %1 = vector.load %arg4[%c0_1, %c0_2, %c0_3] : memref<1x864x8xbf16, #tpu.memory_space<vmem>>, vector<1x864x8xbf16>
    %2 = vector.shape_cast %1 : vector<1x864x8xbf16> to vector<864x8xbf16>
    %cst = arith.constant dense<0.000000e+00> : vector<64x8xf32>
    %3 = tpu.matmul %0, %2, %cst {dimension_numbers = #tpu.dot_dimension_numbers<[1], [0], [0], [1], [0, 0, 1, 1], [], []>} : vector<64x864xbf16>, vector<864x8xbf16>, vector<64x8xf32> -> vector<64x8xf32>
    %c0_4 = arith.constant 0 : index
    %c0_5 = arith.constant 0 : index
    %4 = vector.load %arg3[%c0_4, %c0_5] : memref<64x1xf32, #tpu.memory_space<vmem>>, vector<64x1xf32>
    %5 = vector.broadcast %4 : vector<64x1xf32> to vector<64x8xf32>
    %6 = arith.addf %3, %5 : vector<64x8xf32>
    %cst_6 = arith.constant 0.000000e+00 : f32
    %7 = vector.broadcast %cst_6 : f32 to vector<64x8xf32>
    %8 = arith.maximumf %6, %7 : vector<64x8xf32>
    %9 = arith.truncf %8 : vector<64x8xf32> to vector<64x8xbf16>
    %c0_7 = arith.constant 0 : index
    %c0_8 = arith.constant 0 : index
    %c0_9 = arith.constant 0 : index
    %10 = vector.load %arg5[%c0_7, %c0_8, %c0_9] : memref<1x64x8xbf16, #tpu.memory_space<vmem>>, vector<1x64x8xbf16>
    %11 = vector.shape_cast %10 : vector<1x64x8xbf16> to vector<64x8xbf16>
    %12 = vector.shape_cast %9 : vector<64x8xbf16> to vector<1x64x8xbf16>
    tpu.vector_store %arg5[%c0_7, %c0_8, %c0_9], %12 {strides = array<i32>} : memref<1x64x8xbf16, #tpu.memory_space<vmem>>, vector<1x64x8xbf16>,
    return
  }
  func.func @transform_0(%arg0: i32, %arg1: i32) -> (i32, i32) {
    %c0_i32 = arith.constant 0 : i32
    %c0_i32_0 = arith.constant 0 : i32
    %c0_i32_1 = arith.constant 0 : i32
    return %c0_i32, %c0_i32_0 : i32, i32
  }
  func.func @transform_1(%arg0: i32, %arg1: i32) -> (i32, i32) {
    %c0_i32 = arith.constant 0 : i32
    %c0_i32_0 = arith.constant 0 : i32
    %c0_i32_1 = arith.constant 0 : i32
    return %c0_i32, %c0_i32_0 : i32, i32
  }
  func.func @transform_2(%arg0: i32, %arg1: i32) -> (i32, i32, i32) {
    %c0_i32 = arith.constant 0 : i32
    %c0_i32_0 = arith.constant 0 : i32
    return %arg0, %c0_i32, %arg1 : i32, i32, i32
  }
  func.func @transform_3(%arg0: i32, %arg1: i32) -> (i32, i32, i32) {
    %c0_i32 = arith.constant 0 : i32
    %c0_i32_0 = arith.constant 0 : i32
    return %arg0, %c0_i32, %arg1 : i32, i32, i32
  }
}

module attributes {stable_mosaic.version = 11 : i64} {
  func.func @_conv_mm_kernel(%arg0: i32, %arg1: i32, %arg2: memref<32x1728xbf16, #tpu.memory_space<vmem>>, %arg3: memref<32x1xf32, #tpu.memory_space<vmem>>, %arg4: memref<1x1728x64xbf16, #tpu.memory_space<vmem>>, %arg5: memref<1x32x64xbf16, #tpu.memory_space<vmem>>) attributes {dimension_semantics = [#tpu.dimension_semantics<parallel>, #tpu.dimension_semantics<parallel>], iteration_bounds = array<i64: 2, 1>, scalar_prefetch = 0 : i64, scratch_operands = 0 : i64, tpu.core_type = #tpu.core_type<tc>, window_params = [{pipeline_mode = #tpu.pipeline_mode<synchronous>, transform_indices = @transform_0, window_bounds = array<i64: 32, 1728>}, {pipeline_mode = #tpu.pipeline_mode<synchronous>, transform_indices = @transform_1, window_bounds = array<i64: 32, 1>}, {transform_indices = @transform_2, window_bounds = array<i64: 1, 1728, 64>}, {transform_indices = @transform_3, window_bounds = array<i64: 1, 32, 64>}]} {
    %c0 = arith.constant 0 : index
    %c0_0 = arith.constant 0 : index
    %0 = vector.load %arg2[%c0, %c0_0] : memref<32x1728xbf16, #tpu.memory_space<vmem>>, vector<32x1728xbf16>
    %c0_1 = arith.constant 0 : index
    %c0_2 = arith.constant 0 : index
    %c0_3 = arith.constant 0 : index
    %1 = vector.load %arg4[%c0_1, %c0_2, %c0_3] : memref<1x1728x64xbf16, #tpu.memory_space<vmem>>, vector<1x1728x64xbf16>
    %2 = vector.shape_cast %1 : vector<1x1728x64xbf16> to vector<1728x64xbf16>
    %cst = arith.constant dense<0.000000e+00> : vector<32x64xf32>
    %3 = tpu.matmul %0, %2, %cst {dimension_numbers = #tpu.dot_dimension_numbers<[1], [0], [0], [1], [0, 0, 1, 1], [], []>} : vector<32x1728xbf16>, vector<1728x64xbf16>, vector<32x64xf32> -> vector<32x64xf32>
    %c0_4 = arith.constant 0 : index
    %c0_5 = arith.constant 0 : index
    %4 = vector.load %arg3[%c0_4, %c0_5] : memref<32x1xf32, #tpu.memory_space<vmem>>, vector<32x1xf32>
    %5 = vector.broadcast %4 : vector<32x1xf32> to vector<32x64xf32>
    %6 = arith.addf %3, %5 : vector<32x64xf32>
    %cst_6 = arith.constant 0.000000e+00 : f32
    %7 = vector.broadcast %cst_6 : f32 to vector<32x64xf32>
    %8 = arith.maximumf %6, %7 : vector<32x64xf32>
    %9 = arith.truncf %8 : vector<32x64xf32> to vector<32x64xbf16>
    %c0_7 = arith.constant 0 : index
    %c0_8 = arith.constant 0 : index
    %c0_9 = arith.constant 0 : index
    %10 = vector.load %arg5[%c0_7, %c0_8, %c0_9] : memref<1x32x64xbf16, #tpu.memory_space<vmem>>, vector<1x32x64xbf16>
    %11 = vector.shape_cast %10 : vector<1x32x64xbf16> to vector<32x64xbf16>
    %12 = vector.shape_cast %9 : vector<32x64xbf16> to vector<1x32x64xbf16>
    tpu.vector_store %arg5[%c0_7, %c0_8, %c0_9], %12 {strides = array<i32>} : memref<1x32x64xbf16, #tpu.memory_space<vmem>>, vector<1x32x64xbf16>,
    return
  }
  func.func @transform_0(%arg0: i32, %arg1: i32) -> (i32, i32) {
    %c0_i32 = arith.constant 0 : i32
    %c0_i32_0 = arith.constant 0 : i32
    %c0_i32_1 = arith.constant 0 : i32
    return %c0_i32, %c0_i32_0 : i32, i32
  }
  func.func @transform_1(%arg0: i32, %arg1: i32) -> (i32, i32) {
    %c0_i32 = arith.constant 0 : i32
    %c0_i32_0 = arith.constant 0 : i32
    %c0_i32_1 = arith.constant 0 : i32
    return %c0_i32, %c0_i32_0 : i32, i32
  }
  func.func @transform_2(%arg0: i32, %arg1: i32) -> (i32, i32, i32) {
    %c0_i32 = arith.constant 0 : i32
    %c0_i32_0 = arith.constant 0 : i32
    return %arg0, %c0_i32, %arg1 : i32, i32, i32
  }
  func.func @transform_3(%arg0: i32, %arg1: i32) -> (i32, i32, i32) {
    %c0_i32 = arith.constant 0 : i32
    %c0_i32_0 = arith.constant 0 : i32
    return %arg0, %c0_i32, %arg1 : i32, i32, i32
  }
}

module attributes {stable_mosaic.version = 11 : i64} {
  func.func @_conv_mm_kernel(%arg0: i32, %arg1: i32, %arg2: memref<16x864xbf16, #tpu.memory_space<vmem>>, %arg3: memref<16x1xf32, #tpu.memory_space<vmem>>, %arg4: memref<1x864x512xbf16, #tpu.memory_space<vmem>>, %arg5: memref<1x16x512xbf16, #tpu.memory_space<vmem>>) attributes {dimension_semantics = [#tpu.dimension_semantics<parallel>, #tpu.dimension_semantics<parallel>], iteration_bounds = array<i64: 2, 1>, scalar_prefetch = 0 : i64, scratch_operands = 0 : i64, tpu.core_type = #tpu.core_type<tc>, window_params = [{pipeline_mode = #tpu.pipeline_mode<synchronous>, transform_indices = @transform_0, window_bounds = array<i64: 16, 864>}, {pipeline_mode = #tpu.pipeline_mode<synchronous>, transform_indices = @transform_1, window_bounds = array<i64: 16, 1>}, {transform_indices = @transform_2, window_bounds = array<i64: 1, 864, 512>}, {transform_indices = @transform_3, window_bounds = array<i64: 1, 16, 512>}]} {
    %c0 = arith.constant 0 : index
    %c0_0 = arith.constant 0 : index
    %0 = vector.load %arg2[%c0, %c0_0] : memref<16x864xbf16, #tpu.memory_space<vmem>>, vector<16x864xbf16>
    %c0_1 = arith.constant 0 : index
    %c0_2 = arith.constant 0 : index
    %c0_3 = arith.constant 0 : index
    %1 = vector.load %arg4[%c0_1, %c0_2, %c0_3] : memref<1x864x512xbf16, #tpu.memory_space<vmem>>, vector<1x864x512xbf16>
    %2 = vector.shape_cast %1 : vector<1x864x512xbf16> to vector<864x512xbf16>
    %cst = arith.constant dense<0.000000e+00> : vector<16x512xf32>
    %3 = tpu.matmul %0, %2, %cst {dimension_numbers = #tpu.dot_dimension_numbers<[1], [0], [0], [1], [0, 0, 1, 1], [], []>} : vector<16x864xbf16>, vector<864x512xbf16>, vector<16x512xf32> -> vector<16x512xf32>
    %c0_4 = arith.constant 0 : index
    %c0_5 = arith.constant 0 : index
    %4 = vector.load %arg3[%c0_4, %c0_5] : memref<16x1xf32, #tpu.memory_space<vmem>>, vector<16x1xf32>
    %5 = vector.broadcast %4 : vector<16x1xf32> to vector<16x512xf32>
    %6 = arith.addf %3, %5 : vector<16x512xf32>
    %cst_6 = arith.constant 0.000000e+00 : f32
    %7 = vector.broadcast %cst_6 : f32 to vector<16x512xf32>
    %8 = arith.maximumf %6, %7 : vector<16x512xf32>
    %9 = arith.truncf %8 : vector<16x512xf32> to vector<16x512xbf16>
    %c0_7 = arith.constant 0 : index
    %c0_8 = arith.constant 0 : index
    %c0_9 = arith.constant 0 : index
    %10 = vector.load %arg5[%c0_7, %c0_8, %c0_9] : memref<1x16x512xbf16, #tpu.memory_space<vmem>>, vector<1x16x512xbf16>
    %11 = vector.shape_cast %10 : vector<1x16x512xbf16> to vector<16x512xbf16>
    %12 = vector.shape_cast %9 : vector<16x512xbf16> to vector<1x16x512xbf16>
    tpu.vector_store %arg5[%c0_7, %c0_8, %c0_9], %12 {strides = array<i32>} : memref<1x16x512xbf16, #tpu.memory_space<vmem>>, vector<1x16x512xbf16>,
    return
  }
  func.func @transform_0(%arg0: i32, %arg1: i32) -> (i32, i32) {
    %c0_i32 = arith.constant 0 : i32
    %c0_i32_0 = arith.constant 0 : i32
    %c0_i32_1 = arith.constant 0 : i32
    return %c0_i32, %c0_i32_0 : i32, i32
  }
  func.func @transform_1(%arg0: i32, %arg1: i32) -> (i32, i32) {
    %c0_i32 = arith.constant 0 : i32
    %c0_i32_0 = arith.constant 0 : i32
    %c0_i32_1 = arith.constant 0 : i32
    return %c0_i32, %c0_i32_0 : i32, i32
  }
  func.func @transform_2(%arg0: i32, %arg1: i32) -> (i32, i32, i32) {
    %c0_i32 = arith.constant 0 : i32
    %c0_i32_0 = arith.constant 0 : i32
    return %arg0, %c0_i32, %arg1 : i32, i32, i32
  }
  func.func @transform_3(%arg0: i32, %arg1: i32) -> (i32, i32, i32) {
    %c0_i32 = arith.constant 0 : i32
    %c0_i32_0 = arith.constant 0 : i32
    return %arg0, %c0_i32, %arg1 : i32, i32, i32
  }
}

module attributes {stable_mosaic.version = 11 : i64} {
  func.func @_conv_mm_kernel(%arg0: i32, %arg1: i32, %arg2: memref<1x432xbf16, #tpu.memory_space<vmem>>, %arg3: memref<1x1xf32, #tpu.memory_space<vmem>>, %arg4: memref<1x432x1024xbf16, #tpu.memory_space<vmem>>, %arg5: memref<1x1x1024xf32, #tpu.memory_space<vmem>>) attributes {dimension_semantics = [#tpu.dimension_semantics<parallel>, #tpu.dimension_semantics<parallel>], iteration_bounds = array<i64: 2, 4>, scalar_prefetch = 0 : i64, scratch_operands = 0 : i64, tpu.core_type = #tpu.core_type<tc>, window_params = [{pipeline_mode = #tpu.pipeline_mode<synchronous>, transform_indices = @transform_0, window_bounds = array<i64: 1, 432>}, {pipeline_mode = #tpu.pipeline_mode<synchronous>, transform_indices = @transform_1, window_bounds = array<i64: 1, 1>}, {transform_indices = @transform_2, window_bounds = array<i64: 1, 432, 1024>}, {transform_indices = @transform_3, window_bounds = array<i64: 1, 1, 1024>}]} {
    %c0 = arith.constant 0 : index
    %c0_0 = arith.constant 0 : index
    %0 = vector.load %arg2[%c0, %c0_0] : memref<1x432xbf16, #tpu.memory_space<vmem>>, vector<1x432xbf16>
    %c0_1 = arith.constant 0 : index
    %c0_2 = arith.constant 0 : index
    %c0_3 = arith.constant 0 : index
    %1 = vector.load %arg4[%c0_1, %c0_2, %c0_3] : memref<1x432x1024xbf16, #tpu.memory_space<vmem>>, vector<1x432x1024xbf16>
    %2 = vector.shape_cast %1 : vector<1x432x1024xbf16> to vector<432x1024xbf16>
    %cst = arith.constant dense<0.000000e+00> : vector<1x1024xf32>
    %3 = tpu.matmul %0, %2, %cst {dimension_numbers = #tpu.dot_dimension_numbers<[1], [0], [0], [1], [0, 0, 1, 1], [], []>} : vector<1x432xbf16>, vector<432x1024xbf16>, vector<1x1024xf32> -> vector<1x1024xf32>
    %c0_4 = arith.constant 0 : index
    %c0_5 = arith.constant 0 : index
    %4 = vector.load %arg3[%c0_4, %c0_5] : memref<1x1xf32, #tpu.memory_space<vmem>>, vector<1x1xf32>
    %5 = vector.broadcast %4 : vector<1x1xf32> to vector<1x1024xf32>
    %6 = arith.addf %3, %5 : vector<1x1024xf32>
    %7 = arith.negf %6 : vector<1x1024xf32>
    %8 = math.exp %7 : vector<1x1024xf32>
    %cst_6 = arith.constant 1.000000e+00 : f32
    %9 = vector.broadcast %cst_6 : f32 to vector<1x1024xf32>
    %10 = arith.addf %9, %8 : vector<1x1024xf32>
    %11 = arith.divf %9, %10 : vector<1x1024xf32>
    %c0_7 = arith.constant 0 : index
    %c0_8 = arith.constant 0 : index
    %c0_9 = arith.constant 0 : index
    %12 = vector.load %arg5[%c0_7, %c0_8, %c0_9] : memref<1x1x1024xf32, #tpu.memory_space<vmem>>, vector<1x1x1024xf32>
    %13 = vector.shape_cast %12 : vector<1x1x1024xf32> to vector<1x1024xf32>
    %14 = vector.shape_cast %11 : vector<1x1024xf32> to vector<1x1x1024xf32>
    tpu.vector_store %arg5[%c0_7, %c0_8, %c0_9], %14 {strides = array<i32>} : memref<1x1x1024xf32, #tpu.memory_space<vmem>>, vector<1x1x1024xf32>,
    return
  }
  func.func @transform_0(%arg0: i32, %arg1: i32) -> (i32, i32) {
    %c0_i32 = arith.constant 0 : i32
    %c0_i32_0 = arith.constant 0 : i32
    %c0_i32_1 = arith.constant 0 : i32
    return %c0_i32, %c0_i32_0 : i32, i32
  }
  func.func @transform_1(%arg0: i32, %arg1: i32) -> (i32, i32) {
    %c0_i32 = arith.constant 0 : i32
    %c0_i32_0 = arith.constant 0 : i32
    %c0_i32_1 = arith.constant 0 : i32
    return %c0_i32, %c0_i32_0 : i32, i32
  }
  func.func @transform_2(%arg0: i32, %arg1: i32) -> (i32, i32, i32) {
    %c0_i32 = arith.constant 0 : i32
    %c0_i32_0 = arith.constant 0 : i32
    return %arg0, %c0_i32, %arg1 : i32, i32, i32
  }
  func.func @transform_3(%arg0: i32, %arg1: i32) -> (i32, i32, i32) {
    %c0_i32 = arith.constant 0 : i32
    %c0_i32_0 = arith.constant 0 : i32
    return %arg0, %c0_i32, %arg1 : i32, i32, i32
  }
}

</mosaic_0001>

<llo_original>
// kernel: autoencoder3d_forward.6
$region0: #{autoencoder3d_forward.6}
  #allocation0 [shape = 'u32[]', space=smem, size = 0x4, offset = 0x4, fixed_abs, tag = 'smem constant byte address 0x4 - core index']
  #allocation1 [shape = 'u32[144,128]{1,0:T(1,128)}', space=vmem, size = 0x12000, scoped, tag = 'internal scratch']
  %s0 = inlined_call_operand.vmem [shape: bf16[16,27], index: 0, kind: input, shape index: {}]
  %s1 = inlined_call_operand.vmem [shape: f32[16,1], index: 1, kind: input, shape index: {}]
  %s2 = inlined_call_operand.vmem [shape: bf16[2,27,512], index: 2, kind: input, shape index: {}]
  %s3 = inlined_call_operand.vmem [shape: bf16[2,16,512], index: 3, kind: output, shape index: {}]
  %s4 = sld [smem:[#allocation0]]
  $region45: #{autoencoder3d_forward.6} parent=0
    _
  %s6 = ssub.s32 1, %s4
  %s7 = scalar_select 0, %s6, %s4
  loop: start=0, step=1, limit=4
  $region2: #{autoencoder3d_forward.6} parent=0 // loop_pre_header
    _
  $region3: #{autoencoder3d_forward.6} parent=0 // loop_header
    %s9 = sphi 0, %s13
    %p10 = scmp.ge.s32.totalorder %s9, 4
    %s16 = sphi 0, %s28
    %s17 = sphi 0, %s24
    %s18 = sphi 0, %s16
    %s19 = sphi 0, %s17
    %s20 = sphi 0, %s18
    %s21 = sphi 0, %s19
    %s29 = sphi 0, %s29
    %s31 = sphi 0, %s29
    %s32 = sphi 0, %s31
    %s46 = sphi 0, %s32
    %s50 = sphi 0, %s50
    %s52 = sphi 0, %s50
    %s53 = sphi 0, %s52
    %s67 = sphi 0, %s53
    %s75 = sphi 0, %s77
    %s78 = sphi 0, %s75
    %s79 = sphi 0, %s78
    %s95 = sphi 0, %s79
    %s103 = sphi 0, %s105
    %s106 = sphi 0, %s103
    %s107 = sphi 0, %s106
    %s123 = sphi 0, %s107
  $region4: #{autoencoder3d_forward.6} parent=0 // loop_header_branch
    %12 = sbr.rel (%p10) target = $region8
  $region5: #{autoencoder3d_forward.6} parent=0 // loop_body
    %s14 = ssub.s32 %s9, 1
    %s15 = ssub.s32 %s9, 2
    %s22 = sadd.s32 1, %s17
    %p23 = scmp.ge.s32.totalorder %s22, 1
    %s24 = scalar_select %p23, 0, %s22
    %s25 = sadd.s32 1, %s16
    %s26 = scalar_select %p23, %s25, %s16
    %p27 = scmp.ge.s32.totalorder %s26, 2
    %s28 = scalar_select %p27, 0, %s26
    %s30 = sadd.s32 %s29, 1
    %p33 = scmp.eq.s32.totalorder %s9, 1
    %p34 = scmp.ne.s32.totalorder %s29, %s31
    %p35 = scmp.eq.s32.totalorder %s9, 0
    %p36 = por %p34, %p35
    %p37 = scmp.ne.s32.totalorder %s29, %s31
    %p38 = scmp.eq.s32.totalorder %s14, 1
    %p39 = por %p37, %p38
    %p40 = scmp.ne.s32.totalorder %s31, %s32
    %p41 = scmp.eq.s32.totalorder %s14, 0
    %p42 = por %p40, %p41
    %p43 = scmp.ne.s32.totalorder %s31, %s32
    %p44 = scmp.eq.s32.totalorder %s15, 1
    %p45 = por %p43, %p44
    %p47 = scmp.ne.s32.totalorder %s32, %s46
    %p48 = scmp.eq.s32.totalorder %s15, 0
    %p49 = por %p47, %p48
    %s51 = sadd.s32 %s50, 1
    %p54 = scmp.eq.s32.totalorder %s9, 1
    %p55 = scmp.ne.s32.totalorder %s50, %s52
    %p56 = scmp.eq.s32.totalorder %s9, 0
    %p57 = por %p55, %p56
    %p58 = scmp.ne.s32.totalorder %s50, %s52
    %p59 = scmp.eq.s32.totalorder %s14, 1
    %p60 = por %p58, %p59
    %p61 = scmp.ne.s32.totalorder %s52, %s53
    %p62 = scmp.eq.s32.totalorder %s14, 0
    %p63 = por %p61, %p62
    %p64 = scmp.ne.s32.totalorder %s52, %s53
    %p65 = scmp.eq.s32.totalorder %s15, 1
    %p66 = por %p64, %p65
    %p68 = scmp.ne.s32.totalorder %s53, %s67
    %p69 = scmp.eq.s32.totalorder %s15, 0
    %p70 = por %p68, %p69
    %s71 = ssub.s32 %s16, %s28
    %s72 = ssub.s32 %s17, %s24
    %s73 = sor.u32 %s71, %s72
    %p74 = scmp.eq.s32.totalorder %s73, 0
    %s76 = sadd.s32 %s75, 1
    %s77 = scalar_select %p74, %s75, %s76
    %p80 = pneg %p74
    %p81 = scmp.eq.s32.totalorder %s9, 1
    %p82 = por %p80, %p81
    %p83 = scmp.ne.s32.totalorder %s75, %s78
    %p84 = scmp.eq.s32.totalorder %s9, 0
    %p85 = por %p83, %p84
    %p86 = scmp.ne.s32.totalorder %s75, %s78
    %p87 = scmp.eq.s32.totalorder %s14, 1
    %p88 = por %p86, %p87
    %p89 = scmp.ne.s32.totalorder %s78, %s79
    %p90 = scmp.eq.s32.totalorder %s14, 0
    %p91 = por %p89, %p90
    %p92 = scmp.ne.s32.totalorder %s78, %s79
    %p93 = scmp.eq.s32.totalorder %s15, 1
    %p94 = por %p92, %p93
    %p96 = scmp.ne.s32.totalorder %s79, %s95
    %p97 = scmp.eq.s32.totalorder %s15, 0
    %p98 = por %p96, %p97
    %s99 = ssub.s32 %s16, %s28
    %s100 = ssub.s32 %s17, %s24
    %s101 = sor.u32 %s99, %s100
    %p102 = scmp.eq.s32.totalorder %s101, 0
    %s104 = sadd.s32 %s103, 1
    %s105 = scalar_select %p102, %s103, %s104
    %p108 = pneg %p102
    %p109 = scmp.eq.s32.totalorder %s9, 1
    %p110 = por %p108, %p109
    %p111 = scmp.ne.s32.totalorder %s103, %s106
    %p112 = scmp.eq.s32.totalorder %s9, 0
    %p113 = por %p111, %p112
    %p114 = scmp.ne.s32.totalorder %s103, %s106
    %p115 = scmp.eq.s32.totalorder %s14, 1
    %p116 = por %p114, %p115
    %p117 = scmp.ne.s32.totalorder %s106, %s107
    %p118 = scmp.eq.s32.totalorder %s14, 0
    %p119 = por %p117, %p118
    %p120 = scmp.ne.s32.totalorder %s106, %s107
    %p121 = scmp.eq.s32.totalorder %s15, 1
    %p122 = por %p120, %p121
    %p124 = scmp.ne.s32.totalorder %s107, %s123
    %p125 = scmp.eq.s32.totalorder %s15, 0
    %p126 = por %p124, %p125
    %p127 = scmp.le.s32.totalorder 1, %s9
    %p128 = scmp.lt.s32.totalorder %s9, 3
    %p129 = pnand %p127, %p128
    %p130 = pneg %p129
    // Predicated region
    $region9: #{autoencoder3d_forward.6} parent=5 // pred_check
      _
    $region10: #{autoencoder3d_forward.6} parent=5 // pred_check_branch
      %132 = sbr.rel (%p129) target = $region12
    $region11: #{autoencoder3d_forward.6} parent=5 // pred_region
      %s133 = ssub.s32 %s9, 1
      // Predicated region
      $region13: #{autoencoder3d_forward.6} parent=11 // pred_check
        %p134 = pneg %p42
      $region14: #{autoencoder3d_forward.6} parent=11 // pred_check_branch
        %136 = sbr.rel (%p134) target = $region16
      $region15: #{autoencoder3d_forward.6} parent=11 // pred_region
        _
      $region16: #{autoencoder3d_forward.6} parent=11 // pred_fallthru
        _
      // Predicated region
      $region17: #{autoencoder3d_forward.6} parent=11 // pred_check
        %p137 = pneg %p63
      $region18: #{autoencoder3d_forward.6} parent=11 // pred_check_branch
        %139 = sbr.rel (%p137) target = $region20
      $region19: #{autoencoder3d_forward.6} parent=11 // pred_region
        _
      $region20: #{autoencoder3d_forward.6} parent=11 // pred_fallthru
        _
    $region12: #{autoencoder3d_forward.6} parent=5 // pred_fallthru
      _
    %p140 = scmp.lt.s32.totalorder %s9, 2
    // Predicated region
    $region21: #{autoencoder3d_forward.6} parent=5 // pred_check
      %p141 = pneg %p140
    $region22: #{autoencoder3d_forward.6} parent=5 // pred_check_branch
      %143 = sbr.rel (%p141) target = $region24
    $region23: #{autoencoder3d_forward.6} parent=5 // pred_region
      // Predicated region
      $region25: #{autoencoder3d_forward.6} parent=23 // pred_check
        %p144 = pneg %p85
      $region26: #{autoencoder3d_forward.6} parent=23 // pred_check_branch
        %146 = sbr.rel (%p144) target = $region28
      $region27: #{autoencoder3d_forward.6} parent=23 // pred_region
        %s147 = smul.u32 4, %s17
        %p148 = scmp.lt.s32.totalorder %s16, 1
        %s149 = scalar_select %p148, %s16, 1
        %p150 = scmp.lt.s32.totalorder %s147, 3
        %s151 = scalar_select %p150, %s147, 3
        %s152 = smul.addr %s149, 16
        %s153 = sadd.s32 %s151, %s152
        %s154 = smul.addr %s153, 4
        %s155 = scalar_lea.vmem %s2, %s154
        %s156 = smul.u32 4, %s17
      $region28: #{autoencoder3d_forward.6} parent=23 // pred_fallthru
        _
    $region24: #{autoencoder3d_forward.6} parent=5 // pred_fallthru
      _
    %p157 = scmp.le.s32.totalorder 1, %s9
    %p158 = scmp.lt.s32.totalorder %s9, 3
    %p159 = pnand %p157, %p158
    %p160 = pneg %p159
    // Predicated region
    $region29: #{autoencoder3d_forward.6} parent=5 // pred_check
      _
    $region30: #{autoencoder3d_forward.6} parent=5 // pred_check_branch
      %162 = sbr.rel (%p159) target = $region32
    $region31: #{autoencoder3d_forward.6} parent=5 // pred_region
      %s163 = ssub.s32 %s9, 1
      %p164 = pneg %p42
      %p165 = pneg %p39
      %p166 = pneg %p63
      %p167 = pneg %p60
      %s168 = smul.u32 4, %s19
      %p169 = scmp.lt.s32.totalorder %s18, 1
      %s170 = scalar_select %p169, %s18, 1
      %p171 = scmp.lt.s32.totalorder %s168, 3
      %s172 = scalar_select %p171, %s168, 3
      %s173 = smul.addr %s170, 16
      %s174 = sadd.s32 %s172, %s173
      %s175 = smul.addr %s174, 4
      %s176 = scalar_lea.vmem %s2, %s175
      %p177 = pneg %p91
      %p178 = pneg %p88
      %p179 = pneg %p119
      %p180 = pneg %p116
      %s181 = smul.u32 4, %s19
      %p182 = scmp.lt.s32.totalorder %s18, 1
      %s183 = scalar_select %p182, %s18, 1
      %p184 = scmp.lt.s32.totalorder %s181, 3
      %s185 = scalar_select %p184, %s181, 3
      %s186 = smul.addr %s183, 8
      %s187 = sadd.s32 %s185, %s186
      %s188 = smul.addr %s187, 4
      %s189 = scalar_lea.vmem %s3, %s188
      %s190 = smul.u32 4, %s19
      %p191 = scmp.lt.s32.totalorder %s18, 1
      %s192 = scalar_select %p191, %s18, 1
      %p193 = scmp.lt.s32.totalorder %s190, 3
      %s194 = scalar_select %p193, %s190, 3
      %s195 = smul.addr %s192, 16
      %s196 = sadd.s32 %s194, %s195
      %s197 = smul.addr %s196, 4
      %s198 = scalar_lea.vmem %s2, %s197
      %s199 = smul.u32 4, %s19
      %s200 = smul.u32 4, %s19
      %p201 = scmp.lt.s32.totalorder %s18, 1
      %s202 = scalar_select %p201, %s18, 1
      %p203 = scmp.lt.s32.totalorder %s200, 3
      %s204 = scalar_select %p203, %s200, 3
      %s205 = smul.addr %s202, 8
      %s206 = sadd.s32 %s204, %s205
      %s207 = smul.addr %s206, 4
      %s208 = scalar_lea.vmem %s3, %s207
      %s209 = smul.u32 4, %s19
      %v211 = vld [vmem:[%s0] sm:$0xf]
      %v212 = vld [vmem:[%s0 + $0x4] sm:$0xf]
      %v213 = vld [vmem:[%s198] sm:$0xff]
      %v214 = vld [vmem:[%s198 + $0x8] sm:$0xff]
      %v215 = vld [vmem:[%s198 + $0x10] sm:$0xff]
      %v216 = vld [vmem:[%s198 + $0x18] sm:$0xff]
      %v217 = vld [vmem:[%s198 + $0x20] sm:$0xff]
      %v218 = vld [vmem:[%s198 + $0x28] sm:$0xff]
      %v219 = vld [vmem:[%s198 + $0x30] sm:$0x33]
      %v220 = vld [vmem:[%s198 + $0x38] sm:$0x33]
      %v221 = vld [vmem:[%s1] sm:$0xff]
      %v222 = vld [vmem:[%s1 + $0x8] sm:$0xff]
      %224 = vset.pattern.permute.xlu0 0
      %225 = vperm.xlu0 %224, %v221
      %v226 = vpop.permute.xlu0 %225
      %229 = vset.pattern.permute.xlu0 0
      %230 = vperm.xlu0 %229, %v222
      %v231 = vpop.permute.xlu0 %230
      %v235 = vunpack.c.l.b16 %v211
      %v236 = vunpack.c.l.b16 %v212
      %v237 = vpack.c.b16 %v236, %v235
      %v246 = vunpack.c.l.b16 %v213
      %v247 = vunpack.c.h.b16 %v213
      %v248 = vunpack.c.l.b16 %v214
      %v249 = vunpack.c.h.b16 %v214
      %v250 = vunpack.c.l.b16 %v215
      %v251 = vunpack.c.h.b16 %v215
      %v252 = vunpack.c.l.b16 %v216
      %v253 = vunpack.c.h.b16 %v216
      %v254 = vunpack.c.l.b16 %v217
      %v255 = vunpack.c.h.b16 %v217
      %v256 = vunpack.c.l.b16 %v218
      %v257 = vunpack.c.h.b16 %v218
      %v258 = vunpack.c.l.b16 %v219
      %v259 = vunpack.c.h.b16 %v219
      %v260 = vunpack.c.l.b16 %v220
      %v261 = vunpack.c.h.b16 %v220
      %v262 = vpack.c.b16 %v250, %v246
      %v263 = vpack.c.b16 %v251, %v247
      %v264 = vpack.c.b16 %v252, %v248
      %v265 = vpack.c.b16 %v253, %v249
      %v266 = vpack.c.b16 %v258, %v254
      %v267 = vpack.c.b16 %v259, %v255
      %v268 = vpack.c.b16 %v260, %v256
      %v269 = vpack.c.b16 %v261, %v257
      %vm274 = vcmask 220160
      %v276 = vsel %vm274, %v237, 0
      %vm278 = vcmask 1044480
      %vm279 = vcmask 1045504
      %v280 = vsel %vm278, 4294967295, 65535
      %v281 = vsel %vm279, %v280, 0
      %v283 = vand.u32 %v266, %v281
      %v286 = vand.u32 %v267, %v281
      %v289 = vand.u32 %v268, %v281
      %v292 = vand.u32 %v269, %v281
      %294 = vmatprep.subr.bf16.mxu0 0
      %295 = vmatpush1.bf16.msra.mxu0 0
      %296 = vmatprep.subr.bf16.mxu0 0
      %297 = vmatpush1.bf16.msra.mxu0 0
      %298 = vmatprep.subr.bf16.mxu0 0
      %299 = vmatpush1.bf16.msra.mxu0 0
      %300 = vmatprep.subr.bf16.mxu0 0
      %301 = vmatpush1.bf16.msra.mxu0 0
      %302 = vmatprep.subr.bf16.mxu0 0
      %303 = vmatpush1.bf16.msra.mxu0 0
      %304 = vmatprep.subr.bf16.mxu0 0
      %305 = vmatpush1.bf16.msra.mxu0 0
      %306 = vmatprep.subr.bf16.mxu0 %v286
      %307 = vmatpush1.bf16.msra.mxu0 %v283
      %308 = vmatprep.subr.bf16.mxu0 %v263
      %309 = vmatpush1.bf16.msra.mxu0 %v262
      %310 = vmatprep.subr.bf16.mxu0 0
      %311 = vmatpush2.bf16.msra.mxu0 0
      %312 = vmatprep.subr.bf16.mxu0 0
      %313 = vmatpush2.bf16.msra.mxu0 0
      %314 = vmatprep.subr.bf16.mxu0 0
      %315 = vmatpush2.bf16.msra.mxu0 0
      %316 = vmatprep.subr.bf16.mxu0 0
      %317 = vmatpush2.bf16.msra.mxu0 0
      %318 = vmatprep.subr.bf16.mxu0 0
      %319 = vmatpush2.bf16.msra.mxu0 0
      %320 = vmatprep.subr.bf16.mxu0 0
      %321 = vmatpush2.bf16.msra.mxu0 0
      %322 = vmatprep.subr.bf16.mxu0 0
      %323 = vmatpush2.bf16.msra.mxu0 0
      %324 = vmatprep.subr.bf16.mxu0 0
      %325 = vmatpush2.bf16.msra.mxu0 0
      %326 = vmatprep.mubr.bf16.mxu0 0
      %327 = vmatmul.mubr.bf16.gmra.mxu0 %v276
      %v328 = vpop.f32.mrf.mxu0
      %v329 = vadd.f32 %v226, %v328
      %v330 = vpop.f32.mrf.mxu0
      %v331 = vadd.f32 %v226, %v330
      %v332 = vpop.f32.mrf.mxu0
      %v333 = vadd.f32 %v231, %v332
      %v334 = vpop.f32.mrf.mxu0
      %v335 = vadd.f32 %v231, %v334
      %336 = vdwg.mxu0
      %337 = vmatprep.subr.bf16.mxu0 0
      %338 = vmatpush1.bf16.msra.mxu0 0
      %339 = vmatprep.subr.bf16.mxu0 0
      %340 = vmatpush1.bf16.msra.mxu0 0
      %341 = vmatprep.subr.bf16.mxu0 0
      %342 = vmatpush1.bf16.msra.mxu0 0
      %343 = vmatprep.subr.bf16.mxu0 0
      %344 = vmatpush1.bf16.msra.mxu0 0
      %345 = vmatprep.subr.bf16.mxu0 0
      %346 = vmatpush1.bf16.msra.mxu0 0
      %347 = vmatprep.subr.bf16.mxu0 0
      %348 = vmatpush1.bf16.msra.mxu0 0
      %349 = vmatprep.subr.bf16.mxu0 %v292
      %350 = vmatpush1.bf16.msra.mxu0 %v289
      %351 = vmatprep.subr.bf16.mxu0 %v265
      %352 = vmatpush1.bf16.msra.mxu0 %v264
      %353 = vmatprep.subr.bf16.mxu0 0
      %354 = vmatpush2.bf16.msra.mxu0 0
      %355 = vmatprep.subr.bf16.mxu0 0
      %356 = vmatpush2.bf16.msra.mxu0 0
      %357 = vmatprep.subr.bf16.mxu0 0
      %358 = vmatpush2.bf16.msra.mxu0 0
      %359 = vmatprep.subr.bf16.mxu0 0
      %360 = vmatpush2.bf16.msra.mxu0 0
      %361 = vmatprep.subr.bf16.mxu0 0
      %362 = vmatpush2.bf16.msra.mxu0 0
      %363 = vmatprep.subr.bf16.mxu0 0
      %364 = vmatpush2.bf16.msra.mxu0 0
      %365 = vmatprep.subr.bf16.mxu0 0
      %366 = vmatpush2.bf16.msra.mxu0 0
      %367 = vmatprep.subr.bf16.mxu0 0
      %368 = vmatpush2.bf16.msra.mxu0 0
      %369 = vmatprep.mubr.bf16.mxu0 0
      %370 = vmatmul.mubr.bf16.gmra.mxu0 %v276
      %v371 = vpop.f32.mrf.mxu0
      %v372 = vadd.f32 %v226, %v371
      %v373 = vpop.f32.mrf.mxu0
      %v374 = vadd.f32 %v226, %v373
      %v375 = vpop.f32.mrf.mxu0
      %v376 = vadd.f32 %v231, %v375
      %v377 = vpop.f32.mrf.mxu0
      %v378 = vadd.f32 %v231, %v377
      %379 = vdwg.mxu0
      %v380 = vmax.f32 %v329, 0.0
      %v381 = vmax.f32 %v331, 0.0
      %v382 = vmax.f32 %v372, 0.0
      %v383 = vmax.f32 %v374, 0.0
      %v384 = vmax.f32 %v333, 0.0
      %v385 = vmax.f32 %v335, 0.0
      %v386 = vmax.f32 %v376, 0.0
      %v387 = vmax.f32 %v378, 0.0
      %v388 = vpack.c.bf16 %v384, %v380
      %v389 = vpack.c.bf16 %v385, %v381
      %v390 = vpack.c.bf16 %v386, %v382
      %v391 = vpack.c.bf16 %v387, %v383
      %v396 = vunpack.c.l.b16 %v388
      %v397 = vunpack.c.l.b16 %v389
      %v398 = vunpack.c.l.b16 %v390
      %v399 = vunpack.c.l.b16 %v391
      %v400 = vunpack.c.h.b16 %v388
      %v401 = vunpack.c.h.b16 %v389
      %v402 = vunpack.c.h.b16 %v390
      %v403 = vunpack.c.h.b16 %v391
      %v404 = vpack.c.b16 %v397, %v396
      %v405 = vpack.c.b16 %v399, %v398
      %v406 = vpack.c.b16 %v401, %v400
      %v407 = vpack.c.b16 %v403, %v402
      %412 = vst [vmem:[%s208] sm:$0xff] %v404
      %413 = vst [vmem:[%s208 + $0x8] sm:$0xff] %v405
      %414 = vst [vmem:[%s208 + $0x10] sm:$0xff] %v406
      %415 = vst [vmem:[%s208 + $0x18] sm:$0xff] %v407
      %s416 = smul.u32 4, %s19
      %p417 = scmp.lt.s32.totalorder %s18, 1
      %s418 = scalar_select %p417, %s18, 1
      %p419 = scmp.lt.s32.totalorder %s416, 3
      %s420 = scalar_select %p419, %s416, 3
      %s421 = smul.addr %s418, 8
      %s422 = sadd.s32 %s420, %s421
      %s423 = smul.addr %s422, 4
      %s424 = scalar_lea.vmem %s3, %s423
      // Predicated region
      $region33: #{autoencoder3d_forward.6} parent=31 // pred_check
        %p425 = pneg %p116
      $region34: #{autoencoder3d_forward.6} parent=31 // pred_check_branch
        %427 = sbr.rel (%p425) target = $region36
      $region35: #{autoencoder3d_forward.6} parent=31 // pred_region
        %s428 = smul.u32 4, %s19
      $region36: #{autoencoder3d_forward.6} parent=31 // pred_fallthru
        _
    $region32: #{autoencoder3d_forward.6} parent=5 // pred_fallthru
      _
    %p429 = scmp.le.s32.totalorder 2, %s9
    // Predicated region
    $region37: #{autoencoder3d_forward.6} parent=5 // pred_check
      %p430 = pneg %p429
    $region38: #{autoencoder3d_forward.6} parent=5 // pred_check_branch
      %432 = sbr.rel (%p430) target = $region40
    $region39: #{autoencoder3d_forward.6} parent=5 // pred_region
      %s433 = ssub.s32 %s9, 2
      // Predicated region
      $region41: #{autoencoder3d_forward.6} parent=39 // pred_check
        %p434 = pneg %p122
      $region42: #{autoencoder3d_forward.6} parent=39 // pred_check_branch
        %436 = sbr.rel (%p434) target = $region44
      $region43: #{autoencoder3d_forward.6} parent=39 // pred_region
        %s437 = smul.u32 4, %s21
        %p438 = scmp.lt.s32.totalorder %s20, 1
        %s439 = scalar_select %p438, %s20, 1
        %p440 = scmp.lt.s32.totalorder %s437, 3
        %s441 = scalar_select %p440, %s437, 3
        %s442 = smul.addr %s439, 8
        %s443 = sadd.s32 %s441, %s442
        %s444 = smul.addr %s443, 4
        %s445 = scalar_lea.vmem %s3, %s444
      $region44: #{autoencoder3d_forward.6} parent=39 // pred_fallthru
        _
    $region40: #{autoencoder3d_forward.6} parent=5 // pred_fallthru
      _
  $region6: #{autoencoder3d_forward.6} parent=0 // loop_footer
    %s13 = sadd.s32 1, %s9
  $region7: #{autoencoder3d_forward.6} parent=0 // loop_footer_branch
    %8 = sbr.rel target = $region3
  $region8: #{autoencoder3d_forward.6} parent=0 // loop_exit
    _

// kernel: autoencoder3d_forward.7
$region0: #{autoencoder3d_forward.7}
  #allocation0 [shape = 'u32[]', space=smem, size = 0x4, offset = 0x4, fixed_abs, tag = 'smem constant byte address 0x4 - core index']
  #allocation1 [shape = 'u32[144,128]{1,0:T(1,128)}', space=vmem, size = 0x12000, scoped, tag = 'internal scratch']
  %s0 = inlined_call_operand.vmem [shape: bf16[32,432], index: 0, kind: input, shape index: {}]
  %s1 = inlined_call_operand.vmem [shape: f32[32,1], index: 1, kind: input, shape index: {}]
  %s2 = inlined_call_operand.vmem [shape: bf16[2,432,64], index: 2, kind: input, shape index: {}]
  %s3 = inlined_call_operand.vmem [shape: bf16[2,32,64], index: 3, kind: output, shape index: {}]
  %s4 = sld [smem:[#allocation0]]
  $region45: #{autoencoder3d_forward.7} parent=0
    _
  %s6 = ssub.s32 1, %s4
  %s7 = scalar_select 0, %s6, %s4
  loop: start=0, step=1, limit=4
  $region2: #{autoencoder3d_forward.7} parent=0 // loop_pre_header
    _
  $region3: #{autoencoder3d_forward.7} parent=0 // loop_header
    %s9 = sphi 0, %s13
    %p10 = scmp.ge.s32.totalorder %s9, 4
    %s16 = sphi 0, %s28
    %s17 = sphi 0, %s24
    %s18 = sphi 0, %s16
    %s19 = sphi 0, %s17
    %s20 = sphi 0, %s18
    %s21 = sphi 0, %s19
    %s29 = sphi 0, %s29
    %s31 = sphi 0, %s29
    %s32 = sphi 0, %s31
    %s46 = sphi 0, %s32
    %s50 = sphi 0, %s50
    %s52 = sphi 0, %s50
    %s53 = sphi 0, %s52
    %s67 = sphi 0, %s53
    %s75 = sphi 0, %s77
    %s78 = sphi 0, %s75
    %s79 = sphi 0, %s78
    %s95 = sphi 0, %s79
    %s103 = sphi 0, %s105
    %s106 = sphi 0, %s103
    %s107 = sphi 0, %s106
    %s123 = sphi 0, %s107
  $region4: #{autoencoder3d_forward.7} parent=0 // loop_header_branch
    %12 = sbr.rel (%p10) target = $region8
  $region5: #{autoencoder3d_forward.7} parent=0 // loop_body
    %s14 = ssub.s32 %s9, 1
    %s15 = ssub.s32 %s9, 2
    %s22 = sadd.s32 1, %s17
    %p23 = scmp.ge.s32.totalorder %s22, 1
    %s24 = scalar_select %p23, 0, %s22
    %s25 = sadd.s32 1, %s16
    %s26 = scalar_select %p23, %s25, %s16
    %p27 = scmp.ge.s32.totalorder %s26, 2
    %s28 = scalar_select %p27, 0, %s26
    %s30 = sadd.s32 %s29, 1
    %p33 = scmp.eq.s32.totalorder %s9, 1
    %p34 = scmp.ne.s32.totalorder %s29, %s31
    %p35 = scmp.eq.s32.totalorder %s9, 0
    %p36 = por %p34, %p35
    %p37 = scmp.ne.s32.totalorder %s29, %s31
    %p38 = scmp.eq.s32.totalorder %s14, 1
    %p39 = por %p37, %p38
    %p40 = scmp.ne.s32.totalorder %s31, %s32
    %p41 = scmp.eq.s32.totalorder %s14, 0
    %p42 = por %p40, %p41
    %p43 = scmp.ne.s32.totalorder %s31, %s32
    %p44 = scmp.eq.s32.totalorder %s15, 1
    %p45 = por %p43, %p44
    %p47 = scmp.ne.s32.totalorder %s32, %s46
    %p48 = scmp.eq.s32.totalorder %s15, 0
    %p49 = por %p47, %p48
    %s51 = sadd.s32 %s50, 1
    %p54 = scmp.eq.s32.totalorder %s9, 1
    %p55 = scmp.ne.s32.totalorder %s50, %s52
    %p56 = scmp.eq.s32.totalorder %s9, 0
    %p57 = por %p55, %p56
    %p58 = scmp.ne.s32.totalorder %s50, %s52
    %p59 = scmp.eq.s32.totalorder %s14, 1
    %p60 = por %p58, %p59
    %p61 = scmp.ne.s32.totalorder %s52, %s53
    %p62 = scmp.eq.s32.totalorder %s14, 0
    %p63 = por %p61, %p62
    %p64 = scmp.ne.s32.totalorder %s52, %s53
    %p65 = scmp.eq.s32.totalorder %s15, 1
    %p66 = por %p64, %p65
    %p68 = scmp.ne.s32.totalorder %s53, %s67
    %p69 = scmp.eq.s32.totalorder %s15, 0
    %p70 = por %p68, %p69
    %s71 = ssub.s32 %s16, %s28
    %s72 = ssub.s32 %s17, %s24
    %s73 = sor.u32 %s71, %s72
    %p74 = scmp.eq.s32.totalorder %s73, 0
    %s76 = sadd.s32 %s75, 1
    %s77 = scalar_select %p74, %s75, %s76
    %p80 = pneg %p74
    %p81 = scmp.eq.s32.totalorder %s9, 1
    %p82 = por %p80, %p81
    %p83 = scmp.ne.s32.totalorder %s75, %s78
    %p84 = scmp.eq.s32.totalorder %s9, 0
    %p85 = por %p83, %p84
    %p86 = scmp.ne.s32.totalorder %s75, %s78
    %p87 = scmp.eq.s32.totalorder %s14, 1
    %p88 = por %p86, %p87
    %p89 = scmp.ne.s32.totalorder %s78, %s79
    %p90 = scmp.eq.s32.totalorder %s14, 0
    %p91 = por %p89, %p90
    %p92 = scmp.ne.s32.totalorder %s78, %s79
    %p93 = scmp.eq.s32.totalorder %s15, 1
    %p94 = por %p92, %p93
    %p96 = scmp.ne.s32.totalorder %s79, %s95
    %p97 = scmp.eq.s32.totalorder %s15, 0
    %p98 = por %p96, %p97
    %s99 = ssub.s32 %s16, %s28
    %s100 = ssub.s32 %s17, %s24
    %s101 = sor.u32 %s99, %s100
    %p102 = scmp.eq.s32.totalorder %s101, 0
    %s104 = sadd.s32 %s103, 1
    %s105 = scalar_select %p102, %s103, %s104
    %p108 = pneg %p102
    %p109 = scmp.eq.s32.totalorder %s9, 1
    %p110 = por %p108, %p109
    %p111 = scmp.ne.s32.totalorder %s103, %s106
    %p112 = scmp.eq.s32.totalorder %s9, 0
    %p113 = por %p111, %p112
    %p114 = scmp.ne.s32.totalorder %s103, %s106
    %p115 = scmp.eq.s32.totalorder %s14, 1
    %p116 = por %p114, %p115
    %p117 = scmp.ne.s32.totalorder %s106, %s107
    %p118 = scmp.eq.s32.totalorder %s14, 0
    %p119 = por %p117, %p118
    %p120 = scmp.ne.s32.totalorder %s106, %s107
    %p121 = scmp.eq.s32.totalorder %s15, 1
    %p122 = por %p120, %p121
    %p124 = scmp.ne.s32.totalorder %s107, %s123
    %p125 = scmp.eq.s32.totalorder %s15, 0
    %p126 = por %p124, %p125
    %p127 = scmp.le.s32.totalorder 1, %s9
    %p128 = scmp.lt.s32.totalorder %s9, 3
    %p129 = pnand %p127, %p128
    %p130 = pneg %p129
    // Predicated region
    $region9: #{autoencoder3d_forward.7} parent=5 // pred_check
      _
    $region10: #{autoencoder3d_forward.7} parent=5 // pred_check_branch
      %132 = sbr.rel (%p129) target = $region12
    $region11: #{autoencoder3d_forward.7} parent=5 // pred_region
      %s133 = ssub.s32 %s9, 1
      // Predicated region
      $region13: #{autoencoder3d_forward.7} parent=11 // pred_check
        %p134 = pneg %p42
      $region14: #{autoencoder3d_forward.7} parent=11 // pred_check_branch
        %136 = sbr.rel (%p134) target = $region16
      $region15: #{autoencoder3d_forward.7} parent=11 // pred_region
        _
      $region16: #{autoencoder3d_forward.7} parent=11 // pred_fallthru
        _
      // Predicated region
      $region17: #{autoencoder3d_forward.7} parent=11 // pred_check
        %p137 = pneg %p63
      $region18: #{autoencoder3d_forward.7} parent=11 // pred_check_branch
        %139 = sbr.rel (%p137) target = $region20
      $region19: #{autoencoder3d_forward.7} parent=11 // pred_region
        _
      $region20: #{autoencoder3d_forward.7} parent=11 // pred_fallthru
        _
    $region12: #{autoencoder3d_forward.7} parent=5 // pred_fallthru
      _
    %p140 = scmp.lt.s32.totalorder %s9, 2
    // Predicated region
    $region21: #{autoencoder3d_forward.7} parent=5 // pred_check
      %p141 = pneg %p140
    $region22: #{autoencoder3d_forward.7} parent=5 // pred_check_branch
      %143 = sbr.rel (%p141) target = $region24
    $region23: #{autoencoder3d_forward.7} parent=5 // pred_region
      // Predicated region
      $region25: #{autoencoder3d_forward.7} parent=23 // pred_check
        %p144 = pneg %p85
      $region26: #{autoencoder3d_forward.7} parent=23 // pred_check_branch
        %146 = sbr.rel (%p144) target = $region28
      $region27: #{autoencoder3d_forward.7} parent=23 // pred_region
        %p147 = scmp.lt.s32.totalorder %s16, 1
        %s148 = scalar_select %p147, %s16, 1
        %p149 = scmp.lt.s32.totalorder %s17, 0
        %s150 = scalar_select %p149, %s17, 0
        %s151 = smul.addr %s148, 54
        %s152 = sadd.s32 %s150, %s151
        %s153 = smul.addr %s152, 4
        %s154 = scalar_lea.vmem %s2, %s153
      $region28: #{autoencoder3d_forward.7} parent=23 // pred_fallthru
        _
    $region24: #{autoencoder3d_forward.7} parent=5 // pred_fallthru
      _
    %p155 = scmp.le.s32.totalorder 1, %s9
    %p156 = scmp.lt.s32.totalorder %s9, 3
    %p157 = pnand %p155, %p156
    %p158 = pneg %p157
    // Predicated region
    $region29: #{autoencoder3d_forward.7} parent=5 // pred_check
      _
    $region30: #{autoencoder3d_forward.7} parent=5 // pred_check_branch
      %160 = sbr.rel (%p157) target = $region32
    $region31: #{autoencoder3d_forward.7} parent=5 // pred_region
      %s161 = ssub.s32 %s9, 1
      %p162 = pneg %p42
      %p163 = pneg %p39
      %p164 = pneg %p63
      %p165 = pneg %p60
      %p166 = scmp.lt.s32.totalorder %s18, 1
      %s167 = scalar_select %p166, %s18, 1
      %p168 = scmp.lt.s32.totalorder %s19, 0
      %s169 = scalar_select %p168, %s19, 0
      %s170 = smul.addr %s167, 54
      %s171 = sadd.s32 %s169, %s170
      %s172 = smul.addr %s171, 4
      %s173 = scalar_lea.vmem %s2, %s172
      %p174 = pneg %p91
      %p175 = pneg %p88
      %p176 = pneg %p119
      %p177 = pneg %p116
      %p178 = scmp.lt.s32.totalorder %s18, 1
      %s179 = scalar_select %p178, %s18, 1
      %p180 = scmp.lt.s32.totalorder %s19, 0
      %s181 = scalar_select %p180, %s19, 0
      %s182 = smul.addr %s179, 4
      %s183 = sadd.s32 %s181, %s182
      %s184 = smul.addr %s183, 4
      %s185 = scalar_lea.vmem %s3, %s184
      %p186 = scmp.lt.s32.totalorder %s18, 1
      %s187 = scalar_select %p186, %s18, 1
      %p188 = scmp.lt.s32.totalorder %s19, 0
      %s189 = scalar_select %p188, %s19, 0
      %s190 = smul.addr %s187, 54
      %s191 = sadd.s32 %s189, %s190
      %s192 = smul.addr %s191, 4
      %s193 = scalar_lea.vmem %s2, %s192
      %p194 = scmp.lt.s32.totalorder %s18, 1
      %s195 = scalar_select %p194, %s18, 1
      %p196 = scmp.lt.s32.totalorder %s19, 0
      %s197 = scalar_select %p196, %s19, 0
      %s198 = smul.addr %s195, 4
      %s199 = sadd.s32 %s197, %s198
      %s200 = smul.addr %s199, 4
      %s201 = scalar_lea.vmem %s3, %s200
      %v203 = vld [vmem:[%s0] sm:$0xff]
      %v204 = vld [vmem:[%s0 + $0x8] sm:$0xff]
      %v205 = vld [vmem:[%s0 + $0x10] sm:$0xff]
      %v206 = vld [vmem:[%s0 + $0x18] sm:$0xff]
      %v207 = vld [vmem:[%s0 + $0x20] sm:$0xff]
      %v208 = vld [vmem:[%s0 + $0x28] sm:$0xff]
      %v209 = vld [vmem:[%s0 + $0x30] sm:$0xff]
      %v210 = vld [vmem:[%s0 + $0x38] sm:$0xff]
      %v211 = vld [vmem:[%s193] sm:$0xf]
      %v212 = vld [vmem:[%s193 + $0x4] sm:$0xf]
      %v213 = vld [vmem:[%s193 + $0x8] sm:$0xf]
      %v214 = vld [vmem:[%s193 + $0xc] sm:$0xf]
      %v215 = vld [vmem:[%s193 + $0x10] sm:$0xf]
      %v216 = vld [vmem:[%s193 + $0x14] sm:$0xf]
      %v217 = vld [vmem:[%s193 + $0x18] sm:$0xf]
      %v218 = vld [vmem:[%s193 + $0x1c] sm:$0xf]
      %v219 = vld [vmem:[%s193 + $0x20] sm:$0xf]
      %v220 = vld [vmem:[%s193 + $0x24] sm:$0xf]
      %v221 = vld [vmem:[%s193 + $0x28] sm:$0xf]
      %v222 = vld [vmem:[%s193 + $0x2c] sm:$0xf]
      %v223 = vld [vmem:[%s193 + $0x30] sm:$0xf]
      %v224 = vld [vmem:[%s193 + $0x34] sm:$0xf]
      %v225 = vld [vmem:[%s193 + $0x38] sm:$0xf]
      %v226 = vld [vmem:[%s193 + $0x3c] sm:$0xf]
      %v227 = vld [vmem:[%s193 + $0x40] sm:$0xf]
      %v228 = vld [vmem:[%s193 + $0x44] sm:$0xf]
      %v229 = vld [vmem:[%s193 + $0x48] sm:$0xf]
      %v230 = vld [vmem:[%s193 + $0x4c] sm:$0xf]
      %v231 = vld [vmem:[%s193 + $0x50] sm:$0xf]
      %v232 = vld [vmem:[%s193 + $0x54] sm:$0xf]
      %v233 = vld [vmem:[%s193 + $0x58] sm:$0xf]
      %v234 = vld [vmem:[%s193 + $0x5c] sm:$0xf]
      %v235 = vld [vmem:[%s193 + $0x60] sm:$0xf]
      %v236 = vld [vmem:[%s193 + $0x64] sm:$0xf]
      %v237 = vld [vmem:[%s193 + $0x68] sm:$0xf]
      %v238 = vld [vmem:[%s193 + $0x6c] sm:$0xf]
      %v239 = vld [vmem:[%s193 + $0x70] sm:$0xf]
      %v240 = vld [vmem:[%s193 + $0x74] sm:$0xf]
      %v241 = vld [vmem:[%s193 + $0x78] sm:$0xf]
      %v242 = vld [vmem:[%s193 + $0x7c] sm:$0xf]
      %v243 = vld [vmem:[%s193 + $0x80] sm:$0xf]
      %v244 = vld [vmem:[%s193 + $0x84] sm:$0xf]
      %v245 = vld [vmem:[%s193 + $0x88] sm:$0xf]
      %v246 = vld [vmem:[%s193 + $0x8c] sm:$0xf]
      %v247 = vld [vmem:[%s193 + $0x90] sm:$0xf]
      %v248 = vld [vmem:[%s193 + $0x94] sm:$0xf]
      %v249 = vld [vmem:[%s193 + $0x98] sm:$0xf]
      %v250 = vld [vmem:[%s193 + $0x9c] sm:$0xf]
      %v251 = vld [vmem:[%s193 + $0xa0] sm:$0xf]
      %v252 = vld [vmem:[%s193 + $0xa4] sm:$0xf]
      %v253 = vld [vmem:[%s193 + $0xa8] sm:$0xf]
      %v254 = vld [vmem:[%s193 + $0xac] sm:$0xf]
      %v255 = vld [vmem:[%s193 + $0xb0] sm:$0xf]
      %v256 = vld [vmem:[%s193 + $0xb4] sm:$0xf]
      %v257 = vld [vmem:[%s193 + $0xb8] sm:$0xf]
      %v258 = vld [vmem:[%s193 + $0xbc] sm:$0xf]
      %v259 = vld [vmem:[%s193 + $0xc0] sm:$0xf]
      %v260 = vld [vmem:[%s193 + $0xc4] sm:$0xf]
      %v261 = vld [vmem:[%s193 + $0xc8] sm:$0xf]
      %v262 = vld [vmem:[%s193 + $0xcc] sm:$0xf]
      %v263 = vld [vmem:[%s193 + $0xd0] sm:$0xf]
      %v264 = vld [vmem:[%s193 + $0xd4] sm:$0xf]
      %v265 = vld [vmem:[%s1] sm:$0xff]
      %v266 = vld [vmem:[%s1 + $0x8] sm:$0xff]
      %v267 = vld [vmem:[%s1 + $0x10] sm:$0xff]
      %v268 = vld [vmem:[%s1 + $0x18] sm:$0xff]
      %270 = vset.pattern.permute.xlu0 0
      %271 = vperm.xlu0 %270, %v265
      %v272 = vpop.permute.xlu0 %271
      %275 = vset.pattern.permute.xlu0 0
      %276 = vperm.xlu0 %275, %v266
      %v277 = vpop.permute.xlu0 %276
      %280 = vset.pattern.permute.xlu0 0
      %281 = vperm.xlu0 %280, %v267
      %v282 = vpop.permute.xlu0 %281
      %285 = vset.pattern.permute.xlu0 0
      %286 = vperm.xlu0 %285, %v268
      %v287 = vpop.permute.xlu0 %286
      %v297 = vunpack.c.l.b16 %v203
      %v298 = vunpack.c.h.b16 %v203
      %v299 = vunpack.c.l.b16 %v204
      %v300 = vunpack.c.h.b16 %v204
      %v301 = vunpack.c.l.b16 %v205
      %v302 = vunpack.c.h.b16 %v205
      %v303 = vunpack.c.l.b16 %v206
      %v304 = vunpack.c.h.b16 %v206
      %v305 = vunpack.c.l.b16 %v207
      %v306 = vunpack.c.h.b16 %v207
      %v307 = vunpack.c.l.b16 %v208
      %v308 = vunpack.c.h.b16 %v208
      %v309 = vunpack.c.l.b16 %v209
      %v310 = vunpack.c.h.b16 %v209
      %v311 = vunpack.c.l.b16 %v210
      %v312 = vunpack.c.h.b16 %v210
      %v313 = vpack.c.b16 %v301, %v297
      %v314 = vpack.c.b16 %v302, %v298
      %v315 = vpack.c.b16 %v303, %v299
      %v316 = vpack.c.b16 %v304, %v300
      %v317 = vpack.c.b16 %v309, %v305
      %v318 = vpack.c.b16 %v310, %v306
      %v319 = vpack.c.b16 %v311, %v307
      %v320 = vpack.c.b16 %v312, %v308
      %v381 = vunpack.c.l.b16 %v211
      %v382 = vunpack.c.l.b16 %v212
      %v383 = vunpack.c.l.b16 %v213
      %v384 = vunpack.c.l.b16 %v214
      %v385 = vunpack.c.l.b16 %v215
      %v386 = vunpack.c.l.b16 %v216
      %v387 = vunpack.c.l.b16 %v217
      %v388 = vunpack.c.l.b16 %v218
      %v389 = vunpack.c.l.b16 %v219
      %v390 = vunpack.c.l.b16 %v220
      %v391 = vunpack.c.l.b16 %v221
      %v392 = vunpack.c.l.b16 %v222
      %v393 = vunpack.c.l.b16 %v223
      %v394 = vunpack.c.l.b16 %v224
      %v395 = vunpack.c.l.b16 %v225
      %v396 = vunpack.c.l.b16 %v226
      %v397 = vunpack.c.l.b16 %v227
      %v398 = vunpack.c.l.b16 %v228
      %v399 = vunpack.c.l.b16 %v229
      %v400 = vunpack.c.l.b16 %v230
      %v401 = vunpack.c.l.b16 %v231
      %v402 = vunpack.c.l.b16 %v232
      %v403 = vunpack.c.l.b16 %v233
      %v404 = vunpack.c.l.b16 %v234
      %v405 = vunpack.c.l.b16 %v235
      %v406 = vunpack.c.l.b16 %v236
      %v407 = vunpack.c.l.b16 %v237
      %v408 = vunpack.c.l.b16 %v238
      %v409 = vunpack.c.l.b16 %v239
      %v410 = vunpack.c.l.b16 %v240
      %v411 = vunpack.c.l.b16 %v241
      %v412 = vunpack.c.l.b16 %v242
      %v413 = vunpack.c.l.b16 %v243
      %v414 = vunpack.c.l.b16 %v244
      %v415 = vunpack.c.l.b16 %v245
      %v416 = vunpack.c.l.b16 %v246
      %v417 = vunpack.c.l.b16 %v247
      %v418 = vunpack.c.l.b16 %v248
      %v419 = vunpack.c.l.b16 %v249
      %v420 = vunpack.c.l.b16 %v250
      %v421 = vunpack.c.l.b16 %v251
      %v422 = vunpack.c.l.b16 %v252
      %v423 = vunpack.c.l.b16 %v253
      %v424 = vunpack.c.l.b16 %v254
      %v425 = vunpack.c.l.b16 %v255
      %v426 = vunpack.c.l.b16 %v256
      %v427 = vunpack.c.l.b16 %v257
      %v428 = vunpack.c.l.b16 %v258
      %v429 = vunpack.c.l.b16 %v259
      %v430 = vunpack.c.l.b16 %v260
      %v431 = vunpack.c.l.b16 %v261
      %v432 = vunpack.c.l.b16 %v262
      %v433 = vunpack.c.l.b16 %v263
      %v434 = vunpack.c.l.b16 %v264
      %v435 = vpack.c.b16 %v382, %v381
      %v436 = vpack.c.b16 %v384, %v383
      %v437 = vpack.c.b16 %v386, %v385
      %v438 = vpack.c.b16 %v388, %v387
      %v439 = vpack.c.b16 %v390, %v389
      %v440 = vpack.c.b16 %v392, %v391
      %v441 = vpack.c.b16 %v394, %v393
      %v442 = vpack.c.b16 %v396, %v395
      %v443 = vpack.c.b16 %v398, %v397
      %v444 = vpack.c.b16 %v400, %v399
      %v445 = vpack.c.b16 %v402, %v401
      %v446 = vpack.c.b16 %v404, %v403
      %v447 = vpack.c.b16 %v406, %v405
      %v448 = vpack.c.b16 %v408, %v407
      %v449 = vpack.c.b16 %v410, %v409
      %v450 = vpack.c.b16 %v412, %v411
      %v451 = vpack.c.b16 %v414, %v413
      %v452 = vpack.c.b16 %v416, %v415
      %v453 = vpack.c.b16 %v418, %v417
      %v454 = vpack.c.b16 %v420, %v419
      %v455 = vpack.c.b16 %v422, %v421
      %v456 = vpack.c.b16 %v424, %v423
      %v457 = vpack.c.b16 %v426, %v425
      %v458 = vpack.c.b16 %v428, %v427
      %v459 = vpack.c.b16 %v430, %v429
      %v460 = vpack.c.b16 %v432, %v431
      %v461 = vpack.c.b16 %v434, %v433
      %vm489 = vcmask 392192
      %v491 = vsel %vm489, %v316, 0
      %v494 = vsel %vm489, %v320, 0
      %496 = vmatprep.subr.bf16.mxu0 0
      %497 = vmatpush1.bf16.msra.mxu0 %v442
      %498 = vmatprep.subr.bf16.mxu0 0
      %499 = vmatpush1.bf16.msra.mxu0 %v441
      %500 = vmatprep.subr.bf16.mxu0 0
      %501 = vmatpush1.bf16.msra.mxu0 %v440
      %502 = vmatprep.subr.bf16.mxu0 0
      %503 = vmatpush1.bf16.msra.mxu0 %v439
      %504 = vmatprep.subr.bf16.mxu0 0
      %505 = vmatpush1.bf16.msra.mxu0 %v438
      %506 = vmatprep.subr.bf16.mxu0 0
      %507 = vmatpush1.bf16.msra.mxu0 %v437
      %508 = vmatprep.subr.bf16.mxu0 0
      %509 = vmatpush1.bf16.msra.mxu0 %v436
      %510 = vmatprep.subr.bf16.mxu0 0
      %511 = vmatpush1.bf16.msra.mxu0 %v435
      %512 = vmatprep.subr.bf16.mxu0 0
      %513 = vmatpush2.bf16.msra.mxu0 %v450
      %514 = vmatprep.subr.bf16.mxu0 0
      %515 = vmatpush2.bf16.msra.mxu0 %v449
      %516 = vmatprep.subr.bf16.mxu0 0
      %517 = vmatpush2.bf16.msra.mxu0 %v448
      %518 = vmatprep.subr.bf16.mxu0 0
      %519 = vmatpush2.bf16.msra.mxu0 %v447
      %520 = vmatprep.subr.bf16.mxu0 0
      %521 = vmatpush2.bf16.msra.mxu0 %v446
      %522 = vmatprep.subr.bf16.mxu0 0
      %523 = vmatpush2.bf16.msra.mxu0 %v445
      %524 = vmatprep.subr.bf16.mxu0 0
      %525 = vmatpush2.bf16.msra.mxu0 %v444
      %526 = vmatprep.subr.bf16.mxu0 0
      %527 = vmatpush2.bf16.msra.mxu0 %v443
      %528 = vmatprep.mubr.bf16.mxu0 %v314
      %529 = vmatmul.mubr.bf16.gmra.mxu0 %v313
      %v530 = vpop.f32.mrf.mxu0
      %v531 = vadd.f32 %v272, %v530
      %v532 = vpop.f32.mrf.mxu0
      %v533 = vpop.f32.mrf.mxu0
      %v534 = vadd.f32 %v277, %v533
      %v535 = vpop.f32.mrf.mxu0
      %536 = vmatprep.mubr.bf16.mxu0 %v318
      %537 = vmatmul.mubr.bf16.gmra.mxu0 %v317
      %v538 = vpop.f32.mrf.mxu0
      %v539 = vadd.f32 %v282, %v538
      %v540 = vpop.f32.mrf.mxu0
      %v541 = vpop.f32.mrf.mxu0
      %v542 = vadd.f32 %v287, %v541
      %v543 = vpop.f32.mrf.mxu0
      %544 = vdwg.mxu0
      %545 = vmatprep.subr.bf16.mxu0 0
      %546 = vmatpush1.bf16.msra.mxu0 %v458
      %547 = vmatprep.subr.bf16.mxu0 0
      %548 = vmatpush1.bf16.msra.mxu0 %v457
      %549 = vmatprep.subr.bf16.mxu0 0
      %550 = vmatpush1.bf16.msra.mxu0 %v456
      %551 = vmatprep.subr.bf16.mxu0 0
      %552 = vmatpush1.bf16.msra.mxu0 %v455
      %553 = vmatprep.subr.bf16.mxu0 0
      %554 = vmatpush1.bf16.msra.mxu0 %v454
      %555 = vmatprep.subr.bf16.mxu0 0
      %556 = vmatpush1.bf16.msra.mxu0 %v453
      %557 = vmatprep.subr.bf16.mxu0 0
      %558 = vmatpush1.bf16.msra.mxu0 %v452
      %559 = vmatprep.subr.bf16.mxu0 0
      %560 = vmatpush1.bf16.msra.mxu0 %v451
      %561 = vmatprep.subr.bf16.mxu0 0
      %562 = vmatpush2.bf16.msra.mxu0 0
      %563 = vmatprep.subr.bf16.mxu0 0
      %564 = vmatpush2.bf16.msra.mxu0 0
      %565 = vmatprep.subr.bf16.mxu0 0
      %566 = vmatpush2.bf16.msra.mxu0 0
      %567 = vmatprep.subr.bf16.mxu0 0
      %568 = vmatpush2.bf16.msra.mxu0 0
      %569 = vmatprep.subr.bf16.mxu0 0
      %570 = vmatpush2.bf16.msra.mxu0 0
      %571 = vmatprep.subr.bf16.mxu0 0
      %572 = vmatpush2.bf16.msra.mxu0 %v461
      %573 = vmatprep.subr.bf16.mxu0 0
      %574 = vmatpush2.bf16.msra.mxu0 %v460
      %575 = vmatprep.subr.bf16.mxu0 0
      %576 = vmatpush2.bf16.msra.mxu0 %v459
      %577 = vmatprep.mubr.bf16.mxu0 %v491
      %578 = vmatmul.mubr.bf16.gmra.mxu0 %v315
      %v579 = vpop.f32.mrf.mxu0
      %v580 = vadd.f32 %v531, %v579
      %v581 = vpop.f32.mrf.mxu0
      %v582 = vpop.f32.mrf.mxu0
      %v583 = vadd.f32 %v534, %v582
      %v584 = vpop.f32.mrf.mxu0
      %585 = vmatprep.mubr.bf16.mxu0 %v494
      %586 = vmatmul.mubr.bf16.gmra.mxu0 %v319
      %v587 = vpop.f32.mrf.mxu0
      %v588 = vadd.f32 %v539, %v587
      %v589 = vpop.f32.mrf.mxu0
      %v590 = vpop.f32.mrf.mxu0
      %v591 = vadd.f32 %v542, %v590
      %v592 = vpop.f32.mrf.mxu0
      %593 = vdwg.mxu0
      %v594 = vmax.f32 %v580, 0.0
      %v595 = vmax.f32 %v583, 0.0
      %v596 = vmax.f32 %v588, 0.0
      %v597 = vmax.f32 %v591, 0.0
      %v598 = vpack.c.bf16 %v595, %v594
      %v599 = vpack.c.bf16 %v597, %v596
      %v602 = vunpack.c.l.b16 %v598
      %v603 = vunpack.c.h.b16 %v598
      %v604 = vunpack.c.l.b16 %v599
      %v605 = vunpack.c.h.b16 %v599
      %v606 = vpack.c.b16 %v602, %v602
      %v607 = vpack.c.b16 %v603, %v603
      %v608 = vpack.c.b16 %v604, %v604
      %v609 = vpack.c.b16 %v605, %v605
      %vm614 = vcmask 519168
      %615 = vst.msk [vmem:[%s201] sm:$0xf] %vm614, %v606
      %616 = vst.msk [vmem:[%s201 + $0x4] sm:$0xf] %vm614, %v607
      %617 = vst.msk [vmem:[%s201 + $0x8] sm:$0xf] %vm614, %v608
      %618 = vst.msk [vmem:[%s201 + $0xc] sm:$0xf] %vm614, %v609
      %p619 = scmp.lt.s32.totalorder %s18, 1
      %s620 = scalar_select %p619, %s18, 1
      %p621 = scmp.lt.s32.totalorder %s19, 0
      %s622 = scalar_select %p621, %s19, 0
      %s623 = smul.addr %s620, 4
      %s624 = sadd.s32 %s622, %s623
      %s625 = smul.addr %s624, 4
      %s626 = scalar_lea.vmem %s3, %s625
      // Predicated region
      $region33: #{autoencoder3d_forward.7} parent=31 // pred_check
        %p627 = pneg %p116
      $region34: #{autoencoder3d_forward.7} parent=31 // pred_check_branch
        %629 = sbr.rel (%p627) target = $region36
      $region35: #{autoencoder3d_forward.7} parent=31 // pred_region
        _
      $region36: #{autoencoder3d_forward.7} parent=31 // pred_fallthru
        _
    $region32: #{autoencoder3d_forward.7} parent=5 // pred_fallthru
      _
    %p630 = scmp.le.s32.totalorder 2, %s9
    // Predicated region
    $region37: #{autoencoder3d_forward.7} parent=5 // pred_check
      %p631 = pneg %p630
    $region38: #{autoencoder3d_forward.7} parent=5 // pred_check_branch
      %633 = sbr.rel (%p631) target = $region40
    $region39: #{autoencoder3d_forward.7} parent=5 // pred_region
      %s634 = ssub.s32 %s9, 2
      // Predicated region
      $region41: #{autoencoder3d_forward.7} parent=39 // pred_check
        %p635 = pneg %p122
      $region42: #{autoencoder3d_forward.7} parent=39 // pred_check_branch
        %637 = sbr.rel (%p635) target = $region44
      $region43: #{autoencoder3d_forward.7} parent=39 // pred_region
        %p638 = scmp.lt.s32.totalorder %s20, 1
        %s639 = scalar_select %p638, %s20, 1
        %p640 = scmp.lt.s32.totalorder %s21, 0
        %s641 = scalar_select %p640, %s21, 0
        %s642 = smul.addr %s639, 4
        %s643 = sadd.s32 %s641, %s642
        %s644 = smul.addr %s643, 4
        %s645 = scalar_lea.vmem %s3, %s644
      $region44: #{autoencoder3d_forward.7} parent=39 // pred_fallthru
        _
    $region40: #{autoencoder3d_forward.7} parent=5 // pred_fallthru
      _
  $region6: #{autoencoder3d_forward.7} parent=0 // loop_footer
    %s13 = sadd.s32 1, %s9
  $region7: #{autoencoder3d_forward.7} parent=0 // loop_footer_branch
    %8 = sbr.rel target = $region3
  $region8: #{autoencoder3d_forward.7} parent=0 // loop_exit
    _

// kernel: autoencoder3d_forward.8
$region0: #{autoencoder3d_forward.8}
  #allocation0 [shape = 'u32[]', space=smem, size = 0x4, offset = 0x4, fixed_abs, tag = 'smem constant byte address 0x4 - core index']
  #allocation1 [shape = 'u32[144,128]{1,0:T(1,128)}', space=vmem, size = 0x12000, scoped, tag = 'internal scratch']
  %s0 = inlined_call_operand.vmem [shape: bf16[64,864], index: 0, kind: input, shape index: {}]
  %s1 = inlined_call_operand.vmem [shape: f32[64,1], index: 1, kind: input, shape index: {}]
  %s2 = inlined_call_operand.vmem [shape: bf16[2,864,8], index: 2, kind: input, shape index: {}]
  %s3 = inlined_call_operand.vmem [shape: bf16[2,64,8], index: 3, kind: output, shape index: {}]
  %s4 = sld [smem:[#allocation0]]
  $region45: #{autoencoder3d_forward.8} parent=0
    _
  %s6 = ssub.s32 1, %s4
  %s7 = scalar_select 0, %s6, %s4
  loop: start=0, step=1, limit=4
  $region2: #{autoencoder3d_forward.8} parent=0 // loop_pre_header
    _
  $region3: #{autoencoder3d_forward.8} parent=0 // loop_header
    %s9 = sphi 0, %s13
    %p10 = scmp.ge.s32.totalorder %s9, 4
    %s16 = sphi 0, %s28
    %s17 = sphi 0, %s24
    %s18 = sphi 0, %s16
    %s19 = sphi 0, %s17
    %s20 = sphi 0, %s18
    %s21 = sphi 0, %s19
    %s29 = sphi 0, %s29
    %s31 = sphi 0, %s29
    %s32 = sphi 0, %s31
    %s46 = sphi 0, %s32
    %s50 = sphi 0, %s50
    %s52 = sphi 0, %s50
    %s53 = sphi 0, %s52
    %s67 = sphi 0, %s53
    %s75 = sphi 0, %s77
    %s78 = sphi 0, %s75
    %s79 = sphi 0, %s78
    %s95 = sphi 0, %s79
    %s103 = sphi 0, %s105
    %s106 = sphi 0, %s103
    %s107 = sphi 0, %s106
    %s123 = sphi 0, %s107
  $region4: #{autoencoder3d_forward.8} parent=0 // loop_header_branch
    %12 = sbr.rel (%p10) target = $region8
  $region5: #{autoencoder3d_forward.8} parent=0 // loop_body
    %s14 = ssub.s32 %s9, 1
    %s15 = ssub.s32 %s9, 2
    %s22 = sadd.s32 1, %s17
    %p23 = scmp.ge.s32.totalorder %s22, 1
    %s24 = scalar_select %p23, 0, %s22
    %s25 = sadd.s32 1, %s16
    %s26 = scalar_select %p23, %s25, %s16
    %p27 = scmp.ge.s32.totalorder %s26, 2
    %s28 = scalar_select %p27, 0, %s26
    %s30 = sadd.s32 %s29, 1
    %p33 = scmp.eq.s32.totalorder %s9, 1
    %p34 = scmp.ne.s32.totalorder %s29, %s31
    %p35 = scmp.eq.s32.totalorder %s9, 0
    %p36 = por %p34, %p35
    %p37 = scmp.ne.s32.totalorder %s29, %s31
    %p38 = scmp.eq.s32.totalorder %s14, 1
    %p39 = por %p37, %p38
    %p40 = scmp.ne.s32.totalorder %s31, %s32
    %p41 = scmp.eq.s32.totalorder %s14, 0
    %p42 = por %p40, %p41
    %p43 = scmp.ne.s32.totalorder %s31, %s32
    %p44 = scmp.eq.s32.totalorder %s15, 1
    %p45 = por %p43, %p44
    %p47 = scmp.ne.s32.totalorder %s32, %s46
    %p48 = scmp.eq.s32.totalorder %s15, 0
    %p49 = por %p47, %p48
    %s51 = sadd.s32 %s50, 1
    %p54 = scmp.eq.s32.totalorder %s9, 1
    %p55 = scmp.ne.s32.totalorder %s50, %s52
    %p56 = scmp.eq.s32.totalorder %s9, 0
    %p57 = por %p55, %p56
    %p58 = scmp.ne.s32.totalorder %s50, %s52
    %p59 = scmp.eq.s32.totalorder %s14, 1
    %p60 = por %p58, %p59
    %p61 = scmp.ne.s32.totalorder %s52, %s53
    %p62 = scmp.eq.s32.totalorder %s14, 0
    %p63 = por %p61, %p62
    %p64 = scmp.ne.s32.totalorder %s52, %s53
    %p65 = scmp.eq.s32.totalorder %s15, 1
    %p66 = por %p64, %p65
    %p68 = scmp.ne.s32.totalorder %s53, %s67
    %p69 = scmp.eq.s32.totalorder %s15, 0
    %p70 = por %p68, %p69
    %s71 = ssub.s32 %s16, %s28
    %s72 = ssub.s32 %s17, %s24
    %s73 = sor.u32 %s71, %s72
    %p74 = scmp.eq.s32.totalorder %s73, 0
    %s76 = sadd.s32 %s75, 1
    %s77 = scalar_select %p74, %s75, %s76
    %p80 = pneg %p74
    %p81 = scmp.eq.s32.totalorder %s9, 1
    %p82 = por %p80, %p81
    %p83 = scmp.ne.s32.totalorder %s75, %s78
    %p84 = scmp.eq.s32.totalorder %s9, 0
    %p85 = por %p83, %p84
    %p86 = scmp.ne.s32.totalorder %s75, %s78
    %p87 = scmp.eq.s32.totalorder %s14, 1
    %p88 = por %p86, %p87
    %p89 = scmp.ne.s32.totalorder %s78, %s79
    %p90 = scmp.eq.s32.totalorder %s14, 0
    %p91 = por %p89, %p90
    %p92 = scmp.ne.s32.totalorder %s78, %s79
    %p93 = scmp.eq.s32.totalorder %s15, 1
    %p94 = por %p92, %p93
    %p96 = scmp.ne.s32.totalorder %s79, %s95
    %p97 = scmp.eq.s32.totalorder %s15, 0
    %p98 = por %p96, %p97
    %s99 = ssub.s32 %s16, %s28
    %s100 = ssub.s32 %s17, %s24
    %s101 = sor.u32 %s99, %s100
    %p102 = scmp.eq.s32.totalorder %s101, 0
    %s104 = sadd.s32 %s103, 1
    %s105 = scalar_select %p102, %s103, %s104
    %p108 = pneg %p102
    %p109 = scmp.eq.s32.totalorder %s9, 1
    %p110 = por %p108, %p109
    %p111 = scmp.ne.s32.totalorder %s103, %s106
    %p112 = scmp.eq.s32.totalorder %s9, 0
    %p113 = por %p111, %p112
    %p114 = scmp.ne.s32.totalorder %s103, %s106
    %p115 = scmp.eq.s32.totalorder %s14, 1
    %p116 = por %p114, %p115
    %p117 = scmp.ne.s32.totalorder %s106, %s107
    %p118 = scmp.eq.s32.totalorder %s14, 0
    %p119 = por %p117, %p118
    %p120 = scmp.ne.s32.totalorder %s106, %s107
    %p121 = scmp.eq.s32.totalorder %s15, 1
    %p122 = por %p120, %p121
    %p124 = scmp.ne.s32.totalorder %s107, %s123
    %p125 = scmp.eq.s32.totalorder %s15, 0
    %p126 = por %p124, %p125
    %p127 = scmp.le.s32.totalorder 1, %s9
    %p128 = scmp.lt.s32.totalorder %s9, 3
    %p129 = pnand %p127, %p128
    %p130 = pneg %p129
    // Predicated region
    $region9: #{autoencoder3d_forward.8} parent=5 // pred_check
      _
    $region10: #{autoencoder3d_forward.8} parent=5 // pred_check_branch
      %132 = sbr.rel (%p129) target = $region12
    $region11: #{autoencoder3d_forward.8} parent=5 // pred_region
      %s133 = ssub.s32 %s9, 1
      // Predicated region
      $region13: #{autoencoder3d_forward.8} parent=11 // pred_check
        %p134 = pneg %p42
      $region14: #{autoencoder3d_forward.8} parent=11 // pred_check_branch
        %136 = sbr.rel (%p134) target = $region16
      $region15: #{autoencoder3d_forward.8} parent=11 // pred_region
        _
      $region16: #{autoencoder3d_forward.8} parent=11 // pred_fallthru
        _
      // Predicated region
      $region17: #{autoencoder3d_forward.8} parent=11 // pred_check
        %p137 = pneg %p63
      $region18: #{autoencoder3d_forward.8} parent=11 // pred_check_branch
        %139 = sbr.rel (%p137) target = $region20
      $region19: #{autoencoder3d_forward.8} parent=11 // pred_region
        _
      $region20: #{autoencoder3d_forward.8} parent=11 // pred_fallthru
        _
    $region12: #{autoencoder3d_forward.8} parent=5 // pred_fallthru
      _
    %p140 = scmp.lt.s32.totalorder %s9, 2
    // Predicated region
    $region21: #{autoencoder3d_forward.8} parent=5 // pred_check
      %p141 = pneg %p140
    $region22: #{autoencoder3d_forward.8} parent=5 // pred_check_branch
      %143 = sbr.rel (%p141) target = $region24
    $region23: #{autoencoder3d_forward.8} parent=5 // pred_region
      // Predicated region
      $region25: #{autoencoder3d_forward.8} parent=23 // pred_check
        %p144 = pneg %p85
      $region26: #{autoencoder3d_forward.8} parent=23 // pred_check_branch
        %146 = sbr.rel (%p144) target = $region28
      $region27: #{autoencoder3d_forward.8} parent=23 // pred_region
        %p147 = scmp.lt.s32.totalorder %s16, 1
        %s148 = scalar_select %p147, %s16, 1
        %p149 = scmp.lt.s32.totalorder %s17, 0
        %s150 = scalar_select %p149, %s17, 0
        %s151 = smul.addr %s148, 108
        %s152 = sadd.s32 %s150, %s151
        %s153 = smul.addr %s152, 4
        %s154 = scalar_lea.vmem %s2, %s153
      $region28: #{autoencoder3d_forward.8} parent=23 // pred_fallthru
        _
    $region24: #{autoencoder3d_forward.8} parent=5 // pred_fallthru
      _
    %p155 = scmp.le.s32.totalorder 1, %s9
    %p156 = scmp.lt.s32.totalorder %s9, 3
    %p157 = pnand %p155, %p156
    %p158 = pneg %p157
    // Predicated region
    $region29: #{autoencoder3d_forward.8} parent=5 // pred_check
      _
    $region30: #{autoencoder3d_forward.8} parent=5 // pred_check_branch
      %160 = sbr.rel (%p157) target = $region32
    $region31: #{autoencoder3d_forward.8} parent=5 // pred_region
      %s161 = ssub.s32 %s9, 1
      %p162 = pneg %p42
      %p163 = pneg %p39
      %p164 = pneg %p63
      %p165 = pneg %p60
      %p166 = scmp.lt.s32.totalorder %s18, 1
      %s167 = scalar_select %p166, %s18, 1
      %p168 = scmp.lt.s32.totalorder %s19, 0
      %s169 = scalar_select %p168, %s19, 0
      %s170 = smul.addr %s167, 108
      %s171 = sadd.s32 %s169, %s170
      %s172 = smul.addr %s171, 4
      %s173 = scalar_lea.vmem %s2, %s172
      %p174 = pneg %p91
      %p175 = pneg %p88
      %p176 = pneg %p119
      %p177 = pneg %p116
      %p178 = scmp.lt.s32.totalorder %s18, 1
      %s179 = scalar_select %p178, %s18, 1
      %p180 = scmp.lt.s32.totalorder %s19, 0
      %s181 = scalar_select %p180, %s19, 0
      %s182 = smul.addr %s179, 8
      %s183 = sadd.s32 %s181, %s182
      %s184 = smul.addr %s183, 4
      %s185 = scalar_lea.vmem %s3, %s184
      %p186 = scmp.lt.s32.totalorder %s18, 1
      %s187 = scalar_select %p186, %s18, 1
      %p188 = scmp.lt.s32.totalorder %s19, 0
      %s189 = scalar_select %p188, %s19, 0
      %s190 = smul.addr %s187, 108
      %s191 = sadd.s32 %s189, %s190
      %s192 = smul.addr %s191, 4
      %s193 = scalar_lea.vmem %s2, %s192
      %p194 = scmp.lt.s32.totalorder %s18, 1
      %s195 = scalar_select %p194, %s18, 1
      %p196 = scmp.lt.s32.totalorder %s19, 0
      %s197 = scalar_select %p196, %s19, 0
      %s198 = smul.addr %s195, 8
      %s199 = sadd.s32 %s197, %s198
      %s200 = smul.addr %s199, 4
      %s201 = scalar_lea.vmem %s3, %s200
      %v203 = vld [vmem:[%s0] sm:$0xff]
      %v204 = vld [vmem:[%s0 + $0x8] sm:$0xff]
      %v205 = vld [vmem:[%s0 + $0x10] sm:$0xff]
      %v206 = vld [vmem:[%s0 + $0x18] sm:$0xf]
      %v207 = vld [vmem:[%s0 + $0x1c] sm:$0xff]
      %v208 = vld [vmem:[%s0 + $0x24] sm:$0xff]
      %v209 = vld [vmem:[%s0 + $0x2c] sm:$0xff]
      %v210 = vld [vmem:[%s0 + $0x34] sm:$0xf]
      %v211 = vld [vmem:[%s0 + $0x38] sm:$0xff]
      %v212 = vld [vmem:[%s0 + $0x40] sm:$0xff]
      %v213 = vld [vmem:[%s0 + $0x48] sm:$0xff]
      %v214 = vld [vmem:[%s0 + $0x50] sm:$0xf]
      %v215 = vld [vmem:[%s0 + $0x54] sm:$0xff]
      %v216 = vld [vmem:[%s0 + $0x5c] sm:$0xff]
      %v217 = vld [vmem:[%s0 + $0x64] sm:$0xff]
      %v218 = vld [vmem:[%s0 + $0x6c] sm:$0xf]
      %v219 = vld [vmem:[%s0 + $0x70] sm:$0xff]
      %v220 = vld [vmem:[%s0 + $0x78] sm:$0xff]
      %v221 = vld [vmem:[%s0 + $0x80] sm:$0xff]
      %v222 = vld [vmem:[%s0 + $0x88] sm:$0xf]
      %v223 = vld [vmem:[%s0 + $0x8c] sm:$0xff]
      %v224 = vld [vmem:[%s0 + $0x94] sm:$0xff]
      %v225 = vld [vmem:[%s0 + $0x9c] sm:$0xff]
      %v226 = vld [vmem:[%s0 + $0xa4] sm:$0xf]
      %v227 = vld [vmem:[%s0 + $0xa8] sm:$0xff]
      %v228 = vld [vmem:[%s0 + $0xb0] sm:$0xff]
      %v229 = vld [vmem:[%s0 + $0xb8] sm:$0xff]
      %v230 = vld [vmem:[%s0 + $0xc0] sm:$0xf]
      %v231 = vld [vmem:[%s0 + $0xc4] sm:$0xff]
      %v232 = vld [vmem:[%s0 + $0xcc] sm:$0xff]
      %v233 = vld [vmem:[%s0 + $0xd4] sm:$0xff]
      %v234 = vld [vmem:[%s0 + $0xdc] sm:$0xf]
      %v235 = vld [vmem:[%s193] sm:$0xf]
      %v236 = vld [vmem:[%s193 + $0x4] sm:$0xf]
      %v237 = vld [vmem:[%s193 + $0x8] sm:$0xf]
      %v238 = vld [vmem:[%s193 + $0xc] sm:$0xf]
      %v239 = vld [vmem:[%s193 + $0x10] sm:$0xf]
      %v240 = vld [vmem:[%s193 + $0x14] sm:$0xf]
      %v241 = vld [vmem:[%s193 + $0x18] sm:$0xf]
      %v242 = vld [vmem:[%s193 + $0x1c] sm:$0xf]
      %v243 = vld [vmem:[%s193 + $0x20] sm:$0xf]
      %v244 = vld [vmem:[%s193 + $0x24] sm:$0xf]
      %v245 = vld [vmem:[%s193 + $0x28] sm:$0xf]
      %v246 = vld [vmem:[%s193 + $0x2c] sm:$0xf]
      %v247 = vld [vmem:[%s193 + $0x30] sm:$0xf]
      %v248 = vld [vmem:[%s193 + $0x34] sm:$0xf]
      %v249 = vld [vmem:[%s193 + $0x38] sm:$0xf]
      %v250 = vld [vmem:[%s193 + $0x3c] sm:$0xf]
      %v251 = vld [vmem:[%s193 + $0x40] sm:$0xf]
      %v252 = vld [vmem:[%s193 + $0x44] sm:$0xf]
      %v253 = vld [vmem:[%s193 + $0x48] sm:$0xf]
      %v254 = vld [vmem:[%s193 + $0x4c] sm:$0xf]
      %v255 = vld [vmem:[%s193 + $0x50] sm:$0xf]
      %v256 = vld [vmem:[%s193 + $0x54] sm:$0xf]
      %v257 = vld [vmem:[%s193 + $0x58] sm:$0xf]
      %v258 = vld [vmem:[%s193 + $0x5c] sm:$0xf]
      %v259 = vld [vmem:[%s193 + $0x60] sm:$0xf]
      %v260 = vld [vmem:[%s193 + $0x64] sm:$0xf]
      %v261 = vld [vmem:[%s193 + $0x68] sm:$0xf]
      %v262 = vld [vmem:[%s193 + $0x6c] sm:$0xf]
      %v263 = vld [vmem:[%s193 + $0x70] sm:$0xf]
      %v264 = vld [vmem:[%s193 + $0x74] sm:$0xf]
      %v265 = vld [vmem:[%s193 + $0x78] sm:$0xf]
      %v266 = vld [vmem:[%s193 + $0x7c] sm:$0xf]
      %v267 = vld [vmem:[%s193 + $0x80] sm:$0xf]
      %v268 = vld [vmem:[%s193 + $0x84] sm:$0xf]
      %v269 = vld [vmem:[%s193 + $0x88] sm:$0xf]
      %v270 = vld [vmem:[%s193 + $0x8c] sm:$0xf]
      %v271 = vld [vmem:[%s193 + $0x90] sm:$0xf]
      %v272 = vld [vmem:[%s193 + $0x94] sm:$0xf]
      %v273 = vld [vmem:[%s193 + $0x98] sm:$0xf]
      %v274 = vld [vmem:[%s193 + $0x9c] sm:$0xf]
      %v275 = vld [vmem:[%s193 + $0xa0] sm:$0xf]
      %v276 = vld [vmem:[%s193 + $0xa4] sm:$0xf]
      %v277 = vld [vmem:[%s193 + $0xa8] sm:$0xf]
      %v278 = vld [vmem:[%s193 + $0xac] sm:$0xf]
      %v279 = vld [vmem:[%s193 + $0xb0] sm:$0xf]
      %v280 = vld [vmem:[%s193 + $0xb4] sm:$0xf]
      %v281 = vld [vmem:[%s193 + $0xb8] sm:$0xf]
      %v282 = vld [vmem:[%s193 + $0xbc] sm:$0xf]
      %v283 = vld [vmem:[%s193 + $0xc0] sm:$0xf]
      %v284 = vld [vmem:[%s193 + $0xc4] sm:$0xf]
      %v285 = vld [vmem:[%s193 + $0xc8] sm:$0xf]
      %v286 = vld [vmem:[%s193 + $0xcc] sm:$0xf]
      %v287 = vld [vmem:[%s193 + $0xd0] sm:$0xf]
      %v288 = vld [vmem:[%s193 + $0xd4] sm:$0xf]
      %v289 = vld [vmem:[%s193 + $0xd8] sm:$0xf]
      %v290 = vld [vmem:[%s193 + $0xdc] sm:$0xf]
      %v291 = vld [vmem:[%s193 + $0xe0] sm:$0xf]
      %v292 = vld [vmem:[%s193 + $0xe4] sm:$0xf]
      %v293 = vld [vmem:[%s193 + $0xe8] sm:$0xf]
      %v294 = vld [vmem:[%s193 + $0xec] sm:$0xf]
      %v295 = vld [vmem:[%s193 + $0xf0] sm:$0xf]
      %v296 = vld [vmem:[%s193 + $0xf4] sm:$0xf]
      %v297 = vld [vmem:[%s193 + $0xf8] sm:$0xf]
      %v298 = vld [vmem:[%s193 + $0xfc] sm:$0xf]
      %v299 = vld [vmem:[%s193 + $0x100] sm:$0xf]
      %v300 = vld [vmem:[%s193 + $0x104] sm:$0xf]
      %v301 = vld [vmem:[%s193 + $0x108] sm:$0xf]
      %v302 = vld [vmem:[%s193 + $0x10c] sm:$0xf]
      %v303 = vld [vmem:[%s193 + $0x110] sm:$0xf]
      %v304 = vld [vmem:[%s193 + $0x114] sm:$0xf]
      %v305 = vld [vmem:[%s193 + $0x118] sm:$0xf]
      %v306 = vld [vmem:[%s193 + $0x11c] sm:$0xf]
      %v307 = vld [vmem:[%s193 + $0x120] sm:$0xf]
      %v308 = vld [vmem:[%s193 + $0x124] sm:$0xf]
      %v309 = vld [vmem:[%s193 + $0x128] sm:$0xf]
      %v310 = vld [vmem:[%s193 + $0x12c] sm:$0xf]
      %v311 = vld [vmem:[%s193 + $0x130] sm:$0xf]
      %v312 = vld [vmem:[%s193 + $0x134] sm:$0xf]
      %v313 = vld [vmem:[%s193 + $0x138] sm:$0xf]
      %v314 = vld [vmem:[%s193 + $0x13c] sm:$0xf]
      %v315 = vld [vmem:[%s193 + $0x140] sm:$0xf]
      %v316 = vld [vmem:[%s193 + $0x144] sm:$0xf]
      %v317 = vld [vmem:[%s193 + $0x148] sm:$0xf]
      %v318 = vld [vmem:[%s193 + $0x14c] sm:$0xf]
      %v319 = vld [vmem:[%s193 + $0x150] sm:$0xf]
      %v320 = vld [vmem:[%s193 + $0x154] sm:$0xf]
      %v321 = vld [vmem:[%s193 + $0x158] sm:$0xf]
      %v322 = vld [vmem:[%s193 + $0x15c] sm:$0xf]
      %v323 = vld [vmem:[%s193 + $0x160] sm:$0xf]
      %v324 = vld [vmem:[%s193 + $0x164] sm:$0xf]
      %v325 = vld [vmem:[%s193 + $0x168] sm:$0xf]
      %v326 = vld [vmem:[%s193 + $0x16c] sm:$0xf]
      %v327 = vld [vmem:[%s193 + $0x170] sm:$0xf]
      %v328 = vld [vmem:[%s193 + $0x174] sm:$0xf]
      %v329 = vld [vmem:[%s193 + $0x178] sm:$0xf]
      %v330 = vld [vmem:[%s193 + $0x17c] sm:$0xf]
      %v331 = vld [vmem:[%s193 + $0x180] sm:$0xf]
      %v332 = vld [vmem:[%s193 + $0x184] sm:$0xf]
      %v333 = vld [vmem:[%s193 + $0x188] sm:$0xf]
      %v334 = vld [vmem:[%s193 + $0x18c] sm:$0xf]
      %v335 = vld [vmem:[%s193 + $0x190] sm:$0xf]
      %v336 = vld [vmem:[%s193 + $0x194] sm:$0xf]
      %v337 = vld [vmem:[%s193 + $0x198] sm:$0xf]
      %v338 = vld [vmem:[%s193 + $0x19c] sm:$0xf]
      %v339 = vld [vmem:[%s193 + $0x1a0] sm:$0xf]
      %v340 = vld [vmem:[%s193 + $0x1a4] sm:$0xf]
      %v341 = vld [vmem:[%s193 + $0x1a8] sm:$0xf]
      %v342 = vld [vmem:[%s193 + $0x1ac] sm:$0xf]
      %v343 = vld [vmem:[%s1] sm:$0xff]
      %v344 = vld [vmem:[%s1 + $0x8] sm:$0xff]
      %v345 = vld [vmem:[%s1 + $0x10] sm:$0xff]
      %v346 = vld [vmem:[%s1 + $0x18] sm:$0xff]
      %v347 = vld [vmem:[%s1 + $0x20] sm:$0xff]
      %v348 = vld [vmem:[%s1 + $0x28] sm:$0xff]
      %v349 = vld [vmem:[%s1 + $0x30] sm:$0xff]
      %v350 = vld [vmem:[%s1 + $0x38] sm:$0xff]
      %352 = vset.pattern.permute.xlu0 0
      %353 = vperm.xlu0 %352, %v343
      %v354 = vpop.permute.xlu0 %353
      %357 = vset.pattern.permute.xlu0 0
      %358 = vperm.xlu0 %357, %v344
      %v359 = vpop.permute.xlu0 %358
      %362 = vset.pattern.permute.xlu0 0
      %363 = vperm.xlu0 %362, %v345
      %v364 = vpop.permute.xlu0 %363
      %367 = vset.pattern.permute.xlu0 0
      %368 = vperm.xlu0 %367, %v346
      %v369 = vpop.permute.xlu0 %368
      %372 = vset.pattern.permute.xlu0 0
      %373 = vperm.xlu0 %372, %v347
      %v374 = vpop.permute.xlu0 %373
      %377 = vset.pattern.permute.xlu0 0
      %378 = vperm.xlu0 %377, %v348
      %v379 = vpop.permute.xlu0 %378
      %382 = vset.pattern.permute.xlu0 0
      %383 = vperm.xlu0 %382, %v349
      %v384 = vpop.permute.xlu0 %383
      %387 = vset.pattern.permute.xlu0 0
      %388 = vperm.xlu0 %387, %v350
      %v389 = vpop.permute.xlu0 %388
      %v423 = vunpack.c.l.b16 %v203
      %v424 = vunpack.c.h.b16 %v203
      %v425 = vunpack.c.l.b16 %v204
      %v426 = vunpack.c.h.b16 %v204
      %v427 = vunpack.c.l.b16 %v205
      %v428 = vunpack.c.h.b16 %v205
      %v429 = vunpack.c.l.b16 %v206
      %v430 = vunpack.c.l.b16 %v207
      %v431 = vunpack.c.h.b16 %v207
      %v432 = vunpack.c.l.b16 %v208
      %v433 = vunpack.c.h.b16 %v208
      %v434 = vunpack.c.l.b16 %v209
      %v435 = vunpack.c.h.b16 %v209
      %v436 = vunpack.c.l.b16 %v210
      %v437 = vunpack.c.l.b16 %v211
      %v438 = vunpack.c.h.b16 %v211
      %v439 = vunpack.c.l.b16 %v212
      %v440 = vunpack.c.h.b16 %v212
      %v441 = vunpack.c.l.b16 %v213
      %v442 = vunpack.c.h.b16 %v213
      %v443 = vunpack.c.l.b16 %v214
      %v444 = vunpack.c.l.b16 %v215
      %v445 = vunpack.c.h.b16 %v215
      %v446 = vunpack.c.l.b16 %v216
      %v447 = vunpack.c.h.b16 %v216
      %v448 = vunpack.c.l.b16 %v217
      %v449 = vunpack.c.h.b16 %v217
      %v450 = vunpack.c.l.b16 %v218
      %v451 = vunpack.c.l.b16 %v219
      %v452 = vunpack.c.h.b16 %v219
      %v453 = vunpack.c.l.b16 %v220
      %v454 = vunpack.c.h.b16 %v220
      %v455 = vunpack.c.l.b16 %v221
      %v456 = vunpack.c.h.b16 %v221
      %v457 = vunpack.c.l.b16 %v222
      %v458 = vunpack.c.l.b16 %v223
      %v459 = vunpack.c.h.b16 %v223
      %v460 = vunpack.c.l.b16 %v224
      %v461 = vunpack.c.h.b16 %v224
      %v462 = vunpack.c.l.b16 %v225
      %v463 = vunpack.c.h.b16 %v225
      %v464 = vunpack.c.l.b16 %v226
      %v465 = vunpack.c.l.b16 %v227
      %v466 = vunpack.c.h.b16 %v227
      %v467 = vunpack.c.l.b16 %v228
      %v468 = vunpack.c.h.b16 %v228
      %v469 = vunpack.c.l.b16 %v229
      %v470 = vunpack.c.h.b16 %v229
      %v471 = vunpack.c.l.b16 %v230
      %v472 = vunpack.c.l.b16 %v231
      %v473 = vunpack.c.h.b16 %v231
      %v474 = vunpack.c.l.b16 %v232
      %v475 = vunpack.c.h.b16 %v232
      %v476 = vunpack.c.l.b16 %v233
      %v477 = vunpack.c.h.b16 %v233
      %v478 = vunpack.c.l.b16 %v234
      %v479 = vpack.c.b16 %v430, %v423
      %v480 = vpack.c.b16 %v431, %v424
      %v481 = vpack.c.b16 %v432, %v425
      %v482 = vpack.c.b16 %v433, %v426
      %v483 = vpack.c.b16 %v434, %v427
      %v484 = vpack.c.b16 %v435, %v428
      %v485 = vpack.c.b16 %v436, %v429
      %v486 = vpack.c.b16 %v444, %v437
      %v487 = vpack.c.b16 %v445, %v438
      %v488 = vpack.c.b16 %v446, %v439
      %v489 = vpack.c.b16 %v447, %v440
      %v490 = vpack.c.b16 %v448, %v441
      %v491 = vpack.c.b16 %v449, %v442
      %v492 = vpack.c.b16 %v450, %v443
      %v493 = vpack.c.b16 %v458, %v451
      %v494 = vpack.c.b16 %v459, %v452
      %v495 = vpack.c.b16 %v460, %v453
      %v496 = vpack.c.b16 %v461, %v454
      %v497 = vpack.c.b16 %v462, %v455
      %v498 = vpack.c.b16 %v463, %v456
      %v499 = vpack.c.b16 %v464, %v457
      %v500 = vpack.c.b16 %v472, %v465
      %v501 = vpack.c.b16 %v473, %v466
      %v502 = vpack.c.b16 %v474, %v467
      %v503 = vpack.c.b16 %v475, %v468
      %v504 = vpack.c.b16 %v476, %v469
      %v505 = vpack.c.b16 %v477, %v470
      %v506 = vpack.c.b16 %v478, %v471
      %v639 = vunpack.c.l.b16 %v235
      %v640 = vunpack.c.l.b16 %v236
      %v641 = vunpack.c.l.b16 %v237
      %v642 = vunpack.c.l.b16 %v238
      %v643 = vunpack.c.l.b16 %v239
      %v644 = vunpack.c.l.b16 %v240
      %v645 = vunpack.c.l.b16 %v241
      %v646 = vunpack.c.l.b16 %v242
      %v647 = vunpack.c.l.b16 %v243
      %v648 = vunpack.c.l.b16 %v244
      %v649 = vunpack.c.l.b16 %v245
      %v650 = vunpack.c.l.b16 %v246
      %v651 = vunpack.c.l.b16 %v247
      %v652 = vunpack.c.l.b16 %v248
      %v653 = vunpack.c.l.b16 %v249
      %v654 = vunpack.c.l.b16 %v250
      %v655 = vunpack.c.l.b16 %v251
      %v656 = vunpack.c.l.b16 %v252
      %v657 = vunpack.c.l.b16 %v253
      %v658 = vunpack.c.l.b16 %v254
      %v659 = vunpack.c.l.b16 %v255
      %v660 = vunpack.c.l.b16 %v256
      %v661 = vunpack.c.l.b16 %v257
      %v662 = vunpack.c.l.b16 %v258
      %v663 = vunpack.c.l.b16 %v259
      %v664 = vunpack.c.l.b16 %v260
      %v665 = vunpack.c.l.b16 %v261
      %v666 = vunpack.c.l.b16 %v262
      %v667 = vunpack.c.l.b16 %v263
      %v668 = vunpack.c.l.b16 %v264
      %v669 = vunpack.c.l.b16 %v265
      %v670 = vunpack.c.l.b16 %v266
      %v671 = vunpack.c.l.b16 %v267
      %v672 = vunpack.c.l.b16 %v268
      %v673 = vunpack.c.l.b16 %v269
      %v674 = vunpack.c.l.b16 %v270
      %v675 = vunpack.c.l.b16 %v271
      %v676 = vunpack.c.l.b16 %v272
      %v677 = vunpack.c.l.b16 %v273
      %v678 = vunpack.c.l.b16 %v274
      %v679 = vunpack.c.l.b16 %v275
      %v680 = vunpack.c.l.b16 %v276
      %v681 = vunpack.c.l.b16 %v277
      %v682 = vunpack.c.l.b16 %v278
      %v683 = vunpack.c.l.b16 %v279
      %v684 = vunpack.c.l.b16 %v280
      %v685 = vunpack.c.l.b16 %v281
      %v686 = vunpack.c.l.b16 %v282
      %v687 = vunpack.c.l.b16 %v283
      %v688 = vunpack.c.l.b16 %v284
      %v689 = vunpack.c.l.b16 %v285
      %v690 = vunpack.c.l.b16 %v286
      %v691 = vunpack.c.l.b16 %v287
      %v692 = vunpack.c.l.b16 %v288
      %v693 = vunpack.c.l.b16 %v289
      %v694 = vunpack.c.l.b16 %v290
      %v695 = vunpack.c.l.b16 %v291
      %v696 = vunpack.c.l.b16 %v292
      %v697 = vunpack.c.l.b16 %v293
      %v698 = vunpack.c.l.b16 %v294
      %v699 = vunpack.c.l.b16 %v295
      %v700 = vunpack.c.l.b16 %v296
      %v701 = vunpack.c.l.b16 %v297
      %v702 = vunpack.c.l.b16 %v298
      %v703 = vunpack.c.l.b16 %v299
      %v704 = vunpack.c.l.b16 %v300
      %v705 = vunpack.c.l.b16 %v301
      %v706 = vunpack.c.l.b16 %v302
      %v707 = vunpack.c.l.b16 %v303
      %v708 = vunpack.c.l.b16 %v304
      %v709 = vunpack.c.l.b16 %v305
      %v710 = vunpack.c.l.b16 %v306
      %v711 = vunpack.c.l.b16 %v307
      %v712 = vunpack.c.l.b16 %v308
      %v713 = vunpack.c.l.b16 %v309
      %v714 = vunpack.c.l.b16 %v310
      %v715 = vunpack.c.l.b16 %v311
      %v716 = vunpack.c.l.b16 %v312
      %v717 = vunpack.c.l.b16 %v313
      %v718 = vunpack.c.l.b16 %v314
      %v719 = vunpack.c.l.b16 %v315
      %v720 = vunpack.c.l.b16 %v316
      %v721 = vunpack.c.l.b16 %v317
      %v722 = vunpack.c.l.b16 %v318
      %v723 = vunpack.c.l.b16 %v319
      %v724 = vunpack.c.l.b16 %v320
      %v725 = vunpack.c.l.b16 %v321
      %v726 = vunpack.c.l.b16 %v322
      %v727 = vunpack.c.l.b16 %v323
      %v728 = vunpack.c.l.b16 %v324
      %v729 = vunpack.c.l.b16 %v325
      %v730 = vunpack.c.l.b16 %v326
      %v731 = vunpack.c.l.b16 %v327
      %v732 = vunpack.c.l.b16 %v328
      %v733 = vunpack.c.l.b16 %v329
      %v734 = vunpack.c.l.b16 %v330
      %v735 = vunpack.c.l.b16 %v331
      %v736 = vunpack.c.l.b16 %v332
      %v737 = vunpack.c.l.b16 %v333
      %v738 = vunpack.c.l.b16 %v334
      %v739 = vunpack.c.l.b16 %v335
      %v740 = vunpack.c.l.b16 %v336
      %v741 = vunpack.c.l.b16 %v337
      %v742 = vunpack.c.l.b16 %v338
      %v743 = vunpack.c.l.b16 %v339
      %v744 = vunpack.c.l.b16 %v340
      %v745 = vunpack.c.l.b16 %v341
      %v746 = vunpack.c.l.b16 %v342
      %v747 = vpack.c.b16 %v640, %v639
      %v748 = vpack.c.b16 %v642, %v641
      %v749 = vpack.c.b16 %v644, %v643
      %v750 = vpack.c.b16 %v646, %v645
      %v751 = vpack.c.b16 %v648, %v647
      %v752 = vpack.c.b16 %v650, %v649
      %v753 = vpack.c.b16 %v652, %v651
      %v754 = vpack.c.b16 %v654, %v653
      %v755 = vpack.c.b16 %v656, %v655
      %v756 = vpack.c.b16 %v658, %v657
      %v757 = vpack.c.b16 %v660, %v659
      %v758 = vpack.c.b16 %v662, %v661
      %v759 = vpack.c.b16 %v664, %v663
      %v760 = vpack.c.b16 %v666, %v665
      %v761 = vpack.c.b16 %v668, %v667
      %v762 = vpack.c.b16 %v670, %v669
      %v763 = vpack.c.b16 %v672, %v671
      %v764 = vpack.c.b16 %v674, %v673
      %v765 = vpack.c.b16 %v676, %v675
      %v766 = vpack.c.b16 %v678, %v677
      %v767 = vpack.c.b16 %v680, %v679
      %v768 = vpack.c.b16 %v682, %v681
      %v769 = vpack.c.b16 %v684, %v683
      %v770 = vpack.c.b16 %v686, %v685
      %v771 = vpack.c.b16 %v688, %v687
      %v772 = vpack.c.b16 %v690, %v689
      %v773 = vpack.c.b16 %v692, %v691
      %v774 = vpack.c.b16 %v694, %v693
      %v775 = vpack.c.b16 %v696, %v695
      %v776 = vpack.c.b16 %v698, %v697
      %v777 = vpack.c.b16 %v700, %v699
      %v778 = vpack.c.b16 %v702, %v701
      %v779 = vpack.c.b16 %v704, %v703
      %v780 = vpack.c.b16 %v706, %v705
      %v781 = vpack.c.b16 %v708, %v707
      %v782 = vpack.c.b16 %v710, %v709
      %v783 = vpack.c.b16 %v712, %v711
      %v784 = vpack.c.b16 %v714, %v713
      %v785 = vpack.c.b16 %v716, %v715
      %v786 = vpack.c.b16 %v718, %v717
      %v787 = vpack.c.b16 %v720, %v719
      %v788 = vpack.c.b16 %v722, %v721
      %v789 = vpack.c.b16 %v724, %v723
      %v790 = vpack.c.b16 %v726, %v725
      %v791 = vpack.c.b16 %v728, %v727
      %v792 = vpack.c.b16 %v730, %v729
      %v793 = vpack.c.b16 %v732, %v731
      %v794 = vpack.c.b16 %v734, %v733
      %v795 = vpack.c.b16 %v736, %v735
      %v796 = vpack.c.b16 %v738, %v737
      %v797 = vpack.c.b16 %v740, %v739
      %v798 = vpack.c.b16 %v742, %v741
      %v799 = vpack.c.b16 %v744, %v743
      %v800 = vpack.c.b16 %v746, %v745
      %vm855 = vcmask 785408
      %v857 = vsel %vm855, %v485, 0
      %v860 = vsel %vm855, %v492, 0
      %v863 = vsel %vm855, %v499, 0
      %v866 = vsel %vm855, %v506, 0
      %868 = vmatprep.subr.bf16.mxu0 0
      %869 = vmatpush1.bf16.msra.mxu0 %v754
      %870 = vmatprep.subr.bf16.mxu0 0
      %871 = vmatpush1.bf16.msra.mxu0 %v753
      %872 = vmatprep.subr.bf16.mxu0 0
      %873 = vmatpush1.bf16.msra.mxu0 %v752
      %874 = vmatprep.subr.bf16.mxu0 0
      %875 = vmatpush1.bf16.msra.mxu0 %v751
      %876 = vmatprep.subr.bf16.mxu0 0
      %877 = vmatpush1.bf16.msra.mxu0 %v750
      %878 = vmatprep.subr.bf16.mxu0 0
      %879 = vmatpush1.bf16.msra.mxu0 %v749
      %880 = vmatprep.subr.bf16.mxu0 0
      %881 = vmatpush1.bf16.msra.mxu0 %v748
      %882 = vmatprep.subr.bf16.mxu0 0
      %883 = vmatpush1.bf16.msra.mxu0 %v747
      %884 = vmatprep.subr.bf16.mxu0 0
      %885 = vmatpush2.bf16.msra.mxu0 %v762
      %886 = vmatprep.subr.bf16.mxu0 0
      %887 = vmatpush2.bf16.msra.mxu0 %v761
      %888 = vmatprep.subr.bf16.mxu0 0
      %889 = vmatpush2.bf16.msra.mxu0 %v760
      %890 = vmatprep.subr.bf16.mxu0 0
      %891 = vmatpush2.bf16.msra.mxu0 %v759
      %892 = vmatprep.subr.bf16.mxu0 0
      %893 = vmatpush2.bf16.msra.mxu0 %v758
      %894 = vmatprep.subr.bf16.mxu0 0
      %895 = vmatpush2.bf16.msra.mxu0 %v757
      %896 = vmatprep.subr.bf16.mxu0 0
      %897 = vmatpush2.bf16.msra.mxu0 %v756
      %898 = vmatprep.subr.bf16.mxu0 0
      %899 = vmatpush2.bf16.msra.mxu0 %v755
      %900 = vmatprep.mubr.bf16.mxu0 %v480
      %901 = vmatmul.mubr.bf16.gmra.mxu0 %v479
      %v902 = vpop.f32.mrf.mxu0
      %v903 = vadd.f32 %v354, %v902
      %v904 = vpop.f32.mrf.mxu0
      %v905 = vpop.f32.mrf.mxu0
      %v906 = vadd.f32 %v359, %v905
      %v907 = vpop.f32.mrf.mxu0
      %908 = vmatprep.mubr.bf16.mxu0 %v487
      %909 = vmatmul.mubr.bf16.gmra.mxu0 %v486
      %v910 = vpop.f32.mrf.mxu0
      %v911 = vadd.f32 %v364, %v910
      %v912 = vpop.f32.mrf.mxu0
      %v913 = vpop.f32.mrf.mxu0
      %v914 = vadd.f32 %v369, %v913
      %v915 = vpop.f32.mrf.mxu0
      %916 = vmatprep.mubr.bf16.mxu0 %v494
      %917 = vmatmul.mubr.bf16.gmra.mxu0 %v493
      %v918 = vpop.f32.mrf.mxu0
      %v919 = vadd.f32 %v374, %v918
      %v920 = vpop.f32.mrf.mxu0
      %v921 = vpop.f32.mrf.mxu0
      %v922 = vadd.f32 %v379, %v921
      %v923 = vpop.f32.mrf.mxu0
      %924 = vmatprep.mubr.bf16.mxu0 %v501
      %925 = vmatmul.mubr.bf16.gmra.mxu0 %v500
      %v926 = vpop.f32.mrf.mxu0
      %v927 = vadd.f32 %v384, %v926
      %v928 = vpop.f32.mrf.mxu0
      %v929 = vpop.f32.mrf.mxu0
      %v930 = vadd.f32 %v389, %v929
      %v931 = vpop.f32.mrf.mxu0
      %932 = vdwg.mxu0
      %933 = vmatprep.subr.bf16.mxu0 0
      %934 = vmatpush1.bf16.msra.mxu0 %v770
      %935 = vmatprep.subr.bf16.mxu0 0
      %936 = vmatpush1.bf16.msra.mxu0 %v769
      %937 = vmatprep.subr.bf16.mxu0 0
      %938 = vmatpush1.bf16.msra.mxu0 %v768
      %939 = vmatprep.subr.bf16.mxu0 0
      %940 = vmatpush1.bf16.msra.mxu0 %v767
      %941 = vmatprep.subr.bf16.mxu0 0
      %942 = vmatpush1.bf16.msra.mxu0 %v766
      %943 = vmatprep.subr.bf16.mxu0 0
      %944 = vmatpush1.bf16.msra.mxu0 %v765
      %945 = vmatprep.subr.bf16.mxu0 0
      %946 = vmatpush1.bf16.msra.mxu0 %v764
      %947 = vmatprep.subr.bf16.mxu0 0
      %948 = vmatpush1.bf16.msra.mxu0 %v763
      %949 = vmatprep.subr.bf16.mxu0 0
      %950 = vmatpush2.bf16.msra.mxu0 %v778
      %951 = vmatprep.subr.bf16.mxu0 0
      %952 = vmatpush2.bf16.msra.mxu0 %v777
      %953 = vmatprep.subr.bf16.mxu0 0
      %954 = vmatpush2.bf16.msra.mxu0 %v776
      %955 = vmatprep.subr.bf16.mxu0 0
      %956 = vmatpush2.bf16.msra.mxu0 %v775
      %957 = vmatprep.subr.bf16.mxu0 0
      %958 = vmatpush2.bf16.msra.mxu0 %v774
      %959 = vmatprep.subr.bf16.mxu0 0
      %960 = vmatpush2.bf16.msra.mxu0 %v773
      %961 = vmatprep.subr.bf16.mxu0 0
      %962 = vmatpush2.bf16.msra.mxu0 %v772
      %963 = vmatprep.subr.bf16.mxu0 0
      %964 = vmatpush2.bf16.msra.mxu0 %v771
      %965 = vmatprep.mubr.bf16.mxu0 %v482
      %966 = vmatmul.mubr.bf16.gmra.mxu0 %v481
      %v967 = vpop.f32.mrf.mxu0
      %v968 = vadd.f32 %v903, %v967
      %v969 = vpop.f32.mrf.mxu0
      %v970 = vpop.f32.mrf.mxu0
      %v971 = vadd.f32 %v906, %v970
      %v972 = vpop.f32.mrf.mxu0
      %973 = vmatprep.mubr.bf16.mxu0 %v489
      %974 = vmatmul.mubr.bf16.gmra.mxu0 %v488
      %v975 = vpop.f32.mrf.mxu0
      %v976 = vadd.f32 %v911, %v975
      %v977 = vpop.f32.mrf.mxu0
      %v978 = vpop.f32.mrf.mxu0
      %v979 = vadd.f32 %v914, %v978
      %v980 = vpop.f32.mrf.mxu0
      %981 = vmatprep.mubr.bf16.mxu0 %v496
      %982 = vmatmul.mubr.bf16.gmra.mxu0 %v495
      %v983 = vpop.f32.mrf.mxu0
      %v984 = vadd.f32 %v919, %v983
      %v985 = vpop.f32.mrf.mxu0
      %v986 = vpop.f32.mrf.mxu0
      %v987 = vadd.f32 %v922, %v986
      %v988 = vpop.f32.mrf.mxu0
      %989 = vmatprep.mubr.bf16.mxu0 %v503
      %990 = vmatmul.mubr.bf16.gmra.mxu0 %v502
      %v991 = vpop.f32.mrf.mxu0
      %v992 = vadd.f32 %v927, %v991
      %v993 = vpop.f32.mrf.mxu0
      %v994 = vpop.f32.mrf.mxu0
      %v995 = vadd.f32 %v930, %v994
      %v996 = vpop.f32.mrf.mxu0
      %997 = vdwg.mxu0
      %998 = vmatprep.subr.bf16.mxu0 0
      %999 = vmatpush1.bf16.msra.mxu0 %v786
      %1000 = vmatprep.subr.bf16.mxu0 0
      %1001 = vmatpush1.bf16.msra.mxu0 %v785
      %1002 = vmatprep.subr.bf16.mxu0 0
      %1003 = vmatpush1.bf16.msra.mxu0 %v784
      %1004 = vmatprep.subr.bf16.mxu0 0
      %1005 = vmatpush1.bf16.msra.mxu0 %v783
      %1006 = vmatprep.subr.bf16.mxu0 0
      %1007 = vmatpush1.bf16.msra.mxu0 %v782
      %1008 = vmatprep.subr.bf16.mxu0 0
      %1009 = vmatpush1.bf16.msra.mxu0 %v781
      %1010 = vmatprep.subr.bf16.mxu0 0
      %1011 = vmatpush1.bf16.msra.mxu0 %v780
      %1012 = vmatprep.subr.bf16.mxu0 0
      %1013 = vmatpush1.bf16.msra.mxu0 %v779
      %1014 = vmatprep.subr.bf16.mxu0 0
      %1015 = vmatpush2.bf16.msra.mxu0 %v794
      %1016 = vmatprep.subr.bf16.mxu0 0
      %1017 = vmatpush2.bf16.msra.mxu0 %v793
      %1018 = vmatprep.subr.bf16.mxu0 0
      %1019 = vmatpush2.bf16.msra.mxu0 %v792
      %1020 = vmatprep.subr.bf16.mxu0 0
      %1021 = vmatpush2.bf16.msra.mxu0 %v791
      %1022 = vmatprep.subr.bf16.mxu0 0
      %1023 = vmatpush2.bf16.msra.mxu0 %v790
      %1024 = vmatprep.subr.bf16.mxu0 0
      %1025 = vmatpush2.bf16.msra.mxu0 %v789
      %1026 = vmatprep.subr.bf16.mxu0 0
      %1027 = vmatpush2.bf16.msra.mxu0 %v788
      %1028 = vmatprep.subr.bf16.mxu0 0
      %1029 = vmatpush2.bf16.msra.mxu0 %v787
      %1030 = vmatprep.mubr.bf16.mxu0 %v484
      %1031 = vmatmul.mubr.bf16.gmra.mxu0 %v483
      %v1032 = vpop.f32.mrf.mxu0
      %v1033 = vadd.f32 %v968, %v1032
      %v1034 = vpop.f32.mrf.mxu0
      %v1035 = vpop.f32.mrf.mxu0
      %v1036 = vadd.f32 %v971, %v1035
      %v1037 = vpop.f32.mrf.mxu0
      %1038 = vmatprep.mubr.bf16.mxu0 %v491
      %1039 = vmatmul.mubr.bf16.gmra.mxu0 %v490
      %v1040 = vpop.f32.mrf.mxu0
      %v1041 = vadd.f32 %v976, %v1040
      %v1042 = vpop.f32.mrf.mxu0
      %v1043 = vpop.f32.mrf.mxu0
      %v1044 = vadd.f32 %v979, %v1043
      %v1045 = vpop.f32.mrf.mxu0
      %1046 = vmatprep.mubr.bf16.mxu0 %v498
      %1047 = vmatmul.mubr.bf16.gmra.mxu0 %v497
      %v1048 = vpop.f32.mrf.mxu0
      %v1049 = vadd.f32 %v984, %v1048
      %v1050 = vpop.f32.mrf.mxu0
      %v1051 = vpop.f32.mrf.mxu0
      %v1052 = vadd.f32 %v987, %v1051
      %v1053 = vpop.f32.mrf.mxu0
      %1054 = vmatprep.mubr.bf16.mxu0 %v505
      %1055 = vmatmul.mubr.bf16.gmra.mxu0 %v504
      %v1056 = vpop.f32.mrf.mxu0
      %v1057 = vadd.f32 %v992, %v1056
      %v1058 = vpop.f32.mrf.mxu0
      %v1059 = vpop.f32.mrf.mxu0
      %v1060 = vadd.f32 %v995, %v1059
      %v1061 = vpop.f32.mrf.mxu0
      %1062 = vdwg.mxu0
      %1063 = vmatprep.subr.bf16.mxu0 0
      %1064 = vmatpush1.bf16.msra.mxu0 0
      %1065 = vmatprep.subr.bf16.mxu0 0
      %1066 = vmatpush1.bf16.msra.mxu0 0
      %1067 = vmatprep.subr.bf16.mxu0 0
      %1068 = vmatpush1.bf16.msra.mxu0 %v800
      %1069 = vmatprep.subr.bf16.mxu0 0
      %1070 = vmatpush1.bf16.msra.mxu0 %v799
      %1071 = vmatprep.subr.bf16.mxu0 0
      %1072 = vmatpush1.bf16.msra.mxu0 %v798
      %1073 = vmatprep.subr.bf16.mxu0 0
      %1074 = vmatpush1.bf16.msra.mxu0 %v797
      %1075 = vmatprep.subr.bf16.mxu0 0
      %1076 = vmatpush1.bf16.msra.mxu0 %v796
      %1077 = vmatprep.subr.bf16.mxu0 0
      %1078 = vmatpush1.bf16.msra.mxu0 %v795
      %1079 = vmatprep.subr.bf16.mxu0 0
      %1080 = vmatpush2.bf16.msra.mxu0 0
      %1081 = vmatprep.subr.bf16.mxu0 0
      %1082 = vmatpush2.bf16.msra.mxu0 0
      %1083 = vmatprep.subr.bf16.mxu0 0
      %1084 = vmatpush2.bf16.msra.mxu0 0
      %1085 = vmatprep.subr.bf16.mxu0 0
      %1086 = vmatpush2.bf16.msra.mxu0 0
      %1087 = vmatprep.subr.bf16.mxu0 0
      %1088 = vmatpush2.bf16.msra.mxu0 0
      %1089 = vmatprep.subr.bf16.mxu0 0
      %1090 = vmatpush2.bf16.msra.mxu0 0
      %1091 = vmatprep.subr.bf16.mxu0 0
      %1092 = vmatpush2.bf16.msra.mxu0 0
      %1093 = vmatprep.subr.bf16.mxu0 0
      %1094 = vmatpush2.bf16.msra.mxu0 0
      %1095 = vmatprep.mubr.bf16.mxu0 0
      %1096 = vmatmul.mubr.bf16.gmra.mxu0 %v857
      %v1097 = vpop.f32.mrf.mxu0
      %v1098 = vadd.f32 %v1033, %v1097
      %v1099 = vpop.f32.mrf.mxu0
      %v1100 = vpop.f32.mrf.mxu0
      %v1101 = vadd.f32 %v1036, %v1100
      %v1102 = vpop.f32.mrf.mxu0
      %1103 = vmatprep.mubr.bf16.mxu0 0
      %1104 = vmatmul.mubr.bf16.gmra.mxu0 %v860
      %v1105 = vpop.f32.mrf.mxu0
      %v1106 = vadd.f32 %v1041, %v1105
      %v1107 = vpop.f32.mrf.mxu0
      %v1108 = vpop.f32.mrf.mxu0
      %v1109 = vadd.f32 %v1044, %v1108
      %v1110 = vpop.f32.mrf.mxu0
      %1111 = vmatprep.mubr.bf16.mxu0 0
      %1112 = vmatmul.mubr.bf16.gmra.mxu0 %v863
      %v1113 = vpop.f32.mrf.mxu0
      %v1114 = vadd.f32 %v1049, %v1113
      %v1115 = vpop.f32.mrf.mxu0
      %v1116 = vpop.f32.mrf.mxu0
      %v1117 = vadd.f32 %v1052, %v1116
      %v1118 = vpop.f32.mrf.mxu0
      %1119 = vmatprep.mubr.bf16.mxu0 0
      %1120 = vmatmul.mubr.bf16.gmra.mxu0 %v866
      %v1121 = vpop.f32.mrf.mxu0
      %v1122 = vadd.f32 %v1057, %v1121
      %v1123 = vpop.f32.mrf.mxu0
      %v1124 = vpop.f32.mrf.mxu0
      %v1125 = vadd.f32 %v1060, %v1124
      %v1126 = vpop.f32.mrf.mxu0
      %1127 = vdwg.mxu0
      %v1128 = vmax.f32 %v1098, 0.0
      %v1129 = vmax.f32 %v1101, 0.0
      %v1130 = vmax.f32 %v1106, 0.0
      %v1131 = vmax.f32 %v1109, 0.0
      %v1132 = vmax.f32 %v1114, 0.0
      %v1133 = vmax.f32 %v1117, 0.0
      %v1134 = vmax.f32 %v1122, 0.0
      %v1135 = vmax.f32 %v1125, 0.0
      %v1136 = vpack.c.bf16 %v1129, %v1128
      %v1137 = vpack.c.bf16 %v1131, %v1130
      %v1138 = vpack.c.bf16 %v1133, %v1132
      %v1139 = vpack.c.bf16 %v1135, %v1134
      %v1144 = vunpack.c.l.b16 %v1136
      %v1145 = vunpack.c.h.b16 %v1136
      %v1146 = vunpack.c.l.b16 %v1137
      %v1147 = vunpack.c.h.b16 %v1137
      %v1148 = vunpack.c.l.b16 %v1138
      %v1149 = vunpack.c.h.b16 %v1138
      %v1150 = vunpack.c.l.b16 %v1139
      %v1151 = vunpack.c.h.b16 %v1139
      %v1152 = vpack.c.b16 %v1144, %v1144
      %v1153 = vpack.c.b16 %v1145, %v1145
      %v1154 = vpack.c.b16 %v1146, %v1146
      %v1155 = vpack.c.b16 %v1147, %v1147
      %v1156 = vpack.c.b16 %v1148, %v1148
      %v1157 = vpack.c.b16 %v1149, %v1149
      %v1158 = vpack.c.b16 %v1150, %v1150
      %v1159 = vpack.c.b16 %v1151, %v1151
      %vm1168 = vcmask 60416
      %1169 = vst.msk [vmem:[%s201] sm:$0xf] %vm1168, %v1152
      %1170 = vst.msk [vmem:[%s201 + $0x4] sm:$0xf] %vm1168, %v1153
      %1171 = vst.msk [vmem:[%s201 + $0x8] sm:$0xf] %vm1168, %v1154
      %1172 = vst.msk [vmem:[%s201 + $0xc] sm:$0xf] %vm1168, %v1155
      %1173 = vst.msk [vmem:[%s201 + $0x10] sm:$0xf] %vm1168, %v1156
      %1174 = vst.msk [vmem:[%s201 + $0x14] sm:$0xf] %vm1168, %v1157
      %1175 = vst.msk [vmem:[%s201 + $0x18] sm:$0xf] %vm1168, %v1158
      %1176 = vst.msk [vmem:[%s201 + $0x1c] sm:$0xf] %vm1168, %v1159
      %p1177 = scmp.lt.s32.totalorder %s18, 1
      %s1178 = scalar_select %p1177, %s18, 1
      %p1179 = scmp.lt.s32.totalorder %s19, 0
      %s1180 = scalar_select %p1179, %s19, 0
      %s1181 = smul.addr %s1178, 8
      %s1182 = sadd.s32 %s1180, %s1181
      %s1183 = smul.addr %s1182, 4
      %s1184 = scalar_lea.vmem %s3, %s1183
      // Predicated region
      $region33: #{autoencoder3d_forward.8} parent=31 // pred_check
        %p1185 = pneg %p116
      $region34: #{autoencoder3d_forward.8} parent=31 // pred_check_branch
        %1187 = sbr.rel (%p1185) target = $region36
      $region35: #{autoencoder3d_forward.8} parent=31 // pred_region
        _
      $region36: #{autoencoder3d_forward.8} parent=31 // pred_fallthru
        _
    $region32: #{autoencoder3d_forward.8} parent=5 // pred_fallthru
      _
    %p1188 = scmp.le.s32.totalorder 2, %s9
    // Predicated region
    $region37: #{autoencoder3d_forward.8} parent=5 // pred_check
      %p1189 = pneg %p1188
    $region38: #{autoencoder3d_forward.8} parent=5 // pred_check_branch
      %1191 = sbr.rel (%p1189) target = $region40
    $region39: #{autoencoder3d_forward.8} parent=5 // pred_region
      %s1192 = ssub.s32 %s9, 2
      // Predicated region
      $region41: #{autoencoder3d_forward.8} parent=39 // pred_check
        %p1193 = pneg %p122
      $region42: #{autoencoder3d_forward.8} parent=39 // pred_check_branch
        %1195 = sbr.rel (%p1193) target = $region44
      $region43: #{autoencoder3d_forward.8} parent=39 // pred_region
        %p1196 = scmp.lt.s32.totalorder %s20, 1
        %s1197 = scalar_select %p1196, %s20, 1
        %p1198 = scmp.lt.s32.totalorder %s21, 0
        %s1199 = scalar_select %p1198, %s21, 0
        %s1200 = smul.addr %s1197, 8
        %s1201 = sadd.s32 %s1199, %s1200
        %s1202 = smul.addr %s1201, 4
        %s1203 = scalar_lea.vmem %s3, %s1202
      $region44: #{autoencoder3d_forward.8} parent=39 // pred_fallthru
        _
    $region40: #{autoencoder3d_forward.8} parent=5 // pred_fallthru
      _
  $region6: #{autoencoder3d_forward.8} parent=0 // loop_footer
    %s13 = sadd.s32 1, %s9
  $region7: #{autoencoder3d_forward.8} parent=0 // loop_footer_branch
    %8 = sbr.rel target = $region3
  $region8: #{autoencoder3d_forward.8} parent=0 // loop_exit
    _

// kernel: autoencoder3d_forward.9
$region0: #{autoencoder3d_forward.9}
  #allocation0 [shape = 'u32[]', space=smem, size = 0x4, offset = 0x4, fixed_abs, tag = 'smem constant byte address 0x4 - core index']
  #allocation1 [shape = 'u32[144,128]{1,0:T(1,128)}', space=vmem, size = 0x12000, scoped, tag = 'internal scratch']
  %s0 = inlined_call_operand.vmem [shape: bf16[32,1728], index: 0, kind: input, shape index: {}]
  %s1 = inlined_call_operand.vmem [shape: f32[32,1], index: 1, kind: input, shape index: {}]
  %s2 = inlined_call_operand.vmem [shape: bf16[2,1728,64], index: 2, kind: input, shape index: {}]
  %s3 = inlined_call_operand.vmem [shape: bf16[2,32,64], index: 3, kind: output, shape index: {}]
  %s4 = sld [smem:[#allocation0]]
  $region45: #{autoencoder3d_forward.9} parent=0
    _
  %s6 = ssub.s32 1, %s4
  %s7 = scalar_select 0, %s6, %s4
  loop: start=0, step=1, limit=4
  $region2: #{autoencoder3d_forward.9} parent=0 // loop_pre_header
    _
  $region3: #{autoencoder3d_forward.9} parent=0 // loop_header
    %s9 = sphi 0, %s13
    %p10 = scmp.ge.s32.totalorder %s9, 4
    %s16 = sphi 0, %s28
    %s17 = sphi 0, %s24
    %s18 = sphi 0, %s16
    %s19 = sphi 0, %s17
    %s20 = sphi 0, %s18
    %s21 = sphi 0, %s19
    %s29 = sphi 0, %s29
    %s31 = sphi 0, %s29
    %s32 = sphi 0, %s31
    %s46 = sphi 0, %s32
    %s50 = sphi 0, %s50
    %s52 = sphi 0, %s50
    %s53 = sphi 0, %s52
    %s67 = sphi 0, %s53
    %s75 = sphi 0, %s77
    %s78 = sphi 0, %s75
    %s79 = sphi 0, %s78
    %s95 = sphi 0, %s79
    %s103 = sphi 0, %s105
    %s106 = sphi 0, %s103
    %s107 = sphi 0, %s106
    %s123 = sphi 0, %s107
  $region4: #{autoencoder3d_forward.9} parent=0 // loop_header_branch
    %12 = sbr.rel (%p10) target = $region8
  $region5: #{autoencoder3d_forward.9} parent=0 // loop_body
    %s14 = ssub.s32 %s9, 1
    %s15 = ssub.s32 %s9, 2
    %s22 = sadd.s32 1, %s17
    %p23 = scmp.ge.s32.totalorder %s22, 1
    %s24 = scalar_select %p23, 0, %s22
    %s25 = sadd.s32 1, %s16
    %s26 = scalar_select %p23, %s25, %s16
    %p27 = scmp.ge.s32.totalorder %s26, 2
    %s28 = scalar_select %p27, 0, %s26
    %s30 = sadd.s32 %s29, 1
    %p33 = scmp.eq.s32.totalorder %s9, 1
    %p34 = scmp.ne.s32.totalorder %s29, %s31
    %p35 = scmp.eq.s32.totalorder %s9, 0
    %p36 = por %p34, %p35
    %p37 = scmp.ne.s32.totalorder %s29, %s31
    %p38 = scmp.eq.s32.totalorder %s14, 1
    %p39 = por %p37, %p38
    %p40 = scmp.ne.s32.totalorder %s31, %s32
    %p41 = scmp.eq.s32.totalorder %s14, 0
    %p42 = por %p40, %p41
    %p43 = scmp.ne.s32.totalorder %s31, %s32
    %p44 = scmp.eq.s32.totalorder %s15, 1
    %p45 = por %p43, %p44
    %p47 = scmp.ne.s32.totalorder %s32, %s46
    %p48 = scmp.eq.s32.totalorder %s15, 0
    %p49 = por %p47, %p48
    %s51 = sadd.s32 %s50, 1
    %p54 = scmp.eq.s32.totalorder %s9, 1
    %p55 = scmp.ne.s32.totalorder %s50, %s52
    %p56 = scmp.eq.s32.totalorder %s9, 0
    %p57 = por %p55, %p56
    %p58 = scmp.ne.s32.totalorder %s50, %s52
    %p59 = scmp.eq.s32.totalorder %s14, 1
    %p60 = por %p58, %p59
    %p61 = scmp.ne.s32.totalorder %s52, %s53
    %p62 = scmp.eq.s32.totalorder %s14, 0
    %p63 = por %p61, %p62
    %p64 = scmp.ne.s32.totalorder %s52, %s53
    %p65 = scmp.eq.s32.totalorder %s15, 1
    %p66 = por %p64, %p65
    %p68 = scmp.ne.s32.totalorder %s53, %s67
    %p69 = scmp.eq.s32.totalorder %s15, 0
    %p70 = por %p68, %p69
    %s71 = ssub.s32 %s16, %s28
    %s72 = ssub.s32 %s17, %s24
    %s73 = sor.u32 %s71, %s72
    %p74 = scmp.eq.s32.totalorder %s73, 0
    %s76 = sadd.s32 %s75, 1
    %s77 = scalar_select %p74, %s75, %s76
    %p80 = pneg %p74
    %p81 = scmp.eq.s32.totalorder %s9, 1
    %p82 = por %p80, %p81
    %p83 = scmp.ne.s32.totalorder %s75, %s78
    %p84 = scmp.eq.s32.totalorder %s9, 0
    %p85 = por %p83, %p84
    %p86 = scmp.ne.s32.totalorder %s75, %s78
    %p87 = scmp.eq.s32.totalorder %s14, 1
    %p88 = por %p86, %p87
    %p89 = scmp.ne.s32.totalorder %s78, %s79
    %p90 = scmp.eq.s32.totalorder %s14, 0
    %p91 = por %p89, %p90
    %p92 = scmp.ne.s32.totalorder %s78, %s79
    %p93 = scmp.eq.s32.totalorder %s15, 1
    %p94 = por %p92, %p93
    %p96 = scmp.ne.s32.totalorder %s79, %s95
    %p97 = scmp.eq.s32.totalorder %s15, 0
    %p98 = por %p96, %p97
    %s99 = ssub.s32 %s16, %s28
    %s100 = ssub.s32 %s17, %s24
    %s101 = sor.u32 %s99, %s100
    %p102 = scmp.eq.s32.totalorder %s101, 0
    %s104 = sadd.s32 %s103, 1
    %s105 = scalar_select %p102, %s103, %s104
    %p108 = pneg %p102
    %p109 = scmp.eq.s32.totalorder %s9, 1
    %p110 = por %p108, %p109
    %p111 = scmp.ne.s32.totalorder %s103, %s106
    %p112 = scmp.eq.s32.totalorder %s9, 0
    %p113 = por %p111, %p112
    %p114 = scmp.ne.s32.totalorder %s103, %s106
    %p115 = scmp.eq.s32.totalorder %s14, 1
    %p116 = por %p114, %p115
    %p117 = scmp.ne.s32.totalorder %s106, %s107
    %p118 = scmp.eq.s32.totalorder %s14, 0
    %p119 = por %p117, %p118
    %p120 = scmp.ne.s32.totalorder %s106, %s107
    %p121 = scmp.eq.s32.totalorder %s15, 1
    %p122 = por %p120, %p121
    %p124 = scmp.ne.s32.totalorder %s107, %s123
    %p125 = scmp.eq.s32.totalorder %s15, 0
    %p126 = por %p124, %p125
    %p127 = scmp.le.s32.totalorder 1, %s9
    %p128 = scmp.lt.s32.totalorder %s9, 3
    %p129 = pnand %p127, %p128
    %p130 = pneg %p129
    // Predicated region
    $region9: #{autoencoder3d_forward.9} parent=5 // pred_check
      _
    $region10: #{autoencoder3d_forward.9} parent=5 // pred_check_branch
      %132 = sbr.rel (%p129) target = $region12
    $region11: #{autoencoder3d_forward.9} parent=5 // pred_region
      %s133 = ssub.s32 %s9, 1
      // Predicated region
      $region13: #{autoencoder3d_forward.9} parent=11 // pred_check
        %p134 = pneg %p42
      $region14: #{autoencoder3d_forward.9} parent=11 // pred_check_branch
        %136 = sbr.rel (%p134) target = $region16
      $region15: #{autoencoder3d_forward.9} parent=11 // pred_region
        _
      $region16: #{autoencoder3d_forward.9} parent=11 // pred_fallthru
        _
      // Predicated region
      $region17: #{autoencoder3d_forward.9} parent=11 // pred_check
        %p137 = pneg %p63
      $region18: #{autoencoder3d_forward.9} parent=11 // pred_check_branch
        %139 = sbr.rel (%p137) target = $region20
      $region19: #{autoencoder3d_forward.9} parent=11 // pred_region
        _
      $region20: #{autoencoder3d_forward.9} parent=11 // pred_fallthru
        _
    $region12: #{autoencoder3d_forward.9} parent=5 // pred_fallthru
      _
    %p140 = scmp.lt.s32.totalorder %s9, 2
    // Predicated region
    $region21: #{autoencoder3d_forward.9} parent=5 // pred_check
      %p141 = pneg %p140
    $region22: #{autoencoder3d_forward.9} parent=5 // pred_check_branch
      %143 = sbr.rel (%p141) target = $region24
    $region23: #{autoencoder3d_forward.9} parent=5 // pred_region
      // Predicated region
      $region25: #{autoencoder3d_forward.9} parent=23 // pred_check
        %p144 = pneg %p85
      $region26: #{autoencoder3d_forward.9} parent=23 // pred_check_branch
        %146 = sbr.rel (%p144) target = $region28
      $region27: #{autoencoder3d_forward.9} parent=23 // pred_region
        %p147 = scmp.lt.s32.totalorder %s16, 1
        %s148 = scalar_select %p147, %s16, 1
        %p149 = scmp.lt.s32.totalorder %s17, 0
        %s150 = scalar_select %p149, %s17, 0
        %s151 = smul.addr %s148, 216
        %s152 = sadd.s32 %s150, %s151
        %s153 = smul.addr %s152, 4
        %s154 = scalar_lea.vmem %s2, %s153
      $region28: #{autoencoder3d_forward.9} parent=23 // pred_fallthru
        _
    $region24: #{autoencoder3d_forward.9} parent=5 // pred_fallthru
      _
    %p155 = scmp.le.s32.totalorder 1, %s9
    %p156 = scmp.lt.s32.totalorder %s9, 3
    %p157 = pnand %p155, %p156
    %p158 = pneg %p157
    // Predicated region
    $region29: #{autoencoder3d_forward.9} parent=5 // pred_check
      _
    $region30: #{autoencoder3d_forward.9} parent=5 // pred_check_branch
      %160 = sbr.rel (%p157) target = $region32
    $region31: #{autoencoder3d_forward.9} parent=5 // pred_region
      %s161 = ssub.s32 %s9, 1
      %p162 = pneg %p42
      %p163 = pneg %p39
      %p164 = pneg %p63
      %p165 = pneg %p60
      %p166 = scmp.lt.s32.totalorder %s18, 1
      %s167 = scalar_select %p166, %s18, 1
      %p168 = scmp.lt.s32.totalorder %s19, 0
      %s169 = scalar_select %p168, %s19, 0
      %s170 = smul.addr %s167, 216
      %s171 = sadd.s32 %s169, %s170
      %s172 = smul.addr %s171, 4
      %s173 = scalar_lea.vmem %s2, %s172
      %p174 = pneg %p91
      %p175 = pneg %p88
      %p176 = pneg %p119
      %p177 = pneg %p116
      %p178 = scmp.lt.s32.totalorder %s18, 1
      %s179 = scalar_select %p178, %s18, 1
      %p180 = scmp.lt.s32.totalorder %s19, 0
      %s181 = scalar_select %p180, %s19, 0
      %s182 = smul.addr %s179, 4
      %s183 = sadd.s32 %s181, %s182
      %s184 = smul.addr %s183, 4
      %s185 = scalar_lea.vmem %s3, %s184
      %p186 = scmp.lt.s32.totalorder %s18, 1
      %s187 = scalar_select %p186, %s18, 1
      %p188 = scmp.lt.s32.totalorder %s19, 0
      %s189 = scalar_select %p188, %s19, 0
      %s190 = smul.addr %s187, 216
      %s191 = sadd.s32 %s189, %s190
      %s192 = smul.addr %s191, 4
      %s193 = scalar_lea.vmem %s2, %s192
      %p194 = scmp.lt.s32.totalorder %s18, 1
      %s195 = scalar_select %p194, %s18, 1
      %p196 = scmp.lt.s32.totalorder %s19, 0
      %s197 = scalar_select %p196, %s19, 0
      %s198 = smul.addr %s195, 4
      %s199 = sadd.s32 %s197, %s198
      %s200 = smul.addr %s199, 4
      %s201 = scalar_lea.vmem %s3, %s200
      %v203 = vld [vmem:[%s0] sm:$0xff]
      %v204 = vld [vmem:[%s0 + $0x8] sm:$0xff]
      %v205 = vld [vmem:[%s0 + $0x10] sm:$0xff]
      %v206 = vld [vmem:[%s0 + $0x18] sm:$0xff]
      %v207 = vld [vmem:[%s0 + $0x20] sm:$0xff]
      %v208 = vld [vmem:[%s0 + $0x28] sm:$0xff]
      %v209 = vld [vmem:[%s0 + $0x30] sm:$0xff]
      %v210 = vld [vmem:[%s0 + $0x38] sm:$0xff]
      %v211 = vld [vmem:[%s0 + $0x40] sm:$0xff]
      %v212 = vld [vmem:[%s0 + $0x48] sm:$0xff]
      %v213 = vld [vmem:[%s0 + $0x50] sm:$0xff]
      %v214 = vld [vmem:[%s0 + $0x58] sm:$0xff]
      %v215 = vld [vmem:[%s0 + $0x60] sm:$0xff]
      %v216 = vld [vmem:[%s0 + $0x68] sm:$0xff]
      %v217 = vld [vmem:[%s0 + $0x70] sm:$0xff]
      %v218 = vld [vmem:[%s0 + $0x78] sm:$0xff]
      %v219 = vld [vmem:[%s0 + $0x80] sm:$0xff]
      %v220 = vld [vmem:[%s0 + $0x88] sm:$0xff]
      %v221 = vld [vmem:[%s0 + $0x90] sm:$0xff]
      %v222 = vld [vmem:[%s0 + $0x98] sm:$0xff]
      %v223 = vld [vmem:[%s0 + $0xa0] sm:$0xff]
      %v224 = vld [vmem:[%s0 + $0xa8] sm:$0xff]
      %v225 = vld [vmem:[%s0 + $0xb0] sm:$0xff]
      %v226 = vld [vmem:[%s0 + $0xb8] sm:$0xff]
      %v227 = vld [vmem:[%s0 + $0xc0] sm:$0xff]
      %v228 = vld [vmem:[%s0 + $0xc8] sm:$0xff]
      %v229 = vld [vmem:[%s0 + $0xd0] sm:$0xff]
      %v230 = vld [vmem:[%s0 + $0xd8] sm:$0xff]
      %v231 = vld [vmem:[%s193] sm:$0xf]
      %v232 = vld [vmem:[%s193 + $0x4] sm:$0xf]
      %v233 = vld [vmem:[%s193 + $0x8] sm:$0xf]
      %v234 = vld [vmem:[%s193 + $0xc] sm:$0xf]
      %v235 = vld [vmem:[%s193 + $0x10] sm:$0xf]
      %v236 = vld [vmem:[%s193 + $0x14] sm:$0xf]
      %v237 = vld [vmem:[%s193 + $0x18] sm:$0xf]
      %v238 = vld [vmem:[%s193 + $0x1c] sm:$0xf]
      %v239 = vld [vmem:[%s193 + $0x20] sm:$0xf]
      %v240 = vld [vmem:[%s193 + $0x24] sm:$0xf]
      %v241 = vld [vmem:[%s193 + $0x28] sm:$0xf]
      %v242 = vld [vmem:[%s193 + $0x2c] sm:$0xf]
      %v243 = vld [vmem:[%s193 + $0x30] sm:$0xf]
      %v244 = vld [vmem:[%s193 + $0x34] sm:$0xf]
      %v245 = vld [vmem:[%s193 + $0x38] sm:$0xf]
      %v246 = vld [vmem:[%s193 + $0x3c] sm:$0xf]
      %v247 = vld [vmem:[%s193 + $0x40] sm:$0xf]
      %v248 = vld [vmem:[%s193 + $0x44] sm:$0xf]
      %v249 = vld [vmem:[%s193 + $0x48] sm:$0xf]
      %v250 = vld [vmem:[%s193 + $0x4c] sm:$0xf]
      %v251 = vld [vmem:[%s193 + $0x50] sm:$0xf]
      %v252 = vld [vmem:[%s193 + $0x54] sm:$0xf]
      %v253 = vld [vmem:[%s193 + $0x58] sm:$0xf]
      %v254 = vld [vmem:[%s193 + $0x5c] sm:$0xf]
      %v255 = vld [vmem:[%s193 + $0x60] sm:$0xf]
      %v256 = vld [vmem:[%s193 + $0x64] sm:$0xf]
      %v257 = vld [vmem:[%s193 + $0x68] sm:$0xf]
      %v258 = vld [vmem:[%s193 + $0x6c] sm:$0xf]
      %v259 = vld [vmem:[%s193 + $0x70] sm:$0xf]
      %v260 = vld [vmem:[%s193 + $0x74] sm:$0xf]
      %v261 = vld [vmem:[%s193 + $0x78] sm:$0xf]
      %v262 = vld [vmem:[%s193 + $0x7c] sm:$0xf]
      %v263 = vld [vmem:[%s193 + $0x80] sm:$0xf]
      %v264 = vld [vmem:[%s193 + $0x84] sm:$0xf]
      %v265 = vld [vmem:[%s193 + $0x88] sm:$0xf]
      %v266 = vld [vmem:[%s193 + $0x8c] sm:$0xf]
      %v267 = vld [vmem:[%s193 + $0x90] sm:$0xf]
      %v268 = vld [vmem:[%s193 + $0x94] sm:$0xf]
      %v269 = vld [vmem:[%s193 + $0x98] sm:$0xf]
      %v270 = vld [vmem:[%s193 + $0x9c] sm:$0xf]
      %v271 = vld [vmem:[%s193 + $0xa0] sm:$0xf]
      %v272 = vld [vmem:[%s193 + $0xa4] sm:$0xf]
      %v273 = vld [vmem:[%s193 + $0xa8] sm:$0xf]
      %v274 = vld [vmem:[%s193 + $0xac] sm:$0xf]
      %v275 = vld [vmem:[%s193 + $0xb0] sm:$0xf]
      %v276 = vld [vmem:[%s193 + $0xb4] sm:$0xf]
      %v277 = vld [vmem:[%s193 + $0xb8] sm:$0xf]
      %v278 = vld [vmem:[%s193 + $0xbc] sm:$0xf]
      %v279 = vld [vmem:[%s193 + $0xc0] sm:$0xf]
      %v280 = vld [vmem:[%s193 + $0xc4] sm:$0xf]
      %v281 = vld [vmem:[%s193 + $0xc8] sm:$0xf]
      %v282 = vld [vmem:[%s193 + $0xcc] sm:$0xf]
      %v283 = vld [vmem:[%s193 + $0xd0] sm:$0xf]
      %v284 = vld [vmem:[%s193 + $0xd4] sm:$0xf]
      %v285 = vld [vmem:[%s193 + $0xd8] sm:$0xf]
      %v286 = vld [vmem:[%s193 + $0xdc] sm:$0xf]
      %v287 = vld [vmem:[%s193 + $0xe0] sm:$0xf]
      %v288 = vld [vmem:[%s193 + $0xe4] sm:$0xf]
      %v289 = vld [vmem:[%s193 + $0xe8] sm:$0xf]
      %v290 = vld [vmem:[%s193 + $0xec] sm:$0xf]
      %v291 = vld [vmem:[%s193 + $0xf0] sm:$0xf]
      %v292 = vld [vmem:[%s193 + $0xf4] sm:$0xf]
      %v293 = vld [vmem:[%s193 + $0xf8] sm:$0xf]
      %v294 = vld [vmem:[%s193 + $0xfc] sm:$0xf]
      %v295 = vld [vmem:[%s193 + $0x100] sm:$0xf]
      %v296 = vld [vmem:[%s193 + $0x104] sm:$0xf]
      %v297 = vld [vmem:[%s193 + $0x108] sm:$0xf]
      %v298 = vld [vmem:[%s193 + $0x10c] sm:$0xf]
      %v299 = vld [vmem:[%s193 + $0x110] sm:$0xf]
      %v300 = vld [vmem:[%s193 + $0x114] sm:$0xf]
      %v301 = vld [vmem:[%s193 + $0x118] sm:$0xf]
      %v302 = vld [vmem:[%s193 + $0x11c] sm:$0xf]
      %v303 = vld [vmem:[%s193 + $0x120] sm:$0xf]
      %v304 = vld [vmem:[%s193 + $0x124] sm:$0xf]
      %v305 = vld [vmem:[%s193 + $0x128] sm:$0xf]
      %v306 = vld [vmem:[%s193 + $0x12c] sm:$0xf]
      %v307 = vld [vmem:[%s193 + $0x130] sm:$0xf]
      %v308 = vld [vmem:[%s193 + $0x134] sm:$0xf]
      %v309 = vld [vmem:[%s193 + $0x138] sm:$0xf]
      %v310 = vld [vmem:[%s193 + $0x13c] sm:$0xf]
      %v311 = vld [vmem:[%s193 + $0x140] sm:$0xf]
      %v312 = vld [vmem:[%s193 + $0x144] sm:$0xf]
      %v313 = vld [vmem:[%s193 + $0x148] sm:$0xf]
      %v314 = vld [vmem:[%s193 + $0x14c] sm:$0xf]
      %v315 = vld [vmem:[%s193 + $0x150] sm:$0xf]
      %v316 = vld [vmem:[%s193 + $0x154] sm:$0xf]
      %v317 = vld [vmem:[%s193 + $0x158] sm:$0xf]
      %v318 = vld [vmem:[%s193 + $0x15c] sm:$0xf]
      %v319 = vld [vmem:[%s193 + $0x160] sm:$0xf]
      %v320 = vld [vmem:[%s193 + $0x164] sm:$0xf]
      %v321 = vld [vmem:[%s193 + $0x168] sm:$0xf]
      %v322 = vld [vmem:[%s193 + $0x16c] sm:$0xf]
      %v323 = vld [vmem:[%s193 + $0x170] sm:$0xf]
      %v324 = vld [vmem:[%s193 + $0x174] sm:$0xf]
      %v325 = vld [vmem:[%s193 + $0x178] sm:$0xf]
      %v326 = vld [vmem:[%s193 + $0x17c] sm:$0xf]
      %v327 = vld [vmem:[%s193 + $0x180] sm:$0xf]
      %v328 = vld [vmem:[%s193 + $0x184] sm:$0xf]
      %v329 = vld [vmem:[%s193 + $0x188] sm:$0xf]
      %v330 = vld [vmem:[%s193 + $0x18c] sm:$0xf]
      %v331 = vld [vmem:[%s193 + $0x190] sm:$0xf]
      %v332 = vld [vmem:[%s193 + $0x194] sm:$0xf]
      %v333 = vld [vmem:[%s193 + $0x198] sm:$0xf]
      %v334 = vld [vmem:[%s193 + $0x19c] sm:$0xf]
      %v335 = vld [vmem:[%s193 + $0x1a0] sm:$0xf]
      %v336 = vld [vmem:[%s193 + $0x1a4] sm:$0xf]
      %v337 = vld [vmem:[%s193 + $0x1a8] sm:$0xf]
      %v338 = vld [vmem:[%s193 + $0x1ac] sm:$0xf]
      %v339 = vld [vmem:[%s193 + $0x1b0] sm:$0xf]
      %v340 = vld [vmem:[%s193 + $0x1b4] sm:$0xf]
      %v341 = vld [vmem:[%s193 + $0x1b8] sm:$0xf]
      %v342 = vld [vmem:[%s193 + $0x1bc] sm:$0xf]
      %v343 = vld [vmem:[%s193 + $0x1c0] sm:$0xf]
      %v344 = vld [vmem:[%s193 + $0x1c4] sm:$0xf]
      %v345 = vld [vmem:[%s193 + $0x1c8] sm:$0xf]
      %v346 = vld [vmem:[%s193 + $0x1cc] sm:$0xf]
      %v347 = vld [vmem:[%s193 + $0x1d0] sm:$0xf]
      %v348 = vld [vmem:[%s193 + $0x1d4] sm:$0xf]
      %v349 = vld [vmem:[%s193 + $0x1d8] sm:$0xf]
      %v350 = vld [vmem:[%s193 + $0x1dc] sm:$0xf]
      %v351 = vld [vmem:[%s193 + $0x1e0] sm:$0xf]
      %v352 = vld [vmem:[%s193 + $0x1e4] sm:$0xf]
      %v353 = vld [vmem:[%s193 + $0x1e8] sm:$0xf]
      %v354 = vld [vmem:[%s193 + $0x1ec] sm:$0xf]
      %v355 = vld [vmem:[%s193 + $0x1f0] sm:$0xf]
      %v356 = vld [vmem:[%s193 + $0x1f4] sm:$0xf]
      %v357 = vld [vmem:[%s193 + $0x1f8] sm:$0xf]
      %v358 = vld [vmem:[%s193 + $0x1fc] sm:$0xf]
      %v359 = vld [vmem:[%s193 + $0x200] sm:$0xf]
      %v360 = vld [vmem:[%s193 + $0x204] sm:$0xf]
      %v361 = vld [vmem:[%s193 + $0x208] sm:$0xf]
      %v362 = vld [vmem:[%s193 + $0x20c] sm:$0xf]
      %v363 = vld [vmem:[%s193 + $0x210] sm:$0xf]
      %v364 = vld [vmem:[%s193 + $0x214] sm:$0xf]
      %v365 = vld [vmem:[%s193 + $0x218] sm:$0xf]
      %v366 = vld [vmem:[%s193 + $0x21c] sm:$0xf]
      %v367 = vld [vmem:[%s193 + $0x220] sm:$0xf]
      %v368 = vld [vmem:[%s193 + $0x224] sm:$0xf]
      %v369 = vld [vmem:[%s193 + $0x228] sm:$0xf]
      %v370 = vld [vmem:[%s193 + $0x22c] sm:$0xf]
      %v371 = vld [vmem:[%s193 + $0x230] sm:$0xf]
      %v372 = vld [vmem:[%s193 + $0x234] sm:$0xf]
      %v373 = vld [vmem:[%s193 + $0x238] sm:$0xf]
      %v374 = vld [vmem:[%s193 + $0x23c] sm:$0xf]
      %v375 = vld [vmem:[%s193 + $0x240] sm:$0xf]
      %v376 = vld [vmem:[%s193 + $0x244] sm:$0xf]
      %v377 = vld [vmem:[%s193 + $0x248] sm:$0xf]
      %v378 = vld [vmem:[%s193 + $0x24c] sm:$0xf]
      %v379 = vld [vmem:[%s193 + $0x250] sm:$0xf]
      %v380 = vld [vmem:[%s193 + $0x254] sm:$0xf]
      %v381 = vld [vmem:[%s193 + $0x258] sm:$0xf]
      %v382 = vld [vmem:[%s193 + $0x25c] sm:$0xf]
      %v383 = vld [vmem:[%s193 + $0x260] sm:$0xf]
      %v384 = vld [vmem:[%s193 + $0x264] sm:$0xf]
      %v385 = vld [vmem:[%s193 + $0x268] sm:$0xf]
      %v386 = vld [vmem:[%s193 + $0x26c] sm:$0xf]
      %v387 = vld [vmem:[%s193 + $0x270] sm:$0xf]
      %v388 = vld [vmem:[%s193 + $0x274] sm:$0xf]
      %v389 = vld [vmem:[%s193 + $0x278] sm:$0xf]
      %v390 = vld [vmem:[%s193 + $0x27c] sm:$0xf]
      %v391 = vld [vmem:[%s193 + $0x280] sm:$0xf]
      %v392 = vld [vmem:[%s193 + $0x284] sm:$0xf]
      %v393 = vld [vmem:[%s193 + $0x288] sm:$0xf]
      %v394 = vld [vmem:[%s193 + $0x28c] sm:$0xf]
      %v395 = vld [vmem:[%s193 + $0x290] sm:$0xf]
      %v396 = vld [vmem:[%s193 + $0x294] sm:$0xf]
      %v397 = vld [vmem:[%s193 + $0x298] sm:$0xf]
      %v398 = vld [vmem:[%s193 + $0x29c] sm:$0xf]
      %v399 = vld [vmem:[%s193 + $0x2a0] sm:$0xf]
      %v400 = vld [vmem:[%s193 + $0x2a4] sm:$0xf]
      %v401 = vld [vmem:[%s193 + $0x2a8] sm:$0xf]
      %v402 = vld [vmem:[%s193 + $0x2ac] sm:$0xf]
      %v403 = vld [vmem:[%s193 + $0x2b0] sm:$0xf]
      %v404 = vld [vmem:[%s193 + $0x2b4] sm:$0xf]
      %v405 = vld [vmem:[%s193 + $0x2b8] sm:$0xf]
      %v406 = vld [vmem:[%s193 + $0x2bc] sm:$0xf]
      %v407 = vld [vmem:[%s193 + $0x2c0] sm:$0xf]
      %v408 = vld [vmem:[%s193 + $0x2c4] sm:$0xf]
      %v409 = vld [vmem:[%s193 + $0x2c8] sm:$0xf]
      %v410 = vld [vmem:[%s193 + $0x2cc] sm:$0xf]
      %v411 = vld [vmem:[%s193 + $0x2d0] sm:$0xf]
      %v412 = vld [vmem:[%s193 + $0x2d4] sm:$0xf]
      %v413 = vld [vmem:[%s193 + $0x2d8] sm:$0xf]
      %v414 = vld [vmem:[%s193 + $0x2dc] sm:$0xf]
      %v415 = vld [vmem:[%s193 + $0x2e0] sm:$0xf]
      %v416 = vld [vmem:[%s193 + $0x2e4] sm:$0xf]
      %v417 = vld [vmem:[%s193 + $0x2e8] sm:$0xf]
      %v418 = vld [vmem:[%s193 + $0x2ec] sm:$0xf]
      %v419 = vld [vmem:[%s193 + $0x2f0] sm:$0xf]
      %v420 = vld [vmem:[%s193 + $0x2f4] sm:$0xf]
      %v421 = vld [vmem:[%s193 + $0x2f8] sm:$0xf]
      %v422 = vld [vmem:[%s193 + $0x2fc] sm:$0xf]
      %v423 = vld [vmem:[%s193 + $0x300] sm:$0xf]
      %v424 = vld [vmem:[%s193 + $0x304] sm:$0xf]
      %v425 = vld [vmem:[%s193 + $0x308] sm:$0xf]
      %v426 = vld [vmem:[%s193 + $0x30c] sm:$0xf]
      %v427 = vld [vmem:[%s193 + $0x310] sm:$0xf]
      %v428 = vld [vmem:[%s193 + $0x314] sm:$0xf]
      %v429 = vld [vmem:[%s193 + $0x318] sm:$0xf]
      %v430 = vld [vmem:[%s193 + $0x31c] sm:$0xf]
      %v431 = vld [vmem:[%s193 + $0x320] sm:$0xf]
      %v432 = vld [vmem:[%s193 + $0x324] sm:$0xf]
      %v433 = vld [vmem:[%s193 + $0x328] sm:$0xf]
      %v434 = vld [vmem:[%s193 + $0x32c] sm:$0xf]
      %v435 = vld [vmem:[%s193 + $0x330] sm:$0xf]
      %v436 = vld [vmem:[%s193 + $0x334] sm:$0xf]
      %v437 = vld [vmem:[%s193 + $0x338] sm:$0xf]
      %v438 = vld [vmem:[%s193 + $0x33c] sm:$0xf]
      %v439 = vld [vmem:[%s193 + $0x340] sm:$0xf]
      %v440 = vld [vmem:[%s193 + $0x344] sm:$0xf]
      %v441 = vld [vmem:[%s193 + $0x348] sm:$0xf]
      %v442 = vld [vmem:[%s193 + $0x34c] sm:$0xf]
      %v443 = vld [vmem:[%s193 + $0x350] sm:$0xf]
      %v444 = vld [vmem:[%s193 + $0x354] sm:$0xf]
      %v445 = vld [vmem:[%s193 + $0x358] sm:$0xf]
      %v446 = vld [vmem:[%s193 + $0x35c] sm:$0xf]
      %v447 = vld [vmem:[%s1] sm:$0xff]
      %v448 = vld [vmem:[%s1 + $0x8] sm:$0xff]
      %v449 = vld [vmem:[%s1 + $0x10] sm:$0xff]
      %v450 = vld [vmem:[%s1 + $0x18] sm:$0xff]
      %452 = vset.pattern.permute.xlu0 0
      %453 = vperm.xlu0 %452, %v447
      %v454 = vpop.permute.xlu0 %453
      %457 = vset.pattern.permute.xlu0 0
      %458 = vperm.xlu0 %457, %v448
      %v459 = vpop.permute.xlu0 %458
      %462 = vset.pattern.permute.xlu0 0
      %463 = vperm.xlu0 %462, %v449
      %v464 = vpop.permute.xlu0 %463
      %467 = vset.pattern.permute.xlu0 0
      %468 = vperm.xlu0 %467, %v450
      %v469 = vpop.permute.xlu0 %468
      %v499 = vunpack.c.l.b16 %v203
      %v500 = vunpack.c.h.b16 %v203
      %v501 = vunpack.c.l.b16 %v204
      %v502 = vunpack.c.h.b16 %v204
      %v503 = vunpack.c.l.b16 %v205
      %v504 = vunpack.c.h.b16 %v205
      %v505 = vunpack.c.l.b16 %v206
      %v506 = vunpack.c.h.b16 %v206
      %v507 = vunpack.c.l.b16 %v207
      %v508 = vunpack.c.h.b16 %v207
      %v509 = vunpack.c.l.b16 %v208
      %v510 = vunpack.c.h.b16 %v208
      %v511 = vunpack.c.l.b16 %v209
      %v512 = vunpack.c.h.b16 %v209
      %v513 = vunpack.c.l.b16 %v210
      %v514 = vunpack.c.h.b16 %v210
      %v515 = vunpack.c.l.b16 %v211
      %v516 = vunpack.c.h.b16 %v211
      %v517 = vunpack.c.l.b16 %v212
      %v518 = vunpack.c.h.b16 %v212
      %v519 = vunpack.c.l.b16 %v213
      %v520 = vunpack.c.h.b16 %v213
      %v521 = vunpack.c.l.b16 %v214
      %v522 = vunpack.c.h.b16 %v214
      %v523 = vunpack.c.l.b16 %v215
      %v524 = vunpack.c.h.b16 %v215
      %v525 = vunpack.c.l.b16 %v216
      %v526 = vunpack.c.h.b16 %v216
      %v527 = vunpack.c.l.b16 %v217
      %v528 = vunpack.c.h.b16 %v217
      %v529 = vunpack.c.l.b16 %v218
      %v530 = vunpack.c.h.b16 %v218
      %v531 = vunpack.c.l.b16 %v219
      %v532 = vunpack.c.h.b16 %v219
      %v533 = vunpack.c.l.b16 %v220
      %v534 = vunpack.c.h.b16 %v220
      %v535 = vunpack.c.l.b16 %v221
      %v536 = vunpack.c.h.b16 %v221
      %v537 = vunpack.c.l.b16 %v222
      %v538 = vunpack.c.h.b16 %v222
      %v539 = vunpack.c.l.b16 %v223
      %v540 = vunpack.c.h.b16 %v223
      %v541 = vunpack.c.l.b16 %v224
      %v542 = vunpack.c.h.b16 %v224
      %v543 = vunpack.c.l.b16 %v225
      %v544 = vunpack.c.h.b16 %v225
      %v545 = vunpack.c.l.b16 %v226
      %v546 = vunpack.c.h.b16 %v226
      %v547 = vunpack.c.l.b16 %v227
      %v548 = vunpack.c.h.b16 %v227
      %v549 = vunpack.c.l.b16 %v228
      %v550 = vunpack.c.h.b16 %v228
      %v551 = vunpack.c.l.b16 %v229
      %v552 = vunpack.c.h.b16 %v229
      %v553 = vunpack.c.l.b16 %v230
      %v554 = vunpack.c.h.b16 %v230
      %v555 = vpack.c.b16 %v513, %v499
      %v556 = vpack.c.b16 %v514, %v500
      %v557 = vpack.c.b16 %v515, %v501
      %v558 = vpack.c.b16 %v516, %v502
      %v559 = vpack.c.b16 %v517, %v503
      %v560 = vpack.c.b16 %v518, %v504
      %v561 = vpack.c.b16 %v519, %v505
      %v562 = vpack.c.b16 %v520, %v506
      %v563 = vpack.c.b16 %v521, %v507
      %v564 = vpack.c.b16 %v522, %v508
      %v565 = vpack.c.b16 %v523, %v509
      %v566 = vpack.c.b16 %v524, %v510
      %v567 = vpack.c.b16 %v525, %v511
      %v568 = vpack.c.b16 %v526, %v512
      %v569 = vpack.c.b16 %v541, %v527
      %v570 = vpack.c.b16 %v542, %v528
      %v571 = vpack.c.b16 %v543, %v529
      %v572 = vpack.c.b16 %v544, %v530
      %v573 = vpack.c.b16 %v545, %v531
      %v574 = vpack.c.b16 %v546, %v532
      %v575 = vpack.c.b16 %v547, %v533
      %v576 = vpack.c.b16 %v548, %v534
      %v577 = vpack.c.b16 %v549, %v535
      %v578 = vpack.c.b16 %v550, %v536
      %v579 = vpack.c.b16 %v551, %v537
      %v580 = vpack.c.b16 %v552, %v538
      %v581 = vpack.c.b16 %v553, %v539
      %v582 = vpack.c.b16 %v554, %v540
      %v825 = vunpack.c.l.b16 %v231
      %v826 = vunpack.c.l.b16 %v232
      %v827 = vunpack.c.l.b16 %v233
      %v828 = vunpack.c.l.b16 %v234
      %v829 = vunpack.c.l.b16 %v235
      %v830 = vunpack.c.l.b16 %v236
      %v831 = vunpack.c.l.b16 %v237
      %v832 = vunpack.c.l.b16 %v238
      %v833 = vunpack.c.l.b16 %v239
      %v834 = vunpack.c.l.b16 %v240
      %v835 = vunpack.c.l.b16 %v241
      %v836 = vunpack.c.l.b16 %v242
      %v837 = vunpack.c.l.b16 %v243
      %v838 = vunpack.c.l.b16 %v244
      %v839 = vunpack.c.l.b16 %v245
      %v840 = vunpack.c.l.b16 %v246
      %v841 = vunpack.c.l.b16 %v247
      %v842 = vunpack.c.l.b16 %v248
      %v843 = vunpack.c.l.b16 %v249
      %v844 = vunpack.c.l.b16 %v250
      %v845 = vunpack.c.l.b16 %v251
      %v846 = vunpack.c.l.b16 %v252
      %v847 = vunpack.c.l.b16 %v253
      %v848 = vunpack.c.l.b16 %v254
      %v849 = vunpack.c.l.b16 %v255
      %v850 = vunpack.c.l.b16 %v256
      %v851 = vunpack.c.l.b16 %v257
      %v852 = vunpack.c.l.b16 %v258
      %v853 = vunpack.c.l.b16 %v259
      %v854 = vunpack.c.l.b16 %v260
      %v855 = vunpack.c.l.b16 %v261
      %v856 = vunpack.c.l.b16 %v262
      %v857 = vunpack.c.l.b16 %v263
      %v858 = vunpack.c.l.b16 %v264
      %v859 = vunpack.c.l.b16 %v265
      %v860 = vunpack.c.l.b16 %v266
      %v861 = vunpack.c.l.b16 %v267
      %v862 = vunpack.c.l.b16 %v268
      %v863 = vunpack.c.l.b16 %v269
      %v864 = vunpack.c.l.b16 %v270
      %v865 = vunpack.c.l.b16 %v271
      %v866 = vunpack.c.l.b16 %v272
      %v867 = vunpack.c.l.b16 %v273
      %v868 = vunpack.c.l.b16 %v274
      %v869 = vunpack.c.l.b16 %v275
      %v870 = vunpack.c.l.b16 %v276
      %v871 = vunpack.c.l.b16 %v277
      %v872 = vunpack.c.l.b16 %v278
      %v873 = vunpack.c.l.b16 %v279
      %v874 = vunpack.c.l.b16 %v280
      %v875 = vunpack.c.l.b16 %v281
      %v876 = vunpack.c.l.b16 %v282
      %v877 = vunpack.c.l.b16 %v283
      %v878 = vunpack.c.l.b16 %v284
      %v879 = vunpack.c.l.b16 %v285
      %v880 = vunpack.c.l.b16 %v286
      %v881 = vunpack.c.l.b16 %v287
      %v882 = vunpack.c.l.b16 %v288
      %v883 = vunpack.c.l.b16 %v289
      %v884 = vunpack.c.l.b16 %v290
      %v885 = vunpack.c.l.b16 %v291
      %v886 = vunpack.c.l.b16 %v292
      %v887 = vunpack.c.l.b16 %v293
      %v888 = vunpack.c.l.b16 %v294
      %v889 = vunpack.c.l.b16 %v295
      %v890 = vunpack.c.l.b16 %v296
      %v891 = vunpack.c.l.b16 %v297
      %v892 = vunpack.c.l.b16 %v298
      %v893 = vunpack.c.l.b16 %v299
      %v894 = vunpack.c.l.b16 %v300
      %v895 = vunpack.c.l.b16 %v301
      %v896 = vunpack.c.l.b16 %v302
      %v897 = vunpack.c.l.b16 %v303
      %v898 = vunpack.c.l.b16 %v304
      %v899 = vunpack.c.l.b16 %v305
      %v900 = vunpack.c.l.b16 %v306
      %v901 = vunpack.c.l.b16 %v307
      %v902 = vunpack.c.l.b16 %v308
      %v903 = vunpack.c.l.b16 %v309
      %v904 = vunpack.c.l.b16 %v310
      %v905 = vunpack.c.l.b16 %v311
      %v906 = vunpack.c.l.b16 %v312
      %v907 = vunpack.c.l.b16 %v313
      %v908 = vunpack.c.l.b16 %v314
      %v909 = vunpack.c.l.b16 %v315
      %v910 = vunpack.c.l.b16 %v316
      %v911 = vunpack.c.l.b16 %v317
      %v912 = vunpack.c.l.b16 %v318
      %v913 = vunpack.c.l.b16 %v319
      %v914 = vunpack.c.l.b16 %v320
      %v915 = vunpack.c.l.b16 %v321
      %v916 = vunpack.c.l.b16 %v322
      %v917 = vunpack.c.l.b16 %v323
      %v918 = vunpack.c.l.b16 %v324
      %v919 = vunpack.c.l.b16 %v325
      %v920 = vunpack.c.l.b16 %v326
      %v921 = vunpack.c.l.b16 %v327
      %v922 = vunpack.c.l.b16 %v328
      %v923 = vunpack.c.l.b16 %v329
      %v924 = vunpack.c.l.b16 %v330
      %v925 = vunpack.c.l.b16 %v331
      %v926 = vunpack.c.l.b16 %v332
      %v927 = vunpack.c.l.b16 %v333
      %v928 = vunpack.c.l.b16 %v334
      %v929 = vunpack.c.l.b16 %v335
      %v930 = vunpack.c.l.b16 %v336
      %v931 = vunpack.c.l.b16 %v337
      %v932 = vunpack.c.l.b16 %v338
      %v933 = vunpack.c.l.b16 %v339
      %v934 = vunpack.c.l.b16 %v340
      %v935 = vunpack.c.l.b16 %v341
      %v936 = vunpack.c.l.b16 %v342
      %v937 = vunpack.c.l.b16 %v343
      %v938 = vunpack.c.l.b16 %v344
      %v939 = vunpack.c.l.b16 %v345
      %v940 = vunpack.c.l.b16 %v346
      %v941 = vunpack.c.l.b16 %v347
      %v942 = vunpack.c.l.b16 %v348
      %v943 = vunpack.c.l.b16 %v349
      %v944 = vunpack.c.l.b16 %v350
      %v945 = vunpack.c.l.b16 %v351
      %v946 = vunpack.c.l.b16 %v352
      %v947 = vunpack.c.l.b16 %v353
      %v948 = vunpack.c.l.b16 %v354
      %v949 = vunpack.c.l.b16 %v355
      %v950 = vunpack.c.l.b16 %v356
      %v951 = vunpack.c.l.b16 %v357
      %v952 = vunpack.c.l.b16 %v358
      %v953 = vunpack.c.l.b16 %v359
      %v954 = vunpack.c.l.b16 %v360
      %v955 = vunpack.c.l.b16 %v361
      %v956 = vunpack.c.l.b16 %v362
      %v957 = vunpack.c.l.b16 %v363
      %v958 = vunpack.c.l.b16 %v364
      %v959 = vunpack.c.l.b16 %v365
      %v960 = vunpack.c.l.b16 %v366
      %v961 = vunpack.c.l.b16 %v367
      %v962 = vunpack.c.l.b16 %v368
      %v963 = vunpack.c.l.b16 %v369
      %v964 = vunpack.c.l.b16 %v370
      %v965 = vunpack.c.l.b16 %v371
      %v966 = vunpack.c.l.b16 %v372
      %v967 = vunpack.c.l.b16 %v373
      %v968 = vunpack.c.l.b16 %v374
      %v969 = vunpack.c.l.b16 %v375
      %v970 = vunpack.c.l.b16 %v376
      %v971 = vunpack.c.l.b16 %v377
      %v972 = vunpack.c.l.b16 %v378
      %v973 = vunpack.c.l.b16 %v379
      %v974 = vunpack.c.l.b16 %v380
      %v975 = vunpack.c.l.b16 %v381
      %v976 = vunpack.c.l.b16 %v382
      %v977 = vunpack.c.l.b16 %v383
      %v978 = vunpack.c.l.b16 %v384
      %v979 = vunpack.c.l.b16 %v385
      %v980 = vunpack.c.l.b16 %v386
      %v981 = vunpack.c.l.b16 %v387
      %v982 = vunpack.c.l.b16 %v388
      %v983 = vunpack.c.l.b16 %v389
      %v984 = vunpack.c.l.b16 %v390
      %v985 = vunpack.c.l.b16 %v391
      %v986 = vunpack.c.l.b16 %v392
      %v987 = vunpack.c.l.b16 %v393
      %v988 = vunpack.c.l.b16 %v394
      %v989 = vunpack.c.l.b16 %v395
      %v990 = vunpack.c.l.b16 %v396
      %v991 = vunpack.c.l.b16 %v397
      %v992 = vunpack.c.l.b16 %v398
      %v993 = vunpack.c.l.b16 %v399
      %v994 = vunpack.c.l.b16 %v400
      %v995 = vunpack.c.l.b16 %v401
      %v996 = vunpack.c.l.b16 %v402
      %v997 = vunpack.c.l.b16 %v403
      %v998 = vunpack.c.l.b16 %v404
      %v999 = vunpack.c.l.b16 %v405
      %v1000 = vunpack.c.l.b16 %v406
      %v1001 = vunpack.c.l.b16 %v407
      %v1002 = vunpack.c.l.b16 %v408
      %v1003 = vunpack.c.l.b16 %v409
      %v1004 = vunpack.c.l.b16 %v410
      %v1005 = vunpack.c.l.b16 %v411
      %v1006 = vunpack.c.l.b16 %v412
      %v1007 = vunpack.c.l.b16 %v413
      %v1008 = vunpack.c.l.b16 %v414
      %v1009 = vunpack.c.l.b16 %v415
      %v1010 = vunpack.c.l.b16 %v416
      %v1011 = vunpack.c.l.b16 %v417
      %v1012 = vunpack.c.l.b16 %v418
      %v1013 = vunpack.c.l.b16 %v419
      %v1014 = vunpack.c.l.b16 %v420
      %v1015 = vunpack.c.l.b16 %v421
      %v1016 = vunpack.c.l.b16 %v422
      %v1017 = vunpack.c.l.b16 %v423
      %v1018 = vunpack.c.l.b16 %v424
      %v1019 = vunpack.c.l.b16 %v425
      %v1020 = vunpack.c.l.b16 %v426
      %v1021 = vunpack.c.l.b16 %v427
      %v1022 = vunpack.c.l.b16 %v428
      %v1023 = vunpack.c.l.b16 %v429
      %v1024 = vunpack.c.l.b16 %v430
      %v1025 = vunpack.c.l.b16 %v431
      %v1026 = vunpack.c.l.b16 %v432
      %v1027 = vunpack.c.l.b16 %v433
      %v1028 = vunpack.c.l.b16 %v434
      %v1029 = vunpack.c.l.b16 %v435
      %v1030 = vunpack.c.l.b16 %v436
      %v1031 = vunpack.c.l.b16 %v437
      %v1032 = vunpack.c.l.b16 %v438
      %v1033 = vunpack.c.l.b16 %v439
      %v1034 = vunpack.c.l.b16 %v440
      %v1035 = vunpack.c.l.b16 %v441
      %v1036 = vunpack.c.l.b16 %v442
      %v1037 = vunpack.c.l.b16 %v443
      %v1038 = vunpack.c.l.b16 %v444
      %v1039 = vunpack.c.l.b16 %v445
      %v1040 = vunpack.c.l.b16 %v446
      %v1041 = vpack.c.b16 %v826, %v825
      %v1042 = vpack.c.b16 %v828, %v827
      %v1043 = vpack.c.b16 %v830, %v829
      %v1044 = vpack.c.b16 %v832, %v831
      %v1045 = vpack.c.b16 %v834, %v833
      %v1046 = vpack.c.b16 %v836, %v835
      %v1047 = vpack.c.b16 %v838, %v837
      %v1048 = vpack.c.b16 %v840, %v839
      %v1049 = vpack.c.b16 %v842, %v841
      %v1050 = vpack.c.b16 %v844, %v843
      %v1051 = vpack.c.b16 %v846, %v845
      %v1052 = vpack.c.b16 %v848, %v847
      %v1053 = vpack.c.b16 %v850, %v849
      %v1054 = vpack.c.b16 %v852, %v851
      %v1055 = vpack.c.b16 %v854, %v853
      %v1056 = vpack.c.b16 %v856, %v855
      %v1057 = vpack.c.b16 %v858, %v857
      %v1058 = vpack.c.b16 %v860, %v859
      %v1059 = vpack.c.b16 %v862, %v861
      %v1060 = vpack.c.b16 %v864, %v863
      %v1061 = vpack.c.b16 %v866, %v865
      %v1062 = vpack.c.b16 %v868, %v867
      %v1063 = vpack.c.b16 %v870, %v869
      %v1064 = vpack.c.b16 %v872, %v871
      %v1065 = vpack.c.b16 %v874, %v873
      %v1066 = vpack.c.b16 %v876, %v875
      %v1067 = vpack.c.b16 %v878, %v877
      %v1068 = vpack.c.b16 %v880, %v879
      %v1069 = vpack.c.b16 %v882, %v881
      %v1070 = vpack.c.b16 %v884, %v883
      %v1071 = vpack.c.b16 %v886, %v885
      %v1072 = vpack.c.b16 %v888, %v887
      %v1073 = vpack.c.b16 %v890, %v889
      %v1074 = vpack.c.b16 %v892, %v891
      %v1075 = vpack.c.b16 %v894, %v893
      %v1076 = vpack.c.b16 %v896, %v895
      %v1077 = vpack.c.b16 %v898, %v897
      %v1078 = vpack.c.b16 %v900, %v899
      %v1079 = vpack.c.b16 %v902, %v901
      %v1080 = vpack.c.b16 %v904, %v903
      %v1081 = vpack.c.b16 %v906, %v905
      %v1082 = vpack.c.b16 %v908, %v907
      %v1083 = vpack.c.b16 %v910, %v909
      %v1084 = vpack.c.b16 %v912, %v911
      %v1085 = vpack.c.b16 %v914, %v913
      %v1086 = vpack.c.b16 %v916, %v915
      %v1087 = vpack.c.b16 %v918, %v917
      %v1088 = vpack.c.b16 %v920, %v919
      %v1089 = vpack.c.b16 %v922, %v921
      %v1090 = vpack.c.b16 %v924, %v923
      %v1091 = vpack.c.b16 %v926, %v925
      %v1092 = vpack.c.b16 %v928, %v927
      %v1093 = vpack.c.b16 %v930, %v929
      %v1094 = vpack.c.b16 %v932, %v931
      %v1095 = vpack.c.b16 %v934, %v933
      %v1096 = vpack.c.b16 %v936, %v935
      %v1097 = vpack.c.b16 %v938, %v937
      %v1098 = vpack.c.b16 %v940, %v939
      %v1099 = vpack.c.b16 %v942, %v941
      %v1100 = vpack.c.b16 %v944, %v943
      %v1101 = vpack.c.b16 %v946, %v945
      %v1102 = vpack.c.b16 %v948, %v947
      %v1103 = vpack.c.b16 %v950, %v949
      %v1104 = vpack.c.b16 %v952, %v951
      %v1105 = vpack.c.b16 %v954, %v953
      %v1106 = vpack.c.b16 %v956, %v955
      %v1107 = vpack.c.b16 %v958, %v957
      %v1108 = vpack.c.b16 %v960, %v959
      %v1109 = vpack.c.b16 %v962, %v961
      %v1110 = vpack.c.b16 %v964, %v963
      %v1111 = vpack.c.b16 %v966, %v965
      %v1112 = vpack.c.b16 %v968, %v967
      %v1113 = vpack.c.b16 %v970, %v969
      %v1114 = vpack.c.b16 %v972, %v971
      %v1115 = vpack.c.b16 %v974, %v973
      %v1116 = vpack.c.b16 %v976, %v975
      %v1117 = vpack.c.b16 %v978, %v977
      %v1118 = vpack.c.b16 %v980, %v979
      %v1119 = vpack.c.b16 %v982, %v981
      %v1120 = vpack.c.b16 %v984, %v983
      %v1121 = vpack.c.b16 %v986, %v985
      %v1122 = vpack.c.b16 %v988, %v987
      %v1123 = vpack.c.b16 %v990, %v989
      %v1124 = vpack.c.b16 %v992, %v991
      %v1125 = vpack.c.b16 %v994, %v993
      %v1126 = vpack.c.b16 %v996, %v995
      %v1127 = vpack.c.b16 %v998, %v997
      %v1128 = vpack.c.b16 %v1000, %v999
      %v1129 = vpack.c.b16 %v1002, %v1001
      %v1130 = vpack.c.b16 %v1004, %v1003
      %v1131 = vpack.c.b16 %v1006, %v1005
      %v1132 = vpack.c.b16 %v1008, %v1007
      %v1133 = vpack.c.b16 %v1010, %v1009
      %v1134 = vpack.c.b16 %v1012, %v1011
      %v1135 = vpack.c.b16 %v1014, %v1013
      %v1136 = vpack.c.b16 %v1016, %v1015
      %v1137 = vpack.c.b16 %v1018, %v1017
      %v1138 = vpack.c.b16 %v1020, %v1019
      %v1139 = vpack.c.b16 %v1022, %v1021
      %v1140 = vpack.c.b16 %v1024, %v1023
      %v1141 = vpack.c.b16 %v1026, %v1025
      %v1142 = vpack.c.b16 %v1028, %v1027
      %v1143 = vpack.c.b16 %v1030, %v1029
      %v1144 = vpack.c.b16 %v1032, %v1031
      %v1145 = vpack.c.b16 %v1034, %v1033
      %v1146 = vpack.c.b16 %v1036, %v1035
      %v1147 = vpack.c.b16 %v1038, %v1037
      %v1148 = vpack.c.b16 %v1040, %v1039
      %vm1257 = vcmask 523264
      %v1259 = vsel %vm1257, %v568, 0
      %v1262 = vsel %vm1257, %v582, 0
      %1264 = vmatprep.subr.bf16.mxu0 0
      %1265 = vmatpush1.bf16.msra.mxu0 %v1048
      %1266 = vmatprep.subr.bf16.mxu0 0
      %1267 = vmatpush1.bf16.msra.mxu0 %v1047
      %1268 = vmatprep.subr.bf16.mxu0 0
      %1269 = vmatpush1.bf16.msra.mxu0 %v1046
      %1270 = vmatprep.subr.bf16.mxu0 0
      %1271 = vmatpush1.bf16.msra.mxu0 %v1045
      %1272 = vmatprep.subr.bf16.mxu0 0
      %1273 = vmatpush1.bf16.msra.mxu0 %v1044
      %1274 = vmatprep.subr.bf16.mxu0 0
      %1275 = vmatpush1.bf16.msra.mxu0 %v1043
      %1276 = vmatprep.subr.bf16.mxu0 0
      %1277 = vmatpush1.bf16.msra.mxu0 %v1042
      %1278 = vmatprep.subr.bf16.mxu0 0
      %1279 = vmatpush1.bf16.msra.mxu0 %v1041
      %1280 = vmatprep.subr.bf16.mxu0 0
      %1281 = vmatpush2.bf16.msra.mxu0 %v1056
      %1282 = vmatprep.subr.bf16.mxu0 0
      %1283 = vmatpush2.bf16.msra.mxu0 %v1055
      %1284 = vmatprep.subr.bf16.mxu0 0
      %1285 = vmatpush2.bf16.msra.mxu0 %v1054
      %1286 = vmatprep.subr.bf16.mxu0 0
      %1287 = vmatpush2.bf16.msra.mxu0 %v1053
      %1288 = vmatprep.subr.bf16.mxu0 0
      %1289 = vmatpush2.bf16.msra.mxu0 %v1052
      %1290 = vmatprep.subr.bf16.mxu0 0
      %1291 = vmatpush2.bf16.msra.mxu0 %v1051
      %1292 = vmatprep.subr.bf16.mxu0 0
      %1293 = vmatpush2.bf16.msra.mxu0 %v1050
      %1294 = vmatprep.subr.bf16.mxu0 0
      %1295 = vmatpush2.bf16.msra.mxu0 %v1049
      %1296 = vmatprep.mubr.bf16.mxu0 %v556
      %1297 = vmatmul.mubr.bf16.gmra.mxu0 %v555
      %v1298 = vpop.f32.mrf.mxu0
      %v1299 = vadd.f32 %v454, %v1298
      %v1300 = vpop.f32.mrf.mxu0
      %v1301 = vpop.f32.mrf.mxu0
      %v1302 = vadd.f32 %v459, %v1301
      %v1303 = vpop.f32.mrf.mxu0
      %1304 = vmatprep.mubr.bf16.mxu0 %v570
      %1305 = vmatmul.mubr.bf16.gmra.mxu0 %v569
      %v1306 = vpop.f32.mrf.mxu0
      %v1307 = vadd.f32 %v464, %v1306
      %v1308 = vpop.f32.mrf.mxu0
      %v1309 = vpop.f32.mrf.mxu0
      %v1310 = vadd.f32 %v469, %v1309
      %v1311 = vpop.f32.mrf.mxu0
      %1312 = vdwg.mxu0
      %1313 = vmatprep.subr.bf16.mxu0 0
      %1314 = vmatpush1.bf16.msra.mxu0 %v1064
      %1315 = vmatprep.subr.bf16.mxu0 0
      %1316 = vmatpush1.bf16.msra.mxu0 %v1063
      %1317 = vmatprep.subr.bf16.mxu0 0
      %1318 = vmatpush1.bf16.msra.mxu0 %v1062
      %1319 = vmatprep.subr.bf16.mxu0 0
      %1320 = vmatpush1.bf16.msra.mxu0 %v1061
      %1321 = vmatprep.subr.bf16.mxu0 0
      %1322 = vmatpush1.bf16.msra.mxu0 %v1060
      %1323 = vmatprep.subr.bf16.mxu0 0
      %1324 = vmatpush1.bf16.msra.mxu0 %v1059
      %1325 = vmatprep.subr.bf16.mxu0 0
      %1326 = vmatpush1.bf16.msra.mxu0 %v1058
      %1327 = vmatprep.subr.bf16.mxu0 0
      %1328 = vmatpush1.bf16.msra.mxu0 %v1057
      %1329 = vmatprep.subr.bf16.mxu0 0
      %1330 = vmatpush2.bf16.msra.mxu0 %v1072
      %1331 = vmatprep.subr.bf16.mxu0 0
      %1332 = vmatpush2.bf16.msra.mxu0 %v1071
      %1333 = vmatprep.subr.bf16.mxu0 0
      %1334 = vmatpush2.bf16.msra.mxu0 %v1070
      %1335 = vmatprep.subr.bf16.mxu0 0
      %1336 = vmatpush2.bf16.msra.mxu0 %v1069
      %1337 = vmatprep.subr.bf16.mxu0 0
      %1338 = vmatpush2.bf16.msra.mxu0 %v1068
      %1339 = vmatprep.subr.bf16.mxu0 0
      %1340 = vmatpush2.bf16.msra.mxu0 %v1067
      %1341 = vmatprep.subr.bf16.mxu0 0
      %1342 = vmatpush2.bf16.msra.mxu0 %v1066
      %1343 = vmatprep.subr.bf16.mxu0 0
      %1344 = vmatpush2.bf16.msra.mxu0 %v1065
      %1345 = vmatprep.mubr.bf16.mxu0 %v558
      %1346 = vmatmul.mubr.bf16.gmra.mxu0 %v557
      %v1347 = vpop.f32.mrf.mxu0
      %v1348 = vadd.f32 %v1299, %v1347
      %v1349 = vpop.f32.mrf.mxu0
      %v1350 = vpop.f32.mrf.mxu0
      %v1351 = vadd.f32 %v1302, %v1350
      %v1352 = vpop.f32.mrf.mxu0
      %1353 = vmatprep.mubr.bf16.mxu0 %v572
      %1354 = vmatmul.mubr.bf16.gmra.mxu0 %v571
      %v1355 = vpop.f32.mrf.mxu0
      %v1356 = vadd.f32 %v1307, %v1355
      %v1357 = vpop.f32.mrf.mxu0
      %v1358 = vpop.f32.mrf.mxu0
      %v1359 = vadd.f32 %v1310, %v1358
      %v1360 = vpop.f32.mrf.mxu0
      %1361 = vdwg.mxu0
      %1362 = vmatprep.subr.bf16.mxu0 0
      %1363 = vmatpush1.bf16.msra.mxu0 %v1080
      %1364 = vmatprep.subr.bf16.mxu0 0
      %1365 = vmatpush1.bf16.msra.mxu0 %v1079
      %1366 = vmatprep.subr.bf16.mxu0 0
      %1367 = vmatpush1.bf16.msra.mxu0 %v1078
      %1368 = vmatprep.subr.bf16.mxu0 0
      %1369 = vmatpush1.bf16.msra.mxu0 %v1077
      %1370 = vmatprep.subr.bf16.mxu0 0
      %1371 = vmatpush1.bf16.msra.mxu0 %v1076
      %1372 = vmatprep.subr.bf16.mxu0 0
      %1373 = vmatpush1.bf16.msra.mxu0 %v1075
      %1374 = vmatprep.subr.bf16.mxu0 0
      %1375 = vmatpush1.bf16.msra.mxu0 %v1074
      %1376 = vmatprep.subr.bf16.mxu0 0
      %1377 = vmatpush1.bf16.msra.mxu0 %v1073
      %1378 = vmatprep.subr.bf16.mxu0 0
      %1379 = vmatpush2.bf16.msra.mxu0 %v1088
      %1380 = vmatprep.subr.bf16.mxu0 0
      %1381 = vmatpush2.bf16.msra.mxu0 %v1087
      %1382 = vmatprep.subr.bf16.mxu0 0
      %1383 = vmatpush2.bf16.msra.mxu0 %v1086
      %1384 = vmatprep.subr.bf16.mxu0 0
      %1385 = vmatpush2.bf16.msra.mxu0 %v1085
      %1386 = vmatprep.subr.bf16.mxu0 0
      %1387 = vmatpush2.bf16.msra.mxu0 %v1084
      %1388 = vmatprep.subr.bf16.mxu0 0
      %1389 = vmatpush2.bf16.msra.mxu0 %v1083
      %1390 = vmatprep.subr.bf16.mxu0 0
      %1391 = vmatpush2.bf16.msra.mxu0 %v1082
      %1392 = vmatprep.subr.bf16.mxu0 0
      %1393 = vmatpush2.bf16.msra.mxu0 %v1081
      %1394 = vmatprep.mubr.bf16.mxu0 %v560
      %1395 = vmatmul.mubr.bf16.gmra.mxu0 %v559
      %v1396 = vpop.f32.mrf.mxu0
      %v1397 = vadd.f32 %v1348, %v1396
      %v1398 = vpop.f32.mrf.mxu0
      %v1399 = vpop.f32.mrf.mxu0
      %v1400 = vadd.f32 %v1351, %v1399
      %v1401 = vpop.f32.mrf.mxu0
      %1402 = vmatprep.mubr.bf16.mxu0 %v574
      %1403 = vmatmul.mubr.bf16.gmra.mxu0 %v573
      %v1404 = vpop.f32.mrf.mxu0
      %v1405 = vadd.f32 %v1356, %v1404
      %v1406 = vpop.f32.mrf.mxu0
      %v1407 = vpop.f32.mrf.mxu0
      %v1408 = vadd.f32 %v1359, %v1407
      %v1409 = vpop.f32.mrf.mxu0
      %1410 = vdwg.mxu0
      %1411 = vmatprep.subr.bf16.mxu0 0
      %1412 = vmatpush1.bf16.msra.mxu0 %v1096
      %1413 = vmatprep.subr.bf16.mxu0 0
      %1414 = vmatpush1.bf16.msra.mxu0 %v1095
      %1415 = vmatprep.subr.bf16.mxu0 0
      %1416 = vmatpush1.bf16.msra.mxu0 %v1094
      %1417 = vmatprep.subr.bf16.mxu0 0
      %1418 = vmatpush1.bf16.msra.mxu0 %v1093
      %1419 = vmatprep.subr.bf16.mxu0 0
      %1420 = vmatpush1.bf16.msra.mxu0 %v1092
      %1421 = vmatprep.subr.bf16.mxu0 0
      %1422 = vmatpush1.bf16.msra.mxu0 %v1091
      %1423 = vmatprep.subr.bf16.mxu0 0
      %1424 = vmatpush1.bf16.msra.mxu0 %v1090
      %1425 = vmatprep.subr.bf16.mxu0 0
      %1426 = vmatpush1.bf16.msra.mxu0 %v1089
      %1427 = vmatprep.subr.bf16.mxu0 0
      %1428 = vmatpush2.bf16.msra.mxu0 %v1104
      %1429 = vmatprep.subr.bf16.mxu0 0
      %1430 = vmatpush2.bf16.msra.mxu0 %v1103
      %1431 = vmatprep.subr.bf16.mxu0 0
      %1432 = vmatpush2.bf16.msra.mxu0 %v1102
      %1433 = vmatprep.subr.bf16.mxu0 0
      %1434 = vmatpush2.bf16.msra.mxu0 %v1101
      %1435 = vmatprep.subr.bf16.mxu0 0
      %1436 = vmatpush2.bf16.msra.mxu0 %v1100
      %1437 = vmatprep.subr.bf16.mxu0 0
      %1438 = vmatpush2.bf16.msra.mxu0 %v1099
      %1439 = vmatprep.subr.bf16.mxu0 0
      %1440 = vmatpush2.bf16.msra.mxu0 %v1098
      %1441 = vmatprep.subr.bf16.mxu0 0
      %1442 = vmatpush2.bf16.msra.mxu0 %v1097
      %1443 = vmatprep.mubr.bf16.mxu0 %v562
      %1444 = vmatmul.mubr.bf16.gmra.mxu0 %v561
      %v1445 = vpop.f32.mrf.mxu0
      %v1446 = vadd.f32 %v1397, %v1445
      %v1447 = vpop.f32.mrf.mxu0
      %v1448 = vpop.f32.mrf.mxu0
      %v1449 = vadd.f32 %v1400, %v1448
      %v1450 = vpop.f32.mrf.mxu0
      %1451 = vmatprep.mubr.bf16.mxu0 %v576
      %1452 = vmatmul.mubr.bf16.gmra.mxu0 %v575
      %v1453 = vpop.f32.mrf.mxu0
      %v1454 = vadd.f32 %v1405, %v1453
      %v1455 = vpop.f32.mrf.mxu0
      %v1456 = vpop.f32.mrf.mxu0
      %v1457 = vadd.f32 %v1408, %v1456
      %v1458 = vpop.f32.mrf.mxu0
      %1459 = vdwg.mxu0
      %1460 = vmatprep.subr.bf16.mxu0 0
      %1461 = vmatpush1.bf16.msra.mxu0 %v1112
      %1462 = vmatprep.subr.bf16.mxu0 0
      %1463 = vmatpush1.bf16.msra.mxu0 %v1111
      %1464 = vmatprep.subr.bf16.mxu0 0
      %1465 = vmatpush1.bf16.msra.mxu0 %v1110
      %1466 = vmatprep.subr.bf16.mxu0 0
      %1467 = vmatpush1.bf16.msra.mxu0 %v1109
      %1468 = vmatprep.subr.bf16.mxu0 0
      %1469 = vmatpush1.bf16.msra.mxu0 %v1108
      %1470 = vmatprep.subr.bf16.mxu0 0
      %1471 = vmatpush1.bf16.msra.mxu0 %v1107
      %1472 = vmatprep.subr.bf16.mxu0 0
      %1473 = vmatpush1.bf16.msra.mxu0 %v1106
      %1474 = vmatprep.subr.bf16.mxu0 0
      %1475 = vmatpush1.bf16.msra.mxu0 %v1105
      %1476 = vmatprep.subr.bf16.mxu0 0
      %1477 = vmatpush2.bf16.msra.mxu0 %v1120
      %1478 = vmatprep.subr.bf16.mxu0 0
      %1479 = vmatpush2.bf16.msra.mxu0 %v1119
      %1480 = vmatprep.subr.bf16.mxu0 0
      %1481 = vmatpush2.bf16.msra.mxu0 %v1118
      %1482 = vmatprep.subr.bf16.mxu0 0
      %1483 = vmatpush2.bf16.msra.mxu0 %v1117
      %1484 = vmatprep.subr.bf16.mxu0 0
      %1485 = vmatpush2.bf16.msra.mxu0 %v1116
      %1486 = vmatprep.subr.bf16.mxu0 0
      %1487 = vmatpush2.bf16.msra.mxu0 %v1115
      %1488 = vmatprep.subr.bf16.mxu0 0
      %1489 = vmatpush2.bf16.msra.mxu0 %v1114
      %1490 = vmatprep.subr.bf16.mxu0 0
      %1491 = vmatpush2.bf16.msra.mxu0 %v1113
      %1492 = vmatprep.mubr.bf16.mxu0 %v564
      %1493 = vmatmul.mubr.bf16.gmra.mxu0 %v563
      %v1494 = vpop.f32.mrf.mxu0
      %v1495 = vadd.f32 %v1446, %v1494
      %v1496 = vpop.f32.mrf.mxu0
      %v1497 = vpop.f32.mrf.mxu0
      %v1498 = vadd.f32 %v1449, %v1497
      %v1499 = vpop.f32.mrf.mxu0
      %1500 = vmatprep.mubr.bf16.mxu0 %v578
      %1501 = vmatmul.mubr.bf16.gmra.mxu0 %v577
      %v1502 = vpop.f32.mrf.mxu0
      %v1503 = vadd.f32 %v1454, %v1502
      %v1504 = vpop.f32.mrf.mxu0
      %v1505 = vpop.f32.mrf.mxu0
      %v1506 = vadd.f32 %v1457, %v1505
      %v1507 = vpop.f32.mrf.mxu0
      %1508 = vdwg.mxu0
      %1509 = vmatprep.subr.bf16.mxu0 0
      %1510 = vmatpush1.bf16.msra.mxu0 %v1128
      %1511 = vmatprep.subr.bf16.mxu0 0
      %1512 = vmatpush1.bf16.msra.mxu0 %v1127
      %1513 = vmatprep.subr.bf16.mxu0 0
      %1514 = vmatpush1.bf16.msra.mxu0 %v1126
      %1515 = vmatprep.subr.bf16.mxu0 0
      %1516 = vmatpush1.bf16.msra.mxu0 %v1125
      %1517 = vmatprep.subr.bf16.mxu0 0
      %1518 = vmatpush1.bf16.msra.mxu0 %v1124
      %1519 = vmatprep.subr.bf16.mxu0 0
      %1520 = vmatpush1.bf16.msra.mxu0 %v1123
      %1521 = vmatprep.subr.bf16.mxu0 0
      %1522 = vmatpush1.bf16.msra.mxu0 %v1122
      %1523 = vmatprep.subr.bf16.mxu0 0
      %1524 = vmatpush1.bf16.msra.mxu0 %v1121
      %1525 = vmatprep.subr.bf16.mxu0 0
      %1526 = vmatpush2.bf16.msra.mxu0 %v1136
      %1527 = vmatprep.subr.bf16.mxu0 0
      %1528 = vmatpush2.bf16.msra.mxu0 %v1135
      %1529 = vmatprep.subr.bf16.mxu0 0
      %1530 = vmatpush2.bf16.msra.mxu0 %v1134
      %1531 = vmatprep.subr.bf16.mxu0 0
      %1532 = vmatpush2.bf16.msra.mxu0 %v1133
      %1533 = vmatprep.subr.bf16.mxu0 0
      %1534 = vmatpush2.bf16.msra.mxu0 %v1132
      %1535 = vmatprep.subr.bf16.mxu0 0
      %1536 = vmatpush2.bf16.msra.mxu0 %v1131
      %1537 = vmatprep.subr.bf16.mxu0 0
      %1538 = vmatpush2.bf16.msra.mxu0 %v1130
      %1539 = vmatprep.subr.bf16.mxu0 0
      %1540 = vmatpush2.bf16.msra.mxu0 %v1129
      %1541 = vmatprep.mubr.bf16.mxu0 %v566
      %1542 = vmatmul.mubr.bf16.gmra.mxu0 %v565
      %v1543 = vpop.f32.mrf.mxu0
      %v1544 = vadd.f32 %v1495, %v1543
      %v1545 = vpop.f32.mrf.mxu0
      %v1546 = vpop.f32.mrf.mxu0
      %v1547 = vadd.f32 %v1498, %v1546
      %v1548 = vpop.f32.mrf.mxu0
      %1549 = vmatprep.mubr.bf16.mxu0 %v580
      %1550 = vmatmul.mubr.bf16.gmra.mxu0 %v579
      %v1551 = vpop.f32.mrf.mxu0
      %v1552 = vadd.f32 %v1503, %v1551
      %v1553 = vpop.f32.mrf.mxu0
      %v1554 = vpop.f32.mrf.mxu0
      %v1555 = vadd.f32 %v1506, %v1554
      %v1556 = vpop.f32.mrf.mxu0
      %1557 = vdwg.mxu0
      %1558 = vmatprep.subr.bf16.mxu0 0
      %1559 = vmatpush1.bf16.msra.mxu0 %v1144
      %1560 = vmatprep.subr.bf16.mxu0 0
      %1561 = vmatpush1.bf16.msra.mxu0 %v1143
      %1562 = vmatprep.subr.bf16.mxu0 0
      %1563 = vmatpush1.bf16.msra.mxu0 %v1142
      %1564 = vmatprep.subr.bf16.mxu0 0
      %1565 = vmatpush1.bf16.msra.mxu0 %v1141
      %1566 = vmatprep.subr.bf16.mxu0 0
      %1567 = vmatpush1.bf16.msra.mxu0 %v1140
      %1568 = vmatprep.subr.bf16.mxu0 0
      %1569 = vmatpush1.bf16.msra.mxu0 %v1139
      %1570 = vmatprep.subr.bf16.mxu0 0
      %1571 = vmatpush1.bf16.msra.mxu0 %v1138
      %1572 = vmatprep.subr.bf16.mxu0 0
      %1573 = vmatpush1.bf16.msra.mxu0 %v1137
      %1574 = vmatprep.subr.bf16.mxu0 0
      %1575 = vmatpush2.bf16.msra.mxu0 0
      %1576 = vmatprep.subr.bf16.mxu0 0
      %1577 = vmatpush2.bf16.msra.mxu0 0
      %1578 = vmatprep.subr.bf16.mxu0 0
      %1579 = vmatpush2.bf16.msra.mxu0 0
      %1580 = vmatprep.subr.bf16.mxu0 0
      %1581 = vmatpush2.bf16.msra.mxu0 0
      %1582 = vmatprep.subr.bf16.mxu0 0
      %1583 = vmatpush2.bf16.msra.mxu0 %v1148
      %1584 = vmatprep.subr.bf16.mxu0 0
      %1585 = vmatpush2.bf16.msra.mxu0 %v1147
      %1586 = vmatprep.subr.bf16.mxu0 0
      %1587 = vmatpush2.bf16.msra.mxu0 %v1146
      %1588 = vmatprep.subr.bf16.mxu0 0
      %1589 = vmatpush2.bf16.msra.mxu0 %v1145
      %1590 = vmatprep.mubr.bf16.mxu0 %v1259
      %1591 = vmatmul.mubr.bf16.gmra.mxu0 %v567
      %v1592 = vpop.f32.mrf.mxu0
      %v1593 = vadd.f32 %v1544, %v1592
      %v1594 = vpop.f32.mrf.mxu0
      %v1595 = vpop.f32.mrf.mxu0
      %v1596 = vadd.f32 %v1547, %v1595
      %v1597 = vpop.f32.mrf.mxu0
      %1598 = vmatprep.mubr.bf16.mxu0 %v1262
      %1599 = vmatmul.mubr.bf16.gmra.mxu0 %v581
      %v1600 = vpop.f32.mrf.mxu0
      %v1601 = vadd.f32 %v1552, %v1600
      %v1602 = vpop.f32.mrf.mxu0
      %v1603 = vpop.f32.mrf.mxu0
      %v1604 = vadd.f32 %v1555, %v1603
      %v1605 = vpop.f32.mrf.mxu0
      %1606 = vdwg.mxu0
      %v1607 = vmax.f32 %v1593, 0.0
      %v1608 = vmax.f32 %v1596, 0.0
      %v1609 = vmax.f32 %v1601, 0.0
      %v1610 = vmax.f32 %v1604, 0.0
      %v1611 = vpack.c.bf16 %v1608, %v1607
      %v1612 = vpack.c.bf16 %v1610, %v1609
      %v1615 = vunpack.c.l.b16 %v1611
      %v1616 = vunpack.c.h.b16 %v1611
      %v1617 = vunpack.c.l.b16 %v1612
      %v1618 = vunpack.c.h.b16 %v1612
      %v1619 = vpack.c.b16 %v1615, %v1615
      %v1620 = vpack.c.b16 %v1616, %v1616
      %v1621 = vpack.c.b16 %v1617, %v1617
      %v1622 = vpack.c.b16 %v1618, %v1618
      %vm1627 = vcmask 519168
      %1628 = vst.msk [vmem:[%s201] sm:$0xf] %vm1627, %v1619
      %1629 = vst.msk [vmem:[%s201 + $0x4] sm:$0xf] %vm1627, %v1620
      %1630 = vst.msk [vmem:[%s201 + $0x8] sm:$0xf] %vm1627, %v1621
      %1631 = vst.msk [vmem:[%s201 + $0xc] sm:$0xf] %vm1627, %v1622
      %p1632 = scmp.lt.s32.totalorder %s18, 1
      %s1633 = scalar_select %p1632, %s18, 1
      %p1634 = scmp.lt.s32.totalorder %s19, 0
      %s1635 = scalar_select %p1634, %s19, 0
      %s1636 = smul.addr %s1633, 4
      %s1637 = sadd.s32 %s1635, %s1636
      %s1638 = smul.addr %s1637, 4
      %s1639 = scalar_lea.vmem %s3, %s1638
      // Predicated region
      $region33: #{autoencoder3d_forward.9} parent=31 // pred_check
        %p1640 = pneg %p116
      $region34: #{autoencoder3d_forward.9} parent=31 // pred_check_branch
        %1642 = sbr.rel (%p1640) target = $region36
      $region35: #{autoencoder3d_forward.9} parent=31 // pred_region
        _
      $region36: #{autoencoder3d_forward.9} parent=31 // pred_fallthru
        _
    $region32: #{autoencoder3d_forward.9} parent=5 // pred_fallthru
      _
    %p1643 = scmp.le.s32.totalorder 2, %s9
    // Predicated region
    $region37: #{autoencoder3d_forward.9} parent=5 // pred_check
      %p1644 = pneg %p1643
    $region38: #{autoencoder3d_forward.9} parent=5 // pred_check_branch
      %1646 = sbr.rel (%p1644) target = $region40
    $region39: #{autoencoder3d_forward.9} parent=5 // pred_region
      %s1647 = ssub.s32 %s9, 2
      // Predicated region
      $region41: #{autoencoder3d_forward.9} parent=39 // pred_check
        %p1648 = pneg %p122
      $region42: #{autoencoder3d_forward.9} parent=39 // pred_check_branch
        %1650 = sbr.rel (%p1648) target = $region44
      $region43: #{autoencoder3d_forward.9} parent=39 // pred_region
        %p1651 = scmp.lt.s32.totalorder %s20, 1
        %s1652 = scalar_select %p1651, %s20, 1
        %p1653 = scmp.lt.s32.totalorder %s21, 0
        %s1654 = scalar_select %p1653, %s21, 0
        %s1655 = smul.addr %s1652, 4
        %s1656 = sadd.s32 %s1654, %s1655
        %s1657 = smul.addr %s1656, 4
        %s1658 = scalar_lea.vmem %s3, %s1657
      $region44: #{autoencoder3d_forward.9} parent=39 // pred_fallthru
        _
    $region40: #{autoencoder3d_forward.9} parent=5 // pred_fallthru
      _
  $region6: #{autoencoder3d_forward.9} parent=0 // loop_footer
    %s13 = sadd.s32 1, %s9
  $region7: #{autoencoder3d_forward.9} parent=0 // loop_footer_branch
    %8 = sbr.rel target = $region3
  $region8: #{autoencoder3d_forward.9} parent=0 // loop_exit
    _

// kernel: autoencoder3d_forward.10
$region0: #{autoencoder3d_forward.10}
  #allocation0 [shape = 'u32[]', space=smem, size = 0x4, offset = 0x4, fixed_abs, tag = 'smem constant byte address 0x4 - core index']
  #allocation1 [shape = 'u32[144,128]{1,0:T(1,128)}', space=vmem, size = 0x12000, scoped, tag = 'internal scratch']
  %s0 = inlined_call_operand.vmem [shape: bf16[16,864], index: 0, kind: input, shape index: {}]
  %s1 = inlined_call_operand.vmem [shape: f32[16,1], index: 1, kind: input, shape index: {}]
  %s2 = inlined_call_operand.vmem [shape: bf16[2,864,512], index: 2, kind: input, shape index: {}]
  %s3 = inlined_call_operand.vmem [shape: bf16[2,16,512], index: 3, kind: output, shape index: {}]
  %s4 = sld [smem:[#allocation0]]
  $region45: #{autoencoder3d_forward.10} parent=0
    _
  %s6 = ssub.s32 1, %s4
  %s7 = scalar_select 0, %s6, %s4
  loop: start=0, step=1, limit=4
  $region2: #{autoencoder3d_forward.10} parent=0 // loop_pre_header
    _
  $region3: #{autoencoder3d_forward.10} parent=0 // loop_header
    %s9 = sphi 0, %s13
    %p10 = scmp.ge.s32.totalorder %s9, 4
    %s16 = sphi 0, %s28
    %s17 = sphi 0, %s24
    %s18 = sphi 0, %s16
    %s19 = sphi 0, %s17
    %s20 = sphi 0, %s18
    %s21 = sphi 0, %s19
    %s29 = sphi 0, %s29
    %s31 = sphi 0, %s29
    %s32 = sphi 0, %s31
    %s46 = sphi 0, %s32
    %s50 = sphi 0, %s50
    %s52 = sphi 0, %s50
    %s53 = sphi 0, %s52
    %s67 = sphi 0, %s53
    %s75 = sphi 0, %s77
    %s78 = sphi 0, %s75
    %s79 = sphi 0, %s78
    %s95 = sphi 0, %s79
    %s103 = sphi 0, %s105
    %s106 = sphi 0, %s103
    %s107 = sphi 0, %s106
    %s123 = sphi 0, %s107
  $region4: #{autoencoder3d_forward.10} parent=0 // loop_header_branch
    %12 = sbr.rel (%p10) target = $region8
  $region5: #{autoencoder3d_forward.10} parent=0 // loop_body
    %s14 = ssub.s32 %s9, 1
    %s15 = ssub.s32 %s9, 2
    %s22 = sadd.s32 1, %s17
    %p23 = scmp.ge.s32.totalorder %s22, 1
    %s24 = scalar_select %p23, 0, %s22
    %s25 = sadd.s32 1, %s16
    %s26 = scalar_select %p23, %s25, %s16
    %p27 = scmp.ge.s32.totalorder %s26, 2
    %s28 = scalar_select %p27, 0, %s26
    %s30 = sadd.s32 %s29, 1
    %p33 = scmp.eq.s32.totalorder %s9, 1
    %p34 = scmp.ne.s32.totalorder %s29, %s31
    %p35 = scmp.eq.s32.totalorder %s9, 0
    %p36 = por %p34, %p35
    %p37 = scmp.ne.s32.totalorder %s29, %s31
    %p38 = scmp.eq.s32.totalorder %s14, 1
    %p39 = por %p37, %p38
    %p40 = scmp.ne.s32.totalorder %s31, %s32
    %p41 = scmp.eq.s32.totalorder %s14, 0
    %p42 = por %p40, %p41
    %p43 = scmp.ne.s32.totalorder %s31, %s32
    %p44 = scmp.eq.s32.totalorder %s15, 1
    %p45 = por %p43, %p44
    %p47 = scmp.ne.s32.totalorder %s32, %s46
    %p48 = scmp.eq.s32.totalorder %s15, 0
    %p49 = por %p47, %p48
    %s51 = sadd.s32 %s50, 1
    %p54 = scmp.eq.s32.totalorder %s9, 1
    %p55 = scmp.ne.s32.totalorder %s50, %s52
    %p56 = scmp.eq.s32.totalorder %s9, 0
    %p57 = por %p55, %p56
    %p58 = scmp.ne.s32.totalorder %s50, %s52
    %p59 = scmp.eq.s32.totalorder %s14, 1
    %p60 = por %p58, %p59
    %p61 = scmp.ne.s32.totalorder %s52, %s53
    %p62 = scmp.eq.s32.totalorder %s14, 0
    %p63 = por %p61, %p62
    %p64 = scmp.ne.s32.totalorder %s52, %s53
    %p65 = scmp.eq.s32.totalorder %s15, 1
    %p66 = por %p64, %p65
    %p68 = scmp.ne.s32.totalorder %s53, %s67
    %p69 = scmp.eq.s32.totalorder %s15, 0
    %p70 = por %p68, %p69
    %s71 = ssub.s32 %s16, %s28
    %s72 = ssub.s32 %s17, %s24
    %s73 = sor.u32 %s71, %s72
    %p74 = scmp.eq.s32.totalorder %s73, 0
    %s76 = sadd.s32 %s75, 1
    %s77 = scalar_select %p74, %s75, %s76
    %p80 = pneg %p74
    %p81 = scmp.eq.s32.totalorder %s9, 1
    %p82 = por %p80, %p81
    %p83 = scmp.ne.s32.totalorder %s75, %s78
    %p84 = scmp.eq.s32.totalorder %s9, 0
    %p85 = por %p83, %p84
    %p86 = scmp.ne.s32.totalorder %s75, %s78
    %p87 = scmp.eq.s32.totalorder %s14, 1
    %p88 = por %p86, %p87
    %p89 = scmp.ne.s32.totalorder %s78, %s79
    %p90 = scmp.eq.s32.totalorder %s14, 0
    %p91 = por %p89, %p90
    %p92 = scmp.ne.s32.totalorder %s78, %s79
    %p93 = scmp.eq.s32.totalorder %s15, 1
    %p94 = por %p92, %p93
    %p96 = scmp.ne.s32.totalorder %s79, %s95
    %p97 = scmp.eq.s32.totalorder %s15, 0
    %p98 = por %p96, %p97
    %s99 = ssub.s32 %s16, %s28
    %s100 = ssub.s32 %s17, %s24
    %s101 = sor.u32 %s99, %s100
    %p102 = scmp.eq.s32.totalorder %s101, 0
    %s104 = sadd.s32 %s103, 1
    %s105 = scalar_select %p102, %s103, %s104
    %p108 = pneg %p102
    %p109 = scmp.eq.s32.totalorder %s9, 1
    %p110 = por %p108, %p109
    %p111 = scmp.ne.s32.totalorder %s103, %s106
    %p112 = scmp.eq.s32.totalorder %s9, 0
    %p113 = por %p111, %p112
    %p114 = scmp.ne.s32.totalorder %s103, %s106
    %p115 = scmp.eq.s32.totalorder %s14, 1
    %p116 = por %p114, %p115
    %p117 = scmp.ne.s32.totalorder %s106, %s107
    %p118 = scmp.eq.s32.totalorder %s14, 0
    %p119 = por %p117, %p118
    %p120 = scmp.ne.s32.totalorder %s106, %s107
    %p121 = scmp.eq.s32.totalorder %s15, 1
    %p122 = por %p120, %p121
    %p124 = scmp.ne.s32.totalorder %s107, %s123
    %p125 = scmp.eq.s32.totalorder %s15, 0
    %p126 = por %p124, %p125
    %p127 = scmp.le.s32.totalorder 1, %s9
    %p128 = scmp.lt.s32.totalorder %s9, 3
    %p129 = pnand %p127, %p128
    %p130 = pneg %p129
    // Predicated region
    $region9: #{autoencoder3d_forward.10} parent=5 // pred_check
      _
    $region10: #{autoencoder3d_forward.10} parent=5 // pred_check_branch
      %132 = sbr.rel (%p129) target = $region12
    $region11: #{autoencoder3d_forward.10} parent=5 // pred_region
      %s133 = ssub.s32 %s9, 1
      // Predicated region
      $region13: #{autoencoder3d_forward.10} parent=11 // pred_check
        %p134 = pneg %p42
      $region14: #{autoencoder3d_forward.10} parent=11 // pred_check_branch
        %136 = sbr.rel (%p134) target = $region16
      $region15: #{autoencoder3d_forward.10} parent=11 // pred_region
        _
      $region16: #{autoencoder3d_forward.10} parent=11 // pred_fallthru
        _
      // Predicated region
      $region17: #{autoencoder3d_forward.10} parent=11 // pred_check
        %p137 = pneg %p63
      $region18: #{autoencoder3d_forward.10} parent=11 // pred_check_branch
        %139 = sbr.rel (%p137) target = $region20
      $region19: #{autoencoder3d_forward.10} parent=11 // pred_region
        _
      $region20: #{autoencoder3d_forward.10} parent=11 // pred_fallthru
        _
    $region12: #{autoencoder3d_forward.10} parent=5 // pred_fallthru
      _
    %p140 = scmp.lt.s32.totalorder %s9, 2
    // Predicated region
    $region21: #{autoencoder3d_forward.10} parent=5 // pred_check
      %p141 = pneg %p140
    $region22: #{autoencoder3d_forward.10} parent=5 // pred_check_branch
      %143 = sbr.rel (%p141) target = $region24
    $region23: #{autoencoder3d_forward.10} parent=5 // pred_region
      // Predicated region
      $region25: #{autoencoder3d_forward.10} parent=23 // pred_check
        %p144 = pneg %p85
      $region26: #{autoencoder3d_forward.10} parent=23 // pred_check_branch
        %146 = sbr.rel (%p144) target = $region28
      $region27: #{autoencoder3d_forward.10} parent=23 // pred_region
        %s147 = smul.u32 4, %s17
        %p148 = scmp.lt.s32.totalorder %s16, 1
        %s149 = scalar_select %p148, %s16, 1
        %p150 = scmp.lt.s32.totalorder %s147, 3
        %s151 = scalar_select %p150, %s147, 3
        %s152 = smul.addr %s149, 432
        %s153 = sadd.s32 %s151, %s152
        %s154 = smul.addr %s153, 4
        %s155 = scalar_lea.vmem %s2, %s154
        %s156 = smul.u32 4, %s17
      $region28: #{autoencoder3d_forward.10} parent=23 // pred_fallthru
        _
    $region24: #{autoencoder3d_forward.10} parent=5 // pred_fallthru
      _
    %p157 = scmp.le.s32.totalorder 1, %s9
    %p158 = scmp.lt.s32.totalorder %s9, 3
    %p159 = pnand %p157, %p158
    %p160 = pneg %p159
    // Predicated region
    $region29: #{autoencoder3d_forward.10} parent=5 // pred_check
      _
    $region30: #{autoencoder3d_forward.10} parent=5 // pred_check_branch
      %162 = sbr.rel (%p159) target = $region32
    $region31: #{autoencoder3d_forward.10} parent=5 // pred_region
      %s163 = ssub.s32 %s9, 1
      %p164 = pneg %p42
      %p165 = pneg %p39
      %p166 = pneg %p63
      %p167 = pneg %p60
      %s168 = smul.u32 4, %s19
      %p169 = scmp.lt.s32.totalorder %s18, 1
      %s170 = scalar_select %p169, %s18, 1
      %p171 = scmp.lt.s32.totalorder %s168, 3
      %s172 = scalar_select %p171, %s168, 3
      %s173 = smul.addr %s170, 432
      %s174 = sadd.s32 %s172, %s173
      %s175 = smul.addr %s174, 4
      %s176 = scalar_lea.vmem %s2, %s175
      %p177 = pneg %p91
      %p178 = pneg %p88
      %p179 = pneg %p119
      %p180 = pneg %p116
      %s181 = smul.u32 4, %s19
      %p182 = scmp.lt.s32.totalorder %s18, 1
      %s183 = scalar_select %p182, %s18, 1
      %p184 = scmp.lt.s32.totalorder %s181, 3
      %s185 = scalar_select %p184, %s181, 3
      %s186 = smul.addr %s183, 8
      %s187 = sadd.s32 %s185, %s186
      %s188 = smul.addr %s187, 4
      %s189 = scalar_lea.vmem %s3, %s188
      %s190 = smul.u32 4, %s19
      %p191 = scmp.lt.s32.totalorder %s18, 1
      %s192 = scalar_select %p191, %s18, 1
      %p193 = scmp.lt.s32.totalorder %s190, 3
      %s194 = scalar_select %p193, %s190, 3
      %s195 = smul.addr %s192, 432
      %s196 = sadd.s32 %s194, %s195
      %s197 = smul.addr %s196, 4
      %s198 = scalar_lea.vmem %s2, %s197
      %s199 = smul.u32 4, %s19
      %s200 = smul.u32 4, %s19
      %p201 = scmp.lt.s32.totalorder %s18, 1
      %s202 = scalar_select %p201, %s18, 1
      %p203 = scmp.lt.s32.totalorder %s200, 3
      %s204 = scalar_select %p203, %s200, 3
      %s205 = smul.addr %s202, 8
      %s206 = sadd.s32 %s204, %s205
      %s207 = smul.addr %s206, 4
      %s208 = scalar_lea.vmem %s3, %s207
      %s209 = smul.u32 4, %s19
      %v211 = vld [vmem:[%s0] sm:$0xff]
      %v212 = vld [vmem:[%s0 + $0x8] sm:$0xff]
      %v213 = vld [vmem:[%s0 + $0x10] sm:$0xff]
      %v214 = vld [vmem:[%s0 + $0x18] sm:$0xf]
      %v215 = vld [vmem:[%s0 + $0x1c] sm:$0xff]
      %v216 = vld [vmem:[%s0 + $0x24] sm:$0xff]
      %v217 = vld [vmem:[%s0 + $0x2c] sm:$0xff]
      %v218 = vld [vmem:[%s0 + $0x34] sm:$0xf]
      %v219 = vld [vmem:[%s198] sm:$0xff]
      %v220 = vld [vmem:[%s198 + $0x8] sm:$0xff]
      %v221 = vld [vmem:[%s198 + $0x10] sm:$0xff]
      %v222 = vld [vmem:[%s198 + $0x18] sm:$0xff]
      %v223 = vld [vmem:[%s198 + $0x20] sm:$0xff]
      %v224 = vld [vmem:[%s198 + $0x28] sm:$0xff]
      %v225 = vld [vmem:[%s198 + $0x30] sm:$0xff]
      %v226 = vld [vmem:[%s198 + $0x38] sm:$0xff]
      %v227 = vld [vmem:[%s198 + $0x40] sm:$0xff]
      %v228 = vld [vmem:[%s198 + $0x48] sm:$0xff]
      %v229 = vld [vmem:[%s198 + $0x50] sm:$0xff]
      %v230 = vld [vmem:[%s198 + $0x58] sm:$0xff]
      %v231 = vld [vmem:[%s198 + $0x60] sm:$0xff]
      %v232 = vld [vmem:[%s198 + $0x68] sm:$0xff]
      %v233 = vld [vmem:[%s198 + $0x70] sm:$0xff]
      %v234 = vld [vmem:[%s198 + $0x78] sm:$0xff]
      %v235 = vld [vmem:[%s198 + $0x80] sm:$0xff]
      %v236 = vld [vmem:[%s198 + $0x88] sm:$0xff]
      %v237 = vld [vmem:[%s198 + $0x90] sm:$0xff]
      %v238 = vld [vmem:[%s198 + $0x98] sm:$0xff]
      %v239 = vld [vmem:[%s198 + $0xa0] sm:$0xff]
      %v240 = vld [vmem:[%s198 + $0xa8] sm:$0xff]
      %v241 = vld [vmem:[%s198 + $0xb0] sm:$0xff]
      %v242 = vld [vmem:[%s198 + $0xb8] sm:$0xff]
      %v243 = vld [vmem:[%s198 + $0xc0] sm:$0xff]
      %v244 = vld [vmem:[%s198 + $0xc8] sm:$0xff]
      %v245 = vld [vmem:[%s198 + $0xd0] sm:$0xff]
      %v246 = vld [vmem:[%s198 + $0xd8] sm:$0xff]
      %v247 = vld [vmem:[%s198 + $0xe0] sm:$0xff]
      %v248 = vld [vmem:[%s198 + $0xe8] sm:$0xff]
      %v249 = vld [vmem:[%s198 + $0xf0] sm:$0xff]
      %v250 = vld [vmem:[%s198 + $0xf8] sm:$0xff]
      %v251 = vld [vmem:[%s198 + $0x100] sm:$0xff]
      %v252 = vld [vmem:[%s198 + $0x108] sm:$0xff]
      %v253 = vld [vmem:[%s198 + $0x110] sm:$0xff]
      %v254 = vld [vmem:[%s198 + $0x118] sm:$0xff]
      %v255 = vld [vmem:[%s198 + $0x120] sm:$0xff]
      %v256 = vld [vmem:[%s198 + $0x128] sm:$0xff]
      %v257 = vld [vmem:[%s198 + $0x130] sm:$0xff]
      %v258 = vld [vmem:[%s198 + $0x138] sm:$0xff]
      %v259 = vld [vmem:[%s198 + $0x140] sm:$0xff]
      %v260 = vld [vmem:[%s198 + $0x148] sm:$0xff]
      %v261 = vld [vmem:[%s198 + $0x150] sm:$0xff]
      %v262 = vld [vmem:[%s198 + $0x158] sm:$0xff]
      %v263 = vld [vmem:[%s198 + $0x160] sm:$0xff]
      %v264 = vld [vmem:[%s198 + $0x168] sm:$0xff]
      %v265 = vld [vmem:[%s198 + $0x170] sm:$0xff]
      %v266 = vld [vmem:[%s198 + $0x178] sm:$0xff]
      %v267 = vld [vmem:[%s198 + $0x180] sm:$0xff]
      %v268 = vld [vmem:[%s198 + $0x188] sm:$0xff]
      %v269 = vld [vmem:[%s198 + $0x190] sm:$0xff]
      %v270 = vld [vmem:[%s198 + $0x198] sm:$0xff]
      %v271 = vld [vmem:[%s198 + $0x1a0] sm:$0xff]
      %v272 = vld [vmem:[%s198 + $0x1a8] sm:$0xff]
      %v273 = vld [vmem:[%s198 + $0x1b0] sm:$0xff]
      %v274 = vld [vmem:[%s198 + $0x1b8] sm:$0xff]
      %v275 = vld [vmem:[%s198 + $0x1c0] sm:$0xff]
      %v276 = vld [vmem:[%s198 + $0x1c8] sm:$0xff]
      %v277 = vld [vmem:[%s198 + $0x1d0] sm:$0xff]
      %v278 = vld [vmem:[%s198 + $0x1d8] sm:$0xff]
      %v279 = vld [vmem:[%s198 + $0x1e0] sm:$0xff]
      %v280 = vld [vmem:[%s198 + $0x1e8] sm:$0xff]
      %v281 = vld [vmem:[%s198 + $0x1f0] sm:$0xff]
      %v282 = vld [vmem:[%s198 + $0x1f8] sm:$0xff]
      %v283 = vld [vmem:[%s198 + $0x200] sm:$0xff]
      %v284 = vld [vmem:[%s198 + $0x208] sm:$0xff]
      %v285 = vld [vmem:[%s198 + $0x210] sm:$0xff]
      %v286 = vld [vmem:[%s198 + $0x218] sm:$0xff]
      %v287 = vld [vmem:[%s198 + $0x220] sm:$0xff]
      %v288 = vld [vmem:[%s198 + $0x228] sm:$0xff]
      %v289 = vld [vmem:[%s198 + $0x230] sm:$0xff]
      %v290 = vld [vmem:[%s198 + $0x238] sm:$0xff]
      %v291 = vld [vmem:[%s198 + $0x240] sm:$0xff]
      %v292 = vld [vmem:[%s198 + $0x248] sm:$0xff]
      %v293 = vld [vmem:[%s198 + $0x250] sm:$0xff]
      %v294 = vld [vmem:[%s198 + $0x258] sm:$0xff]
      %v295 = vld [vmem:[%s198 + $0x260] sm:$0xff]
      %v296 = vld [vmem:[%s198 + $0x268] sm:$0xff]
      %v297 = vld [vmem:[%s198 + $0x270] sm:$0xff]
      %v298 = vld [vmem:[%s198 + $0x278] sm:$0xff]
      %v299 = vld [vmem:[%s198 + $0x280] sm:$0xff]
      %v300 = vld [vmem:[%s198 + $0x288] sm:$0xff]
      %v301 = vld [vmem:[%s198 + $0x290] sm:$0xff]
      %v302 = vld [vmem:[%s198 + $0x298] sm:$0xff]
      %v303 = vld [vmem:[%s198 + $0x2a0] sm:$0xff]
      %v304 = vld [vmem:[%s198 + $0x2a8] sm:$0xff]
      %v305 = vld [vmem:[%s198 + $0x2b0] sm:$0xff]
      %v306 = vld [vmem:[%s198 + $0x2b8] sm:$0xff]
      %v307 = vld [vmem:[%s198 + $0x2c0] sm:$0xff]
      %v308 = vld [vmem:[%s198 + $0x2c8] sm:$0xff]
      %v309 = vld [vmem:[%s198 + $0x2d0] sm:$0xff]
      %v310 = vld [vmem:[%s198 + $0x2d8] sm:$0xff]
      %v311 = vld [vmem:[%s198 + $0x2e0] sm:$0xff]
      %v312 = vld [vmem:[%s198 + $0x2e8] sm:$0xff]
      %v313 = vld [vmem:[%s198 + $0x2f0] sm:$0xff]
      %v314 = vld [vmem:[%s198 + $0x2f8] sm:$0xff]
      %v315 = vld [vmem:[%s198 + $0x300] sm:$0xff]
      %v316 = vld [vmem:[%s198 + $0x308] sm:$0xff]
      %v317 = vld [vmem:[%s198 + $0x310] sm:$0xff]
      %v318 = vld [vmem:[%s198 + $0x318] sm:$0xff]
      %v319 = vld [vmem:[%s198 + $0x320] sm:$0xff]
      %v320 = vld [vmem:[%s198 + $0x328] sm:$0xff]
      %v321 = vld [vmem:[%s198 + $0x330] sm:$0xff]
      %v322 = vld [vmem:[%s198 + $0x338] sm:$0xff]
      %v323 = vld [vmem:[%s198 + $0x340] sm:$0xff]
      %v324 = vld [vmem:[%s198 + $0x348] sm:$0xff]
      %v325 = vld [vmem:[%s198 + $0x350] sm:$0xff]
      %v326 = vld [vmem:[%s198 + $0x358] sm:$0xff]
      %v327 = vld [vmem:[%s198 + $0x360] sm:$0xff]
      %v328 = vld [vmem:[%s198 + $0x368] sm:$0xff]
      %v329 = vld [vmem:[%s198 + $0x370] sm:$0xff]
      %v330 = vld [vmem:[%s198 + $0x378] sm:$0xff]
      %v331 = vld [vmem:[%s198 + $0x380] sm:$0xff]
      %v332 = vld [vmem:[%s198 + $0x388] sm:$0xff]
      %v333 = vld [vmem:[%s198 + $0x390] sm:$0xff]
      %v334 = vld [vmem:[%s198 + $0x398] sm:$0xff]
      %v335 = vld [vmem:[%s198 + $0x3a0] sm:$0xff]
      %v336 = vld [vmem:[%s198 + $0x3a8] sm:$0xff]
      %v337 = vld [vmem:[%s198 + $0x3b0] sm:$0xff]
      %v338 = vld [vmem:[%s198 + $0x3b8] sm:$0xff]
      %v339 = vld [vmem:[%s198 + $0x3c0] sm:$0xff]
      %v340 = vld [vmem:[%s198 + $0x3c8] sm:$0xff]
      %v341 = vld [vmem:[%s198 + $0x3d0] sm:$0xff]
      %v342 = vld [vmem:[%s198 + $0x3d8] sm:$0xff]
      %v343 = vld [vmem:[%s198 + $0x3e0] sm:$0xff]
      %v344 = vld [vmem:[%s198 + $0x3e8] sm:$0xff]
      %v345 = vld [vmem:[%s198 + $0x3f0] sm:$0xff]
      %v346 = vld [vmem:[%s198 + $0x3f8] sm:$0xff]
      %v347 = vld [vmem:[%s198 + $0x400] sm:$0xff]
      %v348 = vld [vmem:[%s198 + $0x408] sm:$0xff]
      %v349 = vld [vmem:[%s198 + $0x410] sm:$0xff]
      %v350 = vld [vmem:[%s198 + $0x418] sm:$0xff]
      %v351 = vld [vmem:[%s198 + $0x420] sm:$0xff]
      %v352 = vld [vmem:[%s198 + $0x428] sm:$0xff]
      %v353 = vld [vmem:[%s198 + $0x430] sm:$0xff]
      %v354 = vld [vmem:[%s198 + $0x438] sm:$0xff]
      %v355 = vld [vmem:[%s198 + $0x440] sm:$0xff]
      %v356 = vld [vmem:[%s198 + $0x448] sm:$0xff]
      %v357 = vld [vmem:[%s198 + $0x450] sm:$0xff]
      %v358 = vld [vmem:[%s198 + $0x458] sm:$0xff]
      %v359 = vld [vmem:[%s198 + $0x460] sm:$0xff]
      %v360 = vld [vmem:[%s198 + $0x468] sm:$0xff]
      %v361 = vld [vmem:[%s198 + $0x470] sm:$0xff]
      %v362 = vld [vmem:[%s198 + $0x478] sm:$0xff]
      %v363 = vld [vmem:[%s198 + $0x480] sm:$0xff]
      %v364 = vld [vmem:[%s198 + $0x488] sm:$0xff]
      %v365 = vld [vmem:[%s198 + $0x490] sm:$0xff]
      %v366 = vld [vmem:[%s198 + $0x498] sm:$0xff]
      %v367 = vld [vmem:[%s198 + $0x4a0] sm:$0xff]
      %v368 = vld [vmem:[%s198 + $0x4a8] sm:$0xff]
      %v369 = vld [vmem:[%s198 + $0x4b0] sm:$0xff]
      %v370 = vld [vmem:[%s198 + $0x4b8] sm:$0xff]
      %v371 = vld [vmem:[%s198 + $0x4c0] sm:$0xff]
      %v372 = vld [vmem:[%s198 + $0x4c8] sm:$0xff]
      %v373 = vld [vmem:[%s198 + $0x4d0] sm:$0xff]
      %v374 = vld [vmem:[%s198 + $0x4d8] sm:$0xff]
      %v375 = vld [vmem:[%s198 + $0x4e0] sm:$0xff]
      %v376 = vld [vmem:[%s198 + $0x4e8] sm:$0xff]
      %v377 = vld [vmem:[%s198 + $0x4f0] sm:$0xff]
      %v378 = vld [vmem:[%s198 + $0x4f8] sm:$0xff]
      %v379 = vld [vmem:[%s198 + $0x500] sm:$0xff]
      %v380 = vld [vmem:[%s198 + $0x508] sm:$0xff]
      %v381 = vld [vmem:[%s198 + $0x510] sm:$0xff]
      %v382 = vld [vmem:[%s198 + $0x518] sm:$0xff]
      %v383 = vld [vmem:[%s198 + $0x520] sm:$0xff]
      %v384 = vld [vmem:[%s198 + $0x528] sm:$0xff]
      %v385 = vld [vmem:[%s198 + $0x530] sm:$0xff]
      %v386 = vld [vmem:[%s198 + $0x538] sm:$0xff]
      %v387 = vld [vmem:[%s198 + $0x540] sm:$0xff]
      %v388 = vld [vmem:[%s198 + $0x548] sm:$0xff]
      %v389 = vld [vmem:[%s198 + $0x550] sm:$0xff]
      %v390 = vld [vmem:[%s198 + $0x558] sm:$0xff]
      %v391 = vld [vmem:[%s198 + $0x560] sm:$0xff]
      %v392 = vld [vmem:[%s198 + $0x568] sm:$0xff]
      %v393 = vld [vmem:[%s198 + $0x570] sm:$0xff]
      %v394 = vld [vmem:[%s198 + $0x578] sm:$0xff]
      %v395 = vld [vmem:[%s198 + $0x580] sm:$0xff]
      %v396 = vld [vmem:[%s198 + $0x588] sm:$0xff]
      %v397 = vld [vmem:[%s198 + $0x590] sm:$0xff]
      %v398 = vld [vmem:[%s198 + $0x598] sm:$0xff]
      %v399 = vld [vmem:[%s198 + $0x5a0] sm:$0xff]
      %v400 = vld [vmem:[%s198 + $0x5a8] sm:$0xff]
      %v401 = vld [vmem:[%s198 + $0x5b0] sm:$0xff]
      %v402 = vld [vmem:[%s198 + $0x5b8] sm:$0xff]
      %v403 = vld [vmem:[%s198 + $0x5c0] sm:$0xff]
      %v404 = vld [vmem:[%s198 + $0x5c8] sm:$0xff]
      %v405 = vld [vmem:[%s198 + $0x5d0] sm:$0xff]
      %v406 = vld [vmem:[%s198 + $0x5d8] sm:$0xff]
      %v407 = vld [vmem:[%s198 + $0x5e0] sm:$0xff]
      %v408 = vld [vmem:[%s198 + $0x5e8] sm:$0xff]
      %v409 = vld [vmem:[%s198 + $0x5f0] sm:$0xff]
      %v410 = vld [vmem:[%s198 + $0x5f8] sm:$0xff]
      %v411 = vld [vmem:[%s198 + $0x600] sm:$0xff]
      %v412 = vld [vmem:[%s198 + $0x608] sm:$0xff]
      %v413 = vld [vmem:[%s198 + $0x610] sm:$0xff]
      %v414 = vld [vmem:[%s198 + $0x618] sm:$0xff]
      %v415 = vld [vmem:[%s198 + $0x620] sm:$0xff]
      %v416 = vld [vmem:[%s198 + $0x628] sm:$0xff]
      %v417 = vld [vmem:[%s198 + $0x630] sm:$0xff]
      %v418 = vld [vmem:[%s198 + $0x638] sm:$0xff]
      %v419 = vld [vmem:[%s198 + $0x640] sm:$0xff]
      %v420 = vld [vmem:[%s198 + $0x648] sm:$0xff]
      %v421 = vld [vmem:[%s198 + $0x650] sm:$0xff]
      %v422 = vld [vmem:[%s198 + $0x658] sm:$0xff]
      %v423 = vld [vmem:[%s198 + $0x660] sm:$0xff]
      %v424 = vld [vmem:[%s198 + $0x668] sm:$0xff]
      %v425 = vld [vmem:[%s198 + $0x670] sm:$0xff]
      %v426 = vld [vmem:[%s198 + $0x678] sm:$0xff]
      %v427 = vld [vmem:[%s198 + $0x680] sm:$0xff]
      %v428 = vld [vmem:[%s198 + $0x688] sm:$0xff]
      %v429 = vld [vmem:[%s198 + $0x690] sm:$0xff]
      %v430 = vld [vmem:[%s198 + $0x698] sm:$0xff]
      %v431 = vld [vmem:[%s198 + $0x6a0] sm:$0xff]
      %v432 = vld [vmem:[%s198 + $0x6a8] sm:$0xff]
      %v433 = vld [vmem:[%s198 + $0x6b0] sm:$0xff]
      %v434 = vld [vmem:[%s198 + $0x6b8] sm:$0xff]
      %v435 = vld [vmem:[%s1] sm:$0xff]
      %v436 = vld [vmem:[%s1 + $0x8] sm:$0xff]
      %438 = vset.pattern.permute.xlu0 0
      %439 = vperm.xlu0 %438, %v435
      %v440 = vpop.permute.xlu0 %439
      %443 = vset.pattern.permute.xlu0 0
      %444 = vperm.xlu0 %443, %v436
      %v445 = vpop.permute.xlu0 %444
      %v455 = vunpack.c.l.b16 %v211
      %v456 = vunpack.c.h.b16 %v211
      %v457 = vunpack.c.l.b16 %v212
      %v458 = vunpack.c.h.b16 %v212
      %v459 = vunpack.c.l.b16 %v213
      %v460 = vunpack.c.h.b16 %v213
      %v461 = vunpack.c.l.b16 %v214
      %v462 = vunpack.c.l.b16 %v215
      %v463 = vunpack.c.h.b16 %v215
      %v464 = vunpack.c.l.b16 %v216
      %v465 = vunpack.c.h.b16 %v216
      %v466 = vunpack.c.l.b16 %v217
      %v467 = vunpack.c.h.b16 %v217
      %v468 = vunpack.c.l.b16 %v218
      %v469 = vpack.c.b16 %v462, %v455
      %v470 = vpack.c.b16 %v463, %v456
      %v471 = vpack.c.b16 %v464, %v457
      %v472 = vpack.c.b16 %v465, %v458
      %v473 = vpack.c.b16 %v466, %v459
      %v474 = vpack.c.b16 %v467, %v460
      %v475 = vpack.c.b16 %v468, %v461
      %v698 = vunpack.c.l.b16 %v219
      %v699 = vunpack.c.h.b16 %v219
      %v700 = vunpack.c.l.b16 %v220
      %v701 = vunpack.c.h.b16 %v220
      %v702 = vunpack.c.l.b16 %v221
      %v703 = vunpack.c.h.b16 %v221
      %v704 = vunpack.c.l.b16 %v222
      %v705 = vunpack.c.h.b16 %v222
      %v706 = vunpack.c.l.b16 %v223
      %v707 = vunpack.c.h.b16 %v223
      %v708 = vunpack.c.l.b16 %v224
      %v709 = vunpack.c.h.b16 %v224
      %v710 = vunpack.c.l.b16 %v225
      %v711 = vunpack.c.h.b16 %v225
      %v712 = vunpack.c.l.b16 %v226
      %v713 = vunpack.c.h.b16 %v226
      %v714 = vunpack.c.l.b16 %v227
      %v715 = vunpack.c.h.b16 %v227
      %v716 = vunpack.c.l.b16 %v228
      %v717 = vunpack.c.h.b16 %v228
      %v718 = vunpack.c.l.b16 %v229
      %v719 = vunpack.c.h.b16 %v229
      %v720 = vunpack.c.l.b16 %v230
      %v721 = vunpack.c.h.b16 %v230
      %v722 = vunpack.c.l.b16 %v231
      %v723 = vunpack.c.h.b16 %v231
      %v724 = vunpack.c.l.b16 %v232
      %v725 = vunpack.c.h.b16 %v232
      %v726 = vunpack.c.l.b16 %v233
      %v727 = vunpack.c.h.b16 %v233
      %v728 = vunpack.c.l.b16 %v234
      %v729 = vunpack.c.h.b16 %v234
      %v730 = vunpack.c.l.b16 %v235
      %v731 = vunpack.c.h.b16 %v235
      %v732 = vunpack.c.l.b16 %v236
      %v733 = vunpack.c.h.b16 %v236
      %v734 = vunpack.c.l.b16 %v237
      %v735 = vunpack.c.h.b16 %v237
      %v736 = vunpack.c.l.b16 %v238
      %v737 = vunpack.c.h.b16 %v238
      %v738 = vunpack.c.l.b16 %v239
      %v739 = vunpack.c.h.b16 %v239
      %v740 = vunpack.c.l.b16 %v240
      %v741 = vunpack.c.h.b16 %v240
      %v742 = vunpack.c.l.b16 %v241
      %v743 = vunpack.c.h.b16 %v241
      %v744 = vunpack.c.l.b16 %v242
      %v745 = vunpack.c.h.b16 %v242
      %v746 = vunpack.c.l.b16 %v243
      %v747 = vunpack.c.h.b16 %v243
      %v748 = vunpack.c.l.b16 %v244
      %v749 = vunpack.c.h.b16 %v244
      %v750 = vunpack.c.l.b16 %v245
      %v751 = vunpack.c.h.b16 %v245
      %v752 = vunpack.c.l.b16 %v246
      %v753 = vunpack.c.h.b16 %v246
      %v754 = vunpack.c.l.b16 %v247
      %v755 = vunpack.c.h.b16 %v247
      %v756 = vunpack.c.l.b16 %v248
      %v757 = vunpack.c.h.b16 %v248
      %v758 = vunpack.c.l.b16 %v249
      %v759 = vunpack.c.h.b16 %v249
      %v760 = vunpack.c.l.b16 %v250
      %v761 = vunpack.c.h.b16 %v250
      %v762 = vunpack.c.l.b16 %v251
      %v763 = vunpack.c.h.b16 %v251
      %v764 = vunpack.c.l.b16 %v252
      %v765 = vunpack.c.h.b16 %v252
      %v766 = vunpack.c.l.b16 %v253
      %v767 = vunpack.c.h.b16 %v253
      %v768 = vunpack.c.l.b16 %v254
      %v769 = vunpack.c.h.b16 %v254
      %v770 = vunpack.c.l.b16 %v255
      %v771 = vunpack.c.h.b16 %v255
      %v772 = vunpack.c.l.b16 %v256
      %v773 = vunpack.c.h.b16 %v256
      %v774 = vunpack.c.l.b16 %v257
      %v775 = vunpack.c.h.b16 %v257
      %v776 = vunpack.c.l.b16 %v258
      %v777 = vunpack.c.h.b16 %v258
      %v778 = vunpack.c.l.b16 %v259
      %v779 = vunpack.c.h.b16 %v259
      %v780 = vunpack.c.l.b16 %v260
      %v781 = vunpack.c.h.b16 %v260
      %v782 = vunpack.c.l.b16 %v261
      %v783 = vunpack.c.h.b16 %v261
      %v784 = vunpack.c.l.b16 %v262
      %v785 = vunpack.c.h.b16 %v262
      %v786 = vunpack.c.l.b16 %v263
      %v787 = vunpack.c.h.b16 %v263
      %v788 = vunpack.c.l.b16 %v264
      %v789 = vunpack.c.h.b16 %v264
      %v790 = vunpack.c.l.b16 %v265
      %v791 = vunpack.c.h.b16 %v265
      %v792 = vunpack.c.l.b16 %v266
      %v793 = vunpack.c.h.b16 %v266
      %v794 = vunpack.c.l.b16 %v267
      %v795 = vunpack.c.h.b16 %v267
      %v796 = vunpack.c.l.b16 %v268
      %v797 = vunpack.c.h.b16 %v268
      %v798 = vunpack.c.l.b16 %v269
      %v799 = vunpack.c.h.b16 %v269
      %v800 = vunpack.c.l.b16 %v270
      %v801 = vunpack.c.h.b16 %v270
      %v802 = vunpack.c.l.b16 %v271
      %v803 = vunpack.c.h.b16 %v271
      %v804 = vunpack.c.l.b16 %v272
      %v805 = vunpack.c.h.b16 %v272
      %v806 = vunpack.c.l.b16 %v273
      %v807 = vunpack.c.h.b16 %v273
      %v808 = vunpack.c.l.b16 %v274
      %v809 = vunpack.c.h.b16 %v274
      %v810 = vunpack.c.l.b16 %v275
      %v811 = vunpack.c.h.b16 %v275
      %v812 = vunpack.c.l.b16 %v276
      %v813 = vunpack.c.h.b16 %v276
      %v814 = vunpack.c.l.b16 %v277
      %v815 = vunpack.c.h.b16 %v277
      %v816 = vunpack.c.l.b16 %v278
      %v817 = vunpack.c.h.b16 %v278
      %v818 = vunpack.c.l.b16 %v279
      %v819 = vunpack.c.h.b16 %v279
      %v820 = vunpack.c.l.b16 %v280
      %v821 = vunpack.c.h.b16 %v280
      %v822 = vunpack.c.l.b16 %v281
      %v823 = vunpack.c.h.b16 %v281
      %v824 = vunpack.c.l.b16 %v282
      %v825 = vunpack.c.h.b16 %v282
      %v826 = vunpack.c.l.b16 %v283
      %v827 = vunpack.c.h.b16 %v283
      %v828 = vunpack.c.l.b16 %v284
      %v829 = vunpack.c.h.b16 %v284
      %v830 = vunpack.c.l.b16 %v285
      %v831 = vunpack.c.h.b16 %v285
      %v832 = vunpack.c.l.b16 %v286
      %v833 = vunpack.c.h.b16 %v286
      %v834 = vunpack.c.l.b16 %v287
      %v835 = vunpack.c.h.b16 %v287
      %v836 = vunpack.c.l.b16 %v288
      %v837 = vunpack.c.h.b16 %v288
      %v838 = vunpack.c.l.b16 %v289
      %v839 = vunpack.c.h.b16 %v289
      %v840 = vunpack.c.l.b16 %v290
      %v841 = vunpack.c.h.b16 %v290
      %v842 = vunpack.c.l.b16 %v291
      %v843 = vunpack.c.h.b16 %v291
      %v844 = vunpack.c.l.b16 %v292
      %v845 = vunpack.c.h.b16 %v292
      %v846 = vunpack.c.l.b16 %v293
      %v847 = vunpack.c.h.b16 %v293
      %v848 = vunpack.c.l.b16 %v294
      %v849 = vunpack.c.h.b16 %v294
      %v850 = vunpack.c.l.b16 %v295
      %v851 = vunpack.c.h.b16 %v295
      %v852 = vunpack.c.l.b16 %v296
      %v853 = vunpack.c.h.b16 %v296
      %v854 = vunpack.c.l.b16 %v297
      %v855 = vunpack.c.h.b16 %v297
      %v856 = vunpack.c.l.b16 %v298
      %v857 = vunpack.c.h.b16 %v298
      %v858 = vunpack.c.l.b16 %v299
      %v859 = vunpack.c.h.b16 %v299
      %v860 = vunpack.c.l.b16 %v300
      %v861 = vunpack.c.h.b16 %v300
      %v862 = vunpack.c.l.b16 %v301
      %v863 = vunpack.c.h.b16 %v301
      %v864 = vunpack.c.l.b16 %v302
      %v865 = vunpack.c.h.b16 %v302
      %v866 = vunpack.c.l.b16 %v303
      %v867 = vunpack.c.h.b16 %v303
      %v868 = vunpack.c.l.b16 %v304
      %v869 = vunpack.c.h.b16 %v304
      %v870 = vunpack.c.l.b16 %v305
      %v871 = vunpack.c.h.b16 %v305
      %v872 = vunpack.c.l.b16 %v306
      %v873 = vunpack.c.h.b16 %v306
      %v874 = vunpack.c.l.b16 %v307
      %v875 = vunpack.c.h.b16 %v307
      %v876 = vunpack.c.l.b16 %v308
      %v877 = vunpack.c.h.b16 %v308
      %v878 = vunpack.c.l.b16 %v309
      %v879 = vunpack.c.h.b16 %v309
      %v880 = vunpack.c.l.b16 %v310
      %v881 = vunpack.c.h.b16 %v310
      %v882 = vunpack.c.l.b16 %v311
      %v883 = vunpack.c.h.b16 %v311
      %v884 = vunpack.c.l.b16 %v312
      %v885 = vunpack.c.h.b16 %v312
      %v886 = vunpack.c.l.b16 %v313
      %v887 = vunpack.c.h.b16 %v313
      %v888 = vunpack.c.l.b16 %v314
      %v889 = vunpack.c.h.b16 %v314
      %v890 = vunpack.c.l.b16 %v315
      %v891 = vunpack.c.h.b16 %v315
      %v892 = vunpack.c.l.b16 %v316
      %v893 = vunpack.c.h.b16 %v316
      %v894 = vunpack.c.l.b16 %v317
      %v895 = vunpack.c.h.b16 %v317
      %v896 = vunpack.c.l.b16 %v318
      %v897 = vunpack.c.h.b16 %v318
      %v898 = vunpack.c.l.b16 %v319
      %v899 = vunpack.c.h.b16 %v319
      %v900 = vunpack.c.l.b16 %v320
      %v901 = vunpack.c.h.b16 %v320
      %v902 = vunpack.c.l.b16 %v321
      %v903 = vunpack.c.h.b16 %v321
      %v904 = vunpack.c.l.b16 %v322
      %v905 = vunpack.c.h.b16 %v322
      %v906 = vunpack.c.l.b16 %v323
      %v907 = vunpack.c.h.b16 %v323
      %v908 = vunpack.c.l.b16 %v324
      %v909 = vunpack.c.h.b16 %v324
      %v910 = vunpack.c.l.b16 %v325
      %v911 = vunpack.c.h.b16 %v325
      %v912 = vunpack.c.l.b16 %v326
      %v913 = vunpack.c.h.b16 %v326
      %v914 = vunpack.c.l.b16 %v327
      %v915 = vunpack.c.h.b16 %v327
      %v916 = vunpack.c.l.b16 %v328
      %v917 = vunpack.c.h.b16 %v328
      %v918 = vunpack.c.l.b16 %v329
      %v919 = vunpack.c.h.b16 %v329
      %v920 = vunpack.c.l.b16 %v330
      %v921 = vunpack.c.h.b16 %v330
      %v922 = vunpack.c.l.b16 %v331
      %v923 = vunpack.c.h.b16 %v331
      %v924 = vunpack.c.l.b16 %v332
      %v925 = vunpack.c.h.b16 %v332
      %v926 = vunpack.c.l.b16 %v333
      %v927 = vunpack.c.h.b16 %v333
      %v928 = vunpack.c.l.b16 %v334
      %v929 = vunpack.c.h.b16 %v334
      %v930 = vunpack.c.l.b16 %v335
      %v931 = vunpack.c.h.b16 %v335
      %v932 = vunpack.c.l.b16 %v336
      %v933 = vunpack.c.h.b16 %v336
      %v934 = vunpack.c.l.b16 %v337
      %v935 = vunpack.c.h.b16 %v337
      %v936 = vunpack.c.l.b16 %v338
      %v937 = vunpack.c.h.b16 %v338
      %v938 = vunpack.c.l.b16 %v339
      %v939 = vunpack.c.h.b16 %v339
      %v940 = vunpack.c.l.b16 %v340
      %v941 = vunpack.c.h.b16 %v340
      %v942 = vunpack.c.l.b16 %v341
      %v943 = vunpack.c.h.b16 %v341
      %v944 = vunpack.c.l.b16 %v342
      %v945 = vunpack.c.h.b16 %v342
      %v946 = vunpack.c.l.b16 %v343
      %v947 = vunpack.c.h.b16 %v343
      %v948 = vunpack.c.l.b16 %v344
      %v949 = vunpack.c.h.b16 %v344
      %v950 = vunpack.c.l.b16 %v345
      %v951 = vunpack.c.h.b16 %v345
      %v952 = vunpack.c.l.b16 %v346
      %v953 = vunpack.c.h.b16 %v346
      %v954 = vunpack.c.l.b16 %v347
      %v955 = vunpack.c.h.b16 %v347
      %v956 = vunpack.c.l.b16 %v348
      %v957 = vunpack.c.h.b16 %v348
      %v958 = vunpack.c.l.b16 %v349
      %v959 = vunpack.c.h.b16 %v349
      %v960 = vunpack.c.l.b16 %v350
      %v961 = vunpack.c.h.b16 %v350
      %v962 = vunpack.c.l.b16 %v351
      %v963 = vunpack.c.h.b16 %v351
      %v964 = vunpack.c.l.b16 %v352
      %v965 = vunpack.c.h.b16 %v352
      %v966 = vunpack.c.l.b16 %v353
      %v967 = vunpack.c.h.b16 %v353
      %v968 = vunpack.c.l.b16 %v354
      %v969 = vunpack.c.h.b16 %v354
      %v970 = vunpack.c.l.b16 %v355
      %v971 = vunpack.c.h.b16 %v355
      %v972 = vunpack.c.l.b16 %v356
      %v973 = vunpack.c.h.b16 %v356
      %v974 = vunpack.c.l.b16 %v357
      %v975 = vunpack.c.h.b16 %v357
      %v976 = vunpack.c.l.b16 %v358
      %v977 = vunpack.c.h.b16 %v358
      %v978 = vunpack.c.l.b16 %v359
      %v979 = vunpack.c.h.b16 %v359
      %v980 = vunpack.c.l.b16 %v360
      %v981 = vunpack.c.h.b16 %v360
      %v982 = vunpack.c.l.b16 %v361
      %v983 = vunpack.c.h.b16 %v361
      %v984 = vunpack.c.l.b16 %v362
      %v985 = vunpack.c.h.b16 %v362
      %v986 = vunpack.c.l.b16 %v363
      %v987 = vunpack.c.h.b16 %v363
      %v988 = vunpack.c.l.b16 %v364
      %v989 = vunpack.c.h.b16 %v364
      %v990 = vunpack.c.l.b16 %v365
      %v991 = vunpack.c.h.b16 %v365
      %v992 = vunpack.c.l.b16 %v366
      %v993 = vunpack.c.h.b16 %v366
      %v994 = vunpack.c.l.b16 %v367
      %v995 = vunpack.c.h.b16 %v367
      %v996 = vunpack.c.l.b16 %v368
      %v997 = vunpack.c.h.b16 %v368
      %v998 = vunpack.c.l.b16 %v369
      %v999 = vunpack.c.h.b16 %v369
      %v1000 = vunpack.c.l.b16 %v370
      %v1001 = vunpack.c.h.b16 %v370
      %v1002 = vunpack.c.l.b16 %v371
      %v1003 = vunpack.c.h.b16 %v371
      %v1004 = vunpack.c.l.b16 %v372
      %v1005 = vunpack.c.h.b16 %v372
      %v1006 = vunpack.c.l.b16 %v373
      %v1007 = vunpack.c.h.b16 %v373
      %v1008 = vunpack.c.l.b16 %v374
      %v1009 = vunpack.c.h.b16 %v374
      %v1010 = vunpack.c.l.b16 %v375
      %v1011 = vunpack.c.h.b16 %v375
      %v1012 = vunpack.c.l.b16 %v376
      %v1013 = vunpack.c.h.b16 %v376
      %v1014 = vunpack.c.l.b16 %v377
      %v1015 = vunpack.c.h.b16 %v377
      %v1016 = vunpack.c.l.b16 %v378
      %v1017 = vunpack.c.h.b16 %v378
      %v1018 = vunpack.c.l.b16 %v379
      %v1019 = vunpack.c.h.b16 %v379
      %v1020 = vunpack.c.l.b16 %v380
      %v1021 = vunpack.c.h.b16 %v380
      %v1022 = vunpack.c.l.b16 %v381
      %v1023 = vunpack.c.h.b16 %v381
      %v1024 = vunpack.c.l.b16 %v382
      %v1025 = vunpack.c.h.b16 %v382
      %v1026 = vunpack.c.l.b16 %v383
      %v1027 = vunpack.c.h.b16 %v383
      %v1028 = vunpack.c.l.b16 %v384
      %v1029 = vunpack.c.h.b16 %v384
      %v1030 = vunpack.c.l.b16 %v385
      %v1031 = vunpack.c.h.b16 %v385
      %v1032 = vunpack.c.l.b16 %v386
      %v1033 = vunpack.c.h.b16 %v386
      %v1034 = vunpack.c.l.b16 %v387
      %v1035 = vunpack.c.h.b16 %v387
      %v1036 = vunpack.c.l.b16 %v388
      %v1037 = vunpack.c.h.b16 %v388
      %v1038 = vunpack.c.l.b16 %v389
      %v1039 = vunpack.c.h.b16 %v389
      %v1040 = vunpack.c.l.b16 %v390
      %v1041 = vunpack.c.h.b16 %v390
      %v1042 = vunpack.c.l.b16 %v391
      %v1043 = vunpack.c.h.b16 %v391
      %v1044 = vunpack.c.l.b16 %v392
      %v1045 = vunpack.c.h.b16 %v392
      %v1046 = vunpack.c.l.b16 %v393
      %v1047 = vunpack.c.h.b16 %v393
      %v1048 = vunpack.c.l.b16 %v394
      %v1049 = vunpack.c.h.b16 %v394
      %v1050 = vunpack.c.l.b16 %v395
      %v1051 = vunpack.c.h.b16 %v395
      %v1052 = vunpack.c.l.b16 %v396
      %v1053 = vunpack.c.h.b16 %v396
      %v1054 = vunpack.c.l.b16 %v397
      %v1055 = vunpack.c.h.b16 %v397
      %v1056 = vunpack.c.l.b16 %v398
      %v1057 = vunpack.c.h.b16 %v398
      %v1058 = vunpack.c.l.b16 %v399
      %v1059 = vunpack.c.h.b16 %v399
      %v1060 = vunpack.c.l.b16 %v400
      %v1061 = vunpack.c.h.b16 %v400
      %v1062 = vunpack.c.l.b16 %v401
      %v1063 = vunpack.c.h.b16 %v401
      %v1064 = vunpack.c.l.b16 %v402
      %v1065 = vunpack.c.h.b16 %v402
      %v1066 = vunpack.c.l.b16 %v403
      %v1067 = vunpack.c.h.b16 %v403
      %v1068 = vunpack.c.l.b16 %v404
      %v1069 = vunpack.c.h.b16 %v404
      %v1070 = vunpack.c.l.b16 %v405
      %v1071 = vunpack.c.h.b16 %v405
      %v1072 = vunpack.c.l.b16 %v406
      %v1073 = vunpack.c.h.b16 %v406
      %v1074 = vunpack.c.l.b16 %v407
      %v1075 = vunpack.c.h.b16 %v407
      %v1076 = vunpack.c.l.b16 %v408
      %v1077 = vunpack.c.h.b16 %v408
      %v1078 = vunpack.c.l.b16 %v409
      %v1079 = vunpack.c.h.b16 %v409
      %v1080 = vunpack.c.l.b16 %v410
      %v1081 = vunpack.c.h.b16 %v410
      %v1082 = vunpack.c.l.b16 %v411
      %v1083 = vunpack.c.h.b16 %v411
      %v1084 = vunpack.c.l.b16 %v412
      %v1085 = vunpack.c.h.b16 %v412
      %v1086 = vunpack.c.l.b16 %v413
      %v1087 = vunpack.c.h.b16 %v413
      %v1088 = vunpack.c.l.b16 %v414
      %v1089 = vunpack.c.h.b16 %v414
      %v1090 = vunpack.c.l.b16 %v415
      %v1091 = vunpack.c.h.b16 %v415
      %v1092 = vunpack.c.l.b16 %v416
      %v1093 = vunpack.c.h.b16 %v416
      %v1094 = vunpack.c.l.b16 %v417
      %v1095 = vunpack.c.h.b16 %v417
      %v1096 = vunpack.c.l.b16 %v418
      %v1097 = vunpack.c.h.b16 %v418
      %v1098 = vunpack.c.l.b16 %v419
      %v1099 = vunpack.c.h.b16 %v419
      %v1100 = vunpack.c.l.b16 %v420
      %v1101 = vunpack.c.h.b16 %v420
      %v1102 = vunpack.c.l.b16 %v421
      %v1103 = vunpack.c.h.b16 %v421
      %v1104 = vunpack.c.l.b16 %v422
      %v1105 = vunpack.c.h.b16 %v422
      %v1106 = vunpack.c.l.b16 %v423
      %v1107 = vunpack.c.h.b16 %v423
      %v1108 = vunpack.c.l.b16 %v424
      %v1109 = vunpack.c.h.b16 %v424
      %v1110 = vunpack.c.l.b16 %v425
      %v1111 = vunpack.c.h.b16 %v425
      %v1112 = vunpack.c.l.b16 %v426
      %v1113 = vunpack.c.h.b16 %v426
      %v1114 = vunpack.c.l.b16 %v427
      %v1115 = vunpack.c.h.b16 %v427
      %v1116 = vunpack.c.l.b16 %v428
      %v1117 = vunpack.c.h.b16 %v428
      %v1118 = vunpack.c.l.b16 %v429
      %v1119 = vunpack.c.h.b16 %v429
      %v1120 = vunpack.c.l.b16 %v430
      %v1121 = vunpack.c.h.b16 %v430
      %v1122 = vunpack.c.l.b16 %v431
      %v1123 = vunpack.c.h.b16 %v431
      %v1124 = vunpack.c.l.b16 %v432
      %v1125 = vunpack.c.h.b16 %v432
      %v1126 = vunpack.c.l.b16 %v433
      %v1127 = vunpack.c.h.b16 %v433
      %v1128 = vunpack.c.l.b16 %v434
      %v1129 = vunpack.c.h.b16 %v434
      %v1130 = vpack.c.b16 %v702, %v698
      %v1131 = vpack.c.b16 %v703, %v699
      %v1132 = vpack.c.b16 %v704, %v700
      %v1133 = vpack.c.b16 %v705, %v701
      %v1134 = vpack.c.b16 %v710, %v706
      %v1135 = vpack.c.b16 %v711, %v707
      %v1136 = vpack.c.b16 %v712, %v708
      %v1137 = vpack.c.b16 %v713, %v709
      %v1138 = vpack.c.b16 %v718, %v714
      %v1139 = vpack.c.b16 %v719, %v715
      %v1140 = vpack.c.b16 %v720, %v716
      %v1141 = vpack.c.b16 %v721, %v717
      %v1142 = vpack.c.b16 %v726, %v722
      %v1143 = vpack.c.b16 %v727, %v723
      %v1144 = vpack.c.b16 %v728, %v724
      %v1145 = vpack.c.b16 %v729, %v725
      %v1146 = vpack.c.b16 %v734, %v730
      %v1147 = vpack.c.b16 %v735, %v731
      %v1148 = vpack.c.b16 %v736, %v732
      %v1149 = vpack.c.b16 %v737, %v733
      %v1150 = vpack.c.b16 %v742, %v738
      %v1151 = vpack.c.b16 %v743, %v739
      %v1152 = vpack.c.b16 %v744, %v740
      %v1153 = vpack.c.b16 %v745, %v741
      %v1154 = vpack.c.b16 %v750, %v746
      %v1155 = vpack.c.b16 %v751, %v747
      %v1156 = vpack.c.b16 %v752, %v748
      %v1157 = vpack.c.b16 %v753, %v749
      %v1158 = vpack.c.b16 %v758, %v754
      %v1159 = vpack.c.b16 %v759, %v755
      %v1160 = vpack.c.b16 %v760, %v756
      %v1161 = vpack.c.b16 %v761, %v757
      %v1162 = vpack.c.b16 %v766, %v762
      %v1163 = vpack.c.b16 %v767, %v763
      %v1164 = vpack.c.b16 %v768, %v764
      %v1165 = vpack.c.b16 %v769, %v765
      %v1166 = vpack.c.b16 %v774, %v770
      %v1167 = vpack.c.b16 %v775, %v771
      %v1168 = vpack.c.b16 %v776, %v772
      %v1169 = vpack.c.b16 %v777, %v773
      %v1170 = vpack.c.b16 %v782, %v778
      %v1171 = vpack.c.b16 %v783, %v779
      %v1172 = vpack.c.b16 %v784, %v780
      %v1173 = vpack.c.b16 %v785, %v781
      %v1174 = vpack.c.b16 %v790, %v786
      %v1175 = vpack.c.b16 %v791, %v787
      %v1176 = vpack.c.b16 %v792, %v788
      %v1177 = vpack.c.b16 %v793, %v789
      %v1178 = vpack.c.b16 %v798, %v794
      %v1179 = vpack.c.b16 %v799, %v795
      %v1180 = vpack.c.b16 %v800, %v796
      %v1181 = vpack.c.b16 %v801, %v797
      %v1182 = vpack.c.b16 %v806, %v802
      %v1183 = vpack.c.b16 %v807, %v803
      %v1184 = vpack.c.b16 %v808, %v804
      %v1185 = vpack.c.b16 %v809, %v805
      %v1186 = vpack.c.b16 %v814, %v810
      %v1187 = vpack.c.b16 %v815, %v811
      %v1188 = vpack.c.b16 %v816, %v812
      %v1189 = vpack.c.b16 %v817, %v813
      %v1190 = vpack.c.b16 %v822, %v818
      %v1191 = vpack.c.b16 %v823, %v819
      %v1192 = vpack.c.b16 %v824, %v820
      %v1193 = vpack.c.b16 %v825, %v821
      %v1194 = vpack.c.b16 %v830, %v826
      %v1195 = vpack.c.b16 %v831, %v827
      %v1196 = vpack.c.b16 %v832, %v828
      %v1197 = vpack.c.b16 %v833, %v829
      %v1198 = vpack.c.b16 %v838, %v834
      %v1199 = vpack.c.b16 %v839, %v835
      %v1200 = vpack.c.b16 %v840, %v836
      %v1201 = vpack.c.b16 %v841, %v837
      %v1202 = vpack.c.b16 %v846, %v842
      %v1203 = vpack.c.b16 %v847, %v843
      %v1204 = vpack.c.b16 %v848, %v844
      %v1205 = vpack.c.b16 %v849, %v845
      %v1206 = vpack.c.b16 %v854, %v850
      %v1207 = vpack.c.b16 %v855, %v851
      %v1208 = vpack.c.b16 %v856, %v852
      %v1209 = vpack.c.b16 %v857, %v853
      %v1210 = vpack.c.b16 %v862, %v858
      %v1211 = vpack.c.b16 %v863, %v859
      %v1212 = vpack.c.b16 %v864, %v860
      %v1213 = vpack.c.b16 %v865, %v861
      %v1214 = vpack.c.b16 %v870, %v866
      %v1215 = vpack.c.b16 %v871, %v867
      %v1216 = vpack.c.b16 %v872, %v868
      %v1217 = vpack.c.b16 %v873, %v869
      %v1218 = vpack.c.b16 %v878, %v874
      %v1219 = vpack.c.b16 %v879, %v875
      %v1220 = vpack.c.b16 %v880, %v876
      %v1221 = vpack.c.b16 %v881, %v877
      %v1222 = vpack.c.b16 %v886, %v882
      %v1223 = vpack.c.b16 %v887, %v883
      %v1224 = vpack.c.b16 %v888, %v884
      %v1225 = vpack.c.b16 %v889, %v885
      %v1226 = vpack.c.b16 %v894, %v890
      %v1227 = vpack.c.b16 %v895, %v891
      %v1228 = vpack.c.b16 %v896, %v892
      %v1229 = vpack.c.b16 %v897, %v893
      %v1230 = vpack.c.b16 %v902, %v898
      %v1231 = vpack.c.b16 %v903, %v899
      %v1232 = vpack.c.b16 %v904, %v900
      %v1233 = vpack.c.b16 %v905, %v901
      %v1234 = vpack.c.b16 %v910, %v906
      %v1235 = vpack.c.b16 %v911, %v907
      %v1236 = vpack.c.b16 %v912, %v908
      %v1237 = vpack.c.b16 %v913, %v909
      %v1238 = vpack.c.b16 %v918, %v914
      %v1239 = vpack.c.b16 %v919, %v915
      %v1240 = vpack.c.b16 %v920, %v916
      %v1241 = vpack.c.b16 %v921, %v917
      %v1242 = vpack.c.b16 %v926, %v922
      %v1243 = vpack.c.b16 %v927, %v923
      %v1244 = vpack.c.b16 %v928, %v924
      %v1245 = vpack.c.b16 %v929, %v925
      %v1246 = vpack.c.b16 %v934, %v930
      %v1247 = vpack.c.b16 %v935, %v931
      %v1248 = vpack.c.b16 %v936, %v932
      %v1249 = vpack.c.b16 %v937, %v933
      %v1250 = vpack.c.b16 %v942, %v938
      %v1251 = vpack.c.b16 %v943, %v939
      %v1252 = vpack.c.b16 %v944, %v940
      %v1253 = vpack.c.b16 %v945, %v941
      %v1254 = vpack.c.b16 %v950, %v946
      %v1255 = vpack.c.b16 %v951, %v947
      %v1256 = vpack.c.b16 %v952, %v948
      %v1257 = vpack.c.b16 %v953, %v949
      %v1258 = vpack.c.b16 %v958, %v954
      %v1259 = vpack.c.b16 %v959, %v955
      %v1260 = vpack.c.b16 %v960, %v956
      %v1261 = vpack.c.b16 %v961, %v957
      %v1262 = vpack.c.b16 %v966, %v962
      %v1263 = vpack.c.b16 %v967, %v963
      %v1264 = vpack.c.b16 %v968, %v964
      %v1265 = vpack.c.b16 %v969, %v965
      %v1266 = vpack.c.b16 %v974, %v970
      %v1267 = vpack.c.b16 %v975, %v971
      %v1268 = vpack.c.b16 %v976, %v972
      %v1269 = vpack.c.b16 %v977, %v973
      %v1270 = vpack.c.b16 %v982, %v978
      %v1271 = vpack.c.b16 %v983, %v979
      %v1272 = vpack.c.b16 %v984, %v980
      %v1273 = vpack.c.b16 %v985, %v981
      %v1274 = vpack.c.b16 %v990, %v986
      %v1275 = vpack.c.b16 %v991, %v987
      %v1276 = vpack.c.b16 %v992, %v988
      %v1277 = vpack.c.b16 %v993, %v989
      %v1278 = vpack.c.b16 %v998, %v994
      %v1279 = vpack.c.b16 %v999, %v995
      %v1280 = vpack.c.b16 %v1000, %v996
      %v1281 = vpack.c.b16 %v1001, %v997
      %v1282 = vpack.c.b16 %v1006, %v1002
      %v1283 = vpack.c.b16 %v1007, %v1003
      %v1284 = vpack.c.b16 %v1008, %v1004
      %v1285 = vpack.c.b16 %v1009, %v1005
      %v1286 = vpack.c.b16 %v1014, %v1010
      %v1287 = vpack.c.b16 %v1015, %v1011
      %v1288 = vpack.c.b16 %v1016, %v1012
      %v1289 = vpack.c.b16 %v1017, %v1013
      %v1290 = vpack.c.b16 %v1022, %v1018
      %v1291 = vpack.c.b16 %v1023, %v1019
      %v1292 = vpack.c.b16 %v1024, %v1020
      %v1293 = vpack.c.b16 %v1025, %v1021
      %v1294 = vpack.c.b16 %v1030, %v1026
      %v1295 = vpack.c.b16 %v1031, %v1027
      %v1296 = vpack.c.b16 %v1032, %v1028
      %v1297 = vpack.c.b16 %v1033, %v1029
      %v1298 = vpack.c.b16 %v1038, %v1034
      %v1299 = vpack.c.b16 %v1039, %v1035
      %v1300 = vpack.c.b16 %v1040, %v1036
      %v1301 = vpack.c.b16 %v1041, %v1037
      %v1302 = vpack.c.b16 %v1046, %v1042
      %v1303 = vpack.c.b16 %v1047, %v1043
      %v1304 = vpack.c.b16 %v1048, %v1044
      %v1305 = vpack.c.b16 %v1049, %v1045
      %v1306 = vpack.c.b16 %v1054, %v1050
      %v1307 = vpack.c.b16 %v1055, %v1051
      %v1308 = vpack.c.b16 %v1056, %v1052
      %v1309 = vpack.c.b16 %v1057, %v1053
      %v1310 = vpack.c.b16 %v1062, %v1058
      %v1311 = vpack.c.b16 %v1063, %v1059
      %v1312 = vpack.c.b16 %v1064, %v1060
      %v1313 = vpack.c.b16 %v1065, %v1061
      %v1314 = vpack.c.b16 %v1070, %v1066
      %v1315 = vpack.c.b16 %v1071, %v1067
      %v1316 = vpack.c.b16 %v1072, %v1068
      %v1317 = vpack.c.b16 %v1073, %v1069
      %v1318 = vpack.c.b16 %v1078, %v1074
      %v1319 = vpack.c.b16 %v1079, %v1075
      %v1320 = vpack.c.b16 %v1080, %v1076
      %v1321 = vpack.c.b16 %v1081, %v1077
      %v1322 = vpack.c.b16 %v1086, %v1082
      %v1323 = vpack.c.b16 %v1087, %v1083
      %v1324 = vpack.c.b16 %v1088, %v1084
      %v1325 = vpack.c.b16 %v1089, %v1085
      %v1326 = vpack.c.b16 %v1094, %v1090
      %v1327 = vpack.c.b16 %v1095, %v1091
      %v1328 = vpack.c.b16 %v1096, %v1092
      %v1329 = vpack.c.b16 %v1097, %v1093
      %v1330 = vpack.c.b16 %v1102, %v1098
      %v1331 = vpack.c.b16 %v1103, %v1099
      %v1332 = vpack.c.b16 %v1104, %v1100
      %v1333 = vpack.c.b16 %v1105, %v1101
      %v1334 = vpack.c.b16 %v1110, %v1106
      %v1335 = vpack.c.b16 %v1111, %v1107
      %v1336 = vpack.c.b16 %v1112, %v1108
      %v1337 = vpack.c.b16 %v1113, %v1109
      %v1338 = vpack.c.b16 %v1118, %v1114
      %v1339 = vpack.c.b16 %v1119, %v1115
      %v1340 = vpack.c.b16 %v1120, %v1116
      %v1341 = vpack.c.b16 %v1121, %v1117
      %v1342 = vpack.c.b16 %v1126, %v1122
      %v1343 = vpack.c.b16 %v1127, %v1123
      %v1344 = vpack.c.b16 %v1128, %v1124
      %v1345 = vpack.c.b16 %v1129, %v1125
      %vm1562 = vcmask 785408
      %v1564 = vsel %vm1562, %v475, 0
      %1566 = vmatprep.subr.bf16.mxu0 %v1159
      %1567 = vmatpush1.bf16.msra.mxu0 %v1158
      %1568 = vmatprep.subr.bf16.mxu0 %v1155
      %1569 = vmatpush1.bf16.msra.mxu0 %v1154
      %1570 = vmatprep.subr.bf16.mxu0 %v1151
      %1571 = vmatpush1.bf16.msra.mxu0 %v1150
      %1572 = vmatprep.subr.bf16.mxu0 %v1147
      %1573 = vmatpush1.bf16.msra.mxu0 %v1146
      %1574 = vmatprep.subr.bf16.mxu0 %v1143
      %1575 = vmatpush1.bf16.msra.mxu0 %v1142
      %1576 = vmatprep.subr.bf16.mxu0 %v1139
      %1577 = vmatpush1.bf16.msra.mxu0 %v1138
      %1578 = vmatprep.subr.bf16.mxu0 %v1135
      %1579 = vmatpush1.bf16.msra.mxu0 %v1134
      %1580 = vmatprep.subr.bf16.mxu0 %v1131
      %1581 = vmatpush1.bf16.msra.mxu0 %v1130
      %1582 = vmatprep.subr.bf16.mxu0 %v1191
      %1583 = vmatpush2.bf16.msra.mxu0 %v1190
      %1584 = vmatprep.subr.bf16.mxu0 %v1187
      %1585 = vmatpush2.bf16.msra.mxu0 %v1186
      %1586 = vmatprep.subr.bf16.mxu0 %v1183
      %1587 = vmatpush2.bf16.msra.mxu0 %v1182
      %1588 = vmatprep.subr.bf16.mxu0 %v1179
      %1589 = vmatpush2.bf16.msra.mxu0 %v1178
      %1590 = vmatprep.subr.bf16.mxu0 %v1175
      %1591 = vmatpush2.bf16.msra.mxu0 %v1174
      %1592 = vmatprep.subr.bf16.mxu0 %v1171
      %1593 = vmatpush2.bf16.msra.mxu0 %v1170
      %1594 = vmatprep.subr.bf16.mxu0 %v1167
      %1595 = vmatpush2.bf16.msra.mxu0 %v1166
      %1596 = vmatprep.subr.bf16.mxu0 %v1163
      %1597 = vmatpush2.bf16.msra.mxu0 %v1162
      %1598 = vmatprep.mubr.bf16.mxu0 %v470
      %1599 = vmatmul.mubr.bf16.gmra.mxu0 %v469
      %v1600 = vpop.f32.mrf.mxu0
      %v1601 = vadd.f32 %v440, %v1600
      %v1602 = vpop.f32.mrf.mxu0
      %v1603 = vadd.f32 %v440, %v1602
      %v1604 = vpop.f32.mrf.mxu0
      %v1605 = vadd.f32 %v445, %v1604
      %v1606 = vpop.f32.mrf.mxu0
      %v1607 = vadd.f32 %v445, %v1606
      %1608 = vdwg.mxu0
      %1609 = vmatprep.subr.bf16.mxu0 %v1223
      %1610 = vmatpush1.bf16.msra.mxu0 %v1222
      %1611 = vmatprep.subr.bf16.mxu0 %v1219
      %1612 = vmatpush1.bf16.msra.mxu0 %v1218
      %1613 = vmatprep.subr.bf16.mxu0 %v1215
      %1614 = vmatpush1.bf16.msra.mxu0 %v1214
      %1615 = vmatprep.subr.bf16.mxu0 %v1211
      %1616 = vmatpush1.bf16.msra.mxu0 %v1210
      %1617 = vmatprep.subr.bf16.mxu0 %v1207
      %1618 = vmatpush1.bf16.msra.mxu0 %v1206
      %1619 = vmatprep.subr.bf16.mxu0 %v1203
      %1620 = vmatpush1.bf16.msra.mxu0 %v1202
      %1621 = vmatprep.subr.bf16.mxu0 %v1199
      %1622 = vmatpush1.bf16.msra.mxu0 %v1198
      %1623 = vmatprep.subr.bf16.mxu0 %v1195
      %1624 = vmatpush1.bf16.msra.mxu0 %v1194
      %1625 = vmatprep.subr.bf16.mxu0 %v1255
      %1626 = vmatpush2.bf16.msra.mxu0 %v1254
      %1627 = vmatprep.subr.bf16.mxu0 %v1251
      %1628 = vmatpush2.bf16.msra.mxu0 %v1250
      %1629 = vmatprep.subr.bf16.mxu0 %v1247
      %1630 = vmatpush2.bf16.msra.mxu0 %v1246
      %1631 = vmatprep.subr.bf16.mxu0 %v1243
      %1632 = vmatpush2.bf16.msra.mxu0 %v1242
      %1633 = vmatprep.subr.bf16.mxu0 %v1239
      %1634 = vmatpush2.bf16.msra.mxu0 %v1238
      %1635 = vmatprep.subr.bf16.mxu0 %v1235
      %1636 = vmatpush2.bf16.msra.mxu0 %v1234
      %1637 = vmatprep.subr.bf16.mxu0 %v1231
      %1638 = vmatpush2.bf16.msra.mxu0 %v1230
      %1639 = vmatprep.subr.bf16.mxu0 %v1227
      %1640 = vmatpush2.bf16.msra.mxu0 %v1226
      %1641 = vmatprep.mubr.bf16.mxu0 %v472
      %1642 = vmatmul.mubr.bf16.gmra.mxu0 %v471
      %v1643 = vpop.f32.mrf.mxu0
      %v1644 = vadd.f32 %v1601, %v1643
      %v1645 = vpop.f32.mrf.mxu0
      %v1646 = vadd.f32 %v1603, %v1645
      %v1647 = vpop.f32.mrf.mxu0
      %v1648 = vadd.f32 %v1605, %v1647
      %v1649 = vpop.f32.mrf.mxu0
      %v1650 = vadd.f32 %v1607, %v1649
      %1651 = vdwg.mxu0
      %1652 = vmatprep.subr.bf16.mxu0 %v1287
      %1653 = vmatpush1.bf16.msra.mxu0 %v1286
      %1654 = vmatprep.subr.bf16.mxu0 %v1283
      %1655 = vmatpush1.bf16.msra.mxu0 %v1282
      %1656 = vmatprep.subr.bf16.mxu0 %v1279
      %1657 = vmatpush1.bf16.msra.mxu0 %v1278
      %1658 = vmatprep.subr.bf16.mxu0 %v1275
      %1659 = vmatpush1.bf16.msra.mxu0 %v1274
      %1660 = vmatprep.subr.bf16.mxu0 %v1271
      %1661 = vmatpush1.bf16.msra.mxu0 %v1270
      %1662 = vmatprep.subr.bf16.mxu0 %v1267
      %1663 = vmatpush1.bf16.msra.mxu0 %v1266
      %1664 = vmatprep.subr.bf16.mxu0 %v1263
      %1665 = vmatpush1.bf16.msra.mxu0 %v1262
      %1666 = vmatprep.subr.bf16.mxu0 %v1259
      %1667 = vmatpush1.bf16.msra.mxu0 %v1258
      %1668 = vmatprep.subr.bf16.mxu0 %v1319
      %1669 = vmatpush2.bf16.msra.mxu0 %v1318
      %1670 = vmatprep.subr.bf16.mxu0 %v1315
      %1671 = vmatpush2.bf16.msra.mxu0 %v1314
      %1672 = vmatprep.subr.bf16.mxu0 %v1311
      %1673 = vmatpush2.bf16.msra.mxu0 %v1310
      %1674 = vmatprep.subr.bf16.mxu0 %v1307
      %1675 = vmatpush2.bf16.msra.mxu0 %v1306
      %1676 = vmatprep.subr.bf16.mxu0 %v1303
      %1677 = vmatpush2.bf16.msra.mxu0 %v1302
      %1678 = vmatprep.subr.bf16.mxu0 %v1299
      %1679 = vmatpush2.bf16.msra.mxu0 %v1298
      %1680 = vmatprep.subr.bf16.mxu0 %v1295
      %1681 = vmatpush2.bf16.msra.mxu0 %v1294
      %1682 = vmatprep.subr.bf16.mxu0 %v1291
      %1683 = vmatpush2.bf16.msra.mxu0 %v1290
      %1684 = vmatprep.mubr.bf16.mxu0 %v474
      %1685 = vmatmul.mubr.bf16.gmra.mxu0 %v473
      %v1686 = vpop.f32.mrf.mxu0
      %v1687 = vadd.f32 %v1644, %v1686
      %v1688 = vpop.f32.mrf.mxu0
      %v1689 = vadd.f32 %v1646, %v1688
      %v1690 = vpop.f32.mrf.mxu0
      %v1691 = vadd.f32 %v1648, %v1690
      %v1692 = vpop.f32.mrf.mxu0
      %v1693 = vadd.f32 %v1650, %v1692
      %1694 = vdwg.mxu0
      %1695 = vmatprep.subr.bf16.mxu0 0
      %1696 = vmatpush1.bf16.msra.mxu0 0
      %1697 = vmatprep.subr.bf16.mxu0 0
      %1698 = vmatpush1.bf16.msra.mxu0 0
      %1699 = vmatprep.subr.bf16.mxu0 %v1343
      %1700 = vmatpush1.bf16.msra.mxu0 %v1342
      %1701 = vmatprep.subr.bf16.mxu0 %v1339
      %1702 = vmatpush1.bf16.msra.mxu0 %v1338
      %1703 = vmatprep.subr.bf16.mxu0 %v1335
      %1704 = vmatpush1.bf16.msra.mxu0 %v1334
      %1705 = vmatprep.subr.bf16.mxu0 %v1331
      %1706 = vmatpush1.bf16.msra.mxu0 %v1330
      %1707 = vmatprep.subr.bf16.mxu0 %v1327
      %1708 = vmatpush1.bf16.msra.mxu0 %v1326
      %1709 = vmatprep.subr.bf16.mxu0 %v1323
      %1710 = vmatpush1.bf16.msra.mxu0 %v1322
      %1711 = vmatprep.subr.bf16.mxu0 0
      %1712 = vmatpush2.bf16.msra.mxu0 0
      %1713 = vmatprep.subr.bf16.mxu0 0
      %1714 = vmatpush2.bf16.msra.mxu0 0
      %1715 = vmatprep.subr.bf16.mxu0 0
      %1716 = vmatpush2.bf16.msra.mxu0 0
      %1717 = vmatprep.subr.bf16.mxu0 0
      %1718 = vmatpush2.bf16.msra.mxu0 0
      %1719 = vmatprep.subr.bf16.mxu0 0
      %1720 = vmatpush2.bf16.msra.mxu0 0
      %1721 = vmatprep.subr.bf16.mxu0 0
      %1722 = vmatpush2.bf16.msra.mxu0 0
      %1723 = vmatprep.subr.bf16.mxu0 0
      %1724 = vmatpush2.bf16.msra.mxu0 0
      %1725 = vmatprep.subr.bf16.mxu0 0
      %1726 = vmatpush2.bf16.msra.mxu0 0
      %1727 = vmatprep.mubr.bf16.mxu0 0
      %1728 = vmatmul.mubr.bf16.gmra.mxu0 %v1564
      %v1729 = vpop.f32.mrf.mxu0
      %v1730 = vadd.f32 %v1687, %v1729
      %v1731 = vpop.f32.mrf.mxu0
      %v1732 = vadd.f32 %v1689, %v1731
      %v1733 = vpop.f32.mrf.mxu0
      %v1734 = vadd.f32 %v1691, %v1733
      %v1735 = vpop.f32.mrf.mxu0
      %v1736 = vadd.f32 %v1693, %v1735
      %1737 = vdwg.mxu0
      %1738 = vmatprep.subr.bf16.mxu0 %v1161
      %1739 = vmatpush1.bf16.msra.mxu0 %v1160
      %1740 = vmatprep.subr.bf16.mxu0 %v1157
      %1741 = vmatpush1.bf16.msra.mxu0 %v1156
      %1742 = vmatprep.subr.bf16.mxu0 %v1153
      %1743 = vmatpush1.bf16.msra.mxu0 %v1152
      %1744 = vmatprep.subr.bf16.mxu0 %v1149
      %1745 = vmatpush1.bf16.msra.mxu0 %v1148
      %1746 = vmatprep.subr.bf16.mxu0 %v1145
      %1747 = vmatpush1.bf16.msra.mxu0 %v1144
      %1748 = vmatprep.subr.bf16.mxu0 %v1141
      %1749 = vmatpush1.bf16.msra.mxu0 %v1140
      %1750 = vmatprep.subr.bf16.mxu0 %v1137
      %1751 = vmatpush1.bf16.msra.mxu0 %v1136
      %1752 = vmatprep.subr.bf16.mxu0 %v1133
      %1753 = vmatpush1.bf16.msra.mxu0 %v1132
      %1754 = vmatprep.subr.bf16.mxu0 %v1193
      %1755 = vmatpush2.bf16.msra.mxu0 %v1192
      %1756 = vmatprep.subr.bf16.mxu0 %v1189
      %1757 = vmatpush2.bf16.msra.mxu0 %v1188
      %1758 = vmatprep.subr.bf16.mxu0 %v1185
      %1759 = vmatpush2.bf16.msra.mxu0 %v1184
      %1760 = vmatprep.subr.bf16.mxu0 %v1181
      %1761 = vmatpush2.bf16.msra.mxu0 %v1180
      %1762 = vmatprep.subr.bf16.mxu0 %v1177
      %1763 = vmatpush2.bf16.msra.mxu0 %v1176
      %1764 = vmatprep.subr.bf16.mxu0 %v1173
      %1765 = vmatpush2.bf16.msra.mxu0 %v1172
      %1766 = vmatprep.subr.bf16.mxu0 %v1169
      %1767 = vmatpush2.bf16.msra.mxu0 %v1168
      %1768 = vmatprep.subr.bf16.mxu0 %v1165
      %1769 = vmatpush2.bf16.msra.mxu0 %v1164
      %1770 = vmatprep.mubr.bf16.mxu0 %v470
      %1771 = vmatmul.mubr.bf16.gmra.mxu0 %v469
      %v1772 = vpop.f32.mrf.mxu0
      %v1773 = vadd.f32 %v440, %v1772
      %v1774 = vpop.f32.mrf.mxu0
      %v1775 = vadd.f32 %v440, %v1774
      %v1776 = vpop.f32.mrf.mxu0
      %v1777 = vadd.f32 %v445, %v1776
      %v1778 = vpop.f32.mrf.mxu0
      %v1779 = vadd.f32 %v445, %v1778
      %1780 = vdwg.mxu0
      %1781 = vmatprep.subr.bf16.mxu0 %v1225
      %1782 = vmatpush1.bf16.msra.mxu0 %v1224
      %1783 = vmatprep.subr.bf16.mxu0 %v1221
      %1784 = vmatpush1.bf16.msra.mxu0 %v1220
      %1785 = vmatprep.subr.bf16.mxu0 %v1217
      %1786 = vmatpush1.bf16.msra.mxu0 %v1216
      %1787 = vmatprep.subr.bf16.mxu0 %v1213
      %1788 = vmatpush1.bf16.msra.mxu0 %v1212
      %1789 = vmatprep.subr.bf16.mxu0 %v1209
      %1790 = vmatpush1.bf16.msra.mxu0 %v1208
      %1791 = vmatprep.subr.bf16.mxu0 %v1205
      %1792 = vmatpush1.bf16.msra.mxu0 %v1204
      %1793 = vmatprep.subr.bf16.mxu0 %v1201
      %1794 = vmatpush1.bf16.msra.mxu0 %v1200
      %1795 = vmatprep.subr.bf16.mxu0 %v1197
      %1796 = vmatpush1.bf16.msra.mxu0 %v1196
      %1797 = vmatprep.subr.bf16.mxu0 %v1257
      %1798 = vmatpush2.bf16.msra.mxu0 %v1256
      %1799 = vmatprep.subr.bf16.mxu0 %v1253
      %1800 = vmatpush2.bf16.msra.mxu0 %v1252
      %1801 = vmatprep.subr.bf16.mxu0 %v1249
      %1802 = vmatpush2.bf16.msra.mxu0 %v1248
      %1803 = vmatprep.subr.bf16.mxu0 %v1245
      %1804 = vmatpush2.bf16.msra.mxu0 %v1244
      %1805 = vmatprep.subr.bf16.mxu0 %v1241
      %1806 = vmatpush2.bf16.msra.mxu0 %v1240
      %1807 = vmatprep.subr.bf16.mxu0 %v1237
      %1808 = vmatpush2.bf16.msra.mxu0 %v1236
      %1809 = vmatprep.subr.bf16.mxu0 %v1233
      %1810 = vmatpush2.bf16.msra.mxu0 %v1232
      %1811 = vmatprep.subr.bf16.mxu0 %v1229
      %1812 = vmatpush2.bf16.msra.mxu0 %v1228
      %1813 = vmatprep.mubr.bf16.mxu0 %v472
      %1814 = vmatmul.mubr.bf16.gmra.mxu0 %v471
      %v1815 = vpop.f32.mrf.mxu0
      %v1816 = vadd.f32 %v1773, %v1815
      %v1817 = vpop.f32.mrf.mxu0
      %v1818 = vadd.f32 %v1775, %v1817
      %v1819 = vpop.f32.mrf.mxu0
      %v1820 = vadd.f32 %v1777, %v1819
      %v1821 = vpop.f32.mrf.mxu0
      %v1822 = vadd.f32 %v1779, %v1821
      %1823 = vdwg.mxu0
      %1824 = vmatprep.subr.bf16.mxu0 %v1289
      %1825 = vmatpush1.bf16.msra.mxu0 %v1288
      %1826 = vmatprep.subr.bf16.mxu0 %v1285
      %1827 = vmatpush1.bf16.msra.mxu0 %v1284
      %1828 = vmatprep.subr.bf16.mxu0 %v1281
      %1829 = vmatpush1.bf16.msra.mxu0 %v1280
      %1830 = vmatprep.subr.bf16.mxu0 %v1277
      %1831 = vmatpush1.bf16.msra.mxu0 %v1276
      %1832 = vmatprep.subr.bf16.mxu0 %v1273
      %1833 = vmatpush1.bf16.msra.mxu0 %v1272
      %1834 = vmatprep.subr.bf16.mxu0 %v1269
      %1835 = vmatpush1.bf16.msra.mxu0 %v1268
      %1836 = vmatprep.subr.bf16.mxu0 %v1265
      %1837 = vmatpush1.bf16.msra.mxu0 %v1264
      %1838 = vmatprep.subr.bf16.mxu0 %v1261
      %1839 = vmatpush1.bf16.msra.mxu0 %v1260
      %1840 = vmatprep.subr.bf16.mxu0 %v1321
      %1841 = vmatpush2.bf16.msra.mxu0 %v1320
      %1842 = vmatprep.subr.bf16.mxu0 %v1317
      %1843 = vmatpush2.bf16.msra.mxu0 %v1316
      %1844 = vmatprep.subr.bf16.mxu0 %v1313
      %1845 = vmatpush2.bf16.msra.mxu0 %v1312
      %1846 = vmatprep.subr.bf16.mxu0 %v1309
      %1847 = vmatpush2.bf16.msra.mxu0 %v1308
      %1848 = vmatprep.subr.bf16.mxu0 %v1305
      %1849 = vmatpush2.bf16.msra.mxu0 %v1304
      %1850 = vmatprep.subr.bf16.mxu0 %v1301
      %1851 = vmatpush2.bf16.msra.mxu0 %v1300
      %1852 = vmatprep.subr.bf16.mxu0 %v1297
      %1853 = vmatpush2.bf16.msra.mxu0 %v1296
      %1854 = vmatprep.subr.bf16.mxu0 %v1293
      %1855 = vmatpush2.bf16.msra.mxu0 %v1292
      %1856 = vmatprep.mubr.bf16.mxu0 %v474
      %1857 = vmatmul.mubr.bf16.gmra.mxu0 %v473
      %v1858 = vpop.f32.mrf.mxu0
      %v1859 = vadd.f32 %v1816, %v1858
      %v1860 = vpop.f32.mrf.mxu0
      %v1861 = vadd.f32 %v1818, %v1860
      %v1862 = vpop.f32.mrf.mxu0
      %v1863 = vadd.f32 %v1820, %v1862
      %v1864 = vpop.f32.mrf.mxu0
      %v1865 = vadd.f32 %v1822, %v1864
      %1866 = vdwg.mxu0
      %1867 = vmatprep.subr.bf16.mxu0 0
      %1868 = vmatpush1.bf16.msra.mxu0 0
      %1869 = vmatprep.subr.bf16.mxu0 0
      %1870 = vmatpush1.bf16.msra.mxu0 0
      %1871 = vmatprep.subr.bf16.mxu0 %v1345
      %1872 = vmatpush1.bf16.msra.mxu0 %v1344
      %1873 = vmatprep.subr.bf16.mxu0 %v1341
      %1874 = vmatpush1.bf16.msra.mxu0 %v1340
      %1875 = vmatprep.subr.bf16.mxu0 %v1337
      %1876 = vmatpush1.bf16.msra.mxu0 %v1336
      %1877 = vmatprep.subr.bf16.mxu0 %v1333
      %1878 = vmatpush1.bf16.msra.mxu0 %v1332
      %1879 = vmatprep.subr.bf16.mxu0 %v1329
      %1880 = vmatpush1.bf16.msra.mxu0 %v1328
      %1881 = vmatprep.subr.bf16.mxu0 %v1325
      %1882 = vmatpush1.bf16.msra.mxu0 %v1324
      %1883 = vmatprep.subr.bf16.mxu0 0
      %1884 = vmatpush2.bf16.msra.mxu0 0
      %1885 = vmatprep.subr.bf16.mxu0 0
      %1886 = vmatpush2.bf16.msra.mxu0 0
      %1887 = vmatprep.subr.bf16.mxu0 0
      %1888 = vmatpush2.bf16.msra.mxu0 0
      %1889 = vmatprep.subr.bf16.mxu0 0
      %1890 = vmatpush2.bf16.msra.mxu0 0
      %1891 = vmatprep.subr.bf16.mxu0 0
      %1892 = vmatpush2.bf16.msra.mxu0 0
      %1893 = vmatprep.subr.bf16.mxu0 0
      %1894 = vmatpush2.bf16.msra.mxu0 0
      %1895 = vmatprep.subr.bf16.mxu0 0
      %1896 = vmatpush2.bf16.msra.mxu0 0
      %1897 = vmatprep.subr.bf16.mxu0 0
      %1898 = vmatpush2.bf16.msra.mxu0 0
      %1899 = vmatprep.mubr.bf16.mxu0 0
      %1900 = vmatmul.mubr.bf16.gmra.mxu0 %v1564
      %v1901 = vpop.f32.mrf.mxu0
      %v1902 = vadd.f32 %v1859, %v1901
      %v1903 = vpop.f32.mrf.mxu0
      %v1904 = vadd.f32 %v1861, %v1903
      %v1905 = vpop.f32.mrf.mxu0
      %v1906 = vadd.f32 %v1863, %v1905
      %v1907 = vpop.f32.mrf.mxu0
      %v1908 = vadd.f32 %v1865, %v1907
      %1909 = vdwg.mxu0
      %v1910 = vmax.f32 %v1730, 0.0
      %v1911 = vmax.f32 %v1732, 0.0
      %v1912 = vmax.f32 %v1902, 0.0
      %v1913 = vmax.f32 %v1904, 0.0
      %v1914 = vmax.f32 %v1734, 0.0
      %v1915 = vmax.f32 %v1736, 0.0
      %v1916 = vmax.f32 %v1906, 0.0
      %v1917 = vmax.f32 %v1908, 0.0
      %v1918 = vpack.c.bf16 %v1914, %v1910
      %v1919 = vpack.c.bf16 %v1915, %v1911
      %v1920 = vpack.c.bf16 %v1916, %v1912
      %v1921 = vpack.c.bf16 %v1917, %v1913
      %v1926 = vunpack.c.l.b16 %v1918
      %v1927 = vunpack.c.l.b16 %v1919
      %v1928 = vunpack.c.l.b16 %v1920
      %v1929 = vunpack.c.l.b16 %v1921
      %v1930 = vunpack.c.h.b16 %v1918
      %v1931 = vunpack.c.h.b16 %v1919
      %v1932 = vunpack.c.h.b16 %v1920
      %v1933 = vunpack.c.h.b16 %v1921
      %v1934 = vpack.c.b16 %v1927, %v1926
      %v1935 = vpack.c.b16 %v1929, %v1928
      %v1936 = vpack.c.b16 %v1931, %v1930
      %v1937 = vpack.c.b16 %v1933, %v1932
      %1942 = vst [vmem:[%s208] sm:$0xff] %v1934
      %1943 = vst [vmem:[%s208 + $0x8] sm:$0xff] %v1935
      %1944 = vst [vmem:[%s208 + $0x10] sm:$0xff] %v1936
      %1945 = vst [vmem:[%s208 + $0x18] sm:$0xff] %v1937
      %s1946 = smul.u32 4, %s19
      %p1947 = scmp.lt.s32.totalorder %s18, 1
      %s1948 = scalar_select %p1947, %s18, 1
      %p1949 = scmp.lt.s32.totalorder %s1946, 3
      %s1950 = scalar_select %p1949, %s1946, 3
      %s1951 = smul.addr %s1948, 8
      %s1952 = sadd.s32 %s1950, %s1951
      %s1953 = smul.addr %s1952, 4
      %s1954 = scalar_lea.vmem %s3, %s1953
      // Predicated region
      $region33: #{autoencoder3d_forward.10} parent=31 // pred_check
        %p1955 = pneg %p116
      $region34: #{autoencoder3d_forward.10} parent=31 // pred_check_branch
        %1957 = sbr.rel (%p1955) target = $region36
      $region35: #{autoencoder3d_forward.10} parent=31 // pred_region
        %s1958 = smul.u32 4, %s19
      $region36: #{autoencoder3d_forward.10} parent=31 // pred_fallthru
        _
    $region32: #{autoencoder3d_forward.10} parent=5 // pred_fallthru
      _
    %p1959 = scmp.le.s32.totalorder 2, %s9
    // Predicated region
    $region37: #{autoencoder3d_forward.10} parent=5 // pred_check
      %p1960 = pneg %p1959
    $region38: #{autoencoder3d_forward.10} parent=5 // pred_check_branch
      %1962 = sbr.rel (%p1960) target = $region40
    $region39: #{autoencoder3d_forward.10} parent=5 // pred_region
      %s1963 = ssub.s32 %s9, 2
      // Predicated region
      $region41: #{autoencoder3d_forward.10} parent=39 // pred_check
        %p1964 = pneg %p122
      $region42: #{autoencoder3d_forward.10} parent=39 // pred_check_branch
        %1966 = sbr.rel (%p1964) target = $region44
      $region43: #{autoencoder3d_forward.10} parent=39 // pred_region
        %s1967 = smul.u32 4, %s21
        %p1968 = scmp.lt.s32.totalorder %s20, 1
        %s1969 = scalar_select %p1968, %s20, 1
        %p1970 = scmp.lt.s32.totalorder %s1967, 3
        %s1971 = scalar_select %p1970, %s1967, 3
        %s1972 = smul.addr %s1969, 8
        %s1973 = sadd.s32 %s1971, %s1972
        %s1974 = smul.addr %s1973, 4
        %s1975 = scalar_lea.vmem %s3, %s1974
      $region44: #{autoencoder3d_forward.10} parent=39 // pred_fallthru
        _
    $region40: #{autoencoder3d_forward.10} parent=5 // pred_fallthru
      _
  $region6: #{autoencoder3d_forward.10} parent=0 // loop_footer
    %s13 = sadd.s32 1, %s9
  $region7: #{autoencoder3d_forward.10} parent=0 // loop_footer_branch
    %8 = sbr.rel target = $region3
  $region8: #{autoencoder3d_forward.10} parent=0 // loop_exit
    _

// kernel: autoencoder3d_forward.11
$region0: #{autoencoder3d_forward.11}
  #allocation0 [shape = 'u32[]', space=smem, size = 0x4, offset = 0x4, fixed_abs, tag = 'smem constant byte address 0x4 - core index']
  #allocation1 [shape = 'u32[144,128]{1,0:T(1,128)}', space=vmem, size = 0x12000, scoped, tag = 'internal scratch']
  #allocation2 [shape = 'f32[1,1]{1,0:T(1,128)S(1)}', space=vmem, size = 0x200, scoped, tag = 'scoped memory for autoencoder3d_forward.11']
  %s0 = inlined_call_operand.vmem [shape: bf16[1,432], index: 0, kind: input, shape index: {}]
  %s1 = inlined_call_operand.<no memory space> [shape: f32[1,1], index: 1, kind: input, shape index: {}]
  %s2 = inlined_call_operand.vmem [shape: bf16[2,432,4096], index: 2, kind: input, shape index: {}]
  %s3 = inlined_call_operand.vmem [shape: f32[2,1,4096], index: 3, kind: output, shape index: {}]
  %s4 = sld [smem:[#allocation0]]
  $region68: #{autoencoder3d_forward.11} parent=0
    _
  %s6 = ssub.s32 1, %s4
  %s7 = scalar_select 0, %s6, %s4
  %v8 = vstv %s1
  %9 = vst [vmem:[#allocation2] sm:$0x1] %v8
  $region1: #{autoencoder3d_forward.11} parent=0
    #allocation3 [shape = 'u8[1769472]{0}', space=vmem, size = 0x1b0000, scoped, tag = 'input window, operand 2']
    loop: start=0, step=1, limit=10
    $region2: #{autoencoder3d_forward.11} parent=1 // loop_pre_header
      _
    $region3: #{autoencoder3d_forward.11} parent=1 // loop_header
      %s11 = sphi 0, %s15
      %p12 = scmp.ge.s32.totalorder %s11, 10
      %s18 = sphi 0, %s30
      %s19 = sphi 0, %s26
      %s20 = sphi 0, %s18
      %s21 = sphi 0, %s19
      %s22 = sphi 0, %s20
      %s23 = sphi 0, %s21
      %s31 = sphi 0, %s31
      %s33 = sphi 0, %s31
      %s34 = sphi 0, %s33
      %s48 = sphi 0, %s34
      %s52 = sphi 0, %s52
      %s54 = sphi 0, %s52
      %s55 = sphi 0, %s54
      %s69 = sphi 0, %s55
      %s77 = sphi 0, %s79
      %s80 = sphi 0, %s77
      %s81 = sphi 0, %s80
      %s97 = sphi 0, %s81
      %s105 = sphi 0, %s107
      %s108 = sphi 0, %s105
      %s109 = sphi 0, %s108
      %s125 = sphi 0, %s109
    $region4: #{autoencoder3d_forward.11} parent=1 // loop_header_branch
      %14 = sbr.rel (%p12) target = $region8
    $region5: #{autoencoder3d_forward.11} parent=1 // loop_body
      %s16 = ssub.s32 %s11, 1
      %s17 = ssub.s32 %s11, 2
      %s24 = sadd.s32 1, %s19
      %p25 = scmp.ge.s32.totalorder %s24, 4
      %s26 = scalar_select %p25, 0, %s24
      %s27 = sadd.s32 1, %s18
      %s28 = scalar_select %p25, %s27, %s18
      %p29 = scmp.ge.s32.totalorder %s28, 2
      %s30 = scalar_select %p29, 0, %s28
      %s32 = sadd.s32 %s31, 1
      %p35 = scmp.eq.s32.totalorder %s11, 7
      %p36 = scmp.ne.s32.totalorder %s31, %s33
      %p37 = scmp.eq.s32.totalorder %s11, 0
      %p38 = por %p36, %p37
      %p39 = scmp.ne.s32.totalorder %s31, %s33
      %p40 = scmp.eq.s32.totalorder %s16, 7
      %p41 = por %p39, %p40
      %p42 = scmp.ne.s32.totalorder %s33, %s34
      %p43 = scmp.eq.s32.totalorder %s16, 0
      %p44 = por %p42, %p43
      %p45 = scmp.ne.s32.totalorder %s33, %s34
      %p46 = scmp.eq.s32.totalorder %s17, 7
      %p47 = por %p45, %p46
      %p49 = scmp.ne.s32.totalorder %s34, %s48
      %p50 = scmp.eq.s32.totalorder %s17, 0
      %p51 = por %p49, %p50
      %s53 = sadd.s32 %s52, 1
      %p56 = scmp.eq.s32.totalorder %s11, 7
      %p57 = scmp.ne.s32.totalorder %s52, %s54
      %p58 = scmp.eq.s32.totalorder %s11, 0
      %p59 = por %p57, %p58
      %p60 = scmp.ne.s32.totalorder %s52, %s54
      %p61 = scmp.eq.s32.totalorder %s16, 7
      %p62 = por %p60, %p61
      %p63 = scmp.ne.s32.totalorder %s54, %s55
      %p64 = scmp.eq.s32.totalorder %s16, 0
      %p65 = por %p63, %p64
      %p66 = scmp.ne.s32.totalorder %s54, %s55
      %p67 = scmp.eq.s32.totalorder %s17, 7
      %p68 = por %p66, %p67
      %p70 = scmp.ne.s32.totalorder %s55, %s69
      %p71 = scmp.eq.s32.totalorder %s17, 0
      %p72 = por %p70, %p71
      %s73 = ssub.s32 %s18, %s30
      %s74 = ssub.s32 %s19, %s26
      %s75 = sor.u32 %s73, %s74
      %p76 = scmp.eq.s32.totalorder %s75, 0
      %s78 = sadd.s32 %s77, 1
      %s79 = scalar_select %p76, %s77, %s78
      %p82 = pneg %p76
      %p83 = scmp.eq.s32.totalorder %s11, 7
      %p84 = por %p82, %p83
      %p85 = scmp.ne.s32.totalorder %s77, %s80
      %p86 = scmp.eq.s32.totalorder %s11, 0
      %p87 = por %p85, %p86
      %p88 = scmp.ne.s32.totalorder %s77, %s80
      %p89 = scmp.eq.s32.totalorder %s16, 7
      %p90 = por %p88, %p89
      %p91 = scmp.ne.s32.totalorder %s80, %s81
      %p92 = scmp.eq.s32.totalorder %s16, 0
      %p93 = por %p91, %p92
      %p94 = scmp.ne.s32.totalorder %s80, %s81
      %p95 = scmp.eq.s32.totalorder %s17, 7
      %p96 = por %p94, %p95
      %p98 = scmp.ne.s32.totalorder %s81, %s97
      %p99 = scmp.eq.s32.totalorder %s17, 0
      %p100 = por %p98, %p99
      %s101 = ssub.s32 %s18, %s30
      %s102 = ssub.s32 %s19, %s26
      %s103 = sor.u32 %s101, %s102
      %p104 = scmp.eq.s32.totalorder %s103, 0
      %s106 = sadd.s32 %s105, 1
      %s107 = scalar_select %p104, %s105, %s106
      %p110 = pneg %p104
      %p111 = scmp.eq.s32.totalorder %s11, 7
      %p112 = por %p110, %p111
      %p113 = scmp.ne.s32.totalorder %s105, %s108
      %p114 = scmp.eq.s32.totalorder %s11, 0
      %p115 = por %p113, %p114
      %p116 = scmp.ne.s32.totalorder %s105, %s108
      %p117 = scmp.eq.s32.totalorder %s16, 7
      %p118 = por %p116, %p117
      %p119 = scmp.ne.s32.totalorder %s108, %s109
      %p120 = scmp.eq.s32.totalorder %s16, 0
      %p121 = por %p119, %p120
      %p122 = scmp.ne.s32.totalorder %s108, %s109
      %p123 = scmp.eq.s32.totalorder %s17, 7
      %p124 = por %p122, %p123
      %p126 = scmp.ne.s32.totalorder %s109, %s125
      %p127 = scmp.eq.s32.totalorder %s17, 0
      %p128 = por %p126, %p127
      %p129 = scmp.le.s32.totalorder 1, %s11
      %p130 = scmp.lt.s32.totalorder %s11, 9
      %p131 = pnand %p129, %p130
      %p132 = pneg %p131
      // Predicated region
      $region9: #{autoencoder3d_forward.11} parent=5 // pred_check
        _
      $region10: #{autoencoder3d_forward.11} parent=5 // pred_check_branch
        %134 = sbr.rel (%p131) target = $region12
      $region11: #{autoencoder3d_forward.11} parent=5 // pred_region
        %s135 = ssub.s32 %s11, 1
        // Predicated region
        $region13: #{autoencoder3d_forward.11} parent=11 // pred_check
          %p136 = pneg %p44
        $region14: #{autoencoder3d_forward.11} parent=11 // pred_check_branch
          %138 = sbr.rel (%p136) target = $region16
        $region15: #{autoencoder3d_forward.11} parent=11 // pred_region
          _
        $region16: #{autoencoder3d_forward.11} parent=11 // pred_fallthru
          _
        // Predicated region
        $region17: #{autoencoder3d_forward.11} parent=11 // pred_check
          %p139 = pneg %p65
        $region18: #{autoencoder3d_forward.11} parent=11 // pred_check_branch
          %141 = sbr.rel (%p139) target = $region20
        $region19: #{autoencoder3d_forward.11} parent=11 // pred_region
          _
        $region20: #{autoencoder3d_forward.11} parent=11 // pred_fallthru
          _
      $region12: #{autoencoder3d_forward.11} parent=5 // pred_fallthru
        _
      %p142 = scmp.lt.s32.totalorder %s11, 8
      // Predicated region
      $region21: #{autoencoder3d_forward.11} parent=5 // pred_check
        %p143 = pneg %p142
      $region22: #{autoencoder3d_forward.11} parent=5 // pred_check_branch
        %145 = sbr.rel (%p143) target = $region24
      $region23: #{autoencoder3d_forward.11} parent=5 // pred_region
        // Predicated region
        $region25: #{autoencoder3d_forward.11} parent=23 // pred_check
          %p146 = pneg %p87
        $region26: #{autoencoder3d_forward.11} parent=23 // pred_check_branch
          %148 = sbr.rel (%p146) target = $region28
        $region27: #{autoencoder3d_forward.11} parent=23 // pred_region
          %s149 = sand.u32 %s77, 1
          %s150 = sand.u32 %s77, 1
          %s151 = smul.addr %s150, 1728
          %s152 = scalar_lea.vmem [#allocation3], %s151
          %s153 = smul.u32 8, %s19
          %s154 = smul.addr %s18, 1728
          %s155 = sadd.s32 %s153, %s154
          %s156 = smul.addr %s155, 4
          %s157 = scalar_lea.vmem %s2, %s156
          // Predicated region
          $region29: #{autoencoder3d_forward.11} parent=27 // pred_check
            _
          $region30: #{autoencoder3d_forward.11} parent=27 // pred_check_branch
            %159 = sbr.rel (0) target = $region32
          $region31: #{autoencoder3d_forward.11} parent=27 // pred_region
            // Predicated region
            $region33: #{autoencoder3d_forward.11} parent=31 // pred_check
              _
            $region34: #{autoencoder3d_forward.11} parent=31 // pred_check_branch
              %161 = sbr.rel (0) target = $region36
            $region35: #{autoencoder3d_forward.11} parent=31 // pred_region
              loop: start=0, step=1, limit=1
              $region37: #{autoencoder3d_forward.11} parent=35 // loop_pre_header
                _
              $region38: #{autoencoder3d_forward.11} parent=35 // loop_header
                %s163 = sphi 0, %s167
                %p164 = scmp.ge.s32.totalorder %s163, 1
                %s168 = sphi %s157, %s157
                %s169 = sphi %s152, %s152
              $region39: #{autoencoder3d_forward.11} parent=35 // loop_header_branch
                %166 = sbr.rel (%p164) target = $region43
              $region40: #{autoencoder3d_forward.11} parent=35 // loop_body
                %v170 = vld [vmem:[%s168] sm:$0xff]
                %171 = vst [vmem:[%s169] sm:$0xff] %v170
                %v172 = vld [vmem:[%s168 + $0x8] sm:$0xff]
                %173 = vst [vmem:[%s169 + $0x8] sm:$0xff] %v172
                %v174 = vld [vmem:[%s168 + $0x10] sm:$0xff]
                %175 = vst [vmem:[%s169 + $0x10] sm:$0xff] %v174
                %v176 = vld [vmem:[%s168 + $0x18] sm:$0xff]
                %177 = vst [vmem:[%s169 + $0x18] sm:$0xff] %v176
                %v178 = vld [vmem:[%s168 + $0x80] sm:$0xff]
                %179 = vst [vmem:[%s169 + $0x20] sm:$0xff] %v178
                %v180 = vld [vmem:[%s168 + $0x88] sm:$0xff]
                %181 = vst [vmem:[%s169 + $0x28] sm:$0xff] %v180
                %v182 = vld [vmem:[%s168 + $0x90] sm:$0xff]
                %183 = vst [vmem:[%s169 + $0x30] sm:$0xff] %v182
                %v184 = vld [vmem:[%s168 + $0x98] sm:$0xff]
                %185 = vst [vmem:[%s169 + $0x38] sm:$0xff] %v184
                %v186 = vld [vmem:[%s168 + $0x100] sm:$0xff]
                %187 = vst [vmem:[%s169 + $0x40] sm:$0xff] %v186
                %v188 = vld [vmem:[%s168 + $0x108] sm:$0xff]
                %189 = vst [vmem:[%s169 + $0x48] sm:$0xff] %v188
                %v190 = vld [vmem:[%s168 + $0x110] sm:$0xff]
                %191 = vst [vmem:[%s169 + $0x50] sm:$0xff] %v190
                %v192 = vld [vmem:[%s168 + $0x118] sm:$0xff]
                %193 = vst [vmem:[%s169 + $0x58] sm:$0xff] %v192
                %v194 = vld [vmem:[%s168 + $0x180] sm:$0xff]
                %195 = vst [vmem:[%s169 + $0x60] sm:$0xff] %v194
                %v196 = vld [vmem:[%s168 + $0x188] sm:$0xff]
                %197 = vst [vmem:[%s169 + $0x68] sm:$0xff] %v196
                %v198 = vld [vmem:[%s168 + $0x190] sm:$0xff]
                %199 = vst [vmem:[%s169 + $0x70] sm:$0xff] %v198
                %v200 = vld [vmem:[%s168 + $0x198] sm:$0xff]
                %201 = vst [vmem:[%s169 + $0x78] sm:$0xff] %v200
                %v202 = vld [vmem:[%s168 + $0x200] sm:$0xff]
                %203 = vst [vmem:[%s169 + $0x80] sm:$0xff] %v202
                %v204 = vld [vmem:[%s168 + $0x208] sm:$0xff]
                %205 = vst [vmem:[%s169 + $0x88] sm:$0xff] %v204
                %v206 = vld [vmem:[%s168 + $0x210] sm:$0xff]
                %207 = vst [vmem:[%s169 + $0x90] sm:$0xff] %v206
                %v208 = vld [vmem:[%s168 + $0x218] sm:$0xff]
                %209 = vst [vmem:[%s169 + $0x98] sm:$0xff] %v208
                %v210 = vld [vmem:[%s168 + $0x280] sm:$0xff]
                %211 = vst [vmem:[%s169 + $0xa0] sm:$0xff] %v210
                %v212 = vld [vmem:[%s168 + $0x288] sm:$0xff]
                %213 = vst [vmem:[%s169 + $0xa8] sm:$0xff] %v212
                %v214 = vld [vmem:[%s168 + $0x290] sm:$0xff]
                %215 = vst [vmem:[%s169 + $0xb0] sm:$0xff] %v214
                %v216 = vld [vmem:[%s168 + $0x298] sm:$0xff]
                %217 = vst [vmem:[%s169 + $0xb8] sm:$0xff] %v216
                %v218 = vld [vmem:[%s168 + $0x300] sm:$0xff]
                %219 = vst [vmem:[%s169 + $0xc0] sm:$0xff] %v218
                %v220 = vld [vmem:[%s168 + $0x308] sm:$0xff]
                %221 = vst [vmem:[%s169 + $0xc8] sm:$0xff] %v220
                %v222 = vld [vmem:[%s168 + $0x310] sm:$0xff]
                %223 = vst [vmem:[%s169 + $0xd0] sm:$0xff] %v222
                %v224 = vld [vmem:[%s168 + $0x318] sm:$0xff]
                %225 = vst [vmem:[%s169 + $0xd8] sm:$0xff] %v224
                %v226 = vld [vmem:[%s168 + $0x380] sm:$0xff]
                %227 = vst [vmem:[%s169 + $0xe0] sm:$0xff] %v226
                %v228 = vld [vmem:[%s168 + $0x388] sm:$0xff]
                %229 = vst [vmem:[%s169 + $0xe8] sm:$0xff] %v228
                %v230 = vld [vmem:[%s168 + $0x390] sm:$0xff]
                %231 = vst [vmem:[%s169 + $0xf0] sm:$0xff] %v230
                %v232 = vld [vmem:[%s168 + $0x398] sm:$0xff]
                %233 = vst [vmem:[%s169 + $0xf8] sm:$0xff] %v232
                %v234 = vld [vmem:[%s168 + $0x400] sm:$0xff]
                %235 = vst [vmem:[%s169 + $0x100] sm:$0xff] %v234
                %v236 = vld [vmem:[%s168 + $0x408] sm:$0xff]
                %237 = vst [vmem:[%s169 + $0x108] sm:$0xff] %v236
                %v238 = vld [vmem:[%s168 + $0x410] sm:$0xff]
                %239 = vst [vmem:[%s169 + $0x110] sm:$0xff] %v238
                %v240 = vld [vmem:[%s168 + $0x418] sm:$0xff]
                %241 = vst [vmem:[%s169 + $0x118] sm:$0xff] %v240
                %v242 = vld [vmem:[%s168 + $0x480] sm:$0xff]
                %243 = vst [vmem:[%s169 + $0x120] sm:$0xff] %v242
                %v244 = vld [vmem:[%s168 + $0x488] sm:$0xff]
                %245 = vst [vmem:[%s169 + $0x128] sm:$0xff] %v244
                %v246 = vld [vmem:[%s168 + $0x490] sm:$0xff]
                %247 = vst [vmem:[%s169 + $0x130] sm:$0xff] %v246
                %v248 = vld [vmem:[%s168 + $0x498] sm:$0xff]
                %249 = vst [vmem:[%s169 + $0x138] sm:$0xff] %v248
                %v250 = vld [vmem:[%s168 + $0x500] sm:$0xff]
                %251 = vst [vmem:[%s169 + $0x140] sm:$0xff] %v250
                %v252 = vld [vmem:[%s168 + $0x508] sm:$0xff]
                %253 = vst [vmem:[%s169 + $0x148] sm:$0xff] %v252
                %v254 = vld [vmem:[%s168 + $0x510] sm:$0xff]
                %255 = vst [vmem:[%s169 + $0x150] sm:$0xff] %v254
                %v256 = vld [vmem:[%s168 + $0x518] sm:$0xff]
                %257 = vst [vmem:[%s169 + $0x158] sm:$0xff] %v256
                %v258 = vld [vmem:[%s168 + $0x580] sm:$0xff]
                %259 = vst [vmem:[%s169 + $0x160] sm:$0xff] %v258
                %v260 = vld [vmem:[%s168 + $0x588] sm:$0xff]
                %261 = vst [vmem:[%s169 + $0x168] sm:$0xff] %v260
                %v262 = vld [vmem:[%s168 + $0x590] sm:$0xff]
                %263 = vst [vmem:[%s169 + $0x170] sm:$0xff] %v262
                %v264 = vld [vmem:[%s168 + $0x598] sm:$0xff]
                %265 = vst [vmem:[%s169 + $0x178] sm:$0xff] %v264
                %v266 = vld [vmem:[%s168 + $0x600] sm:$0xff]
                %267 = vst [vmem:[%s169 + $0x180] sm:$0xff] %v266
                %v268 = vld [vmem:[%s168 + $0x608] sm:$0xff]
                %269 = vst [vmem:[%s169 + $0x188] sm:$0xff] %v268
                %v270 = vld [vmem:[%s168 + $0x610] sm:$0xff]
                %271 = vst [vmem:[%s169 + $0x190] sm:$0xff] %v270
                %v272 = vld [vmem:[%s168 + $0x618] sm:$0xff]
                %273 = vst [vmem:[%s169 + $0x198] sm:$0xff] %v272
                %v274 = vld [vmem:[%s168 + $0x680] sm:$0xff]
                %275 = vst [vmem:[%s169 + $0x1a0] sm:$0xff] %v274
                %v276 = vld [vmem:[%s168 + $0x688] sm:$0xff]
                %277 = vst [vmem:[%s169 + $0x1a8] sm:$0xff] %v276
                %v278 = vld [vmem:[%s168 + $0x690] sm:$0xff]
                %279 = vst [vmem:[%s169 + $0x1b0] sm:$0xff] %v278
                %v280 = vld [vmem:[%s168 + $0x698] sm:$0xff]
                %281 = vst [vmem:[%s169 + $0x1b8] sm:$0xff] %v280
                %v282 = vld [vmem:[%s168 + $0x700] sm:$0xff]
                %283 = vst [vmem:[%s169 + $0x1c0] sm:$0xff] %v282
                %v284 = vld [vmem:[%s168 + $0x708] sm:$0xff]
                %285 = vst [vmem:[%s169 + $0x1c8] sm:$0xff] %v284
                %v286 = vld [vmem:[%s168 + $0x710] sm:$0xff]
                %287 = vst [vmem:[%s169 + $0x1d0] sm:$0xff] %v286
                %v288 = vld [vmem:[%s168 + $0x718] sm:$0xff]
                %289 = vst [vmem:[%s169 + $0x1d8] sm:$0xff] %v288
                %v290 = vld [vmem:[%s168 + $0x780] sm:$0xff]
                %291 = vst [vmem:[%s169 + $0x1e0] sm:$0xff] %v290
                %v292 = vld [vmem:[%s168 + $0x788] sm:$0xff]
                %293 = vst [vmem:[%s169 + $0x1e8] sm:$0xff] %v292
                %v294 = vld [vmem:[%s168 + $0x790] sm:$0xff]
                %295 = vst [vmem:[%s169 + $0x1f0] sm:$0xff] %v294
                %v296 = vld [vmem:[%s168 + $0x798] sm:$0xff]
                %297 = vst [vmem:[%s169 + $0x1f8] sm:$0xff] %v296
                %v298 = vld [vmem:[%s168 + $0x800] sm:$0xff]
                %299 = vst [vmem:[%s169 + $0x200] sm:$0xff] %v298
                %v300 = vld [vmem:[%s168 + $0x808] sm:$0xff]
                %301 = vst [vmem:[%s169 + $0x208] sm:$0xff] %v300
                %v302 = vld [vmem:[%s168 + $0x810] sm:$0xff]
                %303 = vst [vmem:[%s169 + $0x210] sm:$0xff] %v302
                %v304 = vld [vmem:[%s168 + $0x818] sm:$0xff]
                %305 = vst [vmem:[%s169 + $0x218] sm:$0xff] %v304
                %v306 = vld [vmem:[%s168 + $0x880] sm:$0xff]
                %307 = vst [vmem:[%s169 + $0x220] sm:$0xff] %v306
                %v308 = vld [vmem:[%s168 + $0x888] sm:$0xff]
                %309 = vst [vmem:[%s169 + $0x228] sm:$0xff] %v308
                %v310 = vld [vmem:[%s168 + $0x890] sm:$0xff]
                %311 = vst [vmem:[%s169 + $0x230] sm:$0xff] %v310
                %v312 = vld [vmem:[%s168 + $0x898] sm:$0xff]
                %313 = vst [vmem:[%s169 + $0x238] sm:$0xff] %v312
                %v314 = vld [vmem:[%s168 + $0x900] sm:$0xff]
                %315 = vst [vmem:[%s169 + $0x240] sm:$0xff] %v314
                %v316 = vld [vmem:[%s168 + $0x908] sm:$0xff]
                %317 = vst [vmem:[%s169 + $0x248] sm:$0xff] %v316
                %v318 = vld [vmem:[%s168 + $0x910] sm:$0xff]
                %319 = vst [vmem:[%s169 + $0x250] sm:$0xff] %v318
                %v320 = vld [vmem:[%s168 + $0x918] sm:$0xff]
                %321 = vst [vmem:[%s169 + $0x258] sm:$0xff] %v320
                %v322 = vld [vmem:[%s168 + $0x980] sm:$0xff]
                %323 = vst [vmem:[%s169 + $0x260] sm:$0xff] %v322
                %v324 = vld [vmem:[%s168 + $0x988] sm:$0xff]
                %325 = vst [vmem:[%s169 + $0x268] sm:$0xff] %v324
                %v326 = vld [vmem:[%s168 + $0x990] sm:$0xff]
                %327 = vst [vmem:[%s169 + $0x270] sm:$0xff] %v326
                %v328 = vld [vmem:[%s168 + $0x998] sm:$0xff]
                %329 = vst [vmem:[%s169 + $0x278] sm:$0xff] %v328
                %v330 = vld [vmem:[%s168 + $0xa00] sm:$0xff]
                %331 = vst [vmem:[%s169 + $0x280] sm:$0xff] %v330
                %v332 = vld [vmem:[%s168 + $0xa08] sm:$0xff]
                %333 = vst [vmem:[%s169 + $0x288] sm:$0xff] %v332
                %v334 = vld [vmem:[%s168 + $0xa10] sm:$0xff]
                %335 = vst [vmem:[%s169 + $0x290] sm:$0xff] %v334
                %v336 = vld [vmem:[%s168 + $0xa18] sm:$0xff]
                %337 = vst [vmem:[%s169 + $0x298] sm:$0xff] %v336
                %v338 = vld [vmem:[%s168 + $0xa80] sm:$0xff]
                %339 = vst [vmem:[%s169 + $0x2a0] sm:$0xff] %v338
                %v340 = vld [vmem:[%s168 + $0xa88] sm:$0xff]
                %341 = vst [vmem:[%s169 + $0x2a8] sm:$0xff] %v340
                %v342 = vld [vmem:[%s168 + $0xa90] sm:$0xff]
                %343 = vst [vmem:[%s169 + $0x2b0] sm:$0xff] %v342
                %v344 = vld [vmem:[%s168 + $0xa98] sm:$0xff]
                %345 = vst [vmem:[%s169 + $0x2b8] sm:$0xff] %v344
                %v346 = vld [vmem:[%s168 + $0xb00] sm:$0xff]
                %347 = vst [vmem:[%s169 + $0x2c0] sm:$0xff] %v346
                %v348 = vld [vmem:[%s168 + $0xb08] sm:$0xff]
                %349 = vst [vmem:[%s169 + $0x2c8] sm:$0xff] %v348
                %v350 = vld [vmem:[%s168 + $0xb10] sm:$0xff]
                %351 = vst [vmem:[%s169 + $0x2d0] sm:$0xff] %v350
                %v352 = vld [vmem:[%s168 + $0xb18] sm:$0xff]
                %353 = vst [vmem:[%s169 + $0x2d8] sm:$0xff] %v352
                %v354 = vld [vmem:[%s168 + $0xb80] sm:$0xff]
                %355 = vst [vmem:[%s169 + $0x2e0] sm:$0xff] %v354
                %v356 = vld [vmem:[%s168 + $0xb88] sm:$0xff]
                %357 = vst [vmem:[%s169 + $0x2e8] sm:$0xff] %v356
                %v358 = vld [vmem:[%s168 + $0xb90] sm:$0xff]
                %359 = vst [vmem:[%s169 + $0x2f0] sm:$0xff] %v358
                %v360 = vld [vmem:[%s168 + $0xb98] sm:$0xff]
                %361 = vst [vmem:[%s169 + $0x2f8] sm:$0xff] %v360
                %v362 = vld [vmem:[%s168 + $0xc00] sm:$0xff]
                %363 = vst [vmem:[%s169 + $0x300] sm:$0xff] %v362
                %v364 = vld [vmem:[%s168 + $0xc08] sm:$0xff]
                %365 = vst [vmem:[%s169 + $0x308] sm:$0xff] %v364
                %v366 = vld [vmem:[%s168 + $0xc10] sm:$0xff]
                %367 = vst [vmem:[%s169 + $0x310] sm:$0xff] %v366
                %v368 = vld [vmem:[%s168 + $0xc18] sm:$0xff]
                %369 = vst [vmem:[%s169 + $0x318] sm:$0xff] %v368
                %v370 = vld [vmem:[%s168 + $0xc80] sm:$0xff]
                %371 = vst [vmem:[%s169 + $0x320] sm:$0xff] %v370
                %v372 = vld [vmem:[%s168 + $0xc88] sm:$0xff]
                %373 = vst [vmem:[%s169 + $0x328] sm:$0xff] %v372
                %v374 = vld [vmem:[%s168 + $0xc90] sm:$0xff]
                %375 = vst [vmem:[%s169 + $0x330] sm:$0xff] %v374
                %v376 = vld [vmem:[%s168 + $0xc98] sm:$0xff]
                %377 = vst [vmem:[%s169 + $0x338] sm:$0xff] %v376
                %v378 = vld [vmem:[%s168 + $0xd00] sm:$0xff]
                %379 = vst [vmem:[%s169 + $0x340] sm:$0xff] %v378
                %v380 = vld [vmem:[%s168 + $0xd08] sm:$0xff]
                %381 = vst [vmem:[%s169 + $0x348] sm:$0xff] %v380
                %v382 = vld [vmem:[%s168 + $0xd10] sm:$0xff]
                %383 = vst [vmem:[%s169 + $0x350] sm:$0xff] %v382
                %v384 = vld [vmem:[%s168 + $0xd18] sm:$0xff]
                %385 = vst [vmem:[%s169 + $0x358] sm:$0xff] %v384
                %v386 = vld [vmem:[%s168 + $0xd80] sm:$0xff]
                %387 = vst [vmem:[%s169 + $0x360] sm:$0xff] %v386
                %v388 = vld [vmem:[%s168 + $0xd88] sm:$0xff]
                %389 = vst [vmem:[%s169 + $0x368] sm:$0xff] %v388
                %v390 = vld [vmem:[%s168 + $0xd90] sm:$0xff]
                %391 = vst [vmem:[%s169 + $0x370] sm:$0xff] %v390
                %v392 = vld [vmem:[%s168 + $0xd98] sm:$0xff]
                %393 = vst [vmem:[%s169 + $0x378] sm:$0xff] %v392
                %v394 = vld [vmem:[%s168 + $0xe00] sm:$0xff]
                %395 = vst [vmem:[%s169 + $0x380] sm:$0xff] %v394
                %v396 = vld [vmem:[%s168 + $0xe08] sm:$0xff]
                %397 = vst [vmem:[%s169 + $0x388] sm:$0xff] %v396
                %v398 = vld [vmem:[%s168 + $0xe10] sm:$0xff]
                %399 = vst [vmem:[%s169 + $0x390] sm:$0xff] %v398
                %v400 = vld [vmem:[%s168 + $0xe18] sm:$0xff]
                %401 = vst [vmem:[%s169 + $0x398] sm:$0xff] %v400
                %v402 = vld [vmem:[%s168 + $0xe80] sm:$0xff]
                %403 = vst [vmem:[%s169 + $0x3a0] sm:$0xff] %v402
                %v404 = vld [vmem:[%s168 + $0xe88] sm:$0xff]
                %405 = vst [vmem:[%s169 + $0x3a8] sm:$0xff] %v404
                %v406 = vld [vmem:[%s168 + $0xe90] sm:$0xff]
                %407 = vst [vmem:[%s169 + $0x3b0] sm:$0xff] %v406
                %v408 = vld [vmem:[%s168 + $0xe98] sm:$0xff]
                %409 = vst [vmem:[%s169 + $0x3b8] sm:$0xff] %v408
                %v410 = vld [vmem:[%s168 + $0xf00] sm:$0xff]
                %411 = vst [vmem:[%s169 + $0x3c0] sm:$0xff] %v410
                %v412 = vld [vmem:[%s168 + $0xf08] sm:$0xff]
                %413 = vst [vmem:[%s169 + $0x3c8] sm:$0xff] %v412
                %v414 = vld [vmem:[%s168 + $0xf10] sm:$0xff]
                %415 = vst [vmem:[%s169 + $0x3d0] sm:$0xff] %v414
                %v416 = vld [vmem:[%s168 + $0xf18] sm:$0xff]
                %417 = vst [vmem:[%s169 + $0x3d8] sm:$0xff] %v416
                %v418 = vld [vmem:[%s168 + $0xf80] sm:$0xff]
                %419 = vst [vmem:[%s169 + $0x3e0] sm:$0xff] %v418
                %v420 = vld [vmem:[%s168 + $0xf88] sm:$0xff]
                %421 = vst [vmem:[%s169 + $0x3e8] sm:$0xff] %v420
                %v422 = vld [vmem:[%s168 + $0xf90] sm:$0xff]
                %423 = vst [vmem:[%s169 + $0x3f0] sm:$0xff] %v422
                %v424 = vld [vmem:[%s168 + $0xf98] sm:$0xff]
                %425 = vst [vmem:[%s169 + $0x3f8] sm:$0xff] %v424
                %v426 = vld [vmem:[%s168 + $0x1000] sm:$0xff]
                %427 = vst [vmem:[%s169 + $0x400] sm:$0xff] %v426
                %v428 = vld [vmem:[%s168 + $0x1008] sm:$0xff]
                %429 = vst [vmem:[%s169 + $0x408] sm:$0xff] %v428
                %v430 = vld [vmem:[%s168 + $0x1010] sm:$0xff]
                %431 = vst [vmem:[%s169 + $0x410] sm:$0xff] %v430
                %v432 = vld [vmem:[%s168 + $0x1018] sm:$0xff]
                %433 = vst [vmem:[%s169 + $0x418] sm:$0xff] %v432
                %v434 = vld [vmem:[%s168 + $0x1080] sm:$0xff]
                %435 = vst [vmem:[%s169 + $0x420] sm:$0xff] %v434
                %v436 = vld [vmem:[%s168 + $0x1088] sm:$0xff]
                %437 = vst [vmem:[%s169 + $0x428] sm:$0xff] %v436
                %v438 = vld [vmem:[%s168 + $0x1090] sm:$0xff]
                %439 = vst [vmem:[%s169 + $0x430] sm:$0xff] %v438
                %v440 = vld [vmem:[%s168 + $0x1098] sm:$0xff]
                %441 = vst [vmem:[%s169 + $0x438] sm:$0xff] %v440
                %v442 = vld [vmem:[%s168 + $0x1100] sm:$0xff]
                %443 = vst [vmem:[%s169 + $0x440] sm:$0xff] %v442
                %v444 = vld [vmem:[%s168 + $0x1108] sm:$0xff]
                %445 = vst [vmem:[%s169 + $0x448] sm:$0xff] %v444
                %v446 = vld [vmem:[%s168 + $0x1110] sm:$0xff]
                %447 = vst [vmem:[%s169 + $0x450] sm:$0xff] %v446
                %v448 = vld [vmem:[%s168 + $0x1118] sm:$0xff]
                %449 = vst [vmem:[%s169 + $0x458] sm:$0xff] %v448
                %v450 = vld [vmem:[%s168 + $0x1180] sm:$0xff]
                %451 = vst [vmem:[%s169 + $0x460] sm:$0xff] %v450
                %v452 = vld [vmem:[%s168 + $0x1188] sm:$0xff]
                %453 = vst [vmem:[%s169 + $0x468] sm:$0xff] %v452
                %v454 = vld [vmem:[%s168 + $0x1190] sm:$0xff]
                %455 = vst [vmem:[%s169 + $0x470] sm:$0xff] %v454
                %v456 = vld [vmem:[%s168 + $0x1198] sm:$0xff]
                %457 = vst [vmem:[%s169 + $0x478] sm:$0xff] %v456
                %v458 = vld [vmem:[%s168 + $0x1200] sm:$0xff]
                %459 = vst [vmem:[%s169 + $0x480] sm:$0xff] %v458
                %v460 = vld [vmem:[%s168 + $0x1208] sm:$0xff]
                %461 = vst [vmem:[%s169 + $0x488] sm:$0xff] %v460
                %v462 = vld [vmem:[%s168 + $0x1210] sm:$0xff]
                %463 = vst [vmem:[%s169 + $0x490] sm:$0xff] %v462
                %v464 = vld [vmem:[%s168 + $0x1218] sm:$0xff]
                %465 = vst [vmem:[%s169 + $0x498] sm:$0xff] %v464
                %v466 = vld [vmem:[%s168 + $0x1280] sm:$0xff]
                %467 = vst [vmem:[%s169 + $0x4a0] sm:$0xff] %v466
                %v468 = vld [vmem:[%s168 + $0x1288] sm:$0xff]
                %469 = vst [vmem:[%s169 + $0x4a8] sm:$0xff] %v468
                %v470 = vld [vmem:[%s168 + $0x1290] sm:$0xff]
                %471 = vst [vmem:[%s169 + $0x4b0] sm:$0xff] %v470
                %v472 = vld [vmem:[%s168 + $0x1298] sm:$0xff]
                %473 = vst [vmem:[%s169 + $0x4b8] sm:$0xff] %v472
                %v474 = vld [vmem:[%s168 + $0x1300] sm:$0xff]
                %475 = vst [vmem:[%s169 + $0x4c0] sm:$0xff] %v474
                %v476 = vld [vmem:[%s168 + $0x1308] sm:$0xff]
                %477 = vst [vmem:[%s169 + $0x4c8] sm:$0xff] %v476
                %v478 = vld [vmem:[%s168 + $0x1310] sm:$0xff]
                %479 = vst [vmem:[%s169 + $0x4d0] sm:$0xff] %v478
                %v480 = vld [vmem:[%s168 + $0x1318] sm:$0xff]
                %481 = vst [vmem:[%s169 + $0x4d8] sm:$0xff] %v480
                %v482 = vld [vmem:[%s168 + $0x1380] sm:$0xff]
                %483 = vst [vmem:[%s169 + $0x4e0] sm:$0xff] %v482
                %v484 = vld [vmem:[%s168 + $0x1388] sm:$0xff]
                %485 = vst [vmem:[%s169 + $0x4e8] sm:$0xff] %v484
                %v486 = vld [vmem:[%s168 + $0x1390] sm:$0xff]
                %487 = vst [vmem:[%s169 + $0x4f0] sm:$0xff] %v486
                %v488 = vld [vmem:[%s168 + $0x1398] sm:$0xff]
                %489 = vst [vmem:[%s169 + $0x4f8] sm:$0xff] %v488
                %v490 = vld [vmem:[%s168 + $0x1400] sm:$0xff]
                %491 = vst [vmem:[%s169 + $0x500] sm:$0xff] %v490
                %v492 = vld [vmem:[%s168 + $0x1408] sm:$0xff]
                %493 = vst [vmem:[%s169 + $0x508] sm:$0xff] %v492
                %v494 = vld [vmem:[%s168 + $0x1410] sm:$0xff]
                %495 = vst [vmem:[%s169 + $0x510] sm:$0xff] %v494
                %v496 = vld [vmem:[%s168 + $0x1418] sm:$0xff]
                %497 = vst [vmem:[%s169 + $0x518] sm:$0xff] %v496
                %v498 = vld [vmem:[%s168 + $0x1480] sm:$0xff]
                %499 = vst [vmem:[%s169 + $0x520] sm:$0xff] %v498
                %v500 = vld [vmem:[%s168 + $0x1488] sm:$0xff]
                %501 = vst [vmem:[%s169 + $0x528] sm:$0xff] %v500
                %v502 = vld [vmem:[%s168 + $0x1490] sm:$0xff]
                %503 = vst [vmem:[%s169 + $0x530] sm:$0xff] %v502
                %v504 = vld [vmem:[%s168 + $0x1498] sm:$0xff]
                %505 = vst [vmem:[%s169 + $0x538] sm:$0xff] %v504
                %v506 = vld [vmem:[%s168 + $0x1500] sm:$0xff]
                %507 = vst [vmem:[%s169 + $0x540] sm:$0xff] %v506
                %v508 = vld [vmem:[%s168 + $0x1508] sm:$0xff]
                %509 = vst [vmem:[%s169 + $0x548] sm:$0xff] %v508
                %v510 = vld [vmem:[%s168 + $0x1510] sm:$0xff]
                %511 = vst [vmem:[%s169 + $0x550] sm:$0xff] %v510
                %v512 = vld [vmem:[%s168 + $0x1518] sm:$0xff]
                %513 = vst [vmem:[%s169 + $0x558] sm:$0xff] %v512
                %v514 = vld [vmem:[%s168 + $0x1580] sm:$0xff]
                %515 = vst [vmem:[%s169 + $0x560] sm:$0xff] %v514
                %v516 = vld [vmem:[%s168 + $0x1588] sm:$0xff]
                %517 = vst [vmem:[%s169 + $0x568] sm:$0xff] %v516
                %v518 = vld [vmem:[%s168 + $0x1590] sm:$0xff]
                %519 = vst [vmem:[%s169 + $0x570] sm:$0xff] %v518
                %v520 = vld [vmem:[%s168 + $0x1598] sm:$0xff]
                %521 = vst [vmem:[%s169 + $0x578] sm:$0xff] %v520
                %v522 = vld [vmem:[%s168 + $0x1600] sm:$0xff]
                %523 = vst [vmem:[%s169 + $0x580] sm:$0xff] %v522
                %v524 = vld [vmem:[%s168 + $0x1608] sm:$0xff]
                %525 = vst [vmem:[%s169 + $0x588] sm:$0xff] %v524
                %v526 = vld [vmem:[%s168 + $0x1610] sm:$0xff]
                %527 = vst [vmem:[%s169 + $0x590] sm:$0xff] %v526
                %v528 = vld [vmem:[%s168 + $0x1618] sm:$0xff]
                %529 = vst [vmem:[%s169 + $0x598] sm:$0xff] %v528
                %v530 = vld [vmem:[%s168 + $0x1680] sm:$0xff]
                %531 = vst [vmem:[%s169 + $0x5a0] sm:$0xff] %v530
                %v532 = vld [vmem:[%s168 + $0x1688] sm:$0xff]
                %533 = vst [vmem:[%s169 + $0x5a8] sm:$0xff] %v532
                %v534 = vld [vmem:[%s168 + $0x1690] sm:$0xff]
                %535 = vst [vmem:[%s169 + $0x5b0] sm:$0xff] %v534
                %v536 = vld [vmem:[%s168 + $0x1698] sm:$0xff]
                %537 = vst [vmem:[%s169 + $0x5b8] sm:$0xff] %v536
                %v538 = vld [vmem:[%s168 + $0x1700] sm:$0xff]
                %539 = vst [vmem:[%s169 + $0x5c0] sm:$0xff] %v538
                %v540 = vld [vmem:[%s168 + $0x1708] sm:$0xff]
                %541 = vst [vmem:[%s169 + $0x5c8] sm:$0xff] %v540
                %v542 = vld [vmem:[%s168 + $0x1710] sm:$0xff]
                %543 = vst [vmem:[%s169 + $0x5d0] sm:$0xff] %v542
                %v544 = vld [vmem:[%s168 + $0x1718] sm:$0xff]
                %545 = vst [vmem:[%s169 + $0x5d8] sm:$0xff] %v544
                %v546 = vld [vmem:[%s168 + $0x1780] sm:$0xff]
                %547 = vst [vmem:[%s169 + $0x5e0] sm:$0xff] %v546
                %v548 = vld [vmem:[%s168 + $0x1788] sm:$0xff]
                %549 = vst [vmem:[%s169 + $0x5e8] sm:$0xff] %v548
                %v550 = vld [vmem:[%s168 + $0x1790] sm:$0xff]
                %551 = vst [vmem:[%s169 + $0x5f0] sm:$0xff] %v550
                %v552 = vld [vmem:[%s168 + $0x1798] sm:$0xff]
                %553 = vst [vmem:[%s169 + $0x5f8] sm:$0xff] %v552
                %v554 = vld [vmem:[%s168 + $0x1800] sm:$0xff]
                %555 = vst [vmem:[%s169 + $0x600] sm:$0xff] %v554
                %v556 = vld [vmem:[%s168 + $0x1808] sm:$0xff]
                %557 = vst [vmem:[%s169 + $0x608] sm:$0xff] %v556
                %v558 = vld [vmem:[%s168 + $0x1810] sm:$0xff]
                %559 = vst [vmem:[%s169 + $0x610] sm:$0xff] %v558
                %v560 = vld [vmem:[%s168 + $0x1818] sm:$0xff]
                %561 = vst [vmem:[%s169 + $0x618] sm:$0xff] %v560
                %v562 = vld [vmem:[%s168 + $0x1880] sm:$0xff]
                %563 = vst [vmem:[%s169 + $0x620] sm:$0xff] %v562
                %v564 = vld [vmem:[%s168 + $0x1888] sm:$0xff]
                %565 = vst [vmem:[%s169 + $0x628] sm:$0xff] %v564
                %v566 = vld [vmem:[%s168 + $0x1890] sm:$0xff]
                %567 = vst [vmem:[%s169 + $0x630] sm:$0xff] %v566
                %v568 = vld [vmem:[%s168 + $0x1898] sm:$0xff]
                %569 = vst [vmem:[%s169 + $0x638] sm:$0xff] %v568
                %v570 = vld [vmem:[%s168 + $0x1900] sm:$0xff]
                %571 = vst [vmem:[%s169 + $0x640] sm:$0xff] %v570
                %v572 = vld [vmem:[%s168 + $0x1908] sm:$0xff]
                %573 = vst [vmem:[%s169 + $0x648] sm:$0xff] %v572
                %v574 = vld [vmem:[%s168 + $0x1910] sm:$0xff]
                %575 = vst [vmem:[%s169 + $0x650] sm:$0xff] %v574
                %v576 = vld [vmem:[%s168 + $0x1918] sm:$0xff]
                %577 = vst [vmem:[%s169 + $0x658] sm:$0xff] %v576
                %v578 = vld [vmem:[%s168 + $0x1980] sm:$0xff]
                %579 = vst [vmem:[%s169 + $0x660] sm:$0xff] %v578
                %v580 = vld [vmem:[%s168 + $0x1988] sm:$0xff]
                %581 = vst [vmem:[%s169 + $0x668] sm:$0xff] %v580
                %v582 = vld [vmem:[%s168 + $0x1990] sm:$0xff]
                %583 = vst [vmem:[%s169 + $0x670] sm:$0xff] %v582
                %v584 = vld [vmem:[%s168 + $0x1998] sm:$0xff]
                %585 = vst [vmem:[%s169 + $0x678] sm:$0xff] %v584
                %v586 = vld [vmem:[%s168 + $0x1a00] sm:$0xff]
                %587 = vst [vmem:[%s169 + $0x680] sm:$0xff] %v586
                %v588 = vld [vmem:[%s168 + $0x1a08] sm:$0xff]
                %589 = vst [vmem:[%s169 + $0x688] sm:$0xff] %v588
                %v590 = vld [vmem:[%s168 + $0x1a10] sm:$0xff]
                %591 = vst [vmem:[%s169 + $0x690] sm:$0xff] %v590
                %v592 = vld [vmem:[%s168 + $0x1a18] sm:$0xff]
                %593 = vst [vmem:[%s169 + $0x698] sm:$0xff] %v592
                %v594 = vld [vmem:[%s168 + $0x1a80] sm:$0xff]
                %595 = vst [vmem:[%s169 + $0x6a0] sm:$0xff] %v594
                %v596 = vld [vmem:[%s168 + $0x1a88] sm:$0xff]
                %597 = vst [vmem:[%s169 + $0x6a8] sm:$0xff] %v596
                %v598 = vld [vmem:[%s168 + $0x1a90] sm:$0xff]
                %599 = vst [vmem:[%s169 + $0x6b0] sm:$0xff] %v598
                %v600 = vld [vmem:[%s168 + $0x1a98] sm:$0xff]
                %601 = vst [vmem:[%s169 + $0x6b8] sm:$0xff] %v600
              $region41: #{autoencoder3d_forward.11} parent=35 // loop_footer
                %s167 = sadd.s32 1, %s163
              $region42: #{autoencoder3d_forward.11} parent=35 // loop_footer_branch
                %162 = sbr.rel target = $region38
              $region43: #{autoencoder3d_forward.11} parent=35 // loop_exit
                _
            $region36: #{autoencoder3d_forward.11} parent=31 // pred_fallthru
              _
            // Predicated region
            $region44: #{autoencoder3d_forward.11} parent=31 // pred_check
              _
            $region45: #{autoencoder3d_forward.11} parent=31 // pred_check_branch
              %603 = sbr.rel target = $region47
            $region46: #{autoencoder3d_forward.11} parent=31 // pred_region
              _
            $region47: #{autoencoder3d_forward.11} parent=31 // pred_fallthru
              _
          $region32: #{autoencoder3d_forward.11} parent=27 // pred_fallthru
            _
          %604 = vnop
        $region28: #{autoencoder3d_forward.11} parent=23 // pred_fallthru
          _
      $region24: #{autoencoder3d_forward.11} parent=5 // pred_fallthru
        _
      %p605 = scmp.le.s32.totalorder 1, %s11
      %p606 = scmp.lt.s32.totalorder %s11, 9
      %p607 = pnand %p605, %p606
      %p608 = pneg %p607
      // Predicated region
      $region48: #{autoencoder3d_forward.11} parent=5 // pred_check
        _
      $region49: #{autoencoder3d_forward.11} parent=5 // pred_check_branch
        %610 = sbr.rel (%p607) target = $region51
      $region50: #{autoencoder3d_forward.11} parent=5 // pred_region
        %s611 = ssub.s32 %s11, 1
        %s612 = sand.u32 %s80, 1
        %s613 = sand.u32 %s80, 1
        %s614 = smul.addr %s613, 1728
        %s615 = scalar_lea.vmem [#allocation3], %s614
        // Predicated region
        $region52: #{autoencoder3d_forward.11} parent=50 // pred_check
          %p616 = pneg %p93
        $region53: #{autoencoder3d_forward.11} parent=50 // pred_check_branch
          %618 = sbr.rel (%p616) target = $region55
        $region54: #{autoencoder3d_forward.11} parent=50 // pred_region
          _
        $region55: #{autoencoder3d_forward.11} parent=50 // pred_fallthru
          _
        %p619 = pneg %p44
        %p620 = pneg %p41
        %p621 = pneg %p65
        %p622 = pneg %p62
        %s623 = sand.u32 %s80, 1
        %s624 = sand.u32 %s80, 1
        %s625 = smul.addr %s624, 1728
        %s626 = scalar_lea.vmem [#allocation3], %s625
        %p627 = pneg %p93
        %p628 = pneg %p90
        %p629 = pneg %p121
        %p630 = pneg %p118
        %s631 = smul.u32 8, %s21
        %p632 = scmp.lt.s32.totalorder %s20, 1
        %s633 = scalar_select %p632, %s20, 1
        %p634 = scmp.lt.s32.totalorder %s631, 31
        %s635 = scalar_select %p634, %s631, 31
        %s636 = smul.addr %s633, 32
        %s637 = sadd.s32 %s635, %s636
        %s638 = scalar_lea.vmem %s3, %s637
        %s639 = smul.u32 8, %s21
        %s640 = smul.u32 8, %s21
        %p641 = scmp.lt.s32.totalorder %s20, 1
        %s642 = scalar_select %p641, %s20, 1
        %p643 = scmp.lt.s32.totalorder %s640, 31
        %s644 = scalar_select %p643, %s640, 31
        %s645 = smul.addr %s642, 32
        %s646 = sadd.s32 %s644, %s645
        %s647 = scalar_lea.vmem %s3, %s646
        %s648 = smul.u32 8, %s21
        %v650 = vld [vmem:[%s0] sm:$0xf]
        %v651 = vld [vmem:[%s615] sm:$0xff]
        %v652 = vld [vmem:[%s615 + $0x8] sm:$0xff]
        %v653 = vld [vmem:[%s615 + $0x10] sm:$0xff]
        %v654 = vld [vmem:[%s615 + $0x18] sm:$0xff]
        %v655 = vld [vmem:[%s615 + $0x20] sm:$0xff]
        %v656 = vld [vmem:[%s615 + $0x28] sm:$0xff]
        %v657 = vld [vmem:[%s615 + $0x30] sm:$0xff]
        %v658 = vld [vmem:[%s615 + $0x38] sm:$0xff]
        %v659 = vld [vmem:[%s615 + $0x40] sm:$0xff]
        %v660 = vld [vmem:[%s615 + $0x48] sm:$0xff]
        %v661 = vld [vmem:[%s615 + $0x50] sm:$0xff]
        %v662 = vld [vmem:[%s615 + $0x58] sm:$0xff]
        %v663 = vld [vmem:[%s615 + $0x60] sm:$0xff]
        %v664 = vld [vmem:[%s615 + $0x68] sm:$0xff]
        %v665 = vld [vmem:[%s615 + $0x70] sm:$0xff]
        %v666 = vld [vmem:[%s615 + $0x78] sm:$0xff]
        %v667 = vld [vmem:[%s615 + $0x80] sm:$0xff]
        %v668 = vld [vmem:[%s615 + $0x88] sm:$0xff]
        %v669 = vld [vmem:[%s615 + $0x90] sm:$0xff]
        %v670 = vld [vmem:[%s615 + $0x98] sm:$0xff]
        %v671 = vld [vmem:[%s615 + $0xa0] sm:$0xff]
        %v672 = vld [vmem:[%s615 + $0xa8] sm:$0xff]
        %v673 = vld [vmem:[%s615 + $0xb0] sm:$0xff]
        %v674 = vld [vmem:[%s615 + $0xb8] sm:$0xff]
        %v675 = vld [vmem:[%s615 + $0xc0] sm:$0xff]
        %v676 = vld [vmem:[%s615 + $0xc8] sm:$0xff]
        %v677 = vld [vmem:[%s615 + $0xd0] sm:$0xff]
        %v678 = vld [vmem:[%s615 + $0xd8] sm:$0xff]
        %v679 = vld [vmem:[%s615 + $0xe0] sm:$0xff]
        %v680 = vld [vmem:[%s615 + $0xe8] sm:$0xff]
        %v681 = vld [vmem:[%s615 + $0xf0] sm:$0xff]
        %v682 = vld [vmem:[%s615 + $0xf8] sm:$0xff]
        %v683 = vld [vmem:[%s615 + $0x100] sm:$0xff]
        %v684 = vld [vmem:[%s615 + $0x108] sm:$0xff]
        %v685 = vld [vmem:[%s615 + $0x110] sm:$0xff]
        %v686 = vld [vmem:[%s615 + $0x118] sm:$0xff]
        %v687 = vld [vmem:[%s615 + $0x120] sm:$0xff]
        %v688 = vld [vmem:[%s615 + $0x128] sm:$0xff]
        %v689 = vld [vmem:[%s615 + $0x130] sm:$0xff]
        %v690 = vld [vmem:[%s615 + $0x138] sm:$0xff]
        %v691 = vld [vmem:[%s615 + $0x140] sm:$0xff]
        %v692 = vld [vmem:[%s615 + $0x148] sm:$0xff]
        %v693 = vld [vmem:[%s615 + $0x150] sm:$0xff]
        %v694 = vld [vmem:[%s615 + $0x158] sm:$0xff]
        %v695 = vld [vmem:[%s615 + $0x160] sm:$0xff]
        %v696 = vld [vmem:[%s615 + $0x168] sm:$0xff]
        %v697 = vld [vmem:[%s615 + $0x170] sm:$0xff]
        %v698 = vld [vmem:[%s615 + $0x178] sm:$0xff]
        %v699 = vld [vmem:[%s615 + $0x180] sm:$0xff]
        %v700 = vld [vmem:[%s615 + $0x188] sm:$0xff]
        %v701 = vld [vmem:[%s615 + $0x190] sm:$0xff]
        %v702 = vld [vmem:[%s615 + $0x198] sm:$0xff]
        %v703 = vld [vmem:[%s615 + $0x1a0] sm:$0xff]
        %v704 = vld [vmem:[%s615 + $0x1a8] sm:$0xff]
        %v705 = vld [vmem:[%s615 + $0x1b0] sm:$0xff]
        %v706 = vld [vmem:[%s615 + $0x1b8] sm:$0xff]
        %v707 = vld [vmem:[%s615 + $0x1c0] sm:$0xff]
        %v708 = vld [vmem:[%s615 + $0x1c8] sm:$0xff]
        %v709 = vld [vmem:[%s615 + $0x1d0] sm:$0xff]
        %v710 = vld [vmem:[%s615 + $0x1d8] sm:$0xff]
        %v711 = vld [vmem:[%s615 + $0x1e0] sm:$0xff]
        %v712 = vld [vmem:[%s615 + $0x1e8] sm:$0xff]
        %v713 = vld [vmem:[%s615 + $0x1f0] sm:$0xff]
        %v714 = vld [vmem:[%s615 + $0x1f8] sm:$0xff]
        %v715 = vld [vmem:[%s615 + $0x200] sm:$0xff]
        %v716 = vld [vmem:[%s615 + $0x208] sm:$0xff]
        %v717 = vld [vmem:[%s615 + $0x210] sm:$0xff]
        %v718 = vld [vmem:[%s615 + $0x218] sm:$0xff]
        %v719 = vld [vmem:[%s615 + $0x220] sm:$0xff]
        %v720 = vld [vmem:[%s615 + $0x228] sm:$0xff]
        %v721 = vld [vmem:[%s615 + $0x230] sm:$0xff]
        %v722 = vld [vmem:[%s615 + $0x238] sm:$0xff]
        %v723 = vld [vmem:[%s615 + $0x240] sm:$0xff]
        %v724 = vld [vmem:[%s615 + $0x248] sm:$0xff]
        %v725 = vld [vmem:[%s615 + $0x250] sm:$0xff]
        %v726 = vld [vmem:[%s615 + $0x258] sm:$0xff]
        %v727 = vld [vmem:[%s615 + $0x260] sm:$0xff]
        %v728 = vld [vmem:[%s615 + $0x268] sm:$0xff]
        %v729 = vld [vmem:[%s615 + $0x270] sm:$0xff]
        %v730 = vld [vmem:[%s615 + $0x278] sm:$0xff]
        %v731 = vld [vmem:[%s615 + $0x280] sm:$0xff]
        %v732 = vld [vmem:[%s615 + $0x288] sm:$0xff]
        %v733 = vld [vmem:[%s615 + $0x290] sm:$0xff]
        %v734 = vld [vmem:[%s615 + $0x298] sm:$0xff]
        %v735 = vld [vmem:[%s615 + $0x2a0] sm:$0xff]
        %v736 = vld [vmem:[%s615 + $0x2a8] sm:$0xff]
        %v737 = vld [vmem:[%s615 + $0x2b0] sm:$0xff]
        %v738 = vld [vmem:[%s615 + $0x2b8] sm:$0xff]
        %v739 = vld [vmem:[%s615 + $0x2c0] sm:$0xff]
        %v740 = vld [vmem:[%s615 + $0x2c8] sm:$0xff]
        %v741 = vld [vmem:[%s615 + $0x2d0] sm:$0xff]
        %v742 = vld [vmem:[%s615 + $0x2d8] sm:$0xff]
        %v743 = vld [vmem:[%s615 + $0x2e0] sm:$0xff]
        %v744 = vld [vmem:[%s615 + $0x2e8] sm:$0xff]
        %v745 = vld [vmem:[%s615 + $0x2f0] sm:$0xff]
        %v746 = vld [vmem:[%s615 + $0x2f8] sm:$0xff]
        %v747 = vld [vmem:[%s615 + $0x300] sm:$0xff]
        %v748 = vld [vmem:[%s615 + $0x308] sm:$0xff]
        %v749 = vld [vmem:[%s615 + $0x310] sm:$0xff]
        %v750 = vld [vmem:[%s615 + $0x318] sm:$0xff]
        %v751 = vld [vmem:[%s615 + $0x320] sm:$0xff]
        %v752 = vld [vmem:[%s615 + $0x328] sm:$0xff]
        %v753 = vld [vmem:[%s615 + $0x330] sm:$0xff]
        %v754 = vld [vmem:[%s615 + $0x338] sm:$0xff]
        %v755 = vld [vmem:[%s615 + $0x340] sm:$0xff]
        %v756 = vld [vmem:[%s615 + $0x348] sm:$0xff]
        %v757 = vld [vmem:[%s615 + $0x350] sm:$0xff]
        %v758 = vld [vmem:[%s615 + $0x358] sm:$0xff]
        %v759 = vld [vmem:[%s615 + $0x360] sm:$0xff]
        %v760 = vld [vmem:[%s615 + $0x368] sm:$0xff]
        %v761 = vld [vmem:[%s615 + $0x370] sm:$0xff]
        %v762 = vld [vmem:[%s615 + $0x378] sm:$0xff]
        %v763 = vld [vmem:[%s615 + $0x380] sm:$0xff]
        %v764 = vld [vmem:[%s615 + $0x388] sm:$0xff]
        %v765 = vld [vmem:[%s615 + $0x390] sm:$0xff]
        %v766 = vld [vmem:[%s615 + $0x398] sm:$0xff]
        %v767 = vld [vmem:[%s615 + $0x3a0] sm:$0xff]
        %v768 = vld [vmem:[%s615 + $0x3a8] sm:$0xff]
        %v769 = vld [vmem:[%s615 + $0x3b0] sm:$0xff]
        %v770 = vld [vmem:[%s615 + $0x3b8] sm:$0xff]
        %v771 = vld [vmem:[%s615 + $0x3c0] sm:$0xff]
        %v772 = vld [vmem:[%s615 + $0x3c8] sm:$0xff]
        %v773 = vld [vmem:[%s615 + $0x3d0] sm:$0xff]
        %v774 = vld [vmem:[%s615 + $0x3d8] sm:$0xff]
        %v775 = vld [vmem:[%s615 + $0x3e0] sm:$0xff]
        %v776 = vld [vmem:[%s615 + $0x3e8] sm:$0xff]
        %v777 = vld [vmem:[%s615 + $0x3f0] sm:$0xff]
        %v778 = vld [vmem:[%s615 + $0x3f8] sm:$0xff]
        %v779 = vld [vmem:[%s615 + $0x400] sm:$0xff]
        %v780 = vld [vmem:[%s615 + $0x408] sm:$0xff]
        %v781 = vld [vmem:[%s615 + $0x410] sm:$0xff]
        %v782 = vld [vmem:[%s615 + $0x418] sm:$0xff]
        %v783 = vld [vmem:[%s615 + $0x420] sm:$0xff]
        %v784 = vld [vmem:[%s615 + $0x428] sm:$0xff]
        %v785 = vld [vmem:[%s615 + $0x430] sm:$0xff]
        %v786 = vld [vmem:[%s615 + $0x438] sm:$0xff]
        %v787 = vld [vmem:[%s615 + $0x440] sm:$0xff]
        %v788 = vld [vmem:[%s615 + $0x448] sm:$0xff]
        %v789 = vld [vmem:[%s615 + $0x450] sm:$0xff]
        %v790 = vld [vmem:[%s615 + $0x458] sm:$0xff]
        %v791 = vld [vmem:[%s615 + $0x460] sm:$0xff]
        %v792 = vld [vmem:[%s615 + $0x468] sm:$0xff]
        %v793 = vld [vmem:[%s615 + $0x470] sm:$0xff]
        %v794 = vld [vmem:[%s615 + $0x478] sm:$0xff]
        %v795 = vld [vmem:[%s615 + $0x480] sm:$0xff]
        %v796 = vld [vmem:[%s615 + $0x488] sm:$0xff]
        %v797 = vld [vmem:[%s615 + $0x490] sm:$0xff]
        %v798 = vld [vmem:[%s615 + $0x498] sm:$0xff]
        %v799 = vld [vmem:[%s615 + $0x4a0] sm:$0xff]
        %v800 = vld [vmem:[%s615 + $0x4a8] sm:$0xff]
        %v801 = vld [vmem:[%s615 + $0x4b0] sm:$0xff]
        %v802 = vld [vmem:[%s615 + $0x4b8] sm:$0xff]
        %v803 = vld [vmem:[%s615 + $0x4c0] sm:$0xff]
        %v804 = vld [vmem:[%s615 + $0x4c8] sm:$0xff]
        %v805 = vld [vmem:[%s615 + $0x4d0] sm:$0xff]
        %v806 = vld [vmem:[%s615 + $0x4d8] sm:$0xff]
        %v807 = vld [vmem:[%s615 + $0x4e0] sm:$0xff]
        %v808 = vld [vmem:[%s615 + $0x4e8] sm:$0xff]
        %v809 = vld [vmem:[%s615 + $0x4f0] sm:$0xff]
        %v810 = vld [vmem:[%s615 + $0x4f8] sm:$0xff]
        %v811 = vld [vmem:[%s615 + $0x500] sm:$0xff]
        %v812 = vld [vmem:[%s615 + $0x508] sm:$0xff]
        %v813 = vld [vmem:[%s615 + $0x510] sm:$0xff]
        %v814 = vld [vmem:[%s615 + $0x518] sm:$0xff]
        %v815 = vld [vmem:[%s615 + $0x520] sm:$0xff]
        %v816 = vld [vmem:[%s615 + $0x528] sm:$0xff]
        %v817 = vld [vmem:[%s615 + $0x530] sm:$0xff]
        %v818 = vld [vmem:[%s615 + $0x538] sm:$0xff]
        %v819 = vld [vmem:[%s615 + $0x540] sm:$0xff]
        %v820 = vld [vmem:[%s615 + $0x548] sm:$0xff]
        %v821 = vld [vmem:[%s615 + $0x550] sm:$0xff]
        %v822 = vld [vmem:[%s615 + $0x558] sm:$0xff]
        %v823 = vld [vmem:[%s615 + $0x560] sm:$0xff]
        %v824 = vld [vmem:[%s615 + $0x568] sm:$0xff]
        %v825 = vld [vmem:[%s615 + $0x570] sm:$0xff]
        %v826 = vld [vmem:[%s615 + $0x578] sm:$0xff]
        %v827 = vld [vmem:[%s615 + $0x580] sm:$0xff]
        %v828 = vld [vmem:[%s615 + $0x588] sm:$0xff]
        %v829 = vld [vmem:[%s615 + $0x590] sm:$0xff]
        %v830 = vld [vmem:[%s615 + $0x598] sm:$0xff]
        %v831 = vld [vmem:[%s615 + $0x5a0] sm:$0xff]
        %v832 = vld [vmem:[%s615 + $0x5a8] sm:$0xff]
        %v833 = vld [vmem:[%s615 + $0x5b0] sm:$0xff]
        %v834 = vld [vmem:[%s615 + $0x5b8] sm:$0xff]
        %v835 = vld [vmem:[%s615 + $0x5c0] sm:$0xff]
        %v836 = vld [vmem:[%s615 + $0x5c8] sm:$0xff]
        %v837 = vld [vmem:[%s615 + $0x5d0] sm:$0xff]
        %v838 = vld [vmem:[%s615 + $0x5d8] sm:$0xff]
        %v839 = vld [vmem:[%s615 + $0x5e0] sm:$0xff]
        %v840 = vld [vmem:[%s615 + $0x5e8] sm:$0xff]
        %v841 = vld [vmem:[%s615 + $0x5f0] sm:$0xff]
        %v842 = vld [vmem:[%s615 + $0x5f8] sm:$0xff]
        %v843 = vld [vmem:[%s615 + $0x600] sm:$0xff]
        %v844 = vld [vmem:[%s615 + $0x608] sm:$0xff]
        %v845 = vld [vmem:[%s615 + $0x610] sm:$0xff]
        %v846 = vld [vmem:[%s615 + $0x618] sm:$0xff]
        %v847 = vld [vmem:[%s615 + $0x620] sm:$0xff]
        %v848 = vld [vmem:[%s615 + $0x628] sm:$0xff]
        %v849 = vld [vmem:[%s615 + $0x630] sm:$0xff]
        %v850 = vld [vmem:[%s615 + $0x638] sm:$0xff]
        %v851 = vld [vmem:[%s615 + $0x640] sm:$0xff]
        %v852 = vld [vmem:[%s615 + $0x648] sm:$0xff]
        %v853 = vld [vmem:[%s615 + $0x650] sm:$0xff]
        %v854 = vld [vmem:[%s615 + $0x658] sm:$0xff]
        %v855 = vld [vmem:[%s615 + $0x660] sm:$0xff]
        %v856 = vld [vmem:[%s615 + $0x668] sm:$0xff]
        %v857 = vld [vmem:[%s615 + $0x670] sm:$0xff]
        %v858 = vld [vmem:[%s615 + $0x678] sm:$0xff]
        %v859 = vld [vmem:[%s615 + $0x680] sm:$0xff]
        %v860 = vld [vmem:[%s615 + $0x688] sm:$0xff]
        %v861 = vld [vmem:[%s615 + $0x690] sm:$0xff]
        %v862 = vld [vmem:[%s615 + $0x698] sm:$0xff]
        %v863 = vld [vmem:[%s615 + $0x6a0] sm:$0xff]
        %v864 = vld [vmem:[%s615 + $0x6a8] sm:$0xff]
        %v865 = vld [vmem:[%s615 + $0x6b0] sm:$0xff]
        %v866 = vld [vmem:[%s615 + $0x6b8] sm:$0xff]
        %v867 = vld [vmem:[#allocation2] sm:$0x1]
        %869 = vset.pattern.permute.xlu0 0
        %870 = vperm.xlu0 %869, %v867
        %v871 = vpop.permute.xlu0 %870
        %v873 = vlaneseq
        %v874 = vshrl.u32 %v873, 7
        %v875 = vsub.s32 0, %v874
        %v876 = vrot.slane %v871, %v875
        %v879 = vunpack.c.l.s4 1966171168
        %v880 = vunpack.c.0.s8 %v879
        %v881 = vlaneseq
        %v882 = vshrl.u32 %v881, 7
        %v883 = vsub.s32 %v880, %v882
        %v884 = vrot.slane %v650, %v883
        %v885 = vcombine.high %v884, %v884
        %v887 = vunpack.c.l.s4 1966171168
        %v888 = vunpack.c.0.s8 %v887
        %v889 = vlaneseq
        %v890 = vshrl.u32 %v889, 7
        %v891 = vsub.s32 %v888, %v890
        %v892 = vrot.slane %v884, %v891
        %v894 = vunpack.c.l.s4 1966171168
        %v895 = vunpack.c.0.s8 %v894
        %v896 = vlaneseq
        %v897 = vshrl.u32 %v896, 7
        %v898 = vsub.s32 %v895, %v897
        %v899 = vrot.slane %v885, %v898
        %v900 = vcombine.high %v892, %v892
        %v901 = vcombine.high %v899, %v899
        %v1121 = vunpack.c.l.b16 %v651
        %v1122 = vunpack.c.h.b16 %v651
        %v1123 = vunpack.c.l.b16 %v652
        %v1124 = vunpack.c.h.b16 %v652
        %v1125 = vunpack.c.l.b16 %v653
        %v1126 = vunpack.c.h.b16 %v653
        %v1127 = vunpack.c.l.b16 %v654
        %v1128 = vunpack.c.h.b16 %v654
        %v1129 = vunpack.c.l.b16 %v655
        %v1130 = vunpack.c.h.b16 %v655
        %v1131 = vunpack.c.l.b16 %v656
        %v1132 = vunpack.c.h.b16 %v656
        %v1133 = vunpack.c.l.b16 %v657
        %v1134 = vunpack.c.h.b16 %v657
        %v1135 = vunpack.c.l.b16 %v658
        %v1136 = vunpack.c.h.b16 %v658
        %v1137 = vunpack.c.l.b16 %v659
        %v1138 = vunpack.c.h.b16 %v659
        %v1139 = vunpack.c.l.b16 %v660
        %v1140 = vunpack.c.h.b16 %v660
        %v1141 = vunpack.c.l.b16 %v661
        %v1142 = vunpack.c.h.b16 %v661
        %v1143 = vunpack.c.l.b16 %v662
        %v1144 = vunpack.c.h.b16 %v662
        %v1145 = vunpack.c.l.b16 %v663
        %v1146 = vunpack.c.h.b16 %v663
        %v1147 = vunpack.c.l.b16 %v664
        %v1148 = vunpack.c.h.b16 %v664
        %v1149 = vunpack.c.l.b16 %v665
        %v1150 = vunpack.c.h.b16 %v665
        %v1151 = vunpack.c.l.b16 %v666
        %v1152 = vunpack.c.h.b16 %v666
        %v1153 = vunpack.c.l.b16 %v667
        %v1154 = vunpack.c.h.b16 %v667
        %v1155 = vunpack.c.l.b16 %v668
        %v1156 = vunpack.c.h.b16 %v668
        %v1157 = vunpack.c.l.b16 %v669
        %v1158 = vunpack.c.h.b16 %v669
        %v1159 = vunpack.c.l.b16 %v670
        %v1160 = vunpack.c.h.b16 %v670
        %v1161 = vunpack.c.l.b16 %v671
        %v1162 = vunpack.c.h.b16 %v671
        %v1163 = vunpack.c.l.b16 %v672
        %v1164 = vunpack.c.h.b16 %v672
        %v1165 = vunpack.c.l.b16 %v673
        %v1166 = vunpack.c.h.b16 %v673
        %v1167 = vunpack.c.l.b16 %v674
        %v1168 = vunpack.c.h.b16 %v674
        %v1169 = vunpack.c.l.b16 %v675
        %v1170 = vunpack.c.h.b16 %v675
        %v1171 = vunpack.c.l.b16 %v676
        %v1172 = vunpack.c.h.b16 %v676
        %v1173 = vunpack.c.l.b16 %v677
        %v1174 = vunpack.c.h.b16 %v677
        %v1175 = vunpack.c.l.b16 %v678
        %v1176 = vunpack.c.h.b16 %v678
        %v1177 = vunpack.c.l.b16 %v679
        %v1178 = vunpack.c.h.b16 %v679
        %v1179 = vunpack.c.l.b16 %v680
        %v1180 = vunpack.c.h.b16 %v680
        %v1181 = vunpack.c.l.b16 %v681
        %v1182 = vunpack.c.h.b16 %v681
        %v1183 = vunpack.c.l.b16 %v682
        %v1184 = vunpack.c.h.b16 %v682
        %v1185 = vunpack.c.l.b16 %v683
        %v1186 = vunpack.c.h.b16 %v683
        %v1187 = vunpack.c.l.b16 %v684
        %v1188 = vunpack.c.h.b16 %v684
        %v1189 = vunpack.c.l.b16 %v685
        %v1190 = vunpack.c.h.b16 %v685
        %v1191 = vunpack.c.l.b16 %v686
        %v1192 = vunpack.c.h.b16 %v686
        %v1193 = vunpack.c.l.b16 %v687
        %v1194 = vunpack.c.h.b16 %v687
        %v1195 = vunpack.c.l.b16 %v688
        %v1196 = vunpack.c.h.b16 %v688
        %v1197 = vunpack.c.l.b16 %v689
        %v1198 = vunpack.c.h.b16 %v689
        %v1199 = vunpack.c.l.b16 %v690
        %v1200 = vunpack.c.h.b16 %v690
        %v1201 = vunpack.c.l.b16 %v691
        %v1202 = vunpack.c.h.b16 %v691
        %v1203 = vunpack.c.l.b16 %v692
        %v1204 = vunpack.c.h.b16 %v692
        %v1205 = vunpack.c.l.b16 %v693
        %v1206 = vunpack.c.h.b16 %v693
        %v1207 = vunpack.c.l.b16 %v694
        %v1208 = vunpack.c.h.b16 %v694
        %v1209 = vunpack.c.l.b16 %v695
        %v1210 = vunpack.c.h.b16 %v695
        %v1211 = vunpack.c.l.b16 %v696
        %v1212 = vunpack.c.h.b16 %v696
        %v1213 = vunpack.c.l.b16 %v697
        %v1214 = vunpack.c.h.b16 %v697
        %v1215 = vunpack.c.l.b16 %v698
        %v1216 = vunpack.c.h.b16 %v698
        %v1217 = vunpack.c.l.b16 %v699
        %v1218 = vunpack.c.h.b16 %v699
        %v1219 = vunpack.c.l.b16 %v700
        %v1220 = vunpack.c.h.b16 %v700
        %v1221 = vunpack.c.l.b16 %v701
        %v1222 = vunpack.c.h.b16 %v701
        %v1223 = vunpack.c.l.b16 %v702
        %v1224 = vunpack.c.h.b16 %v702
        %v1225 = vunpack.c.l.b16 %v703
        %v1226 = vunpack.c.h.b16 %v703
        %v1227 = vunpack.c.l.b16 %v704
        %v1228 = vunpack.c.h.b16 %v704
        %v1229 = vunpack.c.l.b16 %v705
        %v1230 = vunpack.c.h.b16 %v705
        %v1231 = vunpack.c.l.b16 %v706
        %v1232 = vunpack.c.h.b16 %v706
        %v1233 = vunpack.c.l.b16 %v707
        %v1234 = vunpack.c.h.b16 %v707
        %v1235 = vunpack.c.l.b16 %v708
        %v1236 = vunpack.c.h.b16 %v708
        %v1237 = vunpack.c.l.b16 %v709
        %v1238 = vunpack.c.h.b16 %v709
        %v1239 = vunpack.c.l.b16 %v710
        %v1240 = vunpack.c.h.b16 %v710
        %v1241 = vunpack.c.l.b16 %v711
        %v1242 = vunpack.c.h.b16 %v711
        %v1243 = vunpack.c.l.b16 %v712
        %v1244 = vunpack.c.h.b16 %v712
        %v1245 = vunpack.c.l.b16 %v713
        %v1246 = vunpack.c.h.b16 %v713
        %v1247 = vunpack.c.l.b16 %v714
        %v1248 = vunpack.c.h.b16 %v714
        %v1249 = vunpack.c.l.b16 %v715
        %v1250 = vunpack.c.h.b16 %v715
        %v1251 = vunpack.c.l.b16 %v716
        %v1252 = vunpack.c.h.b16 %v716
        %v1253 = vunpack.c.l.b16 %v717
        %v1254 = vunpack.c.h.b16 %v717
        %v1255 = vunpack.c.l.b16 %v718
        %v1256 = vunpack.c.h.b16 %v718
        %v1257 = vunpack.c.l.b16 %v719
        %v1258 = vunpack.c.h.b16 %v719
        %v1259 = vunpack.c.l.b16 %v720
        %v1260 = vunpack.c.h.b16 %v720
        %v1261 = vunpack.c.l.b16 %v721
        %v1262 = vunpack.c.h.b16 %v721
        %v1263 = vunpack.c.l.b16 %v722
        %v1264 = vunpack.c.h.b16 %v722
        %v1265 = vunpack.c.l.b16 %v723
        %v1266 = vunpack.c.h.b16 %v723
        %v1267 = vunpack.c.l.b16 %v724
        %v1268 = vunpack.c.h.b16 %v724
        %v1269 = vunpack.c.l.b16 %v725
        %v1270 = vunpack.c.h.b16 %v725
        %v1271 = vunpack.c.l.b16 %v726
        %v1272 = vunpack.c.h.b16 %v726
        %v1273 = vunpack.c.l.b16 %v727
        %v1274 = vunpack.c.h.b16 %v727
        %v1275 = vunpack.c.l.b16 %v728
        %v1276 = vunpack.c.h.b16 %v728
        %v1277 = vunpack.c.l.b16 %v729
        %v1278 = vunpack.c.h.b16 %v729
        %v1279 = vunpack.c.l.b16 %v730
        %v1280 = vunpack.c.h.b16 %v730
        %v1281 = vunpack.c.l.b16 %v731
        %v1282 = vunpack.c.h.b16 %v731
        %v1283 = vunpack.c.l.b16 %v732
        %v1284 = vunpack.c.h.b16 %v732
        %v1285 = vunpack.c.l.b16 %v733
        %v1286 = vunpack.c.h.b16 %v733
        %v1287 = vunpack.c.l.b16 %v734
        %v1288 = vunpack.c.h.b16 %v734
        %v1289 = vunpack.c.l.b16 %v735
        %v1290 = vunpack.c.h.b16 %v735
        %v1291 = vunpack.c.l.b16 %v736
        %v1292 = vunpack.c.h.b16 %v736
        %v1293 = vunpack.c.l.b16 %v737
        %v1294 = vunpack.c.h.b16 %v737
        %v1295 = vunpack.c.l.b16 %v738
        %v1296 = vunpack.c.h.b16 %v738
        %v1297 = vunpack.c.l.b16 %v739
        %v1298 = vunpack.c.h.b16 %v739
        %v1299 = vunpack.c.l.b16 %v740
        %v1300 = vunpack.c.h.b16 %v740
        %v1301 = vunpack.c.l.b16 %v741
        %v1302 = vunpack.c.h.b16 %v741
        %v1303 = vunpack.c.l.b16 %v742
        %v1304 = vunpack.c.h.b16 %v742
        %v1305 = vunpack.c.l.b16 %v743
        %v1306 = vunpack.c.h.b16 %v743
        %v1307 = vunpack.c.l.b16 %v744
        %v1308 = vunpack.c.h.b16 %v744
        %v1309 = vunpack.c.l.b16 %v745
        %v1310 = vunpack.c.h.b16 %v745
        %v1311 = vunpack.c.l.b16 %v746
        %v1312 = vunpack.c.h.b16 %v746
        %v1313 = vunpack.c.l.b16 %v747
        %v1314 = vunpack.c.h.b16 %v747
        %v1315 = vunpack.c.l.b16 %v748
        %v1316 = vunpack.c.h.b16 %v748
        %v1317 = vunpack.c.l.b16 %v749
        %v1318 = vunpack.c.h.b16 %v749
        %v1319 = vunpack.c.l.b16 %v750
        %v1320 = vunpack.c.h.b16 %v750
        %v1321 = vunpack.c.l.b16 %v751
        %v1322 = vunpack.c.h.b16 %v751
        %v1323 = vunpack.c.l.b16 %v752
        %v1324 = vunpack.c.h.b16 %v752
        %v1325 = vunpack.c.l.b16 %v753
        %v1326 = vunpack.c.h.b16 %v753
        %v1327 = vunpack.c.l.b16 %v754
        %v1328 = vunpack.c.h.b16 %v754
        %v1329 = vunpack.c.l.b16 %v755
        %v1330 = vunpack.c.h.b16 %v755
        %v1331 = vunpack.c.l.b16 %v756
        %v1332 = vunpack.c.h.b16 %v756
        %v1333 = vunpack.c.l.b16 %v757
        %v1334 = vunpack.c.h.b16 %v757
        %v1335 = vunpack.c.l.b16 %v758
        %v1336 = vunpack.c.h.b16 %v758
        %v1337 = vunpack.c.l.b16 %v759
        %v1338 = vunpack.c.h.b16 %v759
        %v1339 = vunpack.c.l.b16 %v760
        %v1340 = vunpack.c.h.b16 %v760
        %v1341 = vunpack.c.l.b16 %v761
        %v1342 = vunpack.c.h.b16 %v761
        %v1343 = vunpack.c.l.b16 %v762
        %v1344 = vunpack.c.h.b16 %v762
        %v1345 = vunpack.c.l.b16 %v763
        %v1346 = vunpack.c.h.b16 %v763
        %v1347 = vunpack.c.l.b16 %v764
        %v1348 = vunpack.c.h.b16 %v764
        %v1349 = vunpack.c.l.b16 %v765
        %v1350 = vunpack.c.h.b16 %v765
        %v1351 = vunpack.c.l.b16 %v766
        %v1352 = vunpack.c.h.b16 %v766
        %v1353 = vunpack.c.l.b16 %v767
        %v1354 = vunpack.c.h.b16 %v767
        %v1355 = vunpack.c.l.b16 %v768
        %v1356 = vunpack.c.h.b16 %v768
        %v1357 = vunpack.c.l.b16 %v769
        %v1358 = vunpack.c.h.b16 %v769
        %v1359 = vunpack.c.l.b16 %v770
        %v1360 = vunpack.c.h.b16 %v770
        %v1361 = vunpack.c.l.b16 %v771
        %v1362 = vunpack.c.h.b16 %v771
        %v1363 = vunpack.c.l.b16 %v772
        %v1364 = vunpack.c.h.b16 %v772
        %v1365 = vunpack.c.l.b16 %v773
        %v1366 = vunpack.c.h.b16 %v773
        %v1367 = vunpack.c.l.b16 %v774
        %v1368 = vunpack.c.h.b16 %v774
        %v1369 = vunpack.c.l.b16 %v775
        %v1370 = vunpack.c.h.b16 %v775
        %v1371 = vunpack.c.l.b16 %v776
        %v1372 = vunpack.c.h.b16 %v776
        %v1373 = vunpack.c.l.b16 %v777
        %v1374 = vunpack.c.h.b16 %v777
        %v1375 = vunpack.c.l.b16 %v778
        %v1376 = vunpack.c.h.b16 %v778
        %v1377 = vunpack.c.l.b16 %v779
        %v1378 = vunpack.c.h.b16 %v779
        %v1379 = vunpack.c.l.b16 %v780
        %v1380 = vunpack.c.h.b16 %v780
        %v1381 = vunpack.c.l.b16 %v781
        %v1382 = vunpack.c.h.b16 %v781
        %v1383 = vunpack.c.l.b16 %v782
        %v1384 = vunpack.c.h.b16 %v782
        %v1385 = vunpack.c.l.b16 %v783
        %v1386 = vunpack.c.h.b16 %v783
        %v1387 = vunpack.c.l.b16 %v784
        %v1388 = vunpack.c.h.b16 %v784
        %v1389 = vunpack.c.l.b16 %v785
        %v1390 = vunpack.c.h.b16 %v785
        %v1391 = vunpack.c.l.b16 %v786
        %v1392 = vunpack.c.h.b16 %v786
        %v1393 = vunpack.c.l.b16 %v787
        %v1394 = vunpack.c.h.b16 %v787
        %v1395 = vunpack.c.l.b16 %v788
        %v1396 = vunpack.c.h.b16 %v788
        %v1397 = vunpack.c.l.b16 %v789
        %v1398 = vunpack.c.h.b16 %v789
        %v1399 = vunpack.c.l.b16 %v790
        %v1400 = vunpack.c.h.b16 %v790
        %v1401 = vunpack.c.l.b16 %v791
        %v1402 = vunpack.c.h.b16 %v791
        %v1403 = vunpack.c.l.b16 %v792
        %v1404 = vunpack.c.h.b16 %v792
        %v1405 = vunpack.c.l.b16 %v793
        %v1406 = vunpack.c.h.b16 %v793
        %v1407 = vunpack.c.l.b16 %v794
        %v1408 = vunpack.c.h.b16 %v794
        %v1409 = vunpack.c.l.b16 %v795
        %v1410 = vunpack.c.h.b16 %v795
        %v1411 = vunpack.c.l.b16 %v796
        %v1412 = vunpack.c.h.b16 %v796
        %v1413 = vunpack.c.l.b16 %v797
        %v1414 = vunpack.c.h.b16 %v797
        %v1415 = vunpack.c.l.b16 %v798
        %v1416 = vunpack.c.h.b16 %v798
        %v1417 = vunpack.c.l.b16 %v799
        %v1418 = vunpack.c.h.b16 %v799
        %v1419 = vunpack.c.l.b16 %v800
        %v1420 = vunpack.c.h.b16 %v800
        %v1421 = vunpack.c.l.b16 %v801
        %v1422 = vunpack.c.h.b16 %v801
        %v1423 = vunpack.c.l.b16 %v802
        %v1424 = vunpack.c.h.b16 %v802
        %v1425 = vunpack.c.l.b16 %v803
        %v1426 = vunpack.c.h.b16 %v803
        %v1427 = vunpack.c.l.b16 %v804
        %v1428 = vunpack.c.h.b16 %v804
        %v1429 = vunpack.c.l.b16 %v805
        %v1430 = vunpack.c.h.b16 %v805
        %v1431 = vunpack.c.l.b16 %v806
        %v1432 = vunpack.c.h.b16 %v806
        %v1433 = vunpack.c.l.b16 %v807
        %v1434 = vunpack.c.h.b16 %v807
        %v1435 = vunpack.c.l.b16 %v808
        %v1436 = vunpack.c.h.b16 %v808
        %v1437 = vunpack.c.l.b16 %v809
        %v1438 = vunpack.c.h.b16 %v809
        %v1439 = vunpack.c.l.b16 %v810
        %v1440 = vunpack.c.h.b16 %v810
        %v1441 = vunpack.c.l.b16 %v811
        %v1442 = vunpack.c.h.b16 %v811
        %v1443 = vunpack.c.l.b16 %v812
        %v1444 = vunpack.c.h.b16 %v812
        %v1445 = vunpack.c.l.b16 %v813
        %v1446 = vunpack.c.h.b16 %v813
        %v1447 = vunpack.c.l.b16 %v814
        %v1448 = vunpack.c.h.b16 %v814
        %v1449 = vunpack.c.l.b16 %v815
        %v1450 = vunpack.c.h.b16 %v815
        %v1451 = vunpack.c.l.b16 %v816
        %v1452 = vunpack.c.h.b16 %v816
        %v1453 = vunpack.c.l.b16 %v817
        %v1454 = vunpack.c.h.b16 %v817
        %v1455 = vunpack.c.l.b16 %v818
        %v1456 = vunpack.c.h.b16 %v818
        %v1457 = vunpack.c.l.b16 %v819
        %v1458 = vunpack.c.h.b16 %v819
        %v1459 = vunpack.c.l.b16 %v820
        %v1460 = vunpack.c.h.b16 %v820
        %v1461 = vunpack.c.l.b16 %v821
        %v1462 = vunpack.c.h.b16 %v821
        %v1463 = vunpack.c.l.b16 %v822
        %v1464 = vunpack.c.h.b16 %v822
        %v1465 = vunpack.c.l.b16 %v823
        %v1466 = vunpack.c.h.b16 %v823
        %v1467 = vunpack.c.l.b16 %v824
        %v1468 = vunpack.c.h.b16 %v824
        %v1469 = vunpack.c.l.b16 %v825
        %v1470 = vunpack.c.h.b16 %v825
        %v1471 = vunpack.c.l.b16 %v826
        %v1472 = vunpack.c.h.b16 %v826
        %v1473 = vunpack.c.l.b16 %v827
        %v1474 = vunpack.c.h.b16 %v827
        %v1475 = vunpack.c.l.b16 %v828
        %v1476 = vunpack.c.h.b16 %v828
        %v1477 = vunpack.c.l.b16 %v829
        %v1478 = vunpack.c.h.b16 %v829
        %v1479 = vunpack.c.l.b16 %v830
        %v1480 = vunpack.c.h.b16 %v830
        %v1481 = vunpack.c.l.b16 %v831
        %v1482 = vunpack.c.h.b16 %v831
        %v1483 = vunpack.c.l.b16 %v832
        %v1484 = vunpack.c.h.b16 %v832
        %v1485 = vunpack.c.l.b16 %v833
        %v1486 = vunpack.c.h.b16 %v833
        %v1487 = vunpack.c.l.b16 %v834
        %v1488 = vunpack.c.h.b16 %v834
        %v1489 = vunpack.c.l.b16 %v835
        %v1490 = vunpack.c.h.b16 %v835
        %v1491 = vunpack.c.l.b16 %v836
        %v1492 = vunpack.c.h.b16 %v836
        %v1493 = vunpack.c.l.b16 %v837
        %v1494 = vunpack.c.h.b16 %v837
        %v1495 = vunpack.c.l.b16 %v838
        %v1496 = vunpack.c.h.b16 %v838
        %v1497 = vunpack.c.l.b16 %v839
        %v1498 = vunpack.c.h.b16 %v839
        %v1499 = vunpack.c.l.b16 %v840
        %v1500 = vunpack.c.h.b16 %v840
        %v1501 = vunpack.c.l.b16 %v841
        %v1502 = vunpack.c.h.b16 %v841
        %v1503 = vunpack.c.l.b16 %v842
        %v1504 = vunpack.c.h.b16 %v842
        %v1505 = vunpack.c.l.b16 %v843
        %v1506 = vunpack.c.h.b16 %v843
        %v1507 = vunpack.c.l.b16 %v844
        %v1508 = vunpack.c.h.b16 %v844
        %v1509 = vunpack.c.l.b16 %v845
        %v1510 = vunpack.c.h.b16 %v845
        %v1511 = vunpack.c.l.b16 %v846
        %v1512 = vunpack.c.h.b16 %v846
        %v1513 = vunpack.c.l.b16 %v847
        %v1514 = vunpack.c.h.b16 %v847
        %v1515 = vunpack.c.l.b16 %v848
        %v1516 = vunpack.c.h.b16 %v848
        %v1517 = vunpack.c.l.b16 %v849
        %v1518 = vunpack.c.h.b16 %v849
        %v1519 = vunpack.c.l.b16 %v850
        %v1520 = vunpack.c.h.b16 %v850
        %v1521 = vunpack.c.l.b16 %v851
        %v1522 = vunpack.c.h.b16 %v851
        %v1523 = vunpack.c.l.b16 %v852
        %v1524 = vunpack.c.h.b16 %v852
        %v1525 = vunpack.c.l.b16 %v853
        %v1526 = vunpack.c.h.b16 %v853
        %v1527 = vunpack.c.l.b16 %v854
        %v1528 = vunpack.c.h.b16 %v854
        %v1529 = vunpack.c.l.b16 %v855
        %v1530 = vunpack.c.h.b16 %v855
        %v1531 = vunpack.c.l.b16 %v856
        %v1532 = vunpack.c.h.b16 %v856
        %v1533 = vunpack.c.l.b16 %v857
        %v1534 = vunpack.c.h.b16 %v857
        %v1535 = vunpack.c.l.b16 %v858
        %v1536 = vunpack.c.h.b16 %v858
        %v1537 = vunpack.c.l.b16 %v859
        %v1538 = vunpack.c.h.b16 %v859
        %v1539 = vunpack.c.l.b16 %v860
        %v1540 = vunpack.c.h.b16 %v860
        %v1541 = vunpack.c.l.b16 %v861
        %v1542 = vunpack.c.h.b16 %v861
        %v1543 = vunpack.c.l.b16 %v862
        %v1544 = vunpack.c.h.b16 %v862
        %v1545 = vunpack.c.l.b16 %v863
        %v1546 = vunpack.c.h.b16 %v863
        %v1547 = vunpack.c.l.b16 %v864
        %v1548 = vunpack.c.h.b16 %v864
        %v1549 = vunpack.c.l.b16 %v865
        %v1550 = vunpack.c.h.b16 %v865
        %v1551 = vunpack.c.l.b16 %v866
        %v1552 = vunpack.c.h.b16 %v866
        %v1553 = vpack.c.b16 %v1129, %v1121
        %v1554 = vpack.c.b16 %v1130, %v1122
        %v1555 = vpack.c.b16 %v1131, %v1123
        %v1556 = vpack.c.b16 %v1132, %v1124
        %v1557 = vpack.c.b16 %v1133, %v1125
        %v1558 = vpack.c.b16 %v1134, %v1126
        %v1559 = vpack.c.b16 %v1135, %v1127
        %v1560 = vpack.c.b16 %v1136, %v1128
        %v1561 = vpack.c.b16 %v1145, %v1137
        %v1562 = vpack.c.b16 %v1146, %v1138
        %v1563 = vpack.c.b16 %v1147, %v1139
        %v1564 = vpack.c.b16 %v1148, %v1140
        %v1565 = vpack.c.b16 %v1149, %v1141
        %v1566 = vpack.c.b16 %v1150, %v1142
        %v1567 = vpack.c.b16 %v1151, %v1143
        %v1568 = vpack.c.b16 %v1152, %v1144
        %v1569 = vpack.c.b16 %v1161, %v1153
        %v1570 = vpack.c.b16 %v1162, %v1154
        %v1571 = vpack.c.b16 %v1163, %v1155
        %v1572 = vpack.c.b16 %v1164, %v1156
        %v1573 = vpack.c.b16 %v1165, %v1157
        %v1574 = vpack.c.b16 %v1166, %v1158
        %v1575 = vpack.c.b16 %v1167, %v1159
        %v1576 = vpack.c.b16 %v1168, %v1160
        %v1577 = vpack.c.b16 %v1177, %v1169
        %v1578 = vpack.c.b16 %v1178, %v1170
        %v1579 = vpack.c.b16 %v1179, %v1171
        %v1580 = vpack.c.b16 %v1180, %v1172
        %v1581 = vpack.c.b16 %v1181, %v1173
        %v1582 = vpack.c.b16 %v1182, %v1174
        %v1583 = vpack.c.b16 %v1183, %v1175
        %v1584 = vpack.c.b16 %v1184, %v1176
        %v1585 = vpack.c.b16 %v1193, %v1185
        %v1586 = vpack.c.b16 %v1194, %v1186
        %v1587 = vpack.c.b16 %v1195, %v1187
        %v1588 = vpack.c.b16 %v1196, %v1188
        %v1589 = vpack.c.b16 %v1197, %v1189
        %v1590 = vpack.c.b16 %v1198, %v1190
        %v1591 = vpack.c.b16 %v1199, %v1191
        %v1592 = vpack.c.b16 %v1200, %v1192
        %v1593 = vpack.c.b16 %v1209, %v1201
        %v1594 = vpack.c.b16 %v1210, %v1202
        %v1595 = vpack.c.b16 %v1211, %v1203
        %v1596 = vpack.c.b16 %v1212, %v1204
        %v1597 = vpack.c.b16 %v1213, %v1205
        %v1598 = vpack.c.b16 %v1214, %v1206
        %v1599 = vpack.c.b16 %v1215, %v1207
        %v1600 = vpack.c.b16 %v1216, %v1208
        %v1601 = vpack.c.b16 %v1225, %v1217
        %v1602 = vpack.c.b16 %v1226, %v1218
        %v1603 = vpack.c.b16 %v1227, %v1219
        %v1604 = vpack.c.b16 %v1228, %v1220
        %v1605 = vpack.c.b16 %v1229, %v1221
        %v1606 = vpack.c.b16 %v1230, %v1222
        %v1607 = vpack.c.b16 %v1231, %v1223
        %v1608 = vpack.c.b16 %v1232, %v1224
        %v1609 = vpack.c.b16 %v1241, %v1233
        %v1610 = vpack.c.b16 %v1242, %v1234
        %v1611 = vpack.c.b16 %v1243, %v1235
        %v1612 = vpack.c.b16 %v1244, %v1236
        %v1613 = vpack.c.b16 %v1245, %v1237
        %v1614 = vpack.c.b16 %v1246, %v1238
        %v1615 = vpack.c.b16 %v1247, %v1239
        %v1616 = vpack.c.b16 %v1248, %v1240
        %v1617 = vpack.c.b16 %v1257, %v1249
        %v1618 = vpack.c.b16 %v1258, %v1250
        %v1619 = vpack.c.b16 %v1259, %v1251
        %v1620 = vpack.c.b16 %v1260, %v1252
        %v1621 = vpack.c.b16 %v1261, %v1253
        %v1622 = vpack.c.b16 %v1262, %v1254
        %v1623 = vpack.c.b16 %v1263, %v1255
        %v1624 = vpack.c.b16 %v1264, %v1256
        %v1625 = vpack.c.b16 %v1273, %v1265
        %v1626 = vpack.c.b16 %v1274, %v1266
        %v1627 = vpack.c.b16 %v1275, %v1267
        %v1628 = vpack.c.b16 %v1276, %v1268
        %v1629 = vpack.c.b16 %v1277, %v1269
        %v1630 = vpack.c.b16 %v1278, %v1270
        %v1631 = vpack.c.b16 %v1279, %v1271
        %v1632 = vpack.c.b16 %v1280, %v1272
        %v1633 = vpack.c.b16 %v1289, %v1281
        %v1634 = vpack.c.b16 %v1290, %v1282
        %v1635 = vpack.c.b16 %v1291, %v1283
        %v1636 = vpack.c.b16 %v1292, %v1284
        %v1637 = vpack.c.b16 %v1293, %v1285
        %v1638 = vpack.c.b16 %v1294, %v1286
        %v1639 = vpack.c.b16 %v1295, %v1287
        %v1640 = vpack.c.b16 %v1296, %v1288
        %v1641 = vpack.c.b16 %v1305, %v1297
        %v1642 = vpack.c.b16 %v1306, %v1298
        %v1643 = vpack.c.b16 %v1307, %v1299
        %v1644 = vpack.c.b16 %v1308, %v1300
        %v1645 = vpack.c.b16 %v1309, %v1301
        %v1646 = vpack.c.b16 %v1310, %v1302
        %v1647 = vpack.c.b16 %v1311, %v1303
        %v1648 = vpack.c.b16 %v1312, %v1304
        %v1649 = vpack.c.b16 %v1321, %v1313
        %v1650 = vpack.c.b16 %v1322, %v1314
        %v1651 = vpack.c.b16 %v1323, %v1315
        %v1652 = vpack.c.b16 %v1324, %v1316
        %v1653 = vpack.c.b16 %v1325, %v1317
        %v1654 = vpack.c.b16 %v1326, %v1318
        %v1655 = vpack.c.b16 %v1327, %v1319
        %v1656 = vpack.c.b16 %v1328, %v1320
        %v1657 = vpack.c.b16 %v1337, %v1329
        %v1658 = vpack.c.b16 %v1338, %v1330
        %v1659 = vpack.c.b16 %v1339, %v1331
        %v1660 = vpack.c.b16 %v1340, %v1332
        %v1661 = vpack.c.b16 %v1341, %v1333
        %v1662 = vpack.c.b16 %v1342, %v1334
        %v1663 = vpack.c.b16 %v1343, %v1335
        %v1664 = vpack.c.b16 %v1344, %v1336
        %v1665 = vpack.c.b16 %v1353, %v1345
        %v1666 = vpack.c.b16 %v1354, %v1346
        %v1667 = vpack.c.b16 %v1355, %v1347
        %v1668 = vpack.c.b16 %v1356, %v1348
        %v1669 = vpack.c.b16 %v1357, %v1349
        %v1670 = vpack.c.b16 %v1358, %v1350
        %v1671 = vpack.c.b16 %v1359, %v1351
        %v1672 = vpack.c.b16 %v1360, %v1352
        %v1673 = vpack.c.b16 %v1369, %v1361
        %v1674 = vpack.c.b16 %v1370, %v1362
        %v1675 = vpack.c.b16 %v1371, %v1363
        %v1676 = vpack.c.b16 %v1372, %v1364
        %v1677 = vpack.c.b16 %v1373, %v1365
        %v1678 = vpack.c.b16 %v1374, %v1366
        %v1679 = vpack.c.b16 %v1375, %v1367
        %v1680 = vpack.c.b16 %v1376, %v1368
        %v1681 = vpack.c.b16 %v1385, %v1377
        %v1682 = vpack.c.b16 %v1386, %v1378
        %v1683 = vpack.c.b16 %v1387, %v1379
        %v1684 = vpack.c.b16 %v1388, %v1380
        %v1685 = vpack.c.b16 %v1389, %v1381
        %v1686 = vpack.c.b16 %v1390, %v1382
        %v1687 = vpack.c.b16 %v1391, %v1383
        %v1688 = vpack.c.b16 %v1392, %v1384
        %v1689 = vpack.c.b16 %v1401, %v1393
        %v1690 = vpack.c.b16 %v1402, %v1394
        %v1691 = vpack.c.b16 %v1403, %v1395
        %v1692 = vpack.c.b16 %v1404, %v1396
        %v1693 = vpack.c.b16 %v1405, %v1397
        %v1694 = vpack.c.b16 %v1406, %v1398
        %v1695 = vpack.c.b16 %v1407, %v1399
        %v1696 = vpack.c.b16 %v1408, %v1400
        %v1697 = vpack.c.b16 %v1417, %v1409
        %v1698 = vpack.c.b16 %v1418, %v1410
        %v1699 = vpack.c.b16 %v1419, %v1411
        %v1700 = vpack.c.b16 %v1420, %v1412
        %v1701 = vpack.c.b16 %v1421, %v1413
        %v1702 = vpack.c.b16 %v1422, %v1414
        %v1703 = vpack.c.b16 %v1423, %v1415
        %v1704 = vpack.c.b16 %v1424, %v1416
        %v1705 = vpack.c.b16 %v1433, %v1425
        %v1706 = vpack.c.b16 %v1434, %v1426
        %v1707 = vpack.c.b16 %v1435, %v1427
        %v1708 = vpack.c.b16 %v1436, %v1428
        %v1709 = vpack.c.b16 %v1437, %v1429
        %v1710 = vpack.c.b16 %v1438, %v1430
        %v1711 = vpack.c.b16 %v1439, %v1431
        %v1712 = vpack.c.b16 %v1440, %v1432
        %v1713 = vpack.c.b16 %v1449, %v1441
        %v1714 = vpack.c.b16 %v1450, %v1442
        %v1715 = vpack.c.b16 %v1451, %v1443
        %v1716 = vpack.c.b16 %v1452, %v1444
        %v1717 = vpack.c.b16 %v1453, %v1445
        %v1718 = vpack.c.b16 %v1454, %v1446
        %v1719 = vpack.c.b16 %v1455, %v1447
        %v1720 = vpack.c.b16 %v1456, %v1448
        %v1721 = vpack.c.b16 %v1465, %v1457
        %v1722 = vpack.c.b16 %v1466, %v1458
        %v1723 = vpack.c.b16 %v1467, %v1459
        %v1724 = vpack.c.b16 %v1468, %v1460
        %v1725 = vpack.c.b16 %v1469, %v1461
        %v1726 = vpack.c.b16 %v1470, %v1462
        %v1727 = vpack.c.b16 %v1471, %v1463
        %v1728 = vpack.c.b16 %v1472, %v1464
        %v1729 = vpack.c.b16 %v1481, %v1473
        %v1730 = vpack.c.b16 %v1482, %v1474
        %v1731 = vpack.c.b16 %v1483, %v1475
        %v1732 = vpack.c.b16 %v1484, %v1476
        %v1733 = vpack.c.b16 %v1485, %v1477
        %v1734 = vpack.c.b16 %v1486, %v1478
        %v1735 = vpack.c.b16 %v1487, %v1479
        %v1736 = vpack.c.b16 %v1488, %v1480
        %v1737 = vpack.c.b16 %v1497, %v1489
        %v1738 = vpack.c.b16 %v1498, %v1490
        %v1739 = vpack.c.b16 %v1499, %v1491
        %v1740 = vpack.c.b16 %v1500, %v1492
        %v1741 = vpack.c.b16 %v1501, %v1493
        %v1742 = vpack.c.b16 %v1502, %v1494
        %v1743 = vpack.c.b16 %v1503, %v1495
        %v1744 = vpack.c.b16 %v1504, %v1496
        %v1745 = vpack.c.b16 %v1513, %v1505
        %v1746 = vpack.c.b16 %v1514, %v1506
        %v1747 = vpack.c.b16 %v1515, %v1507
        %v1748 = vpack.c.b16 %v1516, %v1508
        %v1749 = vpack.c.b16 %v1517, %v1509
        %v1750 = vpack.c.b16 %v1518, %v1510
        %v1751 = vpack.c.b16 %v1519, %v1511
        %v1752 = vpack.c.b16 %v1520, %v1512
        %v1753 = vpack.c.b16 %v1529, %v1521
        %v1754 = vpack.c.b16 %v1530, %v1522
        %v1755 = vpack.c.b16 %v1531, %v1523
        %v1756 = vpack.c.b16 %v1532, %v1524
        %v1757 = vpack.c.b16 %v1533, %v1525
        %v1758 = vpack.c.b16 %v1534, %v1526
        %v1759 = vpack.c.b16 %v1535, %v1527
        %v1760 = vpack.c.b16 %v1536, %v1528
        %v1761 = vpack.c.b16 %v1545, %v1537
        %v1762 = vpack.c.b16 %v1546, %v1538
        %v1763 = vpack.c.b16 %v1547, %v1539
        %v1764 = vpack.c.b16 %v1548, %v1540
        %v1765 = vpack.c.b16 %v1549, %v1541
        %v1766 = vpack.c.b16 %v1550, %v1542
        %v1767 = vpack.c.b16 %v1551, %v1543
        %v1768 = vpack.c.b16 %v1552, %v1544
        %vm1985 = vcmask 392192
        %v1987 = vsel %vm1985, %v901, 0
        %1989 = vmatprep.subr.bf16.mxu0 %v1610
        %1990 = vmatpush1.bf16.msra.mxu0 %v1609
        %1991 = vmatprep.subr.bf16.mxu0 %v1602
        %1992 = vmatpush1.bf16.msra.mxu0 %v1601
        %1993 = vmatprep.subr.bf16.mxu0 %v1594
        %1994 = vmatpush1.bf16.msra.mxu0 %v1593
        %1995 = vmatprep.subr.bf16.mxu0 %v1586
        %1996 = vmatpush1.bf16.msra.mxu0 %v1585
        %1997 = vmatprep.subr.bf16.mxu0 %v1578
        %1998 = vmatpush1.bf16.msra.mxu0 %v1577
        %1999 = vmatprep.subr.bf16.mxu0 %v1570
        %2000 = vmatpush1.bf16.msra.mxu0 %v1569
        %2001 = vmatprep.subr.bf16.mxu0 %v1562
        %2002 = vmatpush1.bf16.msra.mxu0 %v1561
        %2003 = vmatprep.subr.bf16.mxu0 %v1554
        %2004 = vmatpush1.bf16.msra.mxu0 %v1553
        %2005 = vmatprep.subr.bf16.mxu0 %v1674
        %2006 = vmatpush2.bf16.msra.mxu0 %v1673
        %2007 = vmatprep.subr.bf16.mxu0 %v1666
        %2008 = vmatpush2.bf16.msra.mxu0 %v1665
        %2009 = vmatprep.subr.bf16.mxu0 %v1658
        %2010 = vmatpush2.bf16.msra.mxu0 %v1657
        %2011 = vmatprep.subr.bf16.mxu0 %v1650
        %2012 = vmatpush2.bf16.msra.mxu0 %v1649
        %2013 = vmatprep.subr.bf16.mxu0 %v1642
        %2014 = vmatpush2.bf16.msra.mxu0 %v1641
        %2015 = vmatprep.subr.bf16.mxu0 %v1634
        %2016 = vmatpush2.bf16.msra.mxu0 %v1633
        %2017 = vmatprep.subr.bf16.mxu0 %v1626
        %2018 = vmatpush2.bf16.msra.mxu0 %v1625
        %2019 = vmatprep.subr.bf16.mxu0 %v1618
        %2020 = vmatpush2.bf16.msra.mxu0 %v1617
        %2021 = vmatprep.mubr.bf16.mxu0 %v899
        %2022 = vmatmul.mubr.bf16.gmra.mxu0 %v892
        %v2023 = vpop.f32.mrf.mxu0
        %v2024 = vadd.f32 %v876, %v2023
        %v2025 = vpop.f32.mrf.mxu0
        %v2026 = vadd.f32 %v876, %v2025
        %v2027 = vpop.f32.mrf.mxu0
        %v2028 = vpop.f32.mrf.mxu0
        %2029 = vdwg.mxu0
        %2030 = vmatprep.subr.bf16.mxu0 %v1738
        %2031 = vmatpush1.bf16.msra.mxu0 %v1737
        %2032 = vmatprep.subr.bf16.mxu0 %v1730
        %2033 = vmatpush1.bf16.msra.mxu0 %v1729
        %2034 = vmatprep.subr.bf16.mxu0 %v1722
        %2035 = vmatpush1.bf16.msra.mxu0 %v1721
        %2036 = vmatprep.subr.bf16.mxu0 %v1714
        %2037 = vmatpush1.bf16.msra.mxu0 %v1713
        %2038 = vmatprep.subr.bf16.mxu0 %v1706
        %2039 = vmatpush1.bf16.msra.mxu0 %v1705
        %2040 = vmatprep.subr.bf16.mxu0 %v1698
        %2041 = vmatpush1.bf16.msra.mxu0 %v1697
        %2042 = vmatprep.subr.bf16.mxu0 %v1690
        %2043 = vmatpush1.bf16.msra.mxu0 %v1689
        %2044 = vmatprep.subr.bf16.mxu0 %v1682
        %2045 = vmatpush1.bf16.msra.mxu0 %v1681
        %2046 = vmatprep.subr.bf16.mxu0 0
        %2047 = vmatpush2.bf16.msra.mxu0 0
        %2048 = vmatprep.subr.bf16.mxu0 0
        %2049 = vmatpush2.bf16.msra.mxu0 0
        %2050 = vmatprep.subr.bf16.mxu0 0
        %2051 = vmatpush2.bf16.msra.mxu0 0
        %2052 = vmatprep.subr.bf16.mxu0 0
        %2053 = vmatpush2.bf16.msra.mxu0 0
        %2054 = vmatprep.subr.bf16.mxu0 0
        %2055 = vmatpush2.bf16.msra.mxu0 0
        %2056 = vmatprep.subr.bf16.mxu0 %v1762
        %2057 = vmatpush2.bf16.msra.mxu0 %v1761
        %2058 = vmatprep.subr.bf16.mxu0 %v1754
        %2059 = vmatpush2.bf16.msra.mxu0 %v1753
        %2060 = vmatprep.subr.bf16.mxu0 %v1746
        %2061 = vmatpush2.bf16.msra.mxu0 %v1745
        %2062 = vmatprep.mubr.bf16.mxu0 %v1987
        %2063 = vmatmul.mubr.bf16.gmra.mxu0 %v900
        %v2064 = vpop.f32.mrf.mxu0
        %v2065 = vadd.f32 %v2024, %v2064
        %v2066 = vpop.f32.mrf.mxu0
        %v2067 = vadd.f32 %v2026, %v2066
        %v2068 = vpop.f32.mrf.mxu0
        %v2069 = vpop.f32.mrf.mxu0
        %2070 = vdwg.mxu0
        %2071 = vmatprep.subr.bf16.mxu0 %v1612
        %2072 = vmatpush1.bf16.msra.mxu0 %v1611
        %2073 = vmatprep.subr.bf16.mxu0 %v1604
        %2074 = vmatpush1.bf16.msra.mxu0 %v1603
        %2075 = vmatprep.subr.bf16.mxu0 %v1596
        %2076 = vmatpush1.bf16.msra.mxu0 %v1595
        %2077 = vmatprep.subr.bf16.mxu0 %v1588
        %2078 = vmatpush1.bf16.msra.mxu0 %v1587
        %2079 = vmatprep.subr.bf16.mxu0 %v1580
        %2080 = vmatpush1.bf16.msra.mxu0 %v1579
        %2081 = vmatprep.subr.bf16.mxu0 %v1572
        %2082 = vmatpush1.bf16.msra.mxu0 %v1571
        %2083 = vmatprep.subr.bf16.mxu0 %v1564
        %2084 = vmatpush1.bf16.msra.mxu0 %v1563
        %2085 = vmatprep.subr.bf16.mxu0 %v1556
        %2086 = vmatpush1.bf16.msra.mxu0 %v1555
        %2087 = vmatprep.subr.bf16.mxu0 %v1676
        %2088 = vmatpush2.bf16.msra.mxu0 %v1675
        %2089 = vmatprep.subr.bf16.mxu0 %v1668
        %2090 = vmatpush2.bf16.msra.mxu0 %v1667
        %2091 = vmatprep.subr.bf16.mxu0 %v1660
        %2092 = vmatpush2.bf16.msra.mxu0 %v1659
        %2093 = vmatprep.subr.bf16.mxu0 %v1652
        %2094 = vmatpush2.bf16.msra.mxu0 %v1651
        %2095 = vmatprep.subr.bf16.mxu0 %v1644
        %2096 = vmatpush2.bf16.msra.mxu0 %v1643
        %2097 = vmatprep.subr.bf16.mxu0 %v1636
        %2098 = vmatpush2.bf16.msra.mxu0 %v1635
        %2099 = vmatprep.subr.bf16.mxu0 %v1628
        %2100 = vmatpush2.bf16.msra.mxu0 %v1627
        %2101 = vmatprep.subr.bf16.mxu0 %v1620
        %2102 = vmatpush2.bf16.msra.mxu0 %v1619
        %2103 = vmatprep.mubr.bf16.mxu0 %v899
        %2104 = vmatmul.mubr.bf16.gmra.mxu0 %v892
        %v2105 = vpop.f32.mrf.mxu0
        %v2106 = vadd.f32 %v876, %v2105
        %v2107 = vpop.f32.mrf.mxu0
        %v2108 = vadd.f32 %v876, %v2107
        %v2109 = vpop.f32.mrf.mxu0
        %v2110 = vpop.f32.mrf.mxu0
        %2111 = vdwg.mxu0
        %2112 = vmatprep.subr.bf16.mxu0 %v1740
        %2113 = vmatpush1.bf16.msra.mxu0 %v1739
        %2114 = vmatprep.subr.bf16.mxu0 %v1732
        %2115 = vmatpush1.bf16.msra.mxu0 %v1731
        %2116 = vmatprep.subr.bf16.mxu0 %v1724
        %2117 = vmatpush1.bf16.msra.mxu0 %v1723
        %2118 = vmatprep.subr.bf16.mxu0 %v1716
        %2119 = vmatpush1.bf16.msra.mxu0 %v1715
        %2120 = vmatprep.subr.bf16.mxu0 %v1708
        %2121 = vmatpush1.bf16.msra.mxu0 %v1707
        %2122 = vmatprep.subr.bf16.mxu0 %v1700
        %2123 = vmatpush1.bf16.msra.mxu0 %v1699
        %2124 = vmatprep.subr.bf16.mxu0 %v1692
        %2125 = vmatpush1.bf16.msra.mxu0 %v1691
        %2126 = vmatprep.subr.bf16.mxu0 %v1684
        %2127 = vmatpush1.bf16.msra.mxu0 %v1683
        %2128 = vmatprep.subr.bf16.mxu0 0
        %2129 = vmatpush2.bf16.msra.mxu0 0
        %2130 = vmatprep.subr.bf16.mxu0 0
        %2131 = vmatpush2.bf16.msra.mxu0 0
        %2132 = vmatprep.subr.bf16.mxu0 0
        %2133 = vmatpush2.bf16.msra.mxu0 0
        %2134 = vmatprep.subr.bf16.mxu0 0
        %2135 = vmatpush2.bf16.msra.mxu0 0
        %2136 = vmatprep.subr.bf16.mxu0 0
        %2137 = vmatpush2.bf16.msra.mxu0 0
        %2138 = vmatprep.subr.bf16.mxu0 %v1764
        %2139 = vmatpush2.bf16.msra.mxu0 %v1763
        %2140 = vmatprep.subr.bf16.mxu0 %v1756
        %2141 = vmatpush2.bf16.msra.mxu0 %v1755
        %2142 = vmatprep.subr.bf16.mxu0 %v1748
        %2143 = vmatpush2.bf16.msra.mxu0 %v1747
        %2144 = vmatprep.mubr.bf16.mxu0 %v1987
        %2145 = vmatmul.mubr.bf16.gmra.mxu0 %v900
        %v2146 = vpop.f32.mrf.mxu0
        %v2147 = vadd.f32 %v2106, %v2146
        %v2148 = vpop.f32.mrf.mxu0
        %v2149 = vadd.f32 %v2108, %v2148
        %v2150 = vpop.f32.mrf.mxu0
        %v2151 = vpop.f32.mrf.mxu0
        %2152 = vdwg.mxu0
        %2153 = vmatprep.subr.bf16.mxu0 %v1614
        %2154 = vmatpush1.bf16.msra.mxu0 %v1613
        %2155 = vmatprep.subr.bf16.mxu0 %v1606
        %2156 = vmatpush1.bf16.msra.mxu0 %v1605
        %2157 = vmatprep.subr.bf16.mxu0 %v1598
        %2158 = vmatpush1.bf16.msra.mxu0 %v1597
        %2159 = vmatprep.subr.bf16.mxu0 %v1590
        %2160 = vmatpush1.bf16.msra.mxu0 %v1589
        %2161 = vmatprep.subr.bf16.mxu0 %v1582
        %2162 = vmatpush1.bf16.msra.mxu0 %v1581
        %2163 = vmatprep.subr.bf16.mxu0 %v1574
        %2164 = vmatpush1.bf16.msra.mxu0 %v1573
        %2165 = vmatprep.subr.bf16.mxu0 %v1566
        %2166 = vmatpush1.bf16.msra.mxu0 %v1565
        %2167 = vmatprep.subr.bf16.mxu0 %v1558
        %2168 = vmatpush1.bf16.msra.mxu0 %v1557
        %2169 = vmatprep.subr.bf16.mxu0 %v1678
        %2170 = vmatpush2.bf16.msra.mxu0 %v1677
        %2171 = vmatprep.subr.bf16.mxu0 %v1670
        %2172 = vmatpush2.bf16.msra.mxu0 %v1669
        %2173 = vmatprep.subr.bf16.mxu0 %v1662
        %2174 = vmatpush2.bf16.msra.mxu0 %v1661
        %2175 = vmatprep.subr.bf16.mxu0 %v1654
        %2176 = vmatpush2.bf16.msra.mxu0 %v1653
        %2177 = vmatprep.subr.bf16.mxu0 %v1646
        %2178 = vmatpush2.bf16.msra.mxu0 %v1645
        %2179 = vmatprep.subr.bf16.mxu0 %v1638
        %2180 = vmatpush2.bf16.msra.mxu0 %v1637
        %2181 = vmatprep.subr.bf16.mxu0 %v1630
        %2182 = vmatpush2.bf16.msra.mxu0 %v1629
        %2183 = vmatprep.subr.bf16.mxu0 %v1622
        %2184 = vmatpush2.bf16.msra.mxu0 %v1621
        %2185 = vmatprep.mubr.bf16.mxu0 %v899
        %2186 = vmatmul.mubr.bf16.gmra.mxu0 %v892
        %v2187 = vpop.f32.mrf.mxu0
        %v2188 = vadd.f32 %v876, %v2187
        %v2189 = vpop.f32.mrf.mxu0
        %v2190 = vadd.f32 %v876, %v2189
        %v2191 = vpop.f32.mrf.mxu0
        %v2192 = vpop.f32.mrf.mxu0
        %2193 = vdwg.mxu0
        %2194 = vmatprep.subr.bf16.mxu0 %v1742
        %2195 = vmatpush1.bf16.msra.mxu0 %v1741
        %2196 = vmatprep.subr.bf16.mxu0 %v1734
        %2197 = vmatpush1.bf16.msra.mxu0 %v1733
        %2198 = vmatprep.subr.bf16.mxu0 %v1726
        %2199 = vmatpush1.bf16.msra.mxu0 %v1725
        %2200 = vmatprep.subr.bf16.mxu0 %v1718
        %2201 = vmatpush1.bf16.msra.mxu0 %v1717
        %2202 = vmatprep.subr.bf16.mxu0 %v1710
        %2203 = vmatpush1.bf16.msra.mxu0 %v1709
        %2204 = vmatprep.subr.bf16.mxu0 %v1702
        %2205 = vmatpush1.bf16.msra.mxu0 %v1701
        %2206 = vmatprep.subr.bf16.mxu0 %v1694
        %2207 = vmatpush1.bf16.msra.mxu0 %v1693
        %2208 = vmatprep.subr.bf16.mxu0 %v1686
        %2209 = vmatpush1.bf16.msra.mxu0 %v1685
        %2210 = vmatprep.subr.bf16.mxu0 0
        %2211 = vmatpush2.bf16.msra.mxu0 0
        %2212 = vmatprep.subr.bf16.mxu0 0
        %2213 = vmatpush2.bf16.msra.mxu0 0
        %2214 = vmatprep.subr.bf16.mxu0 0
        %2215 = vmatpush2.bf16.msra.mxu0 0
        %2216 = vmatprep.subr.bf16.mxu0 0
        %2217 = vmatpush2.bf16.msra.mxu0 0
        %2218 = vmatprep.subr.bf16.mxu0 0
        %2219 = vmatpush2.bf16.msra.mxu0 0
        %2220 = vmatprep.subr.bf16.mxu0 %v1766
        %2221 = vmatpush2.bf16.msra.mxu0 %v1765
        %2222 = vmatprep.subr.bf16.mxu0 %v1758
        %2223 = vmatpush2.bf16.msra.mxu0 %v1757
        %2224 = vmatprep.subr.bf16.mxu0 %v1750
        %2225 = vmatpush2.bf16.msra.mxu0 %v1749
        %2226 = vmatprep.mubr.bf16.mxu0 %v1987
        %2227 = vmatmul.mubr.bf16.gmra.mxu0 %v900
        %v2228 = vpop.f32.mrf.mxu0
        %v2229 = vadd.f32 %v2188, %v2228
        %v2230 = vpop.f32.mrf.mxu0
        %v2231 = vadd.f32 %v2190, %v2230
        %v2232 = vpop.f32.mrf.mxu0
        %v2233 = vpop.f32.mrf.mxu0
        %2234 = vdwg.mxu0
        %2235 = vmatprep.subr.bf16.mxu0 %v1616
        %2236 = vmatpush1.bf16.msra.mxu0 %v1615
        %2237 = vmatprep.subr.bf16.mxu0 %v1608
        %2238 = vmatpush1.bf16.msra.mxu0 %v1607
        %2239 = vmatprep.subr.bf16.mxu0 %v1600
        %2240 = vmatpush1.bf16.msra.mxu0 %v1599
        %2241 = vmatprep.subr.bf16.mxu0 %v1592
        %2242 = vmatpush1.bf16.msra.mxu0 %v1591
        %2243 = vmatprep.subr.bf16.mxu0 %v1584
        %2244 = vmatpush1.bf16.msra.mxu0 %v1583
        %2245 = vmatprep.subr.bf16.mxu0 %v1576
        %2246 = vmatpush1.bf16.msra.mxu0 %v1575
        %2247 = vmatprep.subr.bf16.mxu0 %v1568
        %2248 = vmatpush1.bf16.msra.mxu0 %v1567
        %2249 = vmatprep.subr.bf16.mxu0 %v1560
        %2250 = vmatpush1.bf16.msra.mxu0 %v1559
        %2251 = vmatprep.subr.bf16.mxu0 %v1680
        %2252 = vmatpush2.bf16.msra.mxu0 %v1679
        %2253 = vmatprep.subr.bf16.mxu0 %v1672
        %2254 = vmatpush2.bf16.msra.mxu0 %v1671
        %2255 = vmatprep.subr.bf16.mxu0 %v1664
        %2256 = vmatpush2.bf16.msra.mxu0 %v1663
        %2257 = vmatprep.subr.bf16.mxu0 %v1656
        %2258 = vmatpush2.bf16.msra.mxu0 %v1655
        %2259 = vmatprep.subr.bf16.mxu0 %v1648
        %2260 = vmatpush2.bf16.msra.mxu0 %v1647
        %2261 = vmatprep.subr.bf16.mxu0 %v1640
        %2262 = vmatpush2.bf16.msra.mxu0 %v1639
        %2263 = vmatprep.subr.bf16.mxu0 %v1632
        %2264 = vmatpush2.bf16.msra.mxu0 %v1631
        %2265 = vmatprep.subr.bf16.mxu0 %v1624
        %2266 = vmatpush2.bf16.msra.mxu0 %v1623
        %2267 = vmatprep.mubr.bf16.mxu0 %v899
        %2268 = vmatmul.mubr.bf16.gmra.mxu0 %v892
        %v2269 = vpop.f32.mrf.mxu0
        %v2270 = vadd.f32 %v876, %v2269
        %v2271 = vpop.f32.mrf.mxu0
        %v2272 = vadd.f32 %v876, %v2271
        %v2273 = vpop.f32.mrf.mxu0
        %v2274 = vpop.f32.mrf.mxu0
        %2275 = vdwg.mxu0
        %2276 = vmatprep.subr.bf16.mxu0 %v1744
        %2277 = vmatpush1.bf16.msra.mxu0 %v1743
        %2278 = vmatprep.subr.bf16.mxu0 %v1736
        %2279 = vmatpush1.bf16.msra.mxu0 %v1735
        %2280 = vmatprep.subr.bf16.mxu0 %v1728
        %2281 = vmatpush1.bf16.msra.mxu0 %v1727
        %2282 = vmatprep.subr.bf16.mxu0 %v1720
        %2283 = vmatpush1.bf16.msra.mxu0 %v1719
        %2284 = vmatprep.subr.bf16.mxu0 %v1712
        %2285 = vmatpush1.bf16.msra.mxu0 %v1711
        %2286 = vmatprep.subr.bf16.mxu0 %v1704
        %2287 = vmatpush1.bf16.msra.mxu0 %v1703
        %2288 = vmatprep.subr.bf16.mxu0 %v1696
        %2289 = vmatpush1.bf16.msra.mxu0 %v1695
        %2290 = vmatprep.subr.bf16.mxu0 %v1688
        %2291 = vmatpush1.bf16.msra.mxu0 %v1687
        %2292 = vmatprep.subr.bf16.mxu0 0
        %2293 = vmatpush2.bf16.msra.mxu0 0
        %2294 = vmatprep.subr.bf16.mxu0 0
        %2295 = vmatpush2.bf16.msra.mxu0 0
        %2296 = vmatprep.subr.bf16.mxu0 0
        %2297 = vmatpush2.bf16.msra.mxu0 0
        %2298 = vmatprep.subr.bf16.mxu0 0
        %2299 = vmatpush2.bf16.msra.mxu0 0
        %2300 = vmatprep.subr.bf16.mxu0 0
        %2301 = vmatpush2.bf16.msra.mxu0 0
        %2302 = vmatprep.subr.bf16.mxu0 %v1768
        %2303 = vmatpush2.bf16.msra.mxu0 %v1767
        %2304 = vmatprep.subr.bf16.mxu0 %v1760
        %2305 = vmatpush2.bf16.msra.mxu0 %v1759
        %2306 = vmatprep.subr.bf16.mxu0 %v1752
        %2307 = vmatpush2.bf16.msra.mxu0 %v1751
        %2308 = vmatprep.mubr.bf16.mxu0 %v1987
        %2309 = vmatmul.mubr.bf16.gmra.mxu0 %v900
        %v2310 = vpop.f32.mrf.mxu0
        %v2311 = vadd.f32 %v2270, %v2310
        %v2312 = vpop.f32.mrf.mxu0
        %v2313 = vadd.f32 %v2272, %v2312
        %v2314 = vpop.f32.mrf.mxu0
        %v2315 = vpop.f32.mrf.mxu0
        %2316 = vdwg.mxu0
        %v2317 = vxor.u32 %v2065, 2147483648
        %v2318 = vxor.u32 %v2067, 2147483648
        %v2319 = vxor.u32 %v2147, 2147483648
        %v2320 = vxor.u32 %v2149, 2147483648
        %v2321 = vxor.u32 %v2229, 2147483648
        %v2322 = vxor.u32 %v2231, 2147483648
        %v2323 = vxor.u32 %v2311, 2147483648
        %v2324 = vxor.u32 %v2313, 2147483648
        %v2325 = vmul.f32 %v2317, 1.442695
        %v2326 = vpow.pop %v2325
        %v2327 = vmul.f32 %v2318, 1.442695
        %v2328 = vpow.pop %v2327
        %v2329 = vmul.f32 %v2319, 1.442695
        %v2330 = vpow.pop %v2329
        %v2331 = vmul.f32 %v2320, 1.442695
        %v2332 = vpow.pop %v2331
        %v2333 = vmul.f32 %v2321, 1.442695
        %v2334 = vpow.pop %v2333
        %v2335 = vmul.f32 %v2322, 1.442695
        %v2336 = vpow.pop %v2335
        %v2337 = vmul.f32 %v2323, 1.442695
        %v2338 = vpow.pop %v2337
        %v2339 = vmul.f32 %v2324, 1.442695
        %v2340 = vpow.pop %v2339
        %v2341 = vadd.f32 %v2326, 1.0
        %v2342 = vadd.f32 %v2328, 1.0
        %v2343 = vadd.f32 %v2330, 1.0
        %v2344 = vadd.f32 %v2332, 1.0
        %v2345 = vadd.f32 %v2334, 1.0
        %v2346 = vadd.f32 %v2336, 1.0
        %v2347 = vadd.f32 %v2338, 1.0
        %v2348 = vadd.f32 %v2340, 1.0
        %v2349 = vrcp.pop %v2341
        %v2350 = vmul.f32 1.0, %v2349
        %v2351 = vrcp.pop %v2342
        %v2352 = vmul.f32 1.0, %v2351
        %v2353 = vrcp.pop %v2343
        %v2354 = vmul.f32 1.0, %v2353
        %v2355 = vrcp.pop %v2344
        %v2356 = vmul.f32 1.0, %v2355
        %v2357 = vrcp.pop %v2345
        %v2358 = vmul.f32 1.0, %v2357
        %v2359 = vrcp.pop %v2346
        %v2360 = vmul.f32 1.0, %v2359
        %v2361 = vrcp.pop %v2347
        %v2362 = vmul.f32 1.0, %v2361
        %v2363 = vrcp.pop %v2348
        %v2364 = vmul.f32 1.0, %v2363
        %v2373 = vcombine.low %v2350, %v2352
        %v2374 = vcombine.low %v2354, %v2356
        %v2375 = vcombine.low %v2358, %v2360
        %v2376 = vcombine.low %v2362, %v2364
        %v2378 = vunpack.c.l.s4 1966171168
        %v2379 = vunpack.c.0.s8 %v2378
        %v2380 = vlaneseq
        %v2381 = vshrl.u32 %v2380, 7
        %v2382 = vsub.s32 %v2379, %v2381
        %v2383 = vrot.slane %v2373, %v2382
        %v2385 = vunpack.c.l.s4 1966171168
        %v2386 = vunpack.c.0.s8 %v2385
        %v2387 = vlaneseq
        %v2388 = vshrl.u32 %v2387, 7
        %v2389 = vsub.s32 %v2386, %v2388
        %v2390 = vrot.slane %v2374, %v2389
        %v2392 = vunpack.c.l.s4 1966171168
        %v2393 = vunpack.c.0.s8 %v2392
        %v2394 = vlaneseq
        %v2395 = vshrl.u32 %v2394, 7
        %v2396 = vsub.s32 %v2393, %v2395
        %v2397 = vrot.slane %v2375, %v2396
        %v2399 = vunpack.c.l.s4 1966171168
        %v2400 = vunpack.c.0.s8 %v2399
        %v2401 = vlaneseq
        %v2402 = vshrl.u32 %v2401, 7
        %v2403 = vsub.s32 %v2400, %v2402
        %v2404 = vrot.slane %v2376, %v2403
        %v2405 = vcombine.low %v2383, %v2390
        %v2406 = vcombine.low %v2397, %v2404
        %v2408 = vunpack.c.l.s4 1966171168
        %v2409 = vunpack.c.0.s8 %v2408
        %v2410 = vlaneseq
        %v2411 = vshrl.u32 %v2410, 7
        %v2412 = vsub.s32 %v2409, %v2411
        %v2413 = vrot.slane %v2405, %v2412
        %v2415 = vunpack.c.l.s4 1966171168
        %v2416 = vunpack.c.0.s8 %v2415
        %v2417 = vlaneseq
        %v2418 = vshrl.u32 %v2417, 7
        %v2419 = vsub.s32 %v2416, %v2418
        %v2420 = vrot.slane %v2406, %v2419
        %v2421 = vcombine.low %v2413, %v2420
        %2423 = vst [vmem:[%s647] sm:$0xff] %v2421
        %s2424 = smul.u32 8, %s21
        %p2425 = scmp.lt.s32.totalorder %s20, 1
        %s2426 = scalar_select %p2425, %s20, 1
        %p2427 = scmp.lt.s32.totalorder %s2424, 31
        %s2428 = scalar_select %p2427, %s2424, 31
        %s2429 = smul.addr %s2426, 32
        %s2430 = sadd.s32 %s2428, %s2429
        %s2431 = scalar_lea.vmem %s3, %s2430
        // Predicated region
        $region56: #{autoencoder3d_forward.11} parent=50 // pred_check
          %p2432 = pneg %p118
        $region57: #{autoencoder3d_forward.11} parent=50 // pred_check_branch
          %2434 = sbr.rel (%p2432) target = $region59
        $region58: #{autoencoder3d_forward.11} parent=50 // pred_region
          %s2435 = smul.u32 8, %s21
        $region59: #{autoencoder3d_forward.11} parent=50 // pred_fallthru
          _
      $region51: #{autoencoder3d_forward.11} parent=5 // pred_fallthru
        _
      %p2436 = scmp.le.s32.totalorder 2, %s11
      // Predicated region
      $region60: #{autoencoder3d_forward.11} parent=5 // pred_check
        %p2437 = pneg %p2436
      $region61: #{autoencoder3d_forward.11} parent=5 // pred_check_branch
        %2439 = sbr.rel (%p2437) target = $region63
      $region62: #{autoencoder3d_forward.11} parent=5 // pred_region
        %s2440 = ssub.s32 %s11, 2
        // Predicated region
        $region64: #{autoencoder3d_forward.11} parent=62 // pred_check
          %p2441 = pneg %p124
        $region65: #{autoencoder3d_forward.11} parent=62 // pred_check_branch
          %2443 = sbr.rel (%p2441) target = $region67
        $region66: #{autoencoder3d_forward.11} parent=62 // pred_region
          %s2444 = smul.u32 8, %s23
          %p2445 = scmp.lt.s32.totalorder %s22, 1
          %s2446 = scalar_select %p2445, %s22, 1
          %p2447 = scmp.lt.s32.totalorder %s2444, 31
          %s2448 = scalar_select %p2447, %s2444, 31
          %s2449 = smul.addr %s2446, 32
          %s2450 = sadd.s32 %s2448, %s2449
          %s2451 = scalar_lea.vmem %s3, %s2450
        $region67: #{autoencoder3d_forward.11} parent=62 // pred_fallthru
          _
      $region63: #{autoencoder3d_forward.11} parent=5 // pred_fallthru
        _
    $region6: #{autoencoder3d_forward.11} parent=1 // loop_footer
      %s15 = sadd.s32 1, %s11
    $region7: #{autoencoder3d_forward.11} parent=1 // loop_footer_branch
      %10 = sbr.rel target = $region3
    $region8: #{autoencoder3d_forward.11} parent=1 // loop_exit
      _

</llo_original>
